<compile_context>
chip_gen: v5e
topology: v5e:2x2
jax: 0.10.0
libtpu: 0.0.40
codegen_flags: <defaults>
</compile_context>

<pallas_src>
import functools

import numpy as np
import jax
import jax.numpy as jnp
from jax.experimental import pallas as pl
from jax.experimental.pallas import tpu as pltpu

VMEM = pltpu.MemorySpace.VMEM


# ----------------------------- in-kernel math helpers -------------------------------------------

def _ln(x, g, b):
    """LayerNorm over the last axis (eps matches PyTorch's 1e-5)."""
    mu = jnp.mean(x, axis=-1, keepdims=True)
    var = jnp.mean(jnp.square(x - mu), axis=-1, keepdims=True)
    return (x - mu) * jax.lax.rsqrt(var + 1e-5) * g + b


def _mm(a, w):
    """2-D matmul on the MXU: bf16 operands, f32 accumulation."""
    return jnp.dot(a.astype(jnp.bfloat16), w.astype(jnp.bfloat16),
                   preferred_element_type=jnp.float32)


def _bqk(q, k):
    return jnp.einsum("bnd,bmd->bnm", q.astype(jnp.bfloat16), k.astype(jnp.bfloat16),
                      preferred_element_type=jnp.float32)


def _bpv(p, v):
    return jnp.einsum("bnm,bmd->bnd", p.astype(jnp.bfloat16), v.astype(jnp.bfloat16),
                      preferred_element_type=jnp.float32)


def _softmax_last(s):
    s = s - jnp.max(s, axis=-1, keepdims=True)
    p = jnp.exp(s)
    return p * pl.reciprocal(jnp.sum(p, axis=-1, keepdims=True), approx=True)


# ----------------------------- kernel A: Attention + norm1 + linear1 ----------------------------

def _attn_block_kernel(xy_ref, pre_g, pre_b, qkv_w, se1_w, se2_w, sa_wa, sa_wm, sa_b,
                       proj_w, proj_b, n1_g, n1_b, lin1_w, lin1_b,
                       n4_ref, h4_ref, *, num_heads):
    _, B, N, D = xy_ref.shape
    H = num_heads
    hd = D // H
    scale = hd ** -0.5
    BN = B * N
    F = lin1_w.shape[1]

    xy = xy_ref[...].reshape(2 * BN, D)                    # [x tokens ; y tokens]
    xy_ln = _ln(xy, pre_g[...], pre_b[...])
    qkv = _mm(xy_ln, qkv_w[...])                           # (2*BN, 4D) lane-dense slab

    # --- SELayer gate (x-stream q group; channels already ordered (head, d)) ---
    qx3 = qkv[:BN, D:2 * D].reshape(B, N, D)
    se_avg = jnp.mean(qx3, axis=1)                         # AdaptiveAvgPool1d(1) -> (B, D)
    se_max = jnp.max(qx3, axis=1)                          # AdaptiveMaxPool1d(1) -> (B, D)
    h_avg = jnp.maximum(_mm(se_avg, se1_w[...]), 0.0)
    h_max = jnp.maximum(_mm(se_max, se1_w[...]), 0.0)
    se_gate = jax.nn.sigmoid(_mm(h_avg, se2_w[...])) + jax.nn.sigmoid(_mm(h_max, se2_w[...]))

    # --- SALayer gate (y-stream q group); the 5x5 conv is two pre-built (N, N) matrices ---
    qy3 = qkv[BN:, D:2 * D].reshape(B, N, D)
    avg_map = jnp.mean(qy3, axis=-1)                       # channel mean -> (B, N)
    max_map = jnp.max(qy3, axis=-1)                        # channel max  -> (B, N)
    sa_gate = jax.nn.sigmoid(_mm(avg_map, sa_wa[...]) + _mm(max_map, sa_wm[...]) + sa_b[...])

    # --- per-head attention for both streams; proj accumulated over heads (no head merge) ---
    pw = proj_w[...]
    acc = jnp.zeros((2 * BN, D), jnp.float32)
    for h in range(H):
        c0 = h * hd
        q_all = qkv[:, D + c0:D + c0 + hd].reshape(2 * B, N, hd)        # [qx ; qy]
        k_all = qkv[:, 2 * D + c0:2 * D + c0 + hd].reshape(2 * B, N, hd)  # [kx ; ky]
        v_x = qkv[:BN, 3 * D + c0:3 * D + c0 + hd].reshape(B, N, hd)    # vy := vx (as in reference)
        qx_h, qy_h = q_all[:B], q_all[B:]
        # attn = (q + gate*q) @ k^T * scale  ->  fold (1+gate)*scale into q before the matmul
        qx_eff = qx_h * (1.0 + se_gate[:, None, c0:c0 + hd]) * scale
        qy_eff = qy_h * (1.0 + sa_gate[:, :, None]) * scale
        q_eff = jnp.concatenate([qx_eff, qy_eff], axis=0)
        p = _softmax_last(_bqk(q_eff, k_all))
        o = _bpv(p, jnp.concatenate([v_x, v_x], axis=0))                # (2B, N, hd)
        acc = acc + _mm(o.reshape(2 * BN, hd), pw[c0:c0 + hd, :])

    xy_out = acc + proj_b[...]                             # proj(attention output)
    reproj = _mm(xy_out, pw) + proj_b[...]                 # reference re-applies proj for xo/yo
    # TODO(synk): attnx/attny in Attention.forward are dead (xo/yo get overwritten by proj(x)/
    #             proj(y)); that dead compute is skipped without changing outputs.
    t4 = jnp.concatenate([xy + xy_out, xy + reproj], axis=0)   # [src, src1, srcx, srcy]
    n4 = _ln(t4, n1_g[...], n1_b[...])
    n4_ref[...] = n4.reshape(4, B, N, D)
    h4_ref[...] = (_mm(n4, lin1_w[...]) + lin1_b[...]).reshape(4, BN, F)


# ----------------------------- kernel B: FF finish + DifAttention + linear1 ---------------------

def _dif_block_kernel(n4_ref, g4_ref, lin2_w, lin2_b, pre_g, pre_b,
                      c_qkv_w, c_proj_w, c_proj_b, lin1_w, lin1_b,
                      srcxy_ref, s2_ref, h2_ref, *, num_heads):
    _, B, N, D = n4_ref.shape
    H = num_heads
    hd = D // H
    scale = hd ** -0.5
    BN = B * N
    F = lin2_w.shape[0]

    t4 = n4_ref[...].reshape(4 * BN, D)
    g4 = g4_ref[...].reshape(4 * BN, F)
    u4 = t4 + _mm(g4, lin2_w[...]) + lin2_b[...]           # first FF finished for all 4 branches
    srcxy_ref[...] = u4[2 * BN:].reshape(2, B, N, D)       # [srcx, srcy] -> chain to next block

    xy = u4[:2 * BN]                                       # [src ; src1]
    xy_ln = _ln(xy, pre_g[...], pre_b[...])
    qkv = _mm(xy_ln, c_qkv_w[...])                         # (2*BN, 4D)

    pw = c_proj_w[...]
    acc = jnp.zeros((2 * BN, D), jnp.float32)
    for h in range(H):
        c0 = h * hd
        qo = qkv[:, c0:c0 + hd].reshape(2 * B, N, hd)              # [qxo ; qyo]
        q = qkv[:, D + c0:D + c0 + hd].reshape(2 * B, N, hd)       # [qx  ; qy ]
        k = qkv[:, 2 * D + c0:2 * D + c0 + hd].reshape(2 * B, N, hd)  # [kx ; ky]
        vx = qkv[:BN, 3 * D + c0:3 * D + c0 + hd].reshape(B, N, hd)   # vy := vx (as in reference)
        # batch the 4 attention maps: [attn1(qx,kx), attn2(qy,ky), attnx(-qyo,kx), attny(-qxo,ky)]
        q_cat = jnp.concatenate([q * scale, qo[B:] * (-scale), qo[:B] * (-scale)], axis=0)
        k_cat = jnp.concatenate([k, k], axis=0)
        v_cat = jnp.concatenate([vx, vx, vx, vx], axis=0)
        p = _softmax_last(_bqk(q_cat, k_cat))
        o = _bpv(p, v_cat)                                          # (4B, N, hd)
        ox = o[:B] + o[2 * B:3 * B]                                 # attn1@vx + attnx@vx
        oy = o[B:2 * B] + o[3 * B:]                                 # attn2@vx + attny@vx
        o2 = jnp.concatenate([ox, oy], axis=0).reshape(2 * BN, hd)
        acc = acc + _mm(o2, pw[c0:c0 + hd, :])

    xy_out = acc + c_proj_b[...]                           # DifAttention output (src, src1)
    s2_ref[...] = xy_out.reshape(2, B, N, D)
    h2_ref[...] = (_mm(xy_out, lin1_w[...]) + lin1_b[...]).reshape(2, BN, lin1_w.shape[1])


# ----------------------------- kernel C: linear2 + residual -------------------------------------

def _ff_finish_kernel(base_ref, g_ref, w_ref, b_ref, out_ref):
    K, B, N, D = base_ref.shape
    F = w_ref.shape[0]
    base = base_ref[...].reshape(K * B * N, D)
    g = g_ref[...].reshape(K * B * N, F)
    out_ref[...] = (base + _mm(g, w_ref[...]) + b_ref[...]).reshape(K, B, N, D)


# ----------------------------- fusion tail: gatefusion(2) + pooling + heads ---------------------

def _tail_kernel(xs_ref, fu_w, fu_b, n2_g, n2_b,
                 g2_f1w, g2_f1b, g2_f2w, g2_f2b, g2_n1g, g2_n1b, g2_apw, g2_apb,
                 pool_w, pool_b, fc_w, fc_b, out_ref):
    _, B, N, D = xs_ref.shape
    BN = B * N
    vs = [xs_ref[i].reshape(BN, D) for i in range(8)]
    xo, yo, x2, y2, x1, y1, x0, y0 = vs

    def gate(a, b, w2d, bias):
        # sigmoid(cat(a, b) @ W + bias) without a lane-dim concat: split W row-wise instead.
        return jax.nn.sigmoid(_mm(a, w2d[:D]) + _mm(b, w2d[D:]) + bias)

    # gatefusion
    w = gate(xo, yo, fu_w[...], fu_b[...])
    t = w * xo + (1.0 - w) * yo
    t = _ln(t, n2_g[...], n2_b[...])

    def gatefusion2(k, x, a, b):
        f1w, f1b = g2_f1w[k], g2_f1b[k]
        f2w, f2b = g2_f2w[k], g2_f2b[k]
        n1g, n1b = g2_n1g[k], g2_n1b[k]
        apw, apb = g2_apw[k], g2_apb[k]
        w1 = gate(x, a, f1w, f1b)
        out1 = w1 * x + (1.0 - w1) * a
        w2 = gate(x, b, f2w, f2b)
        out2 = w2 * x + (1.0 - w2) * b
        # TODO(synk): cross_attention's q/k/v branch is dead in the reference (outputs are
        #             proj(x)/proj(y)); only the proj Linear is applied here.
        out1 = out1 + _mm(out1, apw) + apb
        out2 = out2 + _mm(out2, apw) + apb
        ln1_o1 = _ln(out1, n1g, n1b)
        ln1_o2 = _ln(out2, n1g, n1b)
        w3 = gate(ln1_o1, ln1_o2, f2w, f2b)                 # reference reuses fuse2 here
        out = w3 * ln1_o1 + (1.0 - w3) * ln1_o2
        return x + _ln(out, n1g, n1b)

    t = gatefusion2(0, t, x2, y2)
    t = _ln(t, n2_g[...], n2_b[...])
    t = gatefusion2(1, t, x1, y1)
    t = _ln(t, n2_g[...], n2_b[...])
    t = gatefusion2(2, t, x0, y0)

    # sequence pooling + classifier heads for the 5 outputs, batched in one shot
    p5 = jnp.concatenate([t, xo, yo, x2, y2], axis=0).reshape(5 * B, N, D)
    score = jnp.sum(p5 * pool_w[...][None], axis=-1) + pool_b[...]   # (5B, N)
    attw = _softmax_last(score)                                      # softmax over the sequence
    pooled = jnp.sum(attw[:, :, None] * p5, axis=1)                  # (5B, D)
    logits = _mm(pooled, fc_w[...]) + fc_b[...]                      # (5B, C)
    out_ref[...] = logits.reshape(5, B, fc_w.shape[1])


# ----------------------------- wrappers ----------------------------------------------------------

def encoder_block(bp, xy, num_heads):
    _, B, N, D = xy.shape
    F = bp["lin1_w"].shape[1]
    vspec = pl.BlockSpec(memory_space=VMEM)

    n4, h4 = pl.pallas_call(
        functools.partial(_attn_block_kernel, num_heads=num_heads),
        out_shape=(jax.ShapeDtypeStruct((4, B, N, D), jnp.float32),
                   jax.ShapeDtypeStruct((4, B * N, F), jnp.float32)),
        in_specs=[vspec] * 15,
        out_specs=(vspec, vspec),
    )(xy, bp["pre_g"], bp["pre_b"], bp["qkv_w"], bp["se_fc1_w"], bp["se_fc2_w"],
      bp["sa_wavg"], bp["sa_wmax"], bp["sa_b"], bp["proj_w"], bp["proj_b"],
      bp["norm1_g"], bp["norm1_b"], bp["lin1_w"], bp["lin1_b"])

    # TODO(synk): exact erf-GELU (F.gelu default) stays in XLA glue; erf lowering inside Mosaic is
    #             not guaranteed, so only the GELU sits between the fused kernels.
    g4 = jax.nn.gelu(h4, approximate=False)

    srcxy, s2, h2 = pl.pallas_call(
        functools.partial(_dif_block_kernel, num_heads=num_heads),
        out_shape=(jax.ShapeDtypeStruct((2, B, N, D), jnp.float32),
                   jax.ShapeDtypeStruct((2, B, N, D), jnp.float32),
                   jax.ShapeDtypeStruct((2, B * N, F), jnp.float32)),
        in_specs=[vspec] * 11,
        out_specs=(vspec, vspec, vspec),
    )(n4, g4, bp["lin2_w"], bp["lin2_b"], bp["pre_g"], bp["pre_b"],
      bp["c_qkv_w"], bp["c_proj_w"], bp["c_proj_b"], bp["lin1_w"], bp["lin1_b"])

    g2 = jax.nn.gelu(h2, approximate=False)

    fin = pl.pallas_call(
        _ff_finish_kernel,
        out_shape=jax.ShapeDtypeStruct((2, B, N, D), jnp.float32),
        in_specs=[vspec] * 4,
        out_specs=vspec,
    )(s2, g2, bp["lin2_w"], bp["lin2_b"])
    return srcxy, fin


def fusion_head(p, xs8):
    _, B, N, D = xs8.shape
    C = p["fc_w"].shape[1]
    vspec = pl.BlockSpec(memory_space=VMEM)
    return pl.pallas_call(
        _tail_kernel,
        out_shape=jax.ShapeDtypeStruct((5, B, C), jnp.float32),
        in_specs=[vspec] * 17,
        out_specs=vspec,
    )(xs8, p["fuse1_w"], p["fuse1_b"], p["norm2_g"], p["norm2_b"],
      p["g2_f1w"], p["g2_f1b"], p["g2_f2w"], p["g2_f2b"],
      p["g2_n1g"], p["g2_n1b"], p["g2_apw"], p["g2_apb"],
      p["pool_w"], p["pool_b"], p["fc_w"], p["fc_b"])


def transformer_classifier_fwd(params, x, y, *, num_heads):
    # positional_emb1/2 are None in the reference __init__ (learnable path nulls them); no pos-add.
    xy = jnp.stack([x, y], axis=0)                         # (2, B, N, D): [x-stream, y-stream]
    chain = xy
    fins = []
    for name in ("blk1", "blk2", "blk3"):
        chain, fin = encoder_block(params[name], chain, num_heads)
        fins.append(fin)
    # tail data order: [xo, yo, x2, y2, x1, y1, x0, y0]
    xs8 = jnp.concatenate([chain, fins[2], fins[1], fins[0]], axis=0)
    logits = fusion_head(params, xs8)                      # (5, B, num_classes)
    return tuple(logits[i] for i in range(5))


# ----------------------------- deterministic parameter init -------------------------------------

def _conv_to_mats(conv_w, patch):
    """Fold the SALayer Conv2d(2->1, 5x5, pad=2) into two (N, N) matrices (one per in-channel)."""
    w = np.asarray(conv_w)                                 # (1, 2, 5, 5)
    P = patch
    N = P * P
    mats = []
    for c in range(2):
        M = np.zeros((N, N), np.float32)
        for i in range(P):
            for j in range(P):
                for ki in range(5):
                    for kj in range(5):
                        ii, jj = i + ki - 2, j + kj - 2
                        if 0 <= ii < P and 0 <= jj < P:
                            M[ii * P + jj, i * P + j] += w[0, c, ki, kj]
        mats.append(jnp.asarray(M))
    return mats[0], mats[1]


def init_params(key, D, F, num_classes, patch):
    r = max(D // 16, 1)
    kit = iter(jax.random.split(key, 64))

    def tn(shape):  # trunc_normal_(std=0.02); Linear biases = 0; LayerNorm weight=1 bias=0
        return 0.02 * jax.random.truncated_normal(next(kit), -2.0, 2.0, shape, jnp.float32)

    def ln_pair():
        return jnp.ones((1, D), jnp.float32), jnp.zeros((1, D), jnp.float32)

    def block():
        pre_g, pre_b = ln_pair()
        n1_g, n1_b = ln_pair()
        conv_w = 0.1 * jax.random.normal(next(kit), (1, 2, 5, 5), jnp.float32)
        wa, wm = _conv_to_mats(conv_w, patch)
        return {
            "pre_g": pre_g, "pre_b": pre_b, "norm1_g": n1_g, "norm1_b": n1_b,
            "qkv_w": tn((D, 4 * D)),
            "proj_w": tn((D, D)), "proj_b": jnp.zeros((1, D), jnp.float32),
            "se_fc1_w": tn((D, r)), "se_fc2_w": tn((r, D)),
            "sa_wavg": wa, "sa_wmax": wm, "sa_b": jnp.zeros((1, 1), jnp.float32),
            "lin1_w": tn((D, F)), "lin1_b": jnp.zeros((1, F), jnp.float32),
            "lin2_w": tn((F, D)), "lin2_b": jnp.zeros((1, D), jnp.float32),
            "c_qkv_w": tn((D, 4 * D)),
            "c_proj_w": tn((D, D)), "c_proj_b": jnp.zeros((1, D), jnp.float32),
        }

    def gate2():
        n1_g, n1_b = ln_pair()
        return {"f1_w": tn((2 * D, D)), "f1_b": jnp.zeros((1, D), jnp.float32),
                "f2_w": tn((2 * D, D)), "f2_b": jnp.zeros((1, D), jnp.float32),
                "n1_g": n1_g, "n1_b": n1_b,
                "ap_w": tn((D, D)), "ap_b": jnp.zeros((1, D), jnp.float32)}

    g2s = [gate2() for _ in range(3)]                      # fuse2, fuse3, fuse4
    n2_g, n2_b = ln_pair()
    params = {
        "blk1": block(), "blk2": block(), "blk3": block(),
        "fuse1_w": tn((2 * D, D)), "fuse1_b": jnp.zeros((1, D), jnp.float32),
        "norm2_g": n2_g, "norm2_b": n2_b,
        "pool_w": tn((1, D)), "pool_b": jnp.zeros((1, 1), jnp.float32),
        "fc_w": tn((D, num_classes)), "fc_b": jnp.zeros((1, num_classes), jnp.float32),
        "g2_f1w": jnp.stack([g["f1_w"] for g in g2s]),
        "g2_f1b": jnp.stack([g["f1_b"] for g in g2s]),
        "g2_f2w": jnp.stack([g["f2_w"] for g in g2s]),
        "g2_f2b": jnp.stack([g["f2_b"] for g in g2s]),
        "g2_n1g": jnp.stack([g["n1_g"] for g in g2s]),
        "g2_n1b": jnp.stack([g["n1_b"] for g in g2s]),
        "g2_apw": jnp.stack([g["ap_w"] for g in g2s]),
        "g2_apb": jnp.stack([g["ap_b"] for g in g2s]),
    }
    return params


# ----------------------------- main --------------------------------------------------------------

if __name__ == "__main__":
    B = 2
    embedding_dim = 32
    num_heads = 4
    image_size = 8                      # SALayer patch = image_size // 2
    patch = image_size // 2
    N = patch * patch                   # sequence length must equal patch**2 (= 16)
    mlp_ratio = 2.0
    dim_feedforward = int(embedding_dim * mlp_ratio)
    num_classes = 10

    key = jax.random.PRNGKey(0)
    kx, ky, kp = jax.random.split(key, 3)
    x = jax.random.normal(kx, (B, N, embedding_dim), jnp.float32)
    y = jax.random.normal(ky, (B, N, embedding_dim), jnp.float32)
    params = init_params(kp, embedding_dim, dim_feedforward, num_classes, patch)

    fwd = jax.jit(functools.partial(transformer_classifier_fwd, num_heads=num_heads))
    outs = fwd(params, x, y)
    jax.block_until_ready(outs)
    assert outs[0].shape == (B, num_classes)
    print("KERNEL_OK")
</pallas_src>

<mosaic_0001>
module attributes {stable_mosaic.version = 11 : i64} {
  func.func @_attn_block_kernel(%arg0: memref<2x2x16x32xf32, #tpu.memory_space<vmem>>, %arg1: memref<1x32xf32, #tpu.memory_space<vmem>>, %arg2: memref<1x32xf32, #tpu.memory_space<vmem>>, %arg3: memref<32x128xf32, #tpu.memory_space<vmem>>, %arg4: memref<32x2xf32, #tpu.memory_space<vmem>>, %arg5: memref<2x32xf32, #tpu.memory_space<vmem>>, %arg6: memref<16x16xf32, #tpu.memory_space<vmem>>, %arg7: memref<16x16xf32, #tpu.memory_space<vmem>>, %arg8: memref<1x1xf32, #tpu.memory_space<vmem>>, %arg9: memref<32x32xf32, #tpu.memory_space<vmem>>, %arg10: memref<1x32xf32, #tpu.memory_space<vmem>>, %arg11: memref<1x32xf32, #tpu.memory_space<vmem>>, %arg12: memref<1x32xf32, #tpu.memory_space<vmem>>, %arg13: memref<32x64xf32, #tpu.memory_space<vmem>>, %arg14: memref<1x64xf32, #tpu.memory_space<vmem>>, %arg15: memref<4x2x16x32xf32, #tpu.memory_space<vmem>>, %arg16: memref<4x32x64xf32, #tpu.memory_space<vmem>>) attributes {dimension_semantics = [], scalar_prefetch = 0 : i64, scratch_operands = 0 : i64, tpu.core_type = #tpu.core_type<tc>} {
    %c0 = arith.constant 0 : index
    %c0_0 = arith.constant 0 : index
    %c0_1 = arith.constant 0 : index
    %c0_2 = arith.constant 0 : index
    %0 = vector.load %arg0[%c0, %c0_0, %c0_1, %c0_2] : memref<2x2x16x32xf32, #tpu.memory_space<vmem>>, vector<2x2x16x32xf32>
    %1 = vector.shape_cast %0 : vector<2x2x16x32xf32> to vector<64x32xf32>
    %c0_3 = arith.constant 0 : index
    %c0_4 = arith.constant 0 : index
    %2 = vector.load %arg1[%c0_3, %c0_4] : memref<1x32xf32, #tpu.memory_space<vmem>>, vector<1x32xf32>
    %c0_5 = arith.constant 0 : index
    %c0_6 = arith.constant 0 : index
    %3 = vector.load %arg2[%c0_5, %c0_6] : memref<1x32xf32, #tpu.memory_space<vmem>>, vector<1x32xf32>
    %cst = arith.constant dense<0.000000e+00> : vector<64xf32>
    %4 = vector.multi_reduction <add>, %1, %cst [1] : vector<64x32xf32> to vector<64xf32>
    %5 = vector.shape_cast %4 : vector<64xf32> to vector<64x1xf32>
    %cst_7 = arith.constant 3.200000e+01 : f32
    %6 = vector.broadcast %cst_7 : f32 to vector<64x1xf32>
    %7 = arith.divf %5, %6 : vector<64x1xf32>
    %8 = vector.broadcast %7 : vector<64x1xf32> to vector<64x32xf32>
    %9 = arith.subf %1, %8 : vector<64x32xf32>
    %10 = arith.mulf %9, %9 : vector<64x32xf32>
    %cst_8 = arith.constant dense<0.000000e+00> : vector<64xf32>
    %11 = vector.multi_reduction <add>, %10, %cst_8 [1] : vector<64x32xf32> to vector<64xf32>
    %12 = vector.shape_cast %11 : vector<64xf32> to vector<64x1xf32>
    %cst_9 = arith.constant 3.200000e+01 : f32
    %13 = vector.broadcast %cst_9 : f32 to vector<64x1xf32>
    %14 = arith.divf %12, %13 : vector<64x1xf32>
    %15 = vector.broadcast %7 : vector<64x1xf32> to vector<64x32xf32>
    %16 = arith.subf %1, %15 : vector<64x32xf32>
    %cst_10 = arith.constant 9.99999974E-6 : f32
    %17 = vector.broadcast %cst_10 : f32 to vector<64x1xf32>
    %18 = arith.addf %14, %17 : vector<64x1xf32>
    %19 = math.rsqrt %18 : vector<64x1xf32>
    %20 = vector.broadcast %19 : vector<64x1xf32> to vector<64x32xf32>
    %21 = arith.mulf %16, %20 : vector<64x32xf32>
    %22 = vector.broadcast %2 : vector<1x32xf32> to vector<64x32xf32>
    %23 = arith.mulf %21, %22 : vector<64x32xf32>
    %24 = vector.broadcast %3 : vector<1x32xf32> to vector<64x32xf32>
    %25 = arith.addf %23, %24 : vector<64x32xf32>
    %c0_11 = arith.constant 0 : index
    %c0_12 = arith.constant 0 : index
    %26 = vector.load %arg3[%c0_11, %c0_12] : memref<32x128xf32, #tpu.memory_space<vmem>>, vector<32x128xf32>
    %27 = arith.truncf %25 : vector<64x32xf32> to vector<64x32xbf16>
    %28 = arith.truncf %26 : vector<32x128xf32> to vector<32x128xbf16>
    %cst_13 = arith.constant dense<0.000000e+00> : vector<64x128xf32>
    %29 = tpu.matmul %27, %28, %cst_13 {dimension_numbers = #tpu.dot_dimension_numbers<[1], [0], [0], [1], [0, 0, 1, 1], [], []>} : vector<64x32xbf16>, vector<32x128xbf16>, vector<64x128xf32> -> vector<64x128xf32>
    %30 = vector.extract_strided_slice %29 {offsets = [0, 32], sizes = [32, 32], strides = [1, 1]} : vector<64x128xf32> to vector<32x32xf32>
    %31 = vector.shape_cast %30 : vector<32x32xf32> to vector<2x16x32xf32>
    %cst_14 = arith.constant dense<0.000000e+00> : vector<2x32xf32>
    %32 = vector.multi_reduction <add>, %31, %cst_14 [1] : vector<2x16x32xf32> to vector<2x32xf32>
    %cst_15 = arith.constant 1.600000e+01 : f32
    %33 = vector.broadcast %cst_15 : f32 to vector<2x32xf32>
    %34 = arith.divf %32, %33 : vector<2x32xf32>
    %cst_16 = arith.constant dense<0xFF800000> : vector<2x32xf32>
    %35 = vector.multi_reduction <maximumf>, %31, %cst_16 [1] : vector<2x16x32xf32> to vector<2x32xf32>
    %c0_17 = arith.constant 0 : index
    %c0_18 = arith.constant 0 : index
    %36 = vector.load %arg4[%c0_17, %c0_18] : memref<32x2xf32, #tpu.memory_space<vmem>>, vector<32x2xf32>
    %37 = arith.truncf %34 : vector<2x32xf32> to vector<2x32xbf16>
    %38 = arith.truncf %36 : vector<32x2xf32> to vector<32x2xbf16>
    %cst_19 = arith.constant dense<0.000000e+00> : vector<2x2xf32>
    %39 = tpu.matmul %37, %38, %cst_19 {dimension_numbers = #tpu.dot_dimension_numbers<[1], [0], [0], [1], [0, 0, 1, 1], [], []>} : vector<2x32xbf16>, vector<32x2xbf16>, vector<2x2xf32> -> vector<2x2xf32>
    %cst_20 = arith.constant 0.000000e+00 : f32
    %40 = vector.broadcast %cst_20 : f32 to vector<2x2xf32>
    %41 = arith.maximumf %39, %40 : vector<2x2xf32>
    %c0_21 = arith.constant 0 : index
    %c0_22 = arith.constant 0 : index
    %42 = vector.load %arg4[%c0_21, %c0_22] : memref<32x2xf32, #tpu.memory_space<vmem>>, vector<32x2xf32>
    %43 = arith.truncf %35 : vector<2x32xf32> to vector<2x32xbf16>
    %44 = arith.truncf %42 : vector<32x2xf32> to vector<32x2xbf16>
    %cst_23 = arith.constant dense<0.000000e+00> : vector<2x2xf32>
    %45 = tpu.matmul %43, %44, %cst_23 {dimension_numbers = #tpu.dot_dimension_numbers<[1], [0], [0], [1], [0, 0, 1, 1], [], []>} : vector<2x32xbf16>, vector<32x2xbf16>, vector<2x2xf32> -> vector<2x2xf32>
    %cst_24 = arith.constant 0.000000e+00 : f32
    %46 = vector.broadcast %cst_24 : f32 to vector<2x2xf32>
    %47 = arith.maximumf %45, %46 : vector<2x2xf32>
    %c0_25 = arith.constant 0 : index
    %c0_26 = arith.constant 0 : index
    %48 = vector.load %arg5[%c0_25, %c0_26] : memref<2x32xf32, #tpu.memory_space<vmem>>, vector<2x32xf32>
    %49 = arith.truncf %41 : vector<2x2xf32> to vector<2x2xbf16>
    %50 = arith.truncf %48 : vector<2x32xf32> to vector<2x32xbf16>
    %cst_27 = arith.constant dense<0.000000e+00> : vector<2x32xf32>
    %51 = tpu.matmul %49, %50, %cst_27 {dimension_numbers = #tpu.dot_dimension_numbers<[1], [0], [0], [1], [0, 0, 1, 1], [], []>} : vector<2x2xbf16>, vector<2x32xbf16>, vector<2x32xf32> -> vector<2x32xf32>
    %52 = arith.negf %51 : vector<2x32xf32>
    %53 = math.exp %52 : vector<2x32xf32>
    %cst_28 = arith.constant 1.000000e+00 : f32
    %54 = vector.broadcast %cst_28 : f32 to vector<2x32xf32>
    %55 = arith.addf %54, %53 : vector<2x32xf32>
    %56 = arith.divf %54, %55 : vector<2x32xf32>
    %c0_29 = arith.constant 0 : index
    %c0_30 = arith.constant 0 : index
    %57 = vector.load %arg5[%c0_29, %c0_30] : memref<2x32xf32, #tpu.memory_space<vmem>>, vector<2x32xf32>
    %58 = arith.truncf %47 : vector<2x2xf32> to vector<2x2xbf16>
    %59 = arith.truncf %57 : vector<2x32xf32> to vector<2x32xbf16>
    %cst_31 = arith.constant dense<0.000000e+00> : vector<2x32xf32>
    %60 = tpu.matmul %58, %59, %cst_31 {dimension_numbers = #tpu.dot_dimension_numbers<[1], [0], [0], [1], [0, 0, 1, 1], [], []>} : vector<2x2xbf16>, vector<2x32xbf16>, vector<2x32xf32> -> vector<2x32xf32>
    %61 = arith.negf %60 : vector<2x32xf32>
    %62 = math.exp %61 : vector<2x32xf32>
    %cst_32 = arith.constant 1.000000e+00 : f32
    %63 = vector.broadcast %cst_32 : f32 to vector<2x32xf32>
    %64 = arith.addf %63, %62 : vector<2x32xf32>
    %65 = arith.divf %63, %64 : vector<2x32xf32>
    %66 = arith.addf %56, %65 : vector<2x32xf32>
    %67 = vector.extract_strided_slice %29 {offsets = [32, 32], sizes = [32, 32], strides = [1, 1]} : vector<64x128xf32> to vector<32x32xf32>
    %68 = vector.shape_cast %67 : vector<32x32xf32> to vector<2x16x32xf32>
    %cst_33 = arith.constant dense<0.000000e+00> : vector<2x16xf32>
    %69 = vector.multi_reduction <add>, %68, %cst_33 [2] : vector<2x16x32xf32> to vector<2x16xf32>
    %cst_34 = arith.constant 3.200000e+01 : f32
    %70 = vector.broadcast %cst_34 : f32 to vector<2x16xf32>
    %71 = arith.divf %69, %70 : vector<2x16xf32>
    %cst_35 = arith.constant dense<0xFF800000> : vector<2x16xf32>
    %72 = vector.multi_reduction <maximumf>, %68, %cst_35 [2] : vector<2x16x32xf32> to vector<2x16xf32>
    %c0_36 = arith.constant 0 : index
    %c0_37 = arith.constant 0 : index
    %73 = vector.load %arg6[%c0_36, %c0_37] : memref<16x16xf32, #tpu.memory_space<vmem>>, vector<16x16xf32>
    %74 = arith.truncf %71 : vector<2x16xf32> to vector<2x16xbf16>
    %75 = arith.truncf %73 : vector<16x16xf32> to vector<16x16xbf16>
    %cst_38 = arith.constant dense<0.000000e+00> : vector<2x16xf32>
    %76 = tpu.matmul %74, %75, %cst_38 {dimension_numbers = #tpu.dot_dimension_numbers<[1], [0], [0], [1], [0, 0, 1, 1], [], []>} : vector<2x16xbf16>, vector<16x16xbf16>, vector<2x16xf32> -> vector<2x16xf32>
    %c0_39 = arith.constant 0 : index
    %c0_40 = arith.constant 0 : index
    %77 = vector.load %arg7[%c0_39, %c0_40] : memref<16x16xf32, #tpu.memory_space<vmem>>, vector<16x16xf32>
    %78 = arith.truncf %72 : vector<2x16xf32> to vector<2x16xbf16>
    %79 = arith.truncf %77 : vector<16x16xf32> to vector<16x16xbf16>
    %cst_41 = arith.constant dense<0.000000e+00> : vector<2x16xf32>
    %80 = tpu.matmul %78, %79, %cst_41 {dimension_numbers = #tpu.dot_dimension_numbers<[1], [0], [0], [1], [0, 0, 1, 1], [], []>} : vector<2x16xbf16>, vector<16x16xbf16>, vector<2x16xf32> -> vector<2x16xf32>
    %81 = arith.addf %76, %80 : vector<2x16xf32>
    %c0_42 = arith.constant 0 : index
    %c0_43 = arith.constant 0 : index
    %82 = vector.load %arg8[%c0_42, %c0_43] : memref<1x1xf32, #tpu.memory_space<vmem>>, vector<1x1xf32>
    %83 = vector.broadcast %82 : vector<1x1xf32> to vector<2x16xf32>
    %84 = arith.addf %81, %83 : vector<2x16xf32>
    %85 = arith.negf %84 : vector<2x16xf32>
    %86 = math.exp %85 : vector<2x16xf32>
    %cst_44 = arith.constant 1.000000e+00 : f32
    %87 = vector.broadcast %cst_44 : f32 to vector<2x16xf32>
    %88 = arith.addf %87, %86 : vector<2x16xf32>
    %89 = arith.divf %87, %88 : vector<2x16xf32>
    %c0_45 = arith.constant 0 : index
    %c0_46 = arith.constant 0 : index
    %90 = vector.load %arg9[%c0_45, %c0_46] : memref<32x32xf32, #tpu.memory_space<vmem>>, vector<32x32xf32>
    %cst_47 = arith.constant 0.000000e+00 : f32
    %91 = vector.broadcast %cst_47 : f32 to vector<64x32xf32>
    %92 = vector.extract_strided_slice %29 {offsets = [0, 32], sizes = [64, 8], strides = [1, 1]} : vector<64x128xf32> to vector<64x8xf32>
    %93 = vector.shape_cast %92 : vector<64x8xf32> to vector<4x16x8xf32>
    %94 = vector.extract_strided_slice %29 {offsets = [0, 64], sizes = [64, 8], strides = [1, 1]} : vector<64x128xf32> to vector<64x8xf32>
    %95 = vector.shape_cast %94 : vector<64x8xf32> to vector<4x16x8xf32>
    %96 = vector.extract_strided_slice %29 {offsets = [0, 96], sizes = [32, 8], strides = [1, 1]} : vector<64x128xf32> to vector<32x8xf32>
    %97 = vector.shape_cast %96 : vector<32x8xf32> to vector<2x16x8xf32>
    %98 = vector.extract_strided_slice %93 {offsets = [0, 0, 0], sizes = [2, 16, 8], strides = [1, 1, 1]} : vector<4x16x8xf32> to vector<2x16x8xf32>
    %99 = vector.extract_strided_slice %93 {offsets = [2, 0, 0], sizes = [2, 16, 8], strides = [1, 1, 1]} : vector<4x16x8xf32> to vector<2x16x8xf32>
    %100 = vector.extract_strided_slice %66 {offsets = [0, 0], sizes = [2, 8], strides = [1, 1]} : vector<2x32xf32> to vector<2x8xf32>
    %101 = vector.shape_cast %100 : vector<2x8xf32> to vector<2x1x8xf32>
    %cst_48 = arith.constant 1.000000e+00 : f32
    %102 = vector.broadcast %cst_48 : f32 to vector<2x1x8xf32>
    %103 = arith.addf %102, %101 : vector<2x1x8xf32>
    %104 = vector.broadcast %103 : vector<2x1x8xf32> to vector<2x16x8xf32>
    %105 = arith.mulf %98, %104 : vector<2x16x8xf32>
    %cst_49 = arith.constant 0.353553385 : f32
    %106 = vector.broadcast %cst_49 : f32 to vector<2x16x8xf32>
    %107 = arith.mulf %105, %106 : vector<2x16x8xf32>
    %108 = vector.shape_cast %89 : vector<2x16xf32> to vector<2x16x1xf32>
    %cst_50 = arith.constant 1.000000e+00 : f32
    %109 = vector.broadcast %cst_50 : f32 to vector<2x16x1xf32>
    %110 = arith.addf %109, %108 : vector<2x16x1xf32>
    %111 = vector.broadcast %110 : vector<2x16x1xf32> to vector<2x16x8xf32>
    %112 = arith.mulf %99, %111 : vector<2x16x8xf32>
    %cst_51 = arith.constant 0.353553385 : f32
    %113 = vector.broadcast %cst_51 : f32 to vector<2x16x8xf32>
    %114 = arith.mulf %112, %113 : vector<2x16x8xf32>
    %115 = tpu.concatenate %107, %114 in 0 : vector<2x16x8xf32>, vector<2x16x8xf32> -> vector<4x16x8xf32>
    %116 = arith.truncf %115 : vector<4x16x8xf32> to vector<4x16x8xbf16>
    %117 = arith.truncf %95 : vector<4x16x8xf32> to vector<4x16x8xbf16>
    "tpu.trace_start"() <{level = 10 : i32, message = "bnd,bmd->bnm"}> : () -> ()
    %cst_52 = arith.constant dense<0.000000e+00> : vector<4x16x16xf32>
    %118 = tpu.matmul %116, %117, %cst_52 {dimension_numbers = #tpu.dot_dimension_numbers<[2], [2], [1], [1], [0, 0, 0, 1, 1, 1], [0], [0]>} : vector<4x16x8xbf16>, vector<4x16x8xbf16>, vector<4x16x16xf32> -> vector<4x16x16xf32>
    "tpu.trace_stop"() : () -> ()
    %cst_53 = arith.constant dense<0xFF800000> : vector<4x16xf32>
    %119 = vector.multi_reduction <maximumf>, %118, %cst_53 [2] : vector<4x16x16xf32> to vector<4x16xf32>
    %120 = vector.shape_cast %119 : vector<4x16xf32> to vector<4x16x1xf32>
    %121 = vector.broadcast %120 : vector<4x16x1xf32> to vector<4x16x16xf32>
    %122 = arith.subf %118, %121 : vector<4x16x16xf32>
    %123 = math.exp %122 : vector<4x16x16xf32>
    %cst_54 = arith.constant dense<0.000000e+00> : vector<4x16xf32>
    %124 = vector.multi_reduction <add>, %123, %cst_54 [2] : vector<4x16x16xf32> to vector<4x16xf32>
    %125 = vector.shape_cast %124 : vector<4x16xf32> to vector<4x16x1xf32>
    %126 = tpu.reciprocal %125 {approx = true} : vector<4x16x1xf32> -> vector<4x16x1xf32>
    %127 = vector.broadcast %126 : vector<4x16x1xf32> to vector<4x16x16xf32>
    %128 = arith.mulf %123, %127 : vector<4x16x16xf32>
    %129 = tpu.concatenate %97, %97 in 0 : vector<2x16x8xf32>, vector<2x16x8xf32> -> vector<4x16x8xf32>
    %130 = arith.truncf %128 : vector<4x16x16xf32> to vector<4x16x16xbf16>
    %131 = arith.truncf %129 : vector<4x16x8xf32> to vector<4x16x8xbf16>
    "tpu.trace_start"() <{level = 10 : i32, message = "bnm,bmd->bnd"}> : () -> ()
    %cst_55 = arith.constant dense<0.000000e+00> : vector<4x16x8xf32>
    %132 = tpu.matmul %130, %131, %cst_55 {dimension_numbers = #tpu.dot_dimension_numbers<[2], [1], [1], [2], [0, 0, 0, 1, 1, 2], [0], [0]>} : vector<4x16x16xbf16>, vector<4x16x8xbf16>, vector<4x16x8xf32> -> vector<4x16x8xf32>
    "tpu.trace_stop"() : () -> ()
    %133 = vector.shape_cast %132 : vector<4x16x8xf32> to vector<64x8xf32>
    %134 = vector.extract_strided_slice %90 {offsets = [0, 0], sizes = [8, 32], strides = [1, 1]} : vector<32x32xf32> to vector<8x32xf32>
    %135 = arith.truncf %133 : vector<64x8xf32> to vector<64x8xbf16>
    %136 = arith.truncf %134 : vector<8x32xf32> to vector<8x32xbf16>
    %cst_56 = arith.constant dense<0.000000e+00> : vector<64x32xf32>
    %137 = tpu.matmul %135, %136, %cst_56 {dimension_numbers = #tpu.dot_dimension_numbers<[1], [0], [0], [1], [0, 0, 1, 1], [], []>} : vector<64x8xbf16>, vector<8x32xbf16>, vector<64x32xf32> -> vector<64x32xf32>
    %138 = arith.addf %91, %137 : vector<64x32xf32>
    %139 = vector.extract_strided_slice %29 {offsets = [0, 40], sizes = [64, 8], strides = [1, 1]} : vector<64x128xf32> to vector<64x8xf32>
    %140 = vector.shape_cast %139 : vector<64x8xf32> to vector<4x16x8xf32>
    %141 = vector.extract_strided_slice %29 {offsets = [0, 72], sizes = [64, 8], strides = [1, 1]} : vector<64x128xf32> to vector<64x8xf32>
    %142 = vector.shape_cast %141 : vector<64x8xf32> to vector<4x16x8xf32>
    %143 = vector.extract_strided_slice %29 {offsets = [0, 104], sizes = [32, 8], strides = [1, 1]} : vector<64x128xf32> to vector<32x8xf32>
    %144 = vector.shape_cast %143 : vector<32x8xf32> to vector<2x16x8xf32>
    %145 = vector.extract_strided_slice %140 {offsets = [0, 0, 0], sizes = [2, 16, 8], strides = [1, 1, 1]} : vector<4x16x8xf32> to vector<2x16x8xf32>
    %146 = vector.extract_strided_slice %140 {offsets = [2, 0, 0], sizes = [2, 16, 8], strides = [1, 1, 1]} : vector<4x16x8xf32> to vector<2x16x8xf32>
    %147 = vector.extract_strided_slice %66 {offsets = [0, 8], sizes = [2, 8], strides = [1, 1]} : vector<2x32xf32> to vector<2x8xf32>
    %148 = vector.shape_cast %147 : vector<2x8xf32> to vector<2x1x8xf32>
    %cst_57 = arith.constant 1.000000e+00 : f32
    %149 = vector.broadcast %cst_57 : f32 to vector<2x1x8xf32>
    %150 = arith.addf %149, %148 : vector<2x1x8xf32>
    %151 = vector.broadcast %150 : vector<2x1x8xf32> to vector<2x16x8xf32>
    %152 = arith.mulf %145, %151 : vector<2x16x8xf32>
    %cst_58 = arith.constant 0.353553385 : f32
    %153 = vector.broadcast %cst_58 : f32 to vector<2x16x8xf32>
    %154 = arith.mulf %152, %153 : vector<2x16x8xf32>
    %155 = vector.shape_cast %89 : vector<2x16xf32> to vector<2x16x1xf32>
    %cst_59 = arith.constant 1.000000e+00 : f32
    %156 = vector.broadcast %cst_59 : f32 to vector<2x16x1xf32>
    %157 = arith.addf %156, %155 : vector<2x16x1xf32>
    %158 = vector.broadcast %157 : vector<2x16x1xf32> to vector<2x16x8xf32>
    %159 = arith.mulf %146, %158 : vector<2x16x8xf32>
    %cst_60 = arith.constant 0.353553385 : f32
    %160 = vector.broadcast %cst_60 : f32 to vector<2x16x8xf32>
    %161 = arith.mulf %159, %160 : vector<2x16x8xf32>
    %162 = tpu.concatenate %154, %161 in 0 : vector<2x16x8xf32>, vector<2x16x8xf32> -> vector<4x16x8xf32>
    %163 = arith.truncf %162 : vector<4x16x8xf32> to vector<4x16x8xbf16>
    %164 = arith.truncf %142 : vector<4x16x8xf32> to vector<4x16x8xbf16>
    "tpu.trace_start"() <{level = 10 : i32, message = "bnd,bmd->bnm"}> : () -> ()
    %cst_61 = arith.constant dense<0.000000e+00> : vector<4x16x16xf32>
    %165 = tpu.matmul %163, %164, %cst_61 {dimension_numbers = #tpu.dot_dimension_numbers<[2], [2], [1], [1], [0, 0, 0, 1, 1, 1], [0], [0]>} : vector<4x16x8xbf16>, vector<4x16x8xbf16>, vector<4x16x16xf32> -> vector<4x16x16xf32>
    "tpu.trace_stop"() : () -> ()
    %cst_62 = arith.constant dense<0xFF800000> : vector<4x16xf32>
    %166 = vector.multi_reduction <maximumf>, %165, %cst_62 [2] : vector<4x16x16xf32> to vector<4x16xf32>
    %167 = vector.shape_cast %166 : vector<4x16xf32> to vector<4x16x1xf32>
    %168 = vector.broadcast %167 : vector<4x16x1xf32> to vector<4x16x16xf32>
    %169 = arith.subf %165, %168 : vector<4x16x16xf32>
    %170 = math.exp %169 : vector<4x16x16xf32>
    %cst_63 = arith.constant dense<0.000000e+00> : vector<4x16xf32>
    %171 = vector.multi_reduction <add>, %170, %cst_63 [2] : vector<4x16x16xf32> to vector<4x16xf32>
    %172 = vector.shape_cast %171 : vector<4x16xf32> to vector<4x16x1xf32>
    %173 = tpu.reciprocal %172 {approx = true} : vector<4x16x1xf32> -> vector<4x16x1xf32>
    %174 = vector.broadcast %173 : vector<4x16x1xf32> to vector<4x16x16xf32>
    %175 = arith.mulf %170, %174 : vector<4x16x16xf32>
    %176 = tpu.concatenate %144, %144 in 0 : vector<2x16x8xf32>, vector<2x16x8xf32> -> vector<4x16x8xf32>
    %177 = arith.truncf %175 : vector<4x16x16xf32> to vector<4x16x16xbf16>
    %178 = arith.truncf %176 : vector<4x16x8xf32> to vector<4x16x8xbf16>
    "tpu.trace_start"() <{level = 10 : i32, message = "bnm,bmd->bnd"}> : () -> ()
    %cst_64 = arith.constant dense<0.000000e+00> : vector<4x16x8xf32>
    %179 = tpu.matmul %177, %178, %cst_64 {dimension_numbers = #tpu.dot_dimension_numbers<[2], [1], [1], [2], [0, 0, 0, 1, 1, 2], [0], [0]>} : vector<4x16x16xbf16>, vector<4x16x8xbf16>, vector<4x16x8xf32> -> vector<4x16x8xf32>
    "tpu.trace_stop"() : () -> ()
    %180 = vector.shape_cast %179 : vector<4x16x8xf32> to vector<64x8xf32>
    %181 = vector.extract_strided_slice %90 {offsets = [8, 0], sizes = [8, 32], strides = [1, 1]} : vector<32x32xf32> to vector<8x32xf32>
    %182 = arith.truncf %180 : vector<64x8xf32> to vector<64x8xbf16>
    %183 = arith.truncf %181 : vector<8x32xf32> to vector<8x32xbf16>
    %cst_65 = arith.constant dense<0.000000e+00> : vector<64x32xf32>
    %184 = tpu.matmul %182, %183, %cst_65 {dimension_numbers = #tpu.dot_dimension_numbers<[1], [0], [0], [1], [0, 0, 1, 1], [], []>} : vector<64x8xbf16>, vector<8x32xbf16>, vector<64x32xf32> -> vector<64x32xf32>
    %185 = arith.addf %138, %184 : vector<64x32xf32>
    %186 = vector.extract_strided_slice %29 {offsets = [0, 48], sizes = [64, 8], strides = [1, 1]} : vector<64x128xf32> to vector<64x8xf32>
    %187 = vector.shape_cast %186 : vector<64x8xf32> to vector<4x16x8xf32>
    %188 = vector.extract_strided_slice %29 {offsets = [0, 80], sizes = [64, 8], strides = [1, 1]} : vector<64x128xf32> to vector<64x8xf32>
    %189 = vector.shape_cast %188 : vector<64x8xf32> to vector<4x16x8xf32>
    %190 = vector.extract_strided_slice %29 {offsets = [0, 112], sizes = [32, 8], strides = [1, 1]} : vector<64x128xf32> to vector<32x8xf32>
    %191 = vector.shape_cast %190 : vector<32x8xf32> to vector<2x16x8xf32>
    %192 = vector.extract_strided_slice %187 {offsets = [0, 0, 0], sizes = [2, 16, 8], strides = [1, 1, 1]} : vector<4x16x8xf32> to vector<2x16x8xf32>
    %193 = vector.extract_strided_slice %187 {offsets = [2, 0, 0], sizes = [2, 16, 8], strides = [1, 1, 1]} : vector<4x16x8xf32> to vector<2x16x8xf32>
    %194 = vector.extract_strided_slice %66 {offsets = [0, 16], sizes = [2, 8], strides = [1, 1]} : vector<2x32xf32> to vector<2x8xf32>
    %195 = vector.shape_cast %194 : vector<2x8xf32> to vector<2x1x8xf32>
    %cst_66 = arith.constant 1.000000e+00 : f32
    %196 = vector.broadcast %cst_66 : f32 to vector<2x1x8xf32>
    %197 = arith.addf %196, %195 : vector<2x1x8xf32>
    %198 = vector.broadcast %197 : vector<2x1x8xf32> to vector<2x16x8xf32>
    %199 = arith.mulf %192, %198 : vector<2x16x8xf32>
    %cst_67 = arith.constant 0.353553385 : f32
    %200 = vector.broadcast %cst_67 : f32 to vector<2x16x8xf32>
    %201 = arith.mulf %199, %200 : vector<2x16x8xf32>
    %202 = vector.shape_cast %89 : vector<2x16xf32> to vector<2x16x1xf32>
    %cst_68 = arith.constant 1.000000e+00 : f32
    %203 = vector.broadcast %cst_68 : f32 to vector<2x16x1xf32>
    %204 = arith.addf %203, %202 : vector<2x16x1xf32>
    %205 = vector.broadcast %204 : vector<2x16x1xf32> to vector<2x16x8xf32>
    %206 = arith.mulf %193, %205 : vector<2x16x8xf32>
    %cst_69 = arith.constant 0.353553385 : f32
    %207 = vector.broadcast %cst_69 : f32 to vector<2x16x8xf32>
    %208 = arith.mulf %206, %207 : vector<2x16x8xf32>
    %209 = tpu.concatenate %201, %208 in 0 : vector<2x16x8xf32>, vector<2x16x8xf32> -> vector<4x16x8xf32>
    %210 = arith.truncf %209 : vector<4x16x8xf32> to vector<4x16x8xbf16>
    %211 = arith.truncf %189 : vector<4x16x8xf32> to vector<4x16x8xbf16>
    "tpu.trace_start"() <{level = 10 : i32, message = "bnd,bmd->bnm"}> : () -> ()
    %cst_70 = arith.constant dense<0.000000e+00> : vector<4x16x16xf32>
    %212 = tpu.matmul %210, %211, %cst_70 {dimension_numbers = #tpu.dot_dimension_numbers<[2], [2], [1], [1], [0, 0, 0, 1, 1, 1], [0], [0]>} : vector<4x16x8xbf16>, vector<4x16x8xbf16>, vector<4x16x16xf32> -> vector<4x16x16xf32>
    "tpu.trace_stop"() : () -> ()
    %cst_71 = arith.constant dense<0xFF800000> : vector<4x16xf32>
    %213 = vector.multi_reduction <maximumf>, %212, %cst_71 [2] : vector<4x16x16xf32> to vector<4x16xf32>
    %214 = vector.shape_cast %213 : vector<4x16xf32> to vector<4x16x1xf32>
    %215 = vector.broadcast %214 : vector<4x16x1xf32> to vector<4x16x16xf32>
    %216 = arith.subf %212, %215 : vector<4x16x16xf32>
    %217 = math.exp %216 : vector<4x16x16xf32>
    %cst_72 = arith.constant dense<0.000000e+00> : vector<4x16xf32>
    %218 = vector.multi_reduction <add>, %217, %cst_72 [2] : vector<4x16x16xf32> to vector<4x16xf32>
    %219 = vector.shape_cast %218 : vector<4x16xf32> to vector<4x16x1xf32>
    %220 = tpu.reciprocal %219 {approx = true} : vector<4x16x1xf32> -> vector<4x16x1xf32>
    %221 = vector.broadcast %220 : vector<4x16x1xf32> to vector<4x16x16xf32>
    %222 = arith.mulf %217, %221 : vector<4x16x16xf32>
    %223 = tpu.concatenate %191, %191 in 0 : vector<2x16x8xf32>, vector<2x16x8xf32> -> vector<4x16x8xf32>
    %224 = arith.truncf %222 : vector<4x16x16xf32> to vector<4x16x16xbf16>
    %225 = arith.truncf %223 : vector<4x16x8xf32> to vector<4x16x8xbf16>
    "tpu.trace_start"() <{level = 10 : i32, message = "bnm,bmd->bnd"}> : () -> ()
    %cst_73 = arith.constant dense<0.000000e+00> : vector<4x16x8xf32>
    %226 = tpu.matmul %224, %225, %cst_73 {dimension_numbers = #tpu.dot_dimension_numbers<[2], [1], [1], [2], [0, 0, 0, 1, 1, 2], [0], [0]>} : vector<4x16x16xbf16>, vector<4x16x8xbf16>, vector<4x16x8xf32> -> vector<4x16x8xf32>
    "tpu.trace_stop"() : () -> ()
    %227 = vector.shape_cast %226 : vector<4x16x8xf32> to vector<64x8xf32>
    %228 = vector.extract_strided_slice %90 {offsets = [16, 0], sizes = [8, 32], strides = [1, 1]} : vector<32x32xf32> to vector<8x32xf32>
    %229 = arith.truncf %227 : vector<64x8xf32> to vector<64x8xbf16>
    %230 = arith.truncf %228 : vector<8x32xf32> to vector<8x32xbf16>
    %cst_74 = arith.constant dense<0.000000e+00> : vector<64x32xf32>
    %231 = tpu.matmul %229, %230, %cst_74 {dimension_numbers = #tpu.dot_dimension_numbers<[1], [0], [0], [1], [0, 0, 1, 1], [], []>} : vector<64x8xbf16>, vector<8x32xbf16>, vector<64x32xf32> -> vector<64x32xf32>
    %232 = arith.addf %185, %231 : vector<64x32xf32>
    %233 = vector.extract_strided_slice %29 {offsets = [0, 56], sizes = [64, 8], strides = [1, 1]} : vector<64x128xf32> to vector<64x8xf32>
    %234 = vector.shape_cast %233 : vector<64x8xf32> to vector<4x16x8xf32>
    %235 = vector.extract_strided_slice %29 {offsets = [0, 88], sizes = [64, 8], strides = [1, 1]} : vector<64x128xf32> to vector<64x8xf32>
    %236 = vector.shape_cast %235 : vector<64x8xf32> to vector<4x16x8xf32>
    %237 = vector.extract_strided_slice %29 {offsets = [0, 120], sizes = [32, 8], strides = [1, 1]} : vector<64x128xf32> to vector<32x8xf32>
    %238 = vector.shape_cast %237 : vector<32x8xf32> to vector<2x16x8xf32>
    %239 = vector.extract_strided_slice %234 {offsets = [0, 0, 0], sizes = [2, 16, 8], strides = [1, 1, 1]} : vector<4x16x8xf32> to vector<2x16x8xf32>
    %240 = vector.extract_strided_slice %234 {offsets = [2, 0, 0], sizes = [2, 16, 8], strides = [1, 1, 1]} : vector<4x16x8xf32> to vector<2x16x8xf32>
    %241 = vector.extract_strided_slice %66 {offsets = [0, 24], sizes = [2, 8], strides = [1, 1]} : vector<2x32xf32> to vector<2x8xf32>
    %242 = vector.shape_cast %241 : vector<2x8xf32> to vector<2x1x8xf32>
    %cst_75 = arith.constant 1.000000e+00 : f32
    %243 = vector.broadcast %cst_75 : f32 to vector<2x1x8xf32>
    %244 = arith.addf %243, %242 : vector<2x1x8xf32>
    %245 = vector.broadcast %244 : vector<2x1x8xf32> to vector<2x16x8xf32>
    %246 = arith.mulf %239, %245 : vector<2x16x8xf32>
    %cst_76 = arith.constant 0.353553385 : f32
    %247 = vector.broadcast %cst_76 : f32 to vector<2x16x8xf32>
    %248 = arith.mulf %246, %247 : vector<2x16x8xf32>
    %249 = vector.shape_cast %89 : vector<2x16xf32> to vector<2x16x1xf32>
    %cst_77 = arith.constant 1.000000e+00 : f32
    %250 = vector.broadcast %cst_77 : f32 to vector<2x16x1xf32>
    %251 = arith.addf %250, %249 : vector<2x16x1xf32>
    %252 = vector.broadcast %251 : vector<2x16x1xf32> to vector<2x16x8xf32>
    %253 = arith.mulf %240, %252 : vector<2x16x8xf32>
    %cst_78 = arith.constant 0.353553385 : f32
    %254 = vector.broadcast %cst_78 : f32 to vector<2x16x8xf32>
    %255 = arith.mulf %253, %254 : vector<2x16x8xf32>
    %256 = tpu.concatenate %248, %255 in 0 : vector<2x16x8xf32>, vector<2x16x8xf32> -> vector<4x16x8xf32>
    %257 = arith.truncf %256 : vector<4x16x8xf32> to vector<4x16x8xbf16>
    %258 = arith.truncf %236 : vector<4x16x8xf32> to vector<4x16x8xbf16>
    "tpu.trace_start"() <{level = 10 : i32, message = "bnd,bmd->bnm"}> : () -> ()
    %cst_79 = arith.constant dense<0.000000e+00> : vector<4x16x16xf32>
    %259 = tpu.matmul %257, %258, %cst_79 {dimension_numbers = #tpu.dot_dimension_numbers<[2], [2], [1], [1], [0, 0, 0, 1, 1, 1], [0], [0]>} : vector<4x16x8xbf16>, vector<4x16x8xbf16>, vector<4x16x16xf32> -> vector<4x16x16xf32>
    "tpu.trace_stop"() : () -> ()
    %cst_80 = arith.constant dense<0xFF800000> : vector<4x16xf32>
    %260 = vector.multi_reduction <maximumf>, %259, %cst_80 [2] : vector<4x16x16xf32> to vector<4x16xf32>
    %261 = vector.shape_cast %260 : vector<4x16xf32> to vector<4x16x1xf32>
    %262 = vector.broadcast %261 : vector<4x16x1xf32> to vector<4x16x16xf32>
    %263 = arith.subf %259, %262 : vector<4x16x16xf32>
    %264 = math.exp %263 : vector<4x16x16xf32>
    %cst_81 = arith.constant dense<0.000000e+00> : vector<4x16xf32>
    %265 = vector.multi_reduction <add>, %264, %cst_81 [2] : vector<4x16x16xf32> to vector<4x16xf32>
    %266 = vector.shape_cast %265 : vector<4x16xf32> to vector<4x16x1xf32>
    %267 = tpu.reciprocal %266 {approx = true} : vector<4x16x1xf32> -> vector<4x16x1xf32>
    %268 = vector.broadcast %267 : vector<4x16x1xf32> to vector<4x16x16xf32>
    %269 = arith.mulf %264, %268 : vector<4x16x16xf32>
    %270 = tpu.concatenate %238, %238 in 0 : vector<2x16x8xf32>, vector<2x16x8xf32> -> vector<4x16x8xf32>
    %271 = arith.truncf %269 : vector<4x16x16xf32> to vector<4x16x16xbf16>
    %272 = arith.truncf %270 : vector<4x16x8xf32> to vector<4x16x8xbf16>
    "tpu.trace_start"() <{level = 10 : i32, message = "bnm,bmd->bnd"}> : () -> ()
    %cst_82 = arith.constant dense<0.000000e+00> : vector<4x16x8xf32>
    %273 = tpu.matmul %271, %272, %cst_82 {dimension_numbers = #tpu.dot_dimension_numbers<[2], [1], [1], [2], [0, 0, 0, 1, 1, 2], [0], [0]>} : vector<4x16x16xbf16>, vector<4x16x8xbf16>, vector<4x16x8xf32> -> vector<4x16x8xf32>
    "tpu.trace_stop"() : () -> ()
    %274 = vector.shape_cast %273 : vector<4x16x8xf32> to vector<64x8xf32>
    %275 = vector.extract_strided_slice %90 {offsets = [24, 0], sizes = [8, 32], strides = [1, 1]} : vector<32x32xf32> to vector<8x32xf32>
    %276 = arith.truncf %274 : vector<64x8xf32> to vector<64x8xbf16>
    %277 = arith.truncf %275 : vector<8x32xf32> to vector<8x32xbf16>
    %cst_83 = arith.constant dense<0.000000e+00> : vector<64x32xf32>
    %278 = tpu.matmul %276, %277, %cst_83 {dimension_numbers = #tpu.dot_dimension_numbers<[1], [0], [0], [1], [0, 0, 1, 1], [], []>} : vector<64x8xbf16>, vector<8x32xbf16>, vector<64x32xf32> -> vector<64x32xf32>
    %279 = arith.addf %232, %278 : vector<64x32xf32>
    %c0_84 = arith.constant 0 : index
    %c0_85 = arith.constant 0 : index
    %280 = vector.load %arg10[%c0_84, %c0_85] : memref<1x32xf32, #tpu.memory_space<vmem>>, vector<1x32xf32>
    %281 = vector.broadcast %280 : vector<1x32xf32> to vector<64x32xf32>
    %282 = arith.addf %279, %281 : vector<64x32xf32>
    %283 = arith.truncf %282 : vector<64x32xf32> to vector<64x32xbf16>
    %284 = arith.truncf %90 : vector<32x32xf32> to vector<32x32xbf16>
    %cst_86 = arith.constant dense<0.000000e+00> : vector<64x32xf32>
    %285 = tpu.matmul %283, %284, %cst_86 {dimension_numbers = #tpu.dot_dimension_numbers<[1], [0], [0], [1], [0, 0, 1, 1], [], []>} : vector<64x32xbf16>, vector<32x32xbf16>, vector<64x32xf32> -> vector<64x32xf32>
    %c0_87 = arith.constant 0 : index
    %c0_88 = arith.constant 0 : index
    %286 = vector.load %arg10[%c0_87, %c0_88] : memref<1x32xf32, #tpu.memory_space<vmem>>, vector<1x32xf32>
    %287 = vector.broadcast %286 : vector<1x32xf32> to vector<64x32xf32>
    %288 = arith.addf %285, %287 : vector<64x32xf32>
    %289 = arith.addf %1, %282 : vector<64x32xf32>
    %290 = arith.addf %1, %288 : vector<64x32xf32>
    %291 = tpu.concatenate %289, %290 in 0 : vector<64x32xf32>, vector<64x32xf32> -> vector<128x32xf32>
    %c0_89 = arith.constant 0 : index
    %c0_90 = arith.constant 0 : index
    %292 = vector.load %arg11[%c0_89, %c0_90] : memref<1x32xf32, #tpu.memory_space<vmem>>, vector<1x32xf32>
    %c0_91 = arith.constant 0 : index
    %c0_92 = arith.constant 0 : index
    %293 = vector.load %arg12[%c0_91, %c0_92] : memref<1x32xf32, #tpu.memory_space<vmem>>, vector<1x32xf32>
    %cst_93 = arith.constant dense<0.000000e+00> : vector<128xf32>
    %294 = vector.multi_reduction <add>, %291, %cst_93 [1] : vector<128x32xf32> to vector<128xf32>
    %295 = vector.shape_cast %294 : vector<128xf32> to vector<128x1xf32>
    %cst_94 = arith.constant 3.200000e+01 : f32
    %296 = vector.broadcast %cst_94 : f32 to vector<128x1xf32>
    %297 = arith.divf %295, %296 : vector<128x1xf32>
    %298 = vector.broadcast %297 : vector<128x1xf32> to vector<128x32xf32>
    %299 = arith.subf %291, %298 : vector<128x32xf32>
    %300 = arith.mulf %299, %299 : vector<128x32xf32>
    %cst_95 = arith.constant dense<0.000000e+00> : vector<128xf32>
    %301 = vector.multi_reduction <add>, %300, %cst_95 [1] : vector<128x32xf32> to vector<128xf32>
    %302 = vector.shape_cast %301 : vector<128xf32> to vector<128x1xf32>
    %cst_96 = arith.constant 3.200000e+01 : f32
    %303 = vector.broadcast %cst_96 : f32 to vector<128x1xf32>
    %304 = arith.divf %302, %303 : vector<128x1xf32>
    %305 = vector.broadcast %297 : vector<128x1xf32> to vector<128x32xf32>
    %306 = arith.subf %291, %305 : vector<128x32xf32>
    %cst_97 = arith.constant 9.99999974E-6 : f32
    %307 = vector.broadcast %cst_97 : f32 to vector<128x1xf32>
    %308 = arith.addf %304, %307 : vector<128x1xf32>
    %309 = math.rsqrt %308 : vector<128x1xf32>
    %310 = vector.broadcast %309 : vector<128x1xf32> to vector<128x32xf32>
    %311 = arith.mulf %306, %310 : vector<128x32xf32>
    %312 = vector.broadcast %292 : vector<1x32xf32> to vector<128x32xf32>
    %313 = arith.mulf %311, %312 : vector<128x32xf32>
    %314 = vector.broadcast %293 : vector<1x32xf32> to vector<128x32xf32>
    %315 = arith.addf %313, %314 : vector<128x32xf32>
    %316 = vector.shape_cast %315 : vector<128x32xf32> to vector<4x2x16x32xf32>
    %c0_98 = arith.constant 0 : index
    %c0_99 = arith.constant 0 : index
    %c0_100 = arith.constant 0 : index
    %c0_101 = arith.constant 0 : index
    %317 = vector.load %arg15[%c0_98, %c0_99, %c0_100, %c0_101] : memref<4x2x16x32xf32, #tpu.memory_space<vmem>>, vector<4x2x16x32xf32>
    tpu.vector_store %arg15[%c0_98, %c0_99, %c0_100, %c0_101], %316 {strides = array<i32>} : memref<4x2x16x32xf32, #tpu.memory_space<vmem>>, vector<4x2x16x32xf32>,
    %c0_102 = arith.constant 0 : index
    %c0_103 = arith.constant 0 : index
    %318 = vector.load %arg13[%c0_102, %c0_103] : memref<32x64xf32, #tpu.memory_space<vmem>>, vector<32x64xf32>
    %319 = arith.truncf %315 : vector<128x32xf32> to vector<128x32xbf16>
    %320 = arith.truncf %318 : vector<32x64xf32> to vector<32x64xbf16>
    %cst_104 = arith.constant dense<0.000000e+00> : vector<128x64xf32>
    %321 = tpu.matmul %319, %320, %cst_104 {dimension_numbers = #tpu.dot_dimension_numbers<[1], [0], [0], [1], [0, 0, 1, 1], [], []>} : vector<128x32xbf16>, vector<32x64xbf16>, vector<128x64xf32> -> vector<128x64xf32>
    %c0_105 = arith.constant 0 : index
    %c0_106 = arith.constant 0 : index
    %322 = vector.load %arg14[%c0_105, %c0_106] : memref<1x64xf32, #tpu.memory_space<vmem>>, vector<1x64xf32>
    %323 = vector.broadcast %322 : vector<1x64xf32> to vector<128x64xf32>
    %324 = arith.addf %321, %323 : vector<128x64xf32>
    %325 = vector.shape_cast %324 : vector<128x64xf32> to vector<4x32x64xf32>
    %c0_107 = arith.constant 0 : index
    %c0_108 = arith.constant 0 : index
    %c0_109 = arith.constant 0 : index
    %326 = vector.load %arg16[%c0_107, %c0_108, %c0_109] : memref<4x32x64xf32, #tpu.memory_space<vmem>>, vector<4x32x64xf32>
    tpu.vector_store %arg16[%c0_107, %c0_108, %c0_109], %325 {strides = array<i32>} : memref<4x32x64xf32, #tpu.memory_space<vmem>>, vector<4x32x64xf32>,
    return
  }
}

module attributes {stable_mosaic.version = 11 : i64} {
  func.func @_dif_block_kernel(%arg0: memref<4x2x16x32xf32, #tpu.memory_space<vmem>>, %arg1: memref<4x32x64xf32, #tpu.memory_space<vmem>>, %arg2: memref<64x32xf32, #tpu.memory_space<vmem>>, %arg3: memref<1x32xf32, #tpu.memory_space<vmem>>, %arg4: memref<1x32xf32, #tpu.memory_space<vmem>>, %arg5: memref<1x32xf32, #tpu.memory_space<vmem>>, %arg6: memref<32x128xf32, #tpu.memory_space<vmem>>, %arg7: memref<32x32xf32, #tpu.memory_space<vmem>>, %arg8: memref<1x32xf32, #tpu.memory_space<vmem>>, %arg9: memref<32x64xf32, #tpu.memory_space<vmem>>, %arg10: memref<1x64xf32, #tpu.memory_space<vmem>>, %arg11: memref<2x2x16x32xf32, #tpu.memory_space<vmem>>, %arg12: memref<2x2x16x32xf32, #tpu.memory_space<vmem>>, %arg13: memref<2x32x64xf32, #tpu.memory_space<vmem>>) attributes {dimension_semantics = [], scalar_prefetch = 0 : i64, scratch_operands = 0 : i64, tpu.core_type = #tpu.core_type<tc>} {
    %c0 = arith.constant 0 : index
    %c0_0 = arith.constant 0 : index
    %c0_1 = arith.constant 0 : index
    %c0_2 = arith.constant 0 : index
    %0 = vector.load %arg0[%c0, %c0_0, %c0_1, %c0_2] : memref<4x2x16x32xf32, #tpu.memory_space<vmem>>, vector<4x2x16x32xf32>
    %1 = vector.shape_cast %0 : vector<4x2x16x32xf32> to vector<128x32xf32>
    %c0_3 = arith.constant 0 : index
    %c0_4 = arith.constant 0 : index
    %c0_5 = arith.constant 0 : index
    %2 = vector.load %arg1[%c0_3, %c0_4, %c0_5] : memref<4x32x64xf32, #tpu.memory_space<vmem>>, vector<4x32x64xf32>
    %3 = vector.shape_cast %2 : vector<4x32x64xf32> to vector<128x64xf32>
    %c0_6 = arith.constant 0 : index
    %c0_7 = arith.constant 0 : index
    %4 = vector.load %arg2[%c0_6, %c0_7] : memref<64x32xf32, #tpu.memory_space<vmem>>, vector<64x32xf32>
    %5 = arith.truncf %3 : vector<128x64xf32> to vector<128x64xbf16>
    %6 = arith.truncf %4 : vector<64x32xf32> to vector<64x32xbf16>
    %cst = arith.constant dense<0.000000e+00> : vector<128x32xf32>
    %7 = tpu.matmul %5, %6, %cst {dimension_numbers = #tpu.dot_dimension_numbers<[1], [0], [0], [1], [0, 0, 1, 1], [], []>} : vector<128x64xbf16>, vector<64x32xbf16>, vector<128x32xf32> -> vector<128x32xf32>
    %8 = arith.addf %1, %7 : vector<128x32xf32>
    %c0_8 = arith.constant 0 : index
    %c0_9 = arith.constant 0 : index
    %9 = vector.load %arg3[%c0_8, %c0_9] : memref<1x32xf32, #tpu.memory_space<vmem>>, vector<1x32xf32>
    %10 = vector.broadcast %9 : vector<1x32xf32> to vector<128x32xf32>
    %11 = arith.addf %8, %10 : vector<128x32xf32>
    %12 = vector.extract_strided_slice %11 {offsets = [64, 0], sizes = [64, 32], strides = [1, 1]} : vector<128x32xf32> to vector<64x32xf32>
    %13 = vector.shape_cast %12 : vector<64x32xf32> to vector<2x2x16x32xf32>
    %c0_10 = arith.constant 0 : index
    %c0_11 = arith.constant 0 : index
    %c0_12 = arith.constant 0 : index
    %c0_13 = arith.constant 0 : index
    %14 = vector.load %arg11[%c0_10, %c0_11, %c0_12, %c0_13] : memref<2x2x16x32xf32, #tpu.memory_space<vmem>>, vector<2x2x16x32xf32>
    tpu.vector_store %arg11[%c0_10, %c0_11, %c0_12, %c0_13], %13 {strides = array<i32>} : memref<2x2x16x32xf32, #tpu.memory_space<vmem>>, vector<2x2x16x32xf32>,
    %15 = vector.extract_strided_slice %11 {offsets = [0, 0], sizes = [64, 32], strides = [1, 1]} : vector<128x32xf32> to vector<64x32xf32>
    %c0_14 = arith.constant 0 : index
    %c0_15 = arith.constant 0 : index
    %16 = vector.load %arg4[%c0_14, %c0_15] : memref<1x32xf32, #tpu.memory_space<vmem>>, vector<1x32xf32>
    %c0_16 = arith.constant 0 : index
    %c0_17 = arith.constant 0 : index
    %17 = vector.load %arg5[%c0_16, %c0_17] : memref<1x32xf32, #tpu.memory_space<vmem>>, vector<1x32xf32>
    %cst_18 = arith.constant dense<0.000000e+00> : vector<64xf32>
    %18 = vector.multi_reduction <add>, %15, %cst_18 [1] : vector<64x32xf32> to vector<64xf32>
    %19 = vector.shape_cast %18 : vector<64xf32> to vector<64x1xf32>
    %cst_19 = arith.constant 3.200000e+01 : f32
    %20 = vector.broadcast %cst_19 : f32 to vector<64x1xf32>
    %21 = arith.divf %19, %20 : vector<64x1xf32>
    %22 = vector.broadcast %21 : vector<64x1xf32> to vector<64x32xf32>
    %23 = arith.subf %15, %22 : vector<64x32xf32>
    %24 = arith.mulf %23, %23 : vector<64x32xf32>
    %cst_20 = arith.constant dense<0.000000e+00> : vector<64xf32>
    %25 = vector.multi_reduction <add>, %24, %cst_20 [1] : vector<64x32xf32> to vector<64xf32>
    %26 = vector.shape_cast %25 : vector<64xf32> to vector<64x1xf32>
    %cst_21 = arith.constant 3.200000e+01 : f32
    %27 = vector.broadcast %cst_21 : f32 to vector<64x1xf32>
    %28 = arith.divf %26, %27 : vector<64x1xf32>
    %29 = vector.broadcast %21 : vector<64x1xf32> to vector<64x32xf32>
    %30 = arith.subf %15, %29 : vector<64x32xf32>
    %cst_22 = arith.constant 9.99999974E-6 : f32
    %31 = vector.broadcast %cst_22 : f32 to vector<64x1xf32>
    %32 = arith.addf %28, %31 : vector<64x1xf32>
    %33 = math.rsqrt %32 : vector<64x1xf32>
    %34 = vector.broadcast %33 : vector<64x1xf32> to vector<64x32xf32>
    %35 = arith.mulf %30, %34 : vector<64x32xf32>
    %36 = vector.broadcast %16 : vector<1x32xf32> to vector<64x32xf32>
    %37 = arith.mulf %35, %36 : vector<64x32xf32>
    %38 = vector.broadcast %17 : vector<1x32xf32> to vector<64x32xf32>
    %39 = arith.addf %37, %38 : vector<64x32xf32>
    %c0_23 = arith.constant 0 : index
    %c0_24 = arith.constant 0 : index
    %40 = vector.load %arg6[%c0_23, %c0_24] : memref<32x128xf32, #tpu.memory_space<vmem>>, vector<32x128xf32>
    %41 = arith.truncf %39 : vector<64x32xf32> to vector<64x32xbf16>
    %42 = arith.truncf %40 : vector<32x128xf32> to vector<32x128xbf16>
    %cst_25 = arith.constant dense<0.000000e+00> : vector<64x128xf32>
    %43 = tpu.matmul %41, %42, %cst_25 {dimension_numbers = #tpu.dot_dimension_numbers<[1], [0], [0], [1], [0, 0, 1, 1], [], []>} : vector<64x32xbf16>, vector<32x128xbf16>, vector<64x128xf32> -> vector<64x128xf32>
    %c0_26 = arith.constant 0 : index
    %c0_27 = arith.constant 0 : index
    %44 = vector.load %arg7[%c0_26, %c0_27] : memref<32x32xf32, #tpu.memory_space<vmem>>, vector<32x32xf32>
    %cst_28 = arith.constant 0.000000e+00 : f32
    %45 = vector.broadcast %cst_28 : f32 to vector<64x32xf32>
    %46 = vector.extract_strided_slice %43 {offsets = [0, 0], sizes = [64, 8], strides = [1, 1]} : vector<64x128xf32> to vector<64x8xf32>
    %47 = vector.shape_cast %46 : vector<64x8xf32> to vector<4x16x8xf32>
    %48 = vector.extract_strided_slice %43 {offsets = [0, 32], sizes = [64, 8], strides = [1, 1]} : vector<64x128xf32> to vector<64x8xf32>
    %49 = vector.shape_cast %48 : vector<64x8xf32> to vector<4x16x8xf32>
    %50 = vector.extract_strided_slice %43 {offsets = [0, 64], sizes = [64, 8], strides = [1, 1]} : vector<64x128xf32> to vector<64x8xf32>
    %51 = vector.shape_cast %50 : vector<64x8xf32> to vector<4x16x8xf32>
    %52 = vector.extract_strided_slice %43 {offsets = [0, 96], sizes = [32, 8], strides = [1, 1]} : vector<64x128xf32> to vector<32x8xf32>
    %53 = vector.shape_cast %52 : vector<32x8xf32> to vector<2x16x8xf32>
    %cst_29 = arith.constant 0.353553385 : f32
    %54 = vector.broadcast %cst_29 : f32 to vector<4x16x8xf32>
    %55 = arith.mulf %49, %54 : vector<4x16x8xf32>
    %56 = vector.extract_strided_slice %47 {offsets = [2, 0, 0], sizes = [2, 16, 8], strides = [1, 1, 1]} : vector<4x16x8xf32> to vector<2x16x8xf32>
    %cst_30 = arith.constant -0.353553385 : f32
    %57 = vector.broadcast %cst_30 : f32 to vector<2x16x8xf32>
    %58 = arith.mulf %56, %57 : vector<2x16x8xf32>
    %59 = vector.extract_strided_slice %47 {offsets = [0, 0, 0], sizes = [2, 16, 8], strides = [1, 1, 1]} : vector<4x16x8xf32> to vector<2x16x8xf32>
    %cst_31 = arith.constant -0.353553385 : f32
    %60 = vector.broadcast %cst_31 : f32 to vector<2x16x8xf32>
    %61 = arith.mulf %59, %60 : vector<2x16x8xf32>
    %62 = tpu.concatenate %55, %58, %61 in 0 : vector<4x16x8xf32>, vector<2x16x8xf32>, vector<2x16x8xf32> -> vector<8x16x8xf32>
    %63 = tpu.concatenate %51, %51 in 0 : vector<4x16x8xf32>, vector<4x16x8xf32> -> vector<8x16x8xf32>
    %64 = tpu.concatenate %53, %53, %53, %53 in 0 : vector<2x16x8xf32>, vector<2x16x8xf32>, vector<2x16x8xf32>, vector<2x16x8xf32> -> vector<8x16x8xf32>
    %65 = arith.truncf %62 : vector<8x16x8xf32> to vector<8x16x8xbf16>
    %66 = arith.truncf %63 : vector<8x16x8xf32> to vector<8x16x8xbf16>
    "tpu.trace_start"() <{level = 10 : i32, message = "bnd,bmd->bnm"}> : () -> ()
    %cst_32 = arith.constant dense<0.000000e+00> : vector<8x16x16xf32>
    %67 = tpu.matmul %65, %66, %cst_32 {dimension_numbers = #tpu.dot_dimension_numbers<[2], [2], [1], [1], [0, 0, 0, 1, 1, 1], [0], [0]>} : vector<8x16x8xbf16>, vector<8x16x8xbf16>, vector<8x16x16xf32> -> vector<8x16x16xf32>
    "tpu.trace_stop"() : () -> ()
    %cst_33 = arith.constant dense<0xFF800000> : vector<8x16xf32>
    %68 = vector.multi_reduction <maximumf>, %67, %cst_33 [2] : vector<8x16x16xf32> to vector<8x16xf32>
    %69 = vector.shape_cast %68 : vector<8x16xf32> to vector<8x16x1xf32>
    %70 = vector.broadcast %69 : vector<8x16x1xf32> to vector<8x16x16xf32>
    %71 = arith.subf %67, %70 : vector<8x16x16xf32>
    %72 = math.exp %71 : vector<8x16x16xf32>
    %cst_34 = arith.constant dense<0.000000e+00> : vector<8x16xf32>
    %73 = vector.multi_reduction <add>, %72, %cst_34 [2] : vector<8x16x16xf32> to vector<8x16xf32>
    %74 = vector.shape_cast %73 : vector<8x16xf32> to vector<8x16x1xf32>
    %75 = tpu.reciprocal %74 {approx = true} : vector<8x16x1xf32> -> vector<8x16x1xf32>
    %76 = vector.broadcast %75 : vector<8x16x1xf32> to vector<8x16x16xf32>
    %77 = arith.mulf %72, %76 : vector<8x16x16xf32>
    %78 = arith.truncf %77 : vector<8x16x16xf32> to vector<8x16x16xbf16>
    %79 = arith.truncf %64 : vector<8x16x8xf32> to vector<8x16x8xbf16>
    "tpu.trace_start"() <{level = 10 : i32, message = "bnm,bmd->bnd"}> : () -> ()
    %cst_35 = arith.constant dense<0.000000e+00> : vector<8x16x8xf32>
    %80 = tpu.matmul %78, %79, %cst_35 {dimension_numbers = #tpu.dot_dimension_numbers<[2], [1], [1], [2], [0, 0, 0, 1, 1, 2], [0], [0]>} : vector<8x16x16xbf16>, vector<8x16x8xbf16>, vector<8x16x8xf32> -> vector<8x16x8xf32>
    "tpu.trace_stop"() : () -> ()
    %81 = vector.extract_strided_slice %80 {offsets = [0, 0, 0], sizes = [2, 16, 8], strides = [1, 1, 1]} : vector<8x16x8xf32> to vector<2x16x8xf32>
    %82 = vector.extract_strided_slice %80 {offsets = [4, 0, 0], sizes = [2, 16, 8], strides = [1, 1, 1]} : vector<8x16x8xf32> to vector<2x16x8xf32>
    %83 = arith.addf %81, %82 : vector<2x16x8xf32>
    %84 = vector.extract_strided_slice %80 {offsets = [2, 0, 0], sizes = [2, 16, 8], strides = [1, 1, 1]} : vector<8x16x8xf32> to vector<2x16x8xf32>
    %85 = vector.extract_strided_slice %80 {offsets = [6, 0, 0], sizes = [2, 16, 8], strides = [1, 1, 1]} : vector<8x16x8xf32> to vector<2x16x8xf32>
    %86 = arith.addf %84, %85 : vector<2x16x8xf32>
    %87 = tpu.concatenate %83, %86 in 0 : vector<2x16x8xf32>, vector<2x16x8xf32> -> vector<4x16x8xf32>
    %88 = vector.shape_cast %87 : vector<4x16x8xf32> to vector<64x8xf32>
    %89 = vector.extract_strided_slice %44 {offsets = [0, 0], sizes = [8, 32], strides = [1, 1]} : vector<32x32xf32> to vector<8x32xf32>
    %90 = arith.truncf %88 : vector<64x8xf32> to vector<64x8xbf16>
    %91 = arith.truncf %89 : vector<8x32xf32> to vector<8x32xbf16>
    %cst_36 = arith.constant dense<0.000000e+00> : vector<64x32xf32>
    %92 = tpu.matmul %90, %91, %cst_36 {dimension_numbers = #tpu.dot_dimension_numbers<[1], [0], [0], [1], [0, 0, 1, 1], [], []>} : vector<64x8xbf16>, vector<8x32xbf16>, vector<64x32xf32> -> vector<64x32xf32>
    %93 = arith.addf %45, %92 : vector<64x32xf32>
    %94 = vector.extract_strided_slice %43 {offsets = [0, 8], sizes = [64, 8], strides = [1, 1]} : vector<64x128xf32> to vector<64x8xf32>
    %95 = vector.shape_cast %94 : vector<64x8xf32> to vector<4x16x8xf32>
    %96 = vector.extract_strided_slice %43 {offsets = [0, 40], sizes = [64, 8], strides = [1, 1]} : vector<64x128xf32> to vector<64x8xf32>
    %97 = vector.shape_cast %96 : vector<64x8xf32> to vector<4x16x8xf32>
    %98 = vector.extract_strided_slice %43 {offsets = [0, 72], sizes = [64, 8], strides = [1, 1]} : vector<64x128xf32> to vector<64x8xf32>
    %99 = vector.shape_cast %98 : vector<64x8xf32> to vector<4x16x8xf32>
    %100 = vector.extract_strided_slice %43 {offsets = [0, 104], sizes = [32, 8], strides = [1, 1]} : vector<64x128xf32> to vector<32x8xf32>
    %101 = vector.shape_cast %100 : vector<32x8xf32> to vector<2x16x8xf32>
    %cst_37 = arith.constant 0.353553385 : f32
    %102 = vector.broadcast %cst_37 : f32 to vector<4x16x8xf32>
    %103 = arith.mulf %97, %102 : vector<4x16x8xf32>
    %104 = vector.extract_strided_slice %95 {offsets = [2, 0, 0], sizes = [2, 16, 8], strides = [1, 1, 1]} : vector<4x16x8xf32> to vector<2x16x8xf32>
    %cst_38 = arith.constant -0.353553385 : f32
    %105 = vector.broadcast %cst_38 : f32 to vector<2x16x8xf32>
    %106 = arith.mulf %104, %105 : vector<2x16x8xf32>
    %107 = vector.extract_strided_slice %95 {offsets = [0, 0, 0], sizes = [2, 16, 8], strides = [1, 1, 1]} : vector<4x16x8xf32> to vector<2x16x8xf32>
    %cst_39 = arith.constant -0.353553385 : f32
    %108 = vector.broadcast %cst_39 : f32 to vector<2x16x8xf32>
    %109 = arith.mulf %107, %108 : vector<2x16x8xf32>
    %110 = tpu.concatenate %103, %106, %109 in 0 : vector<4x16x8xf32>, vector<2x16x8xf32>, vector<2x16x8xf32> -> vector<8x16x8xf32>
    %111 = tpu.concatenate %99, %99 in 0 : vector<4x16x8xf32>, vector<4x16x8xf32> -> vector<8x16x8xf32>
    %112 = tpu.concatenate %101, %101, %101, %101 in 0 : vector<2x16x8xf32>, vector<2x16x8xf32>, vector<2x16x8xf32>, vector<2x16x8xf32> -> vector<8x16x8xf32>
    %113 = arith.truncf %110 : vector<8x16x8xf32> to vector<8x16x8xbf16>
    %114 = arith.truncf %111 : vector<8x16x8xf32> to vector<8x16x8xbf16>
    "tpu.trace_start"() <{level = 10 : i32, message = "bnd,bmd->bnm"}> : () -> ()
    %cst_40 = arith.constant dense<0.000000e+00> : vector<8x16x16xf32>
    %115 = tpu.matmul %113, %114, %cst_40 {dimension_numbers = #tpu.dot_dimension_numbers<[2], [2], [1], [1], [0, 0, 0, 1, 1, 1], [0], [0]>} : vector<8x16x8xbf16>, vector<8x16x8xbf16>, vector<8x16x16xf32> -> vector<8x16x16xf32>
    "tpu.trace_stop"() : () -> ()
    %cst_41 = arith.constant dense<0xFF800000> : vector<8x16xf32>
    %116 = vector.multi_reduction <maximumf>, %115, %cst_41 [2] : vector<8x16x16xf32> to vector<8x16xf32>
    %117 = vector.shape_cast %116 : vector<8x16xf32> to vector<8x16x1xf32>
    %118 = vector.broadcast %117 : vector<8x16x1xf32> to vector<8x16x16xf32>
    %119 = arith.subf %115, %118 : vector<8x16x16xf32>
    %120 = math.exp %119 : vector<8x16x16xf32>
    %cst_42 = arith.constant dense<0.000000e+00> : vector<8x16xf32>
    %121 = vector.multi_reduction <add>, %120, %cst_42 [2] : vector<8x16x16xf32> to vector<8x16xf32>
    %122 = vector.shape_cast %121 : vector<8x16xf32> to vector<8x16x1xf32>
    %123 = tpu.reciprocal %122 {approx = true} : vector<8x16x1xf32> -> vector<8x16x1xf32>
    %124 = vector.broadcast %123 : vector<8x16x1xf32> to vector<8x16x16xf32>
    %125 = arith.mulf %120, %124 : vector<8x16x16xf32>
    %126 = arith.truncf %125 : vector<8x16x16xf32> to vector<8x16x16xbf16>
    %127 = arith.truncf %112 : vector<8x16x8xf32> to vector<8x16x8xbf16>
    "tpu.trace_start"() <{level = 10 : i32, message = "bnm,bmd->bnd"}> : () -> ()
    %cst_43 = arith.constant dense<0.000000e+00> : vector<8x16x8xf32>
    %128 = tpu.matmul %126, %127, %cst_43 {dimension_numbers = #tpu.dot_dimension_numbers<[2], [1], [1], [2], [0, 0, 0, 1, 1, 2], [0], [0]>} : vector<8x16x16xbf16>, vector<8x16x8xbf16>, vector<8x16x8xf32> -> vector<8x16x8xf32>
    "tpu.trace_stop"() : () -> ()
    %129 = vector.extract_strided_slice %128 {offsets = [0, 0, 0], sizes = [2, 16, 8], strides = [1, 1, 1]} : vector<8x16x8xf32> to vector<2x16x8xf32>
    %130 = vector.extract_strided_slice %128 {offsets = [4, 0, 0], sizes = [2, 16, 8], strides = [1, 1, 1]} : vector<8x16x8xf32> to vector<2x16x8xf32>
    %131 = arith.addf %129, %130 : vector<2x16x8xf32>
    %132 = vector.extract_strided_slice %128 {offsets = [2, 0, 0], sizes = [2, 16, 8], strides = [1, 1, 1]} : vector<8x16x8xf32> to vector<2x16x8xf32>
    %133 = vector.extract_strided_slice %128 {offsets = [6, 0, 0], sizes = [2, 16, 8], strides = [1, 1, 1]} : vector<8x16x8xf32> to vector<2x16x8xf32>
    %134 = arith.addf %132, %133 : vector<2x16x8xf32>
    %135 = tpu.concatenate %131, %134 in 0 : vector<2x16x8xf32>, vector<2x16x8xf32> -> vector<4x16x8xf32>
    %136 = vector.shape_cast %135 : vector<4x16x8xf32> to vector<64x8xf32>
    %137 = vector.extract_strided_slice %44 {offsets = [8, 0], sizes = [8, 32], strides = [1, 1]} : vector<32x32xf32> to vector<8x32xf32>
    %138 = arith.truncf %136 : vector<64x8xf32> to vector<64x8xbf16>
    %139 = arith.truncf %137 : vector<8x32xf32> to vector<8x32xbf16>
    %cst_44 = arith.constant dense<0.000000e+00> : vector<64x32xf32>
    %140 = tpu.matmul %138, %139, %cst_44 {dimension_numbers = #tpu.dot_dimension_numbers<[1], [0], [0], [1], [0, 0, 1, 1], [], []>} : vector<64x8xbf16>, vector<8x32xbf16>, vector<64x32xf32> -> vector<64x32xf32>
    %141 = arith.addf %93, %140 : vector<64x32xf32>
    %142 = vector.extract_strided_slice %43 {offsets = [0, 16], sizes = [64, 8], strides = [1, 1]} : vector<64x128xf32> to vector<64x8xf32>
    %143 = vector.shape_cast %142 : vector<64x8xf32> to vector<4x16x8xf32>
    %144 = vector.extract_strided_slice %43 {offsets = [0, 48], sizes = [64, 8], strides = [1, 1]} : vector<64x128xf32> to vector<64x8xf32>
    %145 = vector.shape_cast %144 : vector<64x8xf32> to vector<4x16x8xf32>
    %146 = vector.extract_strided_slice %43 {offsets = [0, 80], sizes = [64, 8], strides = [1, 1]} : vector<64x128xf32> to vector<64x8xf32>
    %147 = vector.shape_cast %146 : vector<64x8xf32> to vector<4x16x8xf32>
    %148 = vector.extract_strided_slice %43 {offsets = [0, 112], sizes = [32, 8], strides = [1, 1]} : vector<64x128xf32> to vector<32x8xf32>
    %149 = vector.shape_cast %148 : vector<32x8xf32> to vector<2x16x8xf32>
    %cst_45 = arith.constant 0.353553385 : f32
    %150 = vector.broadcast %cst_45 : f32 to vector<4x16x8xf32>
    %151 = arith.mulf %145, %150 : vector<4x16x8xf32>
    %152 = vector.extract_strided_slice %143 {offsets = [2, 0, 0], sizes = [2, 16, 8], strides = [1, 1, 1]} : vector<4x16x8xf32> to vector<2x16x8xf32>
    %cst_46 = arith.constant -0.353553385 : f32
    %153 = vector.broadcast %cst_46 : f32 to vector<2x16x8xf32>
    %154 = arith.mulf %152, %153 : vector<2x16x8xf32>
    %155 = vector.extract_strided_slice %143 {offsets = [0, 0, 0], sizes = [2, 16, 8], strides = [1, 1, 1]} : vector<4x16x8xf32> to vector<2x16x8xf32>
    %cst_47 = arith.constant -0.353553385 : f32
    %156 = vector.broadcast %cst_47 : f32 to vector<2x16x8xf32>
    %157 = arith.mulf %155, %156 : vector<2x16x8xf32>
    %158 = tpu.concatenate %151, %154, %157 in 0 : vector<4x16x8xf32>, vector<2x16x8xf32>, vector<2x16x8xf32> -> vector<8x16x8xf32>
    %159 = tpu.concatenate %147, %147 in 0 : vector<4x16x8xf32>, vector<4x16x8xf32> -> vector<8x16x8xf32>
    %160 = tpu.concatenate %149, %149, %149, %149 in 0 : vector<2x16x8xf32>, vector<2x16x8xf32>, vector<2x16x8xf32>, vector<2x16x8xf32> -> vector<8x16x8xf32>
    %161 = arith.truncf %158 : vector<8x16x8xf32> to vector<8x16x8xbf16>
    %162 = arith.truncf %159 : vector<8x16x8xf32> to vector<8x16x8xbf16>
    "tpu.trace_start"() <{level = 10 : i32, message = "bnd,bmd->bnm"}> : () -> ()
    %cst_48 = arith.constant dense<0.000000e+00> : vector<8x16x16xf32>
    %163 = tpu.matmul %161, %162, %cst_48 {dimension_numbers = #tpu.dot_dimension_numbers<[2], [2], [1], [1], [0, 0, 0, 1, 1, 1], [0], [0]>} : vector<8x16x8xbf16>, vector<8x16x8xbf16>, vector<8x16x16xf32> -> vector<8x16x16xf32>
    "tpu.trace_stop"() : () -> ()
    %cst_49 = arith.constant dense<0xFF800000> : vector<8x16xf32>
    %164 = vector.multi_reduction <maximumf>, %163, %cst_49 [2] : vector<8x16x16xf32> to vector<8x16xf32>
    %165 = vector.shape_cast %164 : vector<8x16xf32> to vector<8x16x1xf32>
    %166 = vector.broadcast %165 : vector<8x16x1xf32> to vector<8x16x16xf32>
    %167 = arith.subf %163, %166 : vector<8x16x16xf32>
    %168 = math.exp %167 : vector<8x16x16xf32>
    %cst_50 = arith.constant dense<0.000000e+00> : vector<8x16xf32>
    %169 = vector.multi_reduction <add>, %168, %cst_50 [2] : vector<8x16x16xf32> to vector<8x16xf32>
    %170 = vector.shape_cast %169 : vector<8x16xf32> to vector<8x16x1xf32>
    %171 = tpu.reciprocal %170 {approx = true} : vector<8x16x1xf32> -> vector<8x16x1xf32>
    %172 = vector.broadcast %171 : vector<8x16x1xf32> to vector<8x16x16xf32>
    %173 = arith.mulf %168, %172 : vector<8x16x16xf32>
    %174 = arith.truncf %173 : vector<8x16x16xf32> to vector<8x16x16xbf16>
    %175 = arith.truncf %160 : vector<8x16x8xf32> to vector<8x16x8xbf16>
    "tpu.trace_start"() <{level = 10 : i32, message = "bnm,bmd->bnd"}> : () -> ()
    %cst_51 = arith.constant dense<0.000000e+00> : vector<8x16x8xf32>
    %176 = tpu.matmul %174, %175, %cst_51 {dimension_numbers = #tpu.dot_dimension_numbers<[2], [1], [1], [2], [0, 0, 0, 1, 1, 2], [0], [0]>} : vector<8x16x16xbf16>, vector<8x16x8xbf16>, vector<8x16x8xf32> -> vector<8x16x8xf32>
    "tpu.trace_stop"() : () -> ()
    %177 = vector.extract_strided_slice %176 {offsets = [0, 0, 0], sizes = [2, 16, 8], strides = [1, 1, 1]} : vector<8x16x8xf32> to vector<2x16x8xf32>
    %178 = vector.extract_strided_slice %176 {offsets = [4, 0, 0], sizes = [2, 16, 8], strides = [1, 1, 1]} : vector<8x16x8xf32> to vector<2x16x8xf32>
    %179 = arith.addf %177, %178 : vector<2x16x8xf32>
    %180 = vector.extract_strided_slice %176 {offsets = [2, 0, 0], sizes = [2, 16, 8], strides = [1, 1, 1]} : vector<8x16x8xf32> to vector<2x16x8xf32>
    %181 = vector.extract_strided_slice %176 {offsets = [6, 0, 0], sizes = [2, 16, 8], strides = [1, 1, 1]} : vector<8x16x8xf32> to vector<2x16x8xf32>
    %182 = arith.addf %180, %181 : vector<2x16x8xf32>
    %183 = tpu.concatenate %179, %182 in 0 : vector<2x16x8xf32>, vector<2x16x8xf32> -> vector<4x16x8xf32>
    %184 = vector.shape_cast %183 : vector<4x16x8xf32> to vector<64x8xf32>
    %185 = vector.extract_strided_slice %44 {offsets = [16, 0], sizes = [8, 32], strides = [1, 1]} : vector<32x32xf32> to vector<8x32xf32>
    %186 = arith.truncf %184 : vector<64x8xf32> to vector<64x8xbf16>
    %187 = arith.truncf %185 : vector<8x32xf32> to vector<8x32xbf16>
    %cst_52 = arith.constant dense<0.000000e+00> : vector<64x32xf32>
    %188 = tpu.matmul %186, %187, %cst_52 {dimension_numbers = #tpu.dot_dimension_numbers<[1], [0], [0], [1], [0, 0, 1, 1], [], []>} : vector<64x8xbf16>, vector<8x32xbf16>, vector<64x32xf32> -> vector<64x32xf32>
    %189 = arith.addf %141, %188 : vector<64x32xf32>
    %190 = vector.extract_strided_slice %43 {offsets = [0, 24], sizes = [64, 8], strides = [1, 1]} : vector<64x128xf32> to vector<64x8xf32>
    %191 = vector.shape_cast %190 : vector<64x8xf32> to vector<4x16x8xf32>
    %192 = vector.extract_strided_slice %43 {offsets = [0, 56], sizes = [64, 8], strides = [1, 1]} : vector<64x128xf32> to vector<64x8xf32>
    %193 = vector.shape_cast %192 : vector<64x8xf32> to vector<4x16x8xf32>
    %194 = vector.extract_strided_slice %43 {offsets = [0, 88], sizes = [64, 8], strides = [1, 1]} : vector<64x128xf32> to vector<64x8xf32>
    %195 = vector.shape_cast %194 : vector<64x8xf32> to vector<4x16x8xf32>
    %196 = vector.extract_strided_slice %43 {offsets = [0, 120], sizes = [32, 8], strides = [1, 1]} : vector<64x128xf32> to vector<32x8xf32>
    %197 = vector.shape_cast %196 : vector<32x8xf32> to vector<2x16x8xf32>
    %cst_53 = arith.constant 0.353553385 : f32
    %198 = vector.broadcast %cst_53 : f32 to vector<4x16x8xf32>
    %199 = arith.mulf %193, %198 : vector<4x16x8xf32>
    %200 = vector.extract_strided_slice %191 {offsets = [2, 0, 0], sizes = [2, 16, 8], strides = [1, 1, 1]} : vector<4x16x8xf32> to vector<2x16x8xf32>
    %cst_54 = arith.constant -0.353553385 : f32
    %201 = vector.broadcast %cst_54 : f32 to vector<2x16x8xf32>
    %202 = arith.mulf %200, %201 : vector<2x16x8xf32>
    %203 = vector.extract_strided_slice %191 {offsets = [0, 0, 0], sizes = [2, 16, 8], strides = [1, 1, 1]} : vector<4x16x8xf32> to vector<2x16x8xf32>
    %cst_55 = arith.constant -0.353553385 : f32
    %204 = vector.broadcast %cst_55 : f32 to vector<2x16x8xf32>
    %205 = arith.mulf %203, %204 : vector<2x16x8xf32>
    %206 = tpu.concatenate %199, %202, %205 in 0 : vector<4x16x8xf32>, vector<2x16x8xf32>, vector<2x16x8xf32> -> vector<8x16x8xf32>
    %207 = tpu.concatenate %195, %195 in 0 : vector<4x16x8xf32>, vector<4x16x8xf32> -> vector<8x16x8xf32>
    %208 = tpu.concatenate %197, %197, %197, %197 in 0 : vector<2x16x8xf32>, vector<2x16x8xf32>, vector<2x16x8xf32>, vector<2x16x8xf32> -> vector<8x16x8xf32>
    %209 = arith.truncf %206 : vector<8x16x8xf32> to vector<8x16x8xbf16>
    %210 = arith.truncf %207 : vector<8x16x8xf32> to vector<8x16x8xbf16>
    "tpu.trace_start"() <{level = 10 : i32, message = "bnd,bmd->bnm"}> : () -> ()
    %cst_56 = arith.constant dense<0.000000e+00> : vector<8x16x16xf32>
    %211 = tpu.matmul %209, %210, %cst_56 {dimension_numbers = #tpu.dot_dimension_numbers<[2], [2], [1], [1], [0, 0, 0, 1, 1, 1], [0], [0]>} : vector<8x16x8xbf16>, vector<8x16x8xbf16>, vector<8x16x16xf32> -> vector<8x16x16xf32>
    "tpu.trace_stop"() : () -> ()
    %cst_57 = arith.constant dense<0xFF800000> : vector<8x16xf32>
    %212 = vector.multi_reduction <maximumf>, %211, %cst_57 [2] : vector<8x16x16xf32> to vector<8x16xf32>
    %213 = vector.shape_cast %212 : vector<8x16xf32> to vector<8x16x1xf32>
    %214 = vector.broadcast %213 : vector<8x16x1xf32> to vector<8x16x16xf32>
    %215 = arith.subf %211, %214 : vector<8x16x16xf32>
    %216 = math.exp %215 : vector<8x16x16xf32>
    %cst_58 = arith.constant dense<0.000000e+00> : vector<8x16xf32>
    %217 = vector.multi_reduction <add>, %216, %cst_58 [2] : vector<8x16x16xf32> to vector<8x16xf32>
    %218 = vector.shape_cast %217 : vector<8x16xf32> to vector<8x16x1xf32>
    %219 = tpu.reciprocal %218 {approx = true} : vector<8x16x1xf32> -> vector<8x16x1xf32>
    %220 = vector.broadcast %219 : vector<8x16x1xf32> to vector<8x16x16xf32>
    %221 = arith.mulf %216, %220 : vector<8x16x16xf32>
    %222 = arith.truncf %221 : vector<8x16x16xf32> to vector<8x16x16xbf16>
    %223 = arith.truncf %208 : vector<8x16x8xf32> to vector<8x16x8xbf16>
    "tpu.trace_start"() <{level = 10 : i32, message = "bnm,bmd->bnd"}> : () -> ()
    %cst_59 = arith.constant dense<0.000000e+00> : vector<8x16x8xf32>
    %224 = tpu.matmul %222, %223, %cst_59 {dimension_numbers = #tpu.dot_dimension_numbers<[2], [1], [1], [2], [0, 0, 0, 1, 1, 2], [0], [0]>} : vector<8x16x16xbf16>, vector<8x16x8xbf16>, vector<8x16x8xf32> -> vector<8x16x8xf32>
    "tpu.trace_stop"() : () -> ()
    %225 = vector.extract_strided_slice %224 {offsets = [0, 0, 0], sizes = [2, 16, 8], strides = [1, 1, 1]} : vector<8x16x8xf32> to vector<2x16x8xf32>
    %226 = vector.extract_strided_slice %224 {offsets = [4, 0, 0], sizes = [2, 16, 8], strides = [1, 1, 1]} : vector<8x16x8xf32> to vector<2x16x8xf32>
    %227 = arith.addf %225, %226 : vector<2x16x8xf32>
    %228 = vector.extract_strided_slice %224 {offsets = [2, 0, 0], sizes = [2, 16, 8], strides = [1, 1, 1]} : vector<8x16x8xf32> to vector<2x16x8xf32>
    %229 = vector.extract_strided_slice %224 {offsets = [6, 0, 0], sizes = [2, 16, 8], strides = [1, 1, 1]} : vector<8x16x8xf32> to vector<2x16x8xf32>
    %230 = arith.addf %228, %229 : vector<2x16x8xf32>
    %231 = tpu.concatenate %227, %230 in 0 : vector<2x16x8xf32>, vector<2x16x8xf32> -> vector<4x16x8xf32>
    %232 = vector.shape_cast %231 : vector<4x16x8xf32> to vector<64x8xf32>
    %233 = vector.extract_strided_slice %44 {offsets = [24, 0], sizes = [8, 32], strides = [1, 1]} : vector<32x32xf32> to vector<8x32xf32>
    %234 = arith.truncf %232 : vector<64x8xf32> to vector<64x8xbf16>
    %235 = arith.truncf %233 : vector<8x32xf32> to vector<8x32xbf16>
    %cst_60 = arith.constant dense<0.000000e+00> : vector<64x32xf32>
    %236 = tpu.matmul %234, %235, %cst_60 {dimension_numbers = #tpu.dot_dimension_numbers<[1], [0], [0], [1], [0, 0, 1, 1], [], []>} : vector<64x8xbf16>, vector<8x32xbf16>, vector<64x32xf32> -> vector<64x32xf32>
    %237 = arith.addf %189, %236 : vector<64x32xf32>
    %c0_61 = arith.constant 0 : index
    %c0_62 = arith.constant 0 : index
    %238 = vector.load %arg8[%c0_61, %c0_62] : memref<1x32xf32, #tpu.memory_space<vmem>>, vector<1x32xf32>
    %239 = vector.broadcast %238 : vector<1x32xf32> to vector<64x32xf32>
    %240 = arith.addf %237, %239 : vector<64x32xf32>
    %241 = vector.shape_cast %240 : vector<64x32xf32> to vector<2x2x16x32xf32>
    %c0_63 = arith.constant 0 : index
    %c0_64 = arith.constant 0 : index
    %c0_65 = arith.constant 0 : index
    %c0_66 = arith.constant 0 : index
    %242 = vector.load %arg12[%c0_63, %c0_64, %c0_65, %c0_66] : memref<2x2x16x32xf32, #tpu.memory_space<vmem>>, vector<2x2x16x32xf32>
    tpu.vector_store %arg12[%c0_63, %c0_64, %c0_65, %c0_66], %241 {strides = array<i32>} : memref<2x2x16x32xf32, #tpu.memory_space<vmem>>, vector<2x2x16x32xf32>,
    %c0_67 = arith.constant 0 : index
    %c0_68 = arith.constant 0 : index
    %243 = vector.load %arg9[%c0_67, %c0_68] : memref<32x64xf32, #tpu.memory_space<vmem>>, vector<32x64xf32>
    %244 = arith.truncf %240 : vector<64x32xf32> to vector<64x32xbf16>
    %245 = arith.truncf %243 : vector<32x64xf32> to vector<32x64xbf16>
    %cst_69 = arith.constant dense<0.000000e+00> : vector<64x64xf32>
    %246 = tpu.matmul %244, %245, %cst_69 {dimension_numbers = #tpu.dot_dimension_numbers<[1], [0], [0], [1], [0, 0, 1, 1], [], []>} : vector<64x32xbf16>, vector<32x64xbf16>, vector<64x64xf32> -> vector<64x64xf32>
    %c0_70 = arith.constant 0 : index
    %c0_71 = arith.constant 0 : index
    %247 = vector.load %arg10[%c0_70, %c0_71] : memref<1x64xf32, #tpu.memory_space<vmem>>, vector<1x64xf32>
    %248 = vector.broadcast %247 : vector<1x64xf32> to vector<64x64xf32>
    %249 = arith.addf %246, %248 : vector<64x64xf32>
    %250 = vector.shape_cast %249 : vector<64x64xf32> to vector<2x32x64xf32>
    %c0_72 = arith.constant 0 : index
    %c0_73 = arith.constant 0 : index
    %c0_74 = arith.constant 0 : index
    %251 = vector.load %arg13[%c0_72, %c0_73, %c0_74] : memref<2x32x64xf32, #tpu.memory_space<vmem>>, vector<2x32x64xf32>
    tpu.vector_store %arg13[%c0_72, %c0_73, %c0_74], %250 {strides = array<i32>} : memref<2x32x64xf32, #tpu.memory_space<vmem>>, vector<2x32x64xf32>,
    return
  }
}

module attributes {stable_mosaic.version = 11 : i64} {
  func.func @_ff_finish_kernel(%arg0: memref<2x2x16x32xf32, #tpu.memory_space<vmem>>, %arg1: memref<2x32x64xf32, #tpu.memory_space<vmem>>, %arg2: memref<64x32xf32, #tpu.memory_space<vmem>>, %arg3: memref<1x32xf32, #tpu.memory_space<vmem>>, %arg4: memref<2x2x16x32xf32, #tpu.memory_space<vmem>>) attributes {dimension_semantics = [], scalar_prefetch = 0 : i64, scratch_operands = 0 : i64, tpu.core_type = #tpu.core_type<tc>} {
    %c0 = arith.constant 0 : index
    %c0_0 = arith.constant 0 : index
    %c0_1 = arith.constant 0 : index
    %c0_2 = arith.constant 0 : index
    %0 = vector.load %arg0[%c0, %c0_0, %c0_1, %c0_2] : memref<2x2x16x32xf32, #tpu.memory_space<vmem>>, vector<2x2x16x32xf32>
    %1 = vector.shape_cast %0 : vector<2x2x16x32xf32> to vector<64x32xf32>
    %c0_3 = arith.constant 0 : index
    %c0_4 = arith.constant 0 : index
    %c0_5 = arith.constant 0 : index
    %2 = vector.load %arg1[%c0_3, %c0_4, %c0_5] : memref<2x32x64xf32, #tpu.memory_space<vmem>>, vector<2x32x64xf32>
    %3 = vector.shape_cast %2 : vector<2x32x64xf32> to vector<64x64xf32>
    %c0_6 = arith.constant 0 : index
    %c0_7 = arith.constant 0 : index
    %4 = vector.load %arg2[%c0_6, %c0_7] : memref<64x32xf32, #tpu.memory_space<vmem>>, vector<64x32xf32>
    %5 = arith.truncf %3 : vector<64x64xf32> to vector<64x64xbf16>
    %6 = arith.truncf %4 : vector<64x32xf32> to vector<64x32xbf16>
    %cst = arith.constant dense<0.000000e+00> : vector<64x32xf32>
    %7 = tpu.matmul %5, %6, %cst {dimension_numbers = #tpu.dot_dimension_numbers<[1], [0], [0], [1], [0, 0, 1, 1], [], []>} : vector<64x64xbf16>, vector<64x32xbf16>, vector<64x32xf32> -> vector<64x32xf32>
    %8 = arith.addf %1, %7 : vector<64x32xf32>
    %c0_8 = arith.constant 0 : index
    %c0_9 = arith.constant 0 : index
    %9 = vector.load %arg3[%c0_8, %c0_9] : memref<1x32xf32, #tpu.memory_space<vmem>>, vector<1x32xf32>
    %10 = vector.broadcast %9 : vector<1x32xf32> to vector<64x32xf32>
    %11 = arith.addf %8, %10 : vector<64x32xf32>
    %12 = vector.shape_cast %11 : vector<64x32xf32> to vector<2x2x16x32xf32>
    %c0_10 = arith.constant 0 : index
    %c0_11 = arith.constant 0 : index
    %c0_12 = arith.constant 0 : index
    %c0_13 = arith.constant 0 : index
    %13 = vector.load %arg4[%c0_10, %c0_11, %c0_12, %c0_13] : memref<2x2x16x32xf32, #tpu.memory_space<vmem>>, vector<2x2x16x32xf32>
    tpu.vector_store %arg4[%c0_10, %c0_11, %c0_12, %c0_13], %12 {strides = array<i32>} : memref<2x2x16x32xf32, #tpu.memory_space<vmem>>, vector<2x2x16x32xf32>,
    return
  }
}

module attributes {stable_mosaic.version = 11 : i64} {
  func.func @_tail_kernel(%arg0: memref<8x2x16x32xf32, #tpu.memory_space<vmem>>, %arg1: memref<64x32xf32, #tpu.memory_space<vmem>>, %arg2: memref<1x32xf32, #tpu.memory_space<vmem>>, %arg3: memref<1x32xf32, #tpu.memory_space<vmem>>, %arg4: memref<1x32xf32, #tpu.memory_space<vmem>>, %arg5: memref<3x64x32xf32, #tpu.memory_space<vmem>>, %arg6: memref<3x1x32xf32, #tpu.memory_space<vmem>>, %arg7: memref<3x64x32xf32, #tpu.memory_space<vmem>>, %arg8: memref<3x1x32xf32, #tpu.memory_space<vmem>>, %arg9: memref<3x1x32xf32, #tpu.memory_space<vmem>>, %arg10: memref<3x1x32xf32, #tpu.memory_space<vmem>>, %arg11: memref<3x32x32xf32, #tpu.memory_space<vmem>>, %arg12: memref<3x1x32xf32, #tpu.memory_space<vmem>>, %arg13: memref<1x32xf32, #tpu.memory_space<vmem>>, %arg14: memref<1x1xf32, #tpu.memory_space<vmem>>, %arg15: memref<32x10xf32, #tpu.memory_space<vmem>>, %arg16: memref<1x10xf32, #tpu.memory_space<vmem>>, %arg17: memref<5x2x10xf32, #tpu.memory_space<vmem>>) attributes {dimension_semantics = [], scalar_prefetch = 0 : i64, scratch_operands = 0 : i64, tpu.core_type = #tpu.core_type<tc>} {
    %c0 = arith.constant 0 : index
    %c0_0 = arith.constant 0 : index
    %c0_1 = arith.constant 0 : index
    %c0_2 = arith.constant 0 : index
    %0 = vector.load %arg0[%c0, %c0_0, %c0_1, %c0_2] : memref<8x2x16x32xf32, #tpu.memory_space<vmem>>, vector<1x2x16x32xf32>
    %1 = vector.shape_cast %0 : vector<1x2x16x32xf32> to vector<2x16x32xf32>
    %2 = vector.shape_cast %1 : vector<2x16x32xf32> to vector<32x32xf32>
    %c1 = arith.constant 1 : index
    %c0_3 = arith.constant 0 : index
    %c0_4 = arith.constant 0 : index
    %c0_5 = arith.constant 0 : index
    %3 = vector.load %arg0[%c1, %c0_3, %c0_4, %c0_5] : memref<8x2x16x32xf32, #tpu.memory_space<vmem>>, vector<1x2x16x32xf32>
    %4 = vector.shape_cast %3 : vector<1x2x16x32xf32> to vector<2x16x32xf32>
    %5 = vector.shape_cast %4 : vector<2x16x32xf32> to vector<32x32xf32>
    %c2 = arith.constant 2 : index
    %c0_6 = arith.constant 0 : index
    %c0_7 = arith.constant 0 : index
    %c0_8 = arith.constant 0 : index
    %6 = vector.load %arg0[%c2, %c0_6, %c0_7, %c0_8] : memref<8x2x16x32xf32, #tpu.memory_space<vmem>>, vector<1x2x16x32xf32>
    %7 = vector.shape_cast %6 : vector<1x2x16x32xf32> to vector<2x16x32xf32>
    %8 = vector.shape_cast %7 : vector<2x16x32xf32> to vector<32x32xf32>
    %c3 = arith.constant 3 : index
    %c0_9 = arith.constant 0 : index
    %c0_10 = arith.constant 0 : index
    %c0_11 = arith.constant 0 : index
    %9 = vector.load %arg0[%c3, %c0_9, %c0_10, %c0_11] : memref<8x2x16x32xf32, #tpu.memory_space<vmem>>, vector<1x2x16x32xf32>
    %10 = vector.shape_cast %9 : vector<1x2x16x32xf32> to vector<2x16x32xf32>
    %11 = vector.shape_cast %10 : vector<2x16x32xf32> to vector<32x32xf32>
    %c4 = arith.constant 4 : index
    %c0_12 = arith.constant 0 : index
    %c0_13 = arith.constant 0 : index
    %c0_14 = arith.constant 0 : index
    %12 = vector.load %arg0[%c4, %c0_12, %c0_13, %c0_14] : memref<8x2x16x32xf32, #tpu.memory_space<vmem>>, vector<1x2x16x32xf32>
    %13 = vector.shape_cast %12 : vector<1x2x16x32xf32> to vector<2x16x32xf32>
    %14 = vector.shape_cast %13 : vector<2x16x32xf32> to vector<32x32xf32>
    %c5 = arith.constant 5 : index
    %c0_15 = arith.constant 0 : index
    %c0_16 = arith.constant 0 : index
    %c0_17 = arith.constant 0 : index
    %15 = vector.load %arg0[%c5, %c0_15, %c0_16, %c0_17] : memref<8x2x16x32xf32, #tpu.memory_space<vmem>>, vector<1x2x16x32xf32>
    %16 = vector.shape_cast %15 : vector<1x2x16x32xf32> to vector<2x16x32xf32>
    %17 = vector.shape_cast %16 : vector<2x16x32xf32> to vector<32x32xf32>
    %c6 = arith.constant 6 : index
    %c0_18 = arith.constant 0 : index
    %c0_19 = arith.constant 0 : index
    %c0_20 = arith.constant 0 : index
    %18 = vector.load %arg0[%c6, %c0_18, %c0_19, %c0_20] : memref<8x2x16x32xf32, #tpu.memory_space<vmem>>, vector<1x2x16x32xf32>
    %19 = vector.shape_cast %18 : vector<1x2x16x32xf32> to vector<2x16x32xf32>
    %20 = vector.shape_cast %19 : vector<2x16x32xf32> to vector<32x32xf32>
    %c7 = arith.constant 7 : index
    %c0_21 = arith.constant 0 : index
    %c0_22 = arith.constant 0 : index
    %c0_23 = arith.constant 0 : index
    %21 = vector.load %arg0[%c7, %c0_21, %c0_22, %c0_23] : memref<8x2x16x32xf32, #tpu.memory_space<vmem>>, vector<1x2x16x32xf32>
    %22 = vector.shape_cast %21 : vector<1x2x16x32xf32> to vector<2x16x32xf32>
    %23 = vector.shape_cast %22 : vector<2x16x32xf32> to vector<32x32xf32>
    %c0_24 = arith.constant 0 : index
    %c0_25 = arith.constant 0 : index
    %24 = vector.load %arg1[%c0_24, %c0_25] : memref<64x32xf32, #tpu.memory_space<vmem>>, vector<64x32xf32>
    %c0_26 = arith.constant 0 : index
    %c0_27 = arith.constant 0 : index
    %25 = vector.load %arg2[%c0_26, %c0_27] : memref<1x32xf32, #tpu.memory_space<vmem>>, vector<1x32xf32>
    %26 = vector.extract_strided_slice %24 {offsets = [0, 0], sizes = [32, 32], strides = [1, 1]} : vector<64x32xf32> to vector<32x32xf32>
    %27 = arith.truncf %2 : vector<32x32xf32> to vector<32x32xbf16>
    %28 = arith.truncf %26 : vector<32x32xf32> to vector<32x32xbf16>
    %cst = arith.constant dense<0.000000e+00> : vector<32x32xf32>
    %29 = tpu.matmul %27, %28, %cst {dimension_numbers = #tpu.dot_dimension_numbers<[1], [0], [0], [1], [0, 0, 1, 1], [], []>} : vector<32x32xbf16>, vector<32x32xbf16>, vector<32x32xf32> -> vector<32x32xf32>
    %30 = vector.extract_strided_slice %24 {offsets = [32, 0], sizes = [32, 32], strides = [1, 1]} : vector<64x32xf32> to vector<32x32xf32>
    %31 = arith.truncf %5 : vector<32x32xf32> to vector<32x32xbf16>
    %32 = arith.truncf %30 : vector<32x32xf32> to vector<32x32xbf16>
    %cst_28 = arith.constant dense<0.000000e+00> : vector<32x32xf32>
    %33 = tpu.matmul %31, %32, %cst_28 {dimension_numbers = #tpu.dot_dimension_numbers<[1], [0], [0], [1], [0, 0, 1, 1], [], []>} : vector<32x32xbf16>, vector<32x32xbf16>, vector<32x32xf32> -> vector<32x32xf32>
    %34 = arith.addf %29, %33 : vector<32x32xf32>
    %35 = vector.broadcast %25 : vector<1x32xf32> to vector<32x32xf32>
    %36 = arith.addf %34, %35 : vector<32x32xf32>
    %37 = arith.negf %36 : vector<32x32xf32>
    %38 = math.exp %37 : vector<32x32xf32>
    %cst_29 = arith.constant 1.000000e+00 : f32
    %39 = vector.broadcast %cst_29 : f32 to vector<32x32xf32>
    %40 = arith.addf %39, %38 : vector<32x32xf32>
    %41 = arith.divf %39, %40 : vector<32x32xf32>
    %42 = arith.mulf %41, %2 : vector<32x32xf32>
    %cst_30 = arith.constant 1.000000e+00 : f32
    %43 = vector.broadcast %cst_30 : f32 to vector<32x32xf32>
    %44 = arith.subf %43, %41 : vector<32x32xf32>
    %45 = arith.mulf %44, %5 : vector<32x32xf32>
    %46 = arith.addf %42, %45 : vector<32x32xf32>
    %c0_31 = arith.constant 0 : index
    %c0_32 = arith.constant 0 : index
    %47 = vector.load %arg3[%c0_31, %c0_32] : memref<1x32xf32, #tpu.memory_space<vmem>>, vector<1x32xf32>
    %c0_33 = arith.constant 0 : index
    %c0_34 = arith.constant 0 : index
    %48 = vector.load %arg4[%c0_33, %c0_34] : memref<1x32xf32, #tpu.memory_space<vmem>>, vector<1x32xf32>
    %cst_35 = arith.constant dense<0.000000e+00> : vector<32xf32>
    %49 = vector.multi_reduction <add>, %46, %cst_35 [1] : vector<32x32xf32> to vector<32xf32>
    %50 = vector.shape_cast %49 : vector<32xf32> to vector<32x1xf32>
    %cst_36 = arith.constant 3.200000e+01 : f32
    %51 = vector.broadcast %cst_36 : f32 to vector<32x1xf32>
    %52 = arith.divf %50, %51 : vector<32x1xf32>
    %53 = vector.broadcast %52 : vector<32x1xf32> to vector<32x32xf32>
    %54 = arith.subf %46, %53 : vector<32x32xf32>
    %55 = arith.mulf %54, %54 : vector<32x32xf32>
    %cst_37 = arith.constant dense<0.000000e+00> : vector<32xf32>
    %56 = vector.multi_reduction <add>, %55, %cst_37 [1] : vector<32x32xf32> to vector<32xf32>
    %57 = vector.shape_cast %56 : vector<32xf32> to vector<32x1xf32>
    %cst_38 = arith.constant 3.200000e+01 : f32
    %58 = vector.broadcast %cst_38 : f32 to vector<32x1xf32>
    %59 = arith.divf %57, %58 : vector<32x1xf32>
    %60 = vector.broadcast %52 : vector<32x1xf32> to vector<32x32xf32>
    %61 = arith.subf %46, %60 : vector<32x32xf32>
    %cst_39 = arith.constant 9.99999974E-6 : f32
    %62 = vector.broadcast %cst_39 : f32 to vector<32x1xf32>
    %63 = arith.addf %59, %62 : vector<32x1xf32>
    %64 = math.rsqrt %63 : vector<32x1xf32>
    %65 = vector.broadcast %64 : vector<32x1xf32> to vector<32x32xf32>
    %66 = arith.mulf %61, %65 : vector<32x32xf32>
    %67 = vector.broadcast %47 : vector<1x32xf32> to vector<32x32xf32>
    %68 = arith.mulf %66, %67 : vector<32x32xf32>
    %69 = vector.broadcast %48 : vector<1x32xf32> to vector<32x32xf32>
    %70 = arith.addf %68, %69 : vector<32x32xf32>
    %c0_40 = arith.constant 0 : index
    %c0_41 = arith.constant 0 : index
    %c0_42 = arith.constant 0 : index
    %71 = vector.load %arg5[%c0_40, %c0_41, %c0_42] : memref<3x64x32xf32, #tpu.memory_space<vmem>>, vector<1x64x32xf32>
    %72 = vector.shape_cast %71 : vector<1x64x32xf32> to vector<64x32xf32>
    %c0_43 = arith.constant 0 : index
    %c0_44 = arith.constant 0 : index
    %c0_45 = arith.constant 0 : index
    %73 = vector.load %arg6[%c0_43, %c0_44, %c0_45] : memref<3x1x32xf32, #tpu.memory_space<vmem>>, vector<1x1x32xf32>
    %74 = vector.shape_cast %73 : vector<1x1x32xf32> to vector<1x32xf32>
    %c0_46 = arith.constant 0 : index
    %c0_47 = arith.constant 0 : index
    %c0_48 = arith.constant 0 : index
    %75 = vector.load %arg7[%c0_46, %c0_47, %c0_48] : memref<3x64x32xf32, #tpu.memory_space<vmem>>, vector<1x64x32xf32>
    %76 = vector.shape_cast %75 : vector<1x64x32xf32> to vector<64x32xf32>
    %c0_49 = arith.constant 0 : index
    %c0_50 = arith.constant 0 : index
    %c0_51 = arith.constant 0 : index
    %77 = vector.load %arg8[%c0_49, %c0_50, %c0_51] : memref<3x1x32xf32, #tpu.memory_space<vmem>>, vector<1x1x32xf32>
    %78 = vector.shape_cast %77 : vector<1x1x32xf32> to vector<1x32xf32>
    %c0_52 = arith.constant 0 : index
    %c0_53 = arith.constant 0 : index
    %c0_54 = arith.constant 0 : index
    %79 = vector.load %arg9[%c0_52, %c0_53, %c0_54] : memref<3x1x32xf32, #tpu.memory_space<vmem>>, vector<1x1x32xf32>
    %80 = vector.shape_cast %79 : vector<1x1x32xf32> to vector<1x32xf32>
    %c0_55 = arith.constant 0 : index
    %c0_56 = arith.constant 0 : index
    %c0_57 = arith.constant 0 : index
    %81 = vector.load %arg10[%c0_55, %c0_56, %c0_57] : memref<3x1x32xf32, #tpu.memory_space<vmem>>, vector<1x1x32xf32>
    %82 = vector.shape_cast %81 : vector<1x1x32xf32> to vector<1x32xf32>
    %c0_58 = arith.constant 0 : index
    %c0_59 = arith.constant 0 : index
    %c0_60 = arith.constant 0 : index
    %83 = vector.load %arg11[%c0_58, %c0_59, %c0_60] : memref<3x32x32xf32, #tpu.memory_space<vmem>>, vector<1x32x32xf32>
    %84 = vector.shape_cast %83 : vector<1x32x32xf32> to vector<32x32xf32>
    %c0_61 = arith.constant 0 : index
    %c0_62 = arith.constant 0 : index
    %c0_63 = arith.constant 0 : index
    %85 = vector.load %arg12[%c0_61, %c0_62, %c0_63] : memref<3x1x32xf32, #tpu.memory_space<vmem>>, vector<1x1x32xf32>
    %86 = vector.shape_cast %85 : vector<1x1x32xf32> to vector<1x32xf32>
    %87 = vector.extract_strided_slice %72 {offsets = [0, 0], sizes = [32, 32], strides = [1, 1]} : vector<64x32xf32> to vector<32x32xf32>
    %88 = arith.truncf %70 : vector<32x32xf32> to vector<32x32xbf16>
    %89 = arith.truncf %87 : vector<32x32xf32> to vector<32x32xbf16>
    %cst_64 = arith.constant dense<0.000000e+00> : vector<32x32xf32>
    %90 = tpu.matmul %88, %89, %cst_64 {dimension_numbers = #tpu.dot_dimension_numbers<[1], [0], [0], [1], [0, 0, 1, 1], [], []>} : vector<32x32xbf16>, vector<32x32xbf16>, vector<32x32xf32> -> vector<32x32xf32>
    %91 = vector.extract_strided_slice %72 {offsets = [32, 0], sizes = [32, 32], strides = [1, 1]} : vector<64x32xf32> to vector<32x32xf32>
    %92 = arith.truncf %8 : vector<32x32xf32> to vector<32x32xbf16>
    %93 = arith.truncf %91 : vector<32x32xf32> to vector<32x32xbf16>
    %cst_65 = arith.constant dense<0.000000e+00> : vector<32x32xf32>
    %94 = tpu.matmul %92, %93, %cst_65 {dimension_numbers = #tpu.dot_dimension_numbers<[1], [0], [0], [1], [0, 0, 1, 1], [], []>} : vector<32x32xbf16>, vector<32x32xbf16>, vector<32x32xf32> -> vector<32x32xf32>
    %95 = arith.addf %90, %94 : vector<32x32xf32>
    %96 = vector.broadcast %74 : vector<1x32xf32> to vector<32x32xf32>
    %97 = arith.addf %95, %96 : vector<32x32xf32>
    %98 = arith.negf %97 : vector<32x32xf32>
    %99 = math.exp %98 : vector<32x32xf32>
    %cst_66 = arith.constant 1.000000e+00 : f32
    %100 = vector.broadcast %cst_66 : f32 to vector<32x32xf32>
    %101 = arith.addf %100, %99 : vector<32x32xf32>
    %102 = arith.divf %100, %101 : vector<32x32xf32>
    %103 = arith.mulf %102, %70 : vector<32x32xf32>
    %cst_67 = arith.constant 1.000000e+00 : f32
    %104 = vector.broadcast %cst_67 : f32 to vector<32x32xf32>
    %105 = arith.subf %104, %102 : vector<32x32xf32>
    %106 = arith.mulf %105, %8 : vector<32x32xf32>
    %107 = arith.addf %103, %106 : vector<32x32xf32>
    %108 = vector.extract_strided_slice %76 {offsets = [0, 0], sizes = [32, 32], strides = [1, 1]} : vector<64x32xf32> to vector<32x32xf32>
    %109 = arith.truncf %70 : vector<32x32xf32> to vector<32x32xbf16>
    %110 = arith.truncf %108 : vector<32x32xf32> to vector<32x32xbf16>
    %cst_68 = arith.constant dense<0.000000e+00> : vector<32x32xf32>
    %111 = tpu.matmul %109, %110, %cst_68 {dimension_numbers = #tpu.dot_dimension_numbers<[1], [0], [0], [1], [0, 0, 1, 1], [], []>} : vector<32x32xbf16>, vector<32x32xbf16>, vector<32x32xf32> -> vector<32x32xf32>
    %112 = vector.extract_strided_slice %76 {offsets = [32, 0], sizes = [32, 32], strides = [1, 1]} : vector<64x32xf32> to vector<32x32xf32>
    %113 = arith.truncf %11 : vector<32x32xf32> to vector<32x32xbf16>
    %114 = arith.truncf %112 : vector<32x32xf32> to vector<32x32xbf16>
    %cst_69 = arith.constant dense<0.000000e+00> : vector<32x32xf32>
    %115 = tpu.matmul %113, %114, %cst_69 {dimension_numbers = #tpu.dot_dimension_numbers<[1], [0], [0], [1], [0, 0, 1, 1], [], []>} : vector<32x32xbf16>, vector<32x32xbf16>, vector<32x32xf32> -> vector<32x32xf32>
    %116 = arith.addf %111, %115 : vector<32x32xf32>
    %117 = vector.broadcast %78 : vector<1x32xf32> to vector<32x32xf32>
    %118 = arith.addf %116, %117 : vector<32x32xf32>
    %119 = arith.negf %118 : vector<32x32xf32>
    %120 = math.exp %119 : vector<32x32xf32>
    %cst_70 = arith.constant 1.000000e+00 : f32
    %121 = vector.broadcast %cst_70 : f32 to vector<32x32xf32>
    %122 = arith.addf %121, %120 : vector<32x32xf32>
    %123 = arith.divf %121, %122 : vector<32x32xf32>
    %124 = arith.mulf %123, %70 : vector<32x32xf32>
    %cst_71 = arith.constant 1.000000e+00 : f32
    %125 = vector.broadcast %cst_71 : f32 to vector<32x32xf32>
    %126 = arith.subf %125, %123 : vector<32x32xf32>
    %127 = arith.mulf %126, %11 : vector<32x32xf32>
    %128 = arith.addf %124, %127 : vector<32x32xf32>
    %129 = arith.truncf %107 : vector<32x32xf32> to vector<32x32xbf16>
    %130 = arith.truncf %84 : vector<32x32xf32> to vector<32x32xbf16>
    %cst_72 = arith.constant dense<0.000000e+00> : vector<32x32xf32>
    %131 = tpu.matmul %129, %130, %cst_72 {dimension_numbers = #tpu.dot_dimension_numbers<[1], [0], [0], [1], [0, 0, 1, 1], [], []>} : vector<32x32xbf16>, vector<32x32xbf16>, vector<32x32xf32> -> vector<32x32xf32>
    %132 = arith.addf %107, %131 : vector<32x32xf32>
    %133 = vector.broadcast %86 : vector<1x32xf32> to vector<32x32xf32>
    %134 = arith.addf %132, %133 : vector<32x32xf32>
    %135 = arith.truncf %128 : vector<32x32xf32> to vector<32x32xbf16>
    %136 = arith.truncf %84 : vector<32x32xf32> to vector<32x32xbf16>
    %cst_73 = arith.constant dense<0.000000e+00> : vector<32x32xf32>
    %137 = tpu.matmul %135, %136, %cst_73 {dimension_numbers = #tpu.dot_dimension_numbers<[1], [0], [0], [1], [0, 0, 1, 1], [], []>} : vector<32x32xbf16>, vector<32x32xbf16>, vector<32x32xf32> -> vector<32x32xf32>
    %138 = arith.addf %128, %137 : vector<32x32xf32>
    %139 = vector.broadcast %86 : vector<1x32xf32> to vector<32x32xf32>
    %140 = arith.addf %138, %139 : vector<32x32xf32>
    %cst_74 = arith.constant dense<0.000000e+00> : vector<32xf32>
    %141 = vector.multi_reduction <add>, %134, %cst_74 [1] : vector<32x32xf32> to vector<32xf32>
    %142 = vector.shape_cast %141 : vector<32xf32> to vector<32x1xf32>
    %cst_75 = arith.constant 3.200000e+01 : f32
    %143 = vector.broadcast %cst_75 : f32 to vector<32x1xf32>
    %144 = arith.divf %142, %143 : vector<32x1xf32>
    %145 = vector.broadcast %144 : vector<32x1xf32> to vector<32x32xf32>
    %146 = arith.subf %134, %145 : vector<32x32xf32>
    %147 = arith.mulf %146, %146 : vector<32x32xf32>
    %cst_76 = arith.constant dense<0.000000e+00> : vector<32xf32>
    %148 = vector.multi_reduction <add>, %147, %cst_76 [1] : vector<32x32xf32> to vector<32xf32>
    %149 = vector.shape_cast %148 : vector<32xf32> to vector<32x1xf32>
    %cst_77 = arith.constant 3.200000e+01 : f32
    %150 = vector.broadcast %cst_77 : f32 to vector<32x1xf32>
    %151 = arith.divf %149, %150 : vector<32x1xf32>
    %152 = vector.broadcast %144 : vector<32x1xf32> to vector<32x32xf32>
    %153 = arith.subf %134, %152 : vector<32x32xf32>
    %cst_78 = arith.constant 9.99999974E-6 : f32
    %154 = vector.broadcast %cst_78 : f32 to vector<32x1xf32>
    %155 = arith.addf %151, %154 : vector<32x1xf32>
    %156 = math.rsqrt %155 : vector<32x1xf32>
    %157 = vector.broadcast %156 : vector<32x1xf32> to vector<32x32xf32>
    %158 = arith.mulf %153, %157 : vector<32x32xf32>
    %159 = vector.broadcast %80 : vector<1x32xf32> to vector<32x32xf32>
    %160 = arith.mulf %158, %159 : vector<32x32xf32>
    %161 = vector.broadcast %82 : vector<1x32xf32> to vector<32x32xf32>
    %162 = arith.addf %160, %161 : vector<32x32xf32>
    %cst_79 = arith.constant dense<0.000000e+00> : vector<32xf32>
    %163 = vector.multi_reduction <add>, %140, %cst_79 [1] : vector<32x32xf32> to vector<32xf32>
    %164 = vector.shape_cast %163 : vector<32xf32> to vector<32x1xf32>
    %cst_80 = arith.constant 3.200000e+01 : f32
    %165 = vector.broadcast %cst_80 : f32 to vector<32x1xf32>
    %166 = arith.divf %164, %165 : vector<32x1xf32>
    %167 = vector.broadcast %166 : vector<32x1xf32> to vector<32x32xf32>
    %168 = arith.subf %140, %167 : vector<32x32xf32>
    %169 = arith.mulf %168, %168 : vector<32x32xf32>
    %cst_81 = arith.constant dense<0.000000e+00> : vector<32xf32>
    %170 = vector.multi_reduction <add>, %169, %cst_81 [1] : vector<32x32xf32> to vector<32xf32>
    %171 = vector.shape_cast %170 : vector<32xf32> to vector<32x1xf32>
    %cst_82 = arith.constant 3.200000e+01 : f32
    %172 = vector.broadcast %cst_82 : f32 to vector<32x1xf32>
    %173 = arith.divf %171, %172 : vector<32x1xf32>
    %174 = vector.broadcast %166 : vector<32x1xf32> to vector<32x32xf32>
    %175 = arith.subf %140, %174 : vector<32x32xf32>
    %cst_83 = arith.constant 9.99999974E-6 : f32
    %176 = vector.broadcast %cst_83 : f32 to vector<32x1xf32>
    %177 = arith.addf %173, %176 : vector<32x1xf32>
    %178 = math.rsqrt %177 : vector<32x1xf32>
    %179 = vector.broadcast %178 : vector<32x1xf32> to vector<32x32xf32>
    %180 = arith.mulf %175, %179 : vector<32x32xf32>
    %181 = vector.broadcast %80 : vector<1x32xf32> to vector<32x32xf32>
    %182 = arith.mulf %180, %181 : vector<32x32xf32>
    %183 = vector.broadcast %82 : vector<1x32xf32> to vector<32x32xf32>
    %184 = arith.addf %182, %183 : vector<32x32xf32>
    %185 = vector.extract_strided_slice %76 {offsets = [0, 0], sizes = [32, 32], strides = [1, 1]} : vector<64x32xf32> to vector<32x32xf32>
    %186 = arith.truncf %162 : vector<32x32xf32> to vector<32x32xbf16>
    %187 = arith.truncf %185 : vector<32x32xf32> to vector<32x32xbf16>
    %cst_84 = arith.constant dense<0.000000e+00> : vector<32x32xf32>
    %188 = tpu.matmul %186, %187, %cst_84 {dimension_numbers = #tpu.dot_dimension_numbers<[1], [0], [0], [1], [0, 0, 1, 1], [], []>} : vector<32x32xbf16>, vector<32x32xbf16>, vector<32x32xf32> -> vector<32x32xf32>
    %189 = vector.extract_strided_slice %76 {offsets = [32, 0], sizes = [32, 32], strides = [1, 1]} : vector<64x32xf32> to vector<32x32xf32>
    %190 = arith.truncf %184 : vector<32x32xf32> to vector<32x32xbf16>
    %191 = arith.truncf %189 : vector<32x32xf32> to vector<32x32xbf16>
    %cst_85 = arith.constant dense<0.000000e+00> : vector<32x32xf32>
    %192 = tpu.matmul %190, %191, %cst_85 {dimension_numbers = #tpu.dot_dimension_numbers<[1], [0], [0], [1], [0, 0, 1, 1], [], []>} : vector<32x32xbf16>, vector<32x32xbf16>, vector<32x32xf32> -> vector<32x32xf32>
    %193 = arith.addf %188, %192 : vector<32x32xf32>
    %194 = vector.broadcast %78 : vector<1x32xf32> to vector<32x32xf32>
    %195 = arith.addf %193, %194 : vector<32x32xf32>
    %196 = arith.negf %195 : vector<32x32xf32>
    %197 = math.exp %196 : vector<32x32xf32>
    %cst_86 = arith.constant 1.000000e+00 : f32
    %198 = vector.broadcast %cst_86 : f32 to vector<32x32xf32>
    %199 = arith.addf %198, %197 : vector<32x32xf32>
    %200 = arith.divf %198, %199 : vector<32x32xf32>
    %201 = arith.mulf %200, %162 : vector<32x32xf32>
    %cst_87 = arith.constant 1.000000e+00 : f32
    %202 = vector.broadcast %cst_87 : f32 to vector<32x32xf32>
    %203 = arith.subf %202, %200 : vector<32x32xf32>
    %204 = arith.mulf %203, %184 : vector<32x32xf32>
    %205 = arith.addf %201, %204 : vector<32x32xf32>
    %cst_88 = arith.constant dense<0.000000e+00> : vector<32xf32>
    %206 = vector.multi_reduction <add>, %205, %cst_88 [1] : vector<32x32xf32> to vector<32xf32>
    %207 = vector.shape_cast %206 : vector<32xf32> to vector<32x1xf32>
    %cst_89 = arith.constant 3.200000e+01 : f32
    %208 = vector.broadcast %cst_89 : f32 to vector<32x1xf32>
    %209 = arith.divf %207, %208 : vector<32x1xf32>
    %210 = vector.broadcast %209 : vector<32x1xf32> to vector<32x32xf32>
    %211 = arith.subf %205, %210 : vector<32x32xf32>
    %212 = arith.mulf %211, %211 : vector<32x32xf32>
    %cst_90 = arith.constant dense<0.000000e+00> : vector<32xf32>
    %213 = vector.multi_reduction <add>, %212, %cst_90 [1] : vector<32x32xf32> to vector<32xf32>
    %214 = vector.shape_cast %213 : vector<32xf32> to vector<32x1xf32>
    %cst_91 = arith.constant 3.200000e+01 : f32
    %215 = vector.broadcast %cst_91 : f32 to vector<32x1xf32>
    %216 = arith.divf %214, %215 : vector<32x1xf32>
    %217 = vector.broadcast %209 : vector<32x1xf32> to vector<32x32xf32>
    %218 = arith.subf %205, %217 : vector<32x32xf32>
    %cst_92 = arith.constant 9.99999974E-6 : f32
    %219 = vector.broadcast %cst_92 : f32 to vector<32x1xf32>
    %220 = arith.addf %216, %219 : vector<32x1xf32>
    %221 = math.rsqrt %220 : vector<32x1xf32>
    %222 = vector.broadcast %221 : vector<32x1xf32> to vector<32x32xf32>
    %223 = arith.mulf %218, %222 : vector<32x32xf32>
    %224 = vector.broadcast %80 : vector<1x32xf32> to vector<32x32xf32>
    %225 = arith.mulf %223, %224 : vector<32x32xf32>
    %226 = vector.broadcast %82 : vector<1x32xf32> to vector<32x32xf32>
    %227 = arith.addf %225, %226 : vector<32x32xf32>
    %228 = arith.addf %70, %227 : vector<32x32xf32>
    %c0_93 = arith.constant 0 : index
    %c0_94 = arith.constant 0 : index
    %229 = vector.load %arg3[%c0_93, %c0_94] : memref<1x32xf32, #tpu.memory_space<vmem>>, vector<1x32xf32>
    %c0_95 = arith.constant 0 : index
    %c0_96 = arith.constant 0 : index
    %230 = vector.load %arg4[%c0_95, %c0_96] : memref<1x32xf32, #tpu.memory_space<vmem>>, vector<1x32xf32>
    %cst_97 = arith.constant dense<0.000000e+00> : vector<32xf32>
    %231 = vector.multi_reduction <add>, %228, %cst_97 [1] : vector<32x32xf32> to vector<32xf32>
    %232 = vector.shape_cast %231 : vector<32xf32> to vector<32x1xf32>
    %cst_98 = arith.constant 3.200000e+01 : f32
    %233 = vector.broadcast %cst_98 : f32 to vector<32x1xf32>
    %234 = arith.divf %232, %233 : vector<32x1xf32>
    %235 = vector.broadcast %234 : vector<32x1xf32> to vector<32x32xf32>
    %236 = arith.subf %228, %235 : vector<32x32xf32>
    %237 = arith.mulf %236, %236 : vector<32x32xf32>
    %cst_99 = arith.constant dense<0.000000e+00> : vector<32xf32>
    %238 = vector.multi_reduction <add>, %237, %cst_99 [1] : vector<32x32xf32> to vector<32xf32>
    %239 = vector.shape_cast %238 : vector<32xf32> to vector<32x1xf32>
    %cst_100 = arith.constant 3.200000e+01 : f32
    %240 = vector.broadcast %cst_100 : f32 to vector<32x1xf32>
    %241 = arith.divf %239, %240 : vector<32x1xf32>
    %242 = vector.broadcast %234 : vector<32x1xf32> to vector<32x32xf32>
    %243 = arith.subf %228, %242 : vector<32x32xf32>
    %cst_101 = arith.constant 9.99999974E-6 : f32
    %244 = vector.broadcast %cst_101 : f32 to vector<32x1xf32>
    %245 = arith.addf %241, %244 : vector<32x1xf32>
    %246 = math.rsqrt %245 : vector<32x1xf32>
    %247 = vector.broadcast %246 : vector<32x1xf32> to vector<32x32xf32>
    %248 = arith.mulf %243, %247 : vector<32x32xf32>
    %249 = vector.broadcast %229 : vector<1x32xf32> to vector<32x32xf32>
    %250 = arith.mulf %248, %249 : vector<32x32xf32>
    %251 = vector.broadcast %230 : vector<1x32xf32> to vector<32x32xf32>
    %252 = arith.addf %250, %251 : vector<32x32xf32>
    %c1_102 = arith.constant 1 : index
    %c0_103 = arith.constant 0 : index
    %c0_104 = arith.constant 0 : index
    %253 = vector.load %arg5[%c1_102, %c0_103, %c0_104] : memref<3x64x32xf32, #tpu.memory_space<vmem>>, vector<1x64x32xf32>
    %254 = vector.shape_cast %253 : vector<1x64x32xf32> to vector<64x32xf32>
    %c1_105 = arith.constant 1 : index
    %c0_106 = arith.constant 0 : index
    %c0_107 = arith.constant 0 : index
    %255 = vector.load %arg6[%c1_105, %c0_106, %c0_107] : memref<3x1x32xf32, #tpu.memory_space<vmem>>, vector<1x1x32xf32>
    %256 = vector.shape_cast %255 : vector<1x1x32xf32> to vector<1x32xf32>
    %c1_108 = arith.constant 1 : index
    %c0_109 = arith.constant 0 : index
    %c0_110 = arith.constant 0 : index
    %257 = vector.load %arg7[%c1_108, %c0_109, %c0_110] : memref<3x64x32xf32, #tpu.memory_space<vmem>>, vector<1x64x32xf32>
    %258 = vector.shape_cast %257 : vector<1x64x32xf32> to vector<64x32xf32>
    %c1_111 = arith.constant 1 : index
    %c0_112 = arith.constant 0 : index
    %c0_113 = arith.constant 0 : index
    %259 = vector.load %arg8[%c1_111, %c0_112, %c0_113] : memref<3x1x32xf32, #tpu.memory_space<vmem>>, vector<1x1x32xf32>
    %260 = vector.shape_cast %259 : vector<1x1x32xf32> to vector<1x32xf32>
    %c1_114 = arith.constant 1 : index
    %c0_115 = arith.constant 0 : index
    %c0_116 = arith.constant 0 : index
    %261 = vector.load %arg9[%c1_114, %c0_115, %c0_116] : memref<3x1x32xf32, #tpu.memory_space<vmem>>, vector<1x1x32xf32>
    %262 = vector.shape_cast %261 : vector<1x1x32xf32> to vector<1x32xf32>
    %c1_117 = arith.constant 1 : index
    %c0_118 = arith.constant 0 : index
    %c0_119 = arith.constant 0 : index
    %263 = vector.load %arg10[%c1_117, %c0_118, %c0_119] : memref<3x1x32xf32, #tpu.memory_space<vmem>>, vector<1x1x32xf32>
    %264 = vector.shape_cast %263 : vector<1x1x32xf32> to vector<1x32xf32>
    %c1_120 = arith.constant 1 : index
    %c0_121 = arith.constant 0 : index
    %c0_122 = arith.constant 0 : index
    %265 = vector.load %arg11[%c1_120, %c0_121, %c0_122] : memref<3x32x32xf32, #tpu.memory_space<vmem>>, vector<1x32x32xf32>
    %266 = vector.shape_cast %265 : vector<1x32x32xf32> to vector<32x32xf32>
    %c1_123 = arith.constant 1 : index
    %c0_124 = arith.constant 0 : index
    %c0_125 = arith.constant 0 : index
    %267 = vector.load %arg12[%c1_123, %c0_124, %c0_125] : memref<3x1x32xf32, #tpu.memory_space<vmem>>, vector<1x1x32xf32>
    %268 = vector.shape_cast %267 : vector<1x1x32xf32> to vector<1x32xf32>
    %269 = vector.extract_strided_slice %254 {offsets = [0, 0], sizes = [32, 32], strides = [1, 1]} : vector<64x32xf32> to vector<32x32xf32>
    %270 = arith.truncf %252 : vector<32x32xf32> to vector<32x32xbf16>
    %271 = arith.truncf %269 : vector<32x32xf32> to vector<32x32xbf16>
    %cst_126 = arith.constant dense<0.000000e+00> : vector<32x32xf32>
    %272 = tpu.matmul %270, %271, %cst_126 {dimension_numbers = #tpu.dot_dimension_numbers<[1], [0], [0], [1], [0, 0, 1, 1], [], []>} : vector<32x32xbf16>, vector<32x32xbf16>, vector<32x32xf32> -> vector<32x32xf32>
    %273 = vector.extract_strided_slice %254 {offsets = [32, 0], sizes = [32, 32], strides = [1, 1]} : vector<64x32xf32> to vector<32x32xf32>
    %274 = arith.truncf %14 : vector<32x32xf32> to vector<32x32xbf16>
    %275 = arith.truncf %273 : vector<32x32xf32> to vector<32x32xbf16>
    %cst_127 = arith.constant dense<0.000000e+00> : vector<32x32xf32>
    %276 = tpu.matmul %274, %275, %cst_127 {dimension_numbers = #tpu.dot_dimension_numbers<[1], [0], [0], [1], [0, 0, 1, 1], [], []>} : vector<32x32xbf16>, vector<32x32xbf16>, vector<32x32xf32> -> vector<32x32xf32>
    %277 = arith.addf %272, %276 : vector<32x32xf32>
    %278 = vector.broadcast %256 : vector<1x32xf32> to vector<32x32xf32>
    %279 = arith.addf %277, %278 : vector<32x32xf32>
    %280 = arith.negf %279 : vector<32x32xf32>
    %281 = math.exp %280 : vector<32x32xf32>
    %cst_128 = arith.constant 1.000000e+00 : f32
    %282 = vector.broadcast %cst_128 : f32 to vector<32x32xf32>
    %283 = arith.addf %282, %281 : vector<32x32xf32>
    %284 = arith.divf %282, %283 : vector<32x32xf32>
    %285 = arith.mulf %284, %252 : vector<32x32xf32>
    %cst_129 = arith.constant 1.000000e+00 : f32
    %286 = vector.broadcast %cst_129 : f32 to vector<32x32xf32>
    %287 = arith.subf %286, %284 : vector<32x32xf32>
    %288 = arith.mulf %287, %14 : vector<32x32xf32>
    %289 = arith.addf %285, %288 : vector<32x32xf32>
    %290 = vector.extract_strided_slice %258 {offsets = [0, 0], sizes = [32, 32], strides = [1, 1]} : vector<64x32xf32> to vector<32x32xf32>
    %291 = arith.truncf %252 : vector<32x32xf32> to vector<32x32xbf16>
    %292 = arith.truncf %290 : vector<32x32xf32> to vector<32x32xbf16>
    %cst_130 = arith.constant dense<0.000000e+00> : vector<32x32xf32>
    %293 = tpu.matmul %291, %292, %cst_130 {dimension_numbers = #tpu.dot_dimension_numbers<[1], [0], [0], [1], [0, 0, 1, 1], [], []>} : vector<32x32xbf16>, vector<32x32xbf16>, vector<32x32xf32> -> vector<32x32xf32>
    %294 = vector.extract_strided_slice %258 {offsets = [32, 0], sizes = [32, 32], strides = [1, 1]} : vector<64x32xf32> to vector<32x32xf32>
    %295 = arith.truncf %17 : vector<32x32xf32> to vector<32x32xbf16>
    %296 = arith.truncf %294 : vector<32x32xf32> to vector<32x32xbf16>
    %cst_131 = arith.constant dense<0.000000e+00> : vector<32x32xf32>
    %297 = tpu.matmul %295, %296, %cst_131 {dimension_numbers = #tpu.dot_dimension_numbers<[1], [0], [0], [1], [0, 0, 1, 1], [], []>} : vector<32x32xbf16>, vector<32x32xbf16>, vector<32x32xf32> -> vector<32x32xf32>
    %298 = arith.addf %293, %297 : vector<32x32xf32>
    %299 = vector.broadcast %260 : vector<1x32xf32> to vector<32x32xf32>
    %300 = arith.addf %298, %299 : vector<32x32xf32>
    %301 = arith.negf %300 : vector<32x32xf32>
    %302 = math.exp %301 : vector<32x32xf32>
    %cst_132 = arith.constant 1.000000e+00 : f32
    %303 = vector.broadcast %cst_132 : f32 to vector<32x32xf32>
    %304 = arith.addf %303, %302 : vector<32x32xf32>
    %305 = arith.divf %303, %304 : vector<32x32xf32>
    %306 = arith.mulf %305, %252 : vector<32x32xf32>
    %cst_133 = arith.constant 1.000000e+00 : f32
    %307 = vector.broadcast %cst_133 : f32 to vector<32x32xf32>
    %308 = arith.subf %307, %305 : vector<32x32xf32>
    %309 = arith.mulf %308, %17 : vector<32x32xf32>
    %310 = arith.addf %306, %309 : vector<32x32xf32>
    %311 = arith.truncf %289 : vector<32x32xf32> to vector<32x32xbf16>
    %312 = arith.truncf %266 : vector<32x32xf32> to vector<32x32xbf16>
    %cst_134 = arith.constant dense<0.000000e+00> : vector<32x32xf32>
    %313 = tpu.matmul %311, %312, %cst_134 {dimension_numbers = #tpu.dot_dimension_numbers<[1], [0], [0], [1], [0, 0, 1, 1], [], []>} : vector<32x32xbf16>, vector<32x32xbf16>, vector<32x32xf32> -> vector<32x32xf32>
    %314 = arith.addf %289, %313 : vector<32x32xf32>
    %315 = vector.broadcast %268 : vector<1x32xf32> to vector<32x32xf32>
    %316 = arith.addf %314, %315 : vector<32x32xf32>
    %317 = arith.truncf %310 : vector<32x32xf32> to vector<32x32xbf16>
    %318 = arith.truncf %266 : vector<32x32xf32> to vector<32x32xbf16>
    %cst_135 = arith.constant dense<0.000000e+00> : vector<32x32xf32>
    %319 = tpu.matmul %317, %318, %cst_135 {dimension_numbers = #tpu.dot_dimension_numbers<[1], [0], [0], [1], [0, 0, 1, 1], [], []>} : vector<32x32xbf16>, vector<32x32xbf16>, vector<32x32xf32> -> vector<32x32xf32>
    %320 = arith.addf %310, %319 : vector<32x32xf32>
    %321 = vector.broadcast %268 : vector<1x32xf32> to vector<32x32xf32>
    %322 = arith.addf %320, %321 : vector<32x32xf32>
    %cst_136 = arith.constant dense<0.000000e+00> : vector<32xf32>
    %323 = vector.multi_reduction <add>, %316, %cst_136 [1] : vector<32x32xf32> to vector<32xf32>
    %324 = vector.shape_cast %323 : vector<32xf32> to vector<32x1xf32>
    %cst_137 = arith.constant 3.200000e+01 : f32
    %325 = vector.broadcast %cst_137 : f32 to vector<32x1xf32>
    %326 = arith.divf %324, %325 : vector<32x1xf32>
    %327 = vector.broadcast %326 : vector<32x1xf32> to vector<32x32xf32>
    %328 = arith.subf %316, %327 : vector<32x32xf32>
    %329 = arith.mulf %328, %328 : vector<32x32xf32>
    %cst_138 = arith.constant dense<0.000000e+00> : vector<32xf32>
    %330 = vector.multi_reduction <add>, %329, %cst_138 [1] : vector<32x32xf32> to vector<32xf32>
    %331 = vector.shape_cast %330 : vector<32xf32> to vector<32x1xf32>
    %cst_139 = arith.constant 3.200000e+01 : f32
    %332 = vector.broadcast %cst_139 : f32 to vector<32x1xf32>
    %333 = arith.divf %331, %332 : vector<32x1xf32>
    %334 = vector.broadcast %326 : vector<32x1xf32> to vector<32x32xf32>
    %335 = arith.subf %316, %334 : vector<32x32xf32>
    %cst_140 = arith.constant 9.99999974E-6 : f32
    %336 = vector.broadcast %cst_140 : f32 to vector<32x1xf32>
    %337 = arith.addf %333, %336 : vector<32x1xf32>
    %338 = math.rsqrt %337 : vector<32x1xf32>
    %339 = vector.broadcast %338 : vector<32x1xf32> to vector<32x32xf32>
    %340 = arith.mulf %335, %339 : vector<32x32xf32>
    %341 = vector.broadcast %262 : vector<1x32xf32> to vector<32x32xf32>
    %342 = arith.mulf %340, %341 : vector<32x32xf32>
    %343 = vector.broadcast %264 : vector<1x32xf32> to vector<32x32xf32>
    %344 = arith.addf %342, %343 : vector<32x32xf32>
    %cst_141 = arith.constant dense<0.000000e+00> : vector<32xf32>
    %345 = vector.multi_reduction <add>, %322, %cst_141 [1] : vector<32x32xf32> to vector<32xf32>
    %346 = vector.shape_cast %345 : vector<32xf32> to vector<32x1xf32>
    %cst_142 = arith.constant 3.200000e+01 : f32
    %347 = vector.broadcast %cst_142 : f32 to vector<32x1xf32>
    %348 = arith.divf %346, %347 : vector<32x1xf32>
    %349 = vector.broadcast %348 : vector<32x1xf32> to vector<32x32xf32>
    %350 = arith.subf %322, %349 : vector<32x32xf32>
    %351 = arith.mulf %350, %350 : vector<32x32xf32>
    %cst_143 = arith.constant dense<0.000000e+00> : vector<32xf32>
    %352 = vector.multi_reduction <add>, %351, %cst_143 [1] : vector<32x32xf32> to vector<32xf32>
    %353 = vector.shape_cast %352 : vector<32xf32> to vector<32x1xf32>
    %cst_144 = arith.constant 3.200000e+01 : f32
    %354 = vector.broadcast %cst_144 : f32 to vector<32x1xf32>
    %355 = arith.divf %353, %354 : vector<32x1xf32>
    %356 = vector.broadcast %348 : vector<32x1xf32> to vector<32x32xf32>
    %357 = arith.subf %322, %356 : vector<32x32xf32>
    %cst_145 = arith.constant 9.99999974E-6 : f32
    %358 = vector.broadcast %cst_145 : f32 to vector<32x1xf32>
    %359 = arith.addf %355, %358 : vector<32x1xf32>
    %360 = math.rsqrt %359 : vector<32x1xf32>
    %361 = vector.broadcast %360 : vector<32x1xf32> to vector<32x32xf32>
    %362 = arith.mulf %357, %361 : vector<32x32xf32>
    %363 = vector.broadcast %262 : vector<1x32xf32> to vector<32x32xf32>
    %364 = arith.mulf %362, %363 : vector<32x32xf32>
    %365 = vector.broadcast %264 : vector<1x32xf32> to vector<32x32xf32>
    %366 = arith.addf %364, %365 : vector<32x32xf32>
    %367 = vector.extract_strided_slice %258 {offsets = [0, 0], sizes = [32, 32], strides = [1, 1]} : vector<64x32xf32> to vector<32x32xf32>
    %368 = arith.truncf %344 : vector<32x32xf32> to vector<32x32xbf16>
    %369 = arith.truncf %367 : vector<32x32xf32> to vector<32x32xbf16>
    %cst_146 = arith.constant dense<0.000000e+00> : vector<32x32xf32>
    %370 = tpu.matmul %368, %369, %cst_146 {dimension_numbers = #tpu.dot_dimension_numbers<[1], [0], [0], [1], [0, 0, 1, 1], [], []>} : vector<32x32xbf16>, vector<32x32xbf16>, vector<32x32xf32> -> vector<32x32xf32>
    %371 = vector.extract_strided_slice %258 {offsets = [32, 0], sizes = [32, 32], strides = [1, 1]} : vector<64x32xf32> to vector<32x32xf32>
    %372 = arith.truncf %366 : vector<32x32xf32> to vector<32x32xbf16>
    %373 = arith.truncf %371 : vector<32x32xf32> to vector<32x32xbf16>
    %cst_147 = arith.constant dense<0.000000e+00> : vector<32x32xf32>
    %374 = tpu.matmul %372, %373, %cst_147 {dimension_numbers = #tpu.dot_dimension_numbers<[1], [0], [0], [1], [0, 0, 1, 1], [], []>} : vector<32x32xbf16>, vector<32x32xbf16>, vector<32x32xf32> -> vector<32x32xf32>
    %375 = arith.addf %370, %374 : vector<32x32xf32>
    %376 = vector.broadcast %260 : vector<1x32xf32> to vector<32x32xf32>
    %377 = arith.addf %375, %376 : vector<32x32xf32>
    %378 = arith.negf %377 : vector<32x32xf32>
    %379 = math.exp %378 : vector<32x32xf32>
    %cst_148 = arith.constant 1.000000e+00 : f32
    %380 = vector.broadcast %cst_148 : f32 to vector<32x32xf32>
    %381 = arith.addf %380, %379 : vector<32x32xf32>
    %382 = arith.divf %380, %381 : vector<32x32xf32>
    %383 = arith.mulf %382, %344 : vector<32x32xf32>
    %cst_149 = arith.constant 1.000000e+00 : f32
    %384 = vector.broadcast %cst_149 : f32 to vector<32x32xf32>
    %385 = arith.subf %384, %382 : vector<32x32xf32>
    %386 = arith.mulf %385, %366 : vector<32x32xf32>
    %387 = arith.addf %383, %386 : vector<32x32xf32>
    %cst_150 = arith.constant dense<0.000000e+00> : vector<32xf32>
    %388 = vector.multi_reduction <add>, %387, %cst_150 [1] : vector<32x32xf32> to vector<32xf32>
    %389 = vector.shape_cast %388 : vector<32xf32> to vector<32x1xf32>
    %cst_151 = arith.constant 3.200000e+01 : f32
    %390 = vector.broadcast %cst_151 : f32 to vector<32x1xf32>
    %391 = arith.divf %389, %390 : vector<32x1xf32>
    %392 = vector.broadcast %391 : vector<32x1xf32> to vector<32x32xf32>
    %393 = arith.subf %387, %392 : vector<32x32xf32>
    %394 = arith.mulf %393, %393 : vector<32x32xf32>
    %cst_152 = arith.constant dense<0.000000e+00> : vector<32xf32>
    %395 = vector.multi_reduction <add>, %394, %cst_152 [1] : vector<32x32xf32> to vector<32xf32>
    %396 = vector.shape_cast %395 : vector<32xf32> to vector<32x1xf32>
    %cst_153 = arith.constant 3.200000e+01 : f32
    %397 = vector.broadcast %cst_153 : f32 to vector<32x1xf32>
    %398 = arith.divf %396, %397 : vector<32x1xf32>
    %399 = vector.broadcast %391 : vector<32x1xf32> to vector<32x32xf32>
    %400 = arith.subf %387, %399 : vector<32x32xf32>
    %cst_154 = arith.constant 9.99999974E-6 : f32
    %401 = vector.broadcast %cst_154 : f32 to vector<32x1xf32>
    %402 = arith.addf %398, %401 : vector<32x1xf32>
    %403 = math.rsqrt %402 : vector<32x1xf32>
    %404 = vector.broadcast %403 : vector<32x1xf32> to vector<32x32xf32>
    %405 = arith.mulf %400, %404 : vector<32x32xf32>
    %406 = vector.broadcast %262 : vector<1x32xf32> to vector<32x32xf32>
    %407 = arith.mulf %405, %406 : vector<32x32xf32>
    %408 = vector.broadcast %264 : vector<1x32xf32> to vector<32x32xf32>
    %409 = arith.addf %407, %408 : vector<32x32xf32>
    %410 = arith.addf %252, %409 : vector<32x32xf32>
    %c0_155 = arith.constant 0 : index
    %c0_156 = arith.constant 0 : index
    %411 = vector.load %arg3[%c0_155, %c0_156] : memref<1x32xf32, #tpu.memory_space<vmem>>, vector<1x32xf32>
    %c0_157 = arith.constant 0 : index
    %c0_158 = arith.constant 0 : index
    %412 = vector.load %arg4[%c0_157, %c0_158] : memref<1x32xf32, #tpu.memory_space<vmem>>, vector<1x32xf32>
    %cst_159 = arith.constant dense<0.000000e+00> : vector<32xf32>
    %413 = vector.multi_reduction <add>, %410, %cst_159 [1] : vector<32x32xf32> to vector<32xf32>
    %414 = vector.shape_cast %413 : vector<32xf32> to vector<32x1xf32>
    %cst_160 = arith.constant 3.200000e+01 : f32
    %415 = vector.broadcast %cst_160 : f32 to vector<32x1xf32>
    %416 = arith.divf %414, %415 : vector<32x1xf32>
    %417 = vector.broadcast %416 : vector<32x1xf32> to vector<32x32xf32>
    %418 = arith.subf %410, %417 : vector<32x32xf32>
    %419 = arith.mulf %418, %418 : vector<32x32xf32>
    %cst_161 = arith.constant dense<0.000000e+00> : vector<32xf32>
    %420 = vector.multi_reduction <add>, %419, %cst_161 [1] : vector<32x32xf32> to vector<32xf32>
    %421 = vector.shape_cast %420 : vector<32xf32> to vector<32x1xf32>
    %cst_162 = arith.constant 3.200000e+01 : f32
    %422 = vector.broadcast %cst_162 : f32 to vector<32x1xf32>
    %423 = arith.divf %421, %422 : vector<32x1xf32>
    %424 = vector.broadcast %416 : vector<32x1xf32> to vector<32x32xf32>
    %425 = arith.subf %410, %424 : vector<32x32xf32>
    %cst_163 = arith.constant 9.99999974E-6 : f32
    %426 = vector.broadcast %cst_163 : f32 to vector<32x1xf32>
    %427 = arith.addf %423, %426 : vector<32x1xf32>
    %428 = math.rsqrt %427 : vector<32x1xf32>
    %429 = vector.broadcast %428 : vector<32x1xf32> to vector<32x32xf32>
    %430 = arith.mulf %425, %429 : vector<32x32xf32>
    %431 = vector.broadcast %411 : vector<1x32xf32> to vector<32x32xf32>
    %432 = arith.mulf %430, %431 : vector<32x32xf32>
    %433 = vector.broadcast %412 : vector<1x32xf32> to vector<32x32xf32>
    %434 = arith.addf %432, %433 : vector<32x32xf32>
    %c2_164 = arith.constant 2 : index
    %c0_165 = arith.constant 0 : index
    %c0_166 = arith.constant 0 : index
    %435 = vector.load %arg5[%c2_164, %c0_165, %c0_166] : memref<3x64x32xf32, #tpu.memory_space<vmem>>, vector<1x64x32xf32>
    %436 = vector.shape_cast %435 : vector<1x64x32xf32> to vector<64x32xf32>
    %c2_167 = arith.constant 2 : index
    %c0_168 = arith.constant 0 : index
    %c0_169 = arith.constant 0 : index
    %437 = vector.load %arg6[%c2_167, %c0_168, %c0_169] : memref<3x1x32xf32, #tpu.memory_space<vmem>>, vector<1x1x32xf32>
    %438 = vector.shape_cast %437 : vector<1x1x32xf32> to vector<1x32xf32>
    %c2_170 = arith.constant 2 : index
    %c0_171 = arith.constant 0 : index
    %c0_172 = arith.constant 0 : index
    %439 = vector.load %arg7[%c2_170, %c0_171, %c0_172] : memref<3x64x32xf32, #tpu.memory_space<vmem>>, vector<1x64x32xf32>
    %440 = vector.shape_cast %439 : vector<1x64x32xf32> to vector<64x32xf32>
    %c2_173 = arith.constant 2 : index
    %c0_174 = arith.constant 0 : index
    %c0_175 = arith.constant 0 : index
    %441 = vector.load %arg8[%c2_173, %c0_174, %c0_175] : memref<3x1x32xf32, #tpu.memory_space<vmem>>, vector<1x1x32xf32>
    %442 = vector.shape_cast %441 : vector<1x1x32xf32> to vector<1x32xf32>
    %c2_176 = arith.constant 2 : index
    %c0_177 = arith.constant 0 : index
    %c0_178 = arith.constant 0 : index
    %443 = vector.load %arg9[%c2_176, %c0_177, %c0_178] : memref<3x1x32xf32, #tpu.memory_space<vmem>>, vector<1x1x32xf32>
    %444 = vector.shape_cast %443 : vector<1x1x32xf32> to vector<1x32xf32>
    %c2_179 = arith.constant 2 : index
    %c0_180 = arith.constant 0 : index
    %c0_181 = arith.constant 0 : index
    %445 = vector.load %arg10[%c2_179, %c0_180, %c0_181] : memref<3x1x32xf32, #tpu.memory_space<vmem>>, vector<1x1x32xf32>
    %446 = vector.shape_cast %445 : vector<1x1x32xf32> to vector<1x32xf32>
    %c2_182 = arith.constant 2 : index
    %c0_183 = arith.constant 0 : index
    %c0_184 = arith.constant 0 : index
    %447 = vector.load %arg11[%c2_182, %c0_183, %c0_184] : memref<3x32x32xf32, #tpu.memory_space<vmem>>, vector<1x32x32xf32>
    %448 = vector.shape_cast %447 : vector<1x32x32xf32> to vector<32x32xf32>
    %c2_185 = arith.constant 2 : index
    %c0_186 = arith.constant 0 : index
    %c0_187 = arith.constant 0 : index
    %449 = vector.load %arg12[%c2_185, %c0_186, %c0_187] : memref<3x1x32xf32, #tpu.memory_space<vmem>>, vector<1x1x32xf32>
    %450 = vector.shape_cast %449 : vector<1x1x32xf32> to vector<1x32xf32>
    %451 = vector.extract_strided_slice %436 {offsets = [0, 0], sizes = [32, 32], strides = [1, 1]} : vector<64x32xf32> to vector<32x32xf32>
    %452 = arith.truncf %434 : vector<32x32xf32> to vector<32x32xbf16>
    %453 = arith.truncf %451 : vector<32x32xf32> to vector<32x32xbf16>
    %cst_188 = arith.constant dense<0.000000e+00> : vector<32x32xf32>
    %454 = tpu.matmul %452, %453, %cst_188 {dimension_numbers = #tpu.dot_dimension_numbers<[1], [0], [0], [1], [0, 0, 1, 1], [], []>} : vector<32x32xbf16>, vector<32x32xbf16>, vector<32x32xf32> -> vector<32x32xf32>
    %455 = vector.extract_strided_slice %436 {offsets = [32, 0], sizes = [32, 32], strides = [1, 1]} : vector<64x32xf32> to vector<32x32xf32>
    %456 = arith.truncf %20 : vector<32x32xf32> to vector<32x32xbf16>
    %457 = arith.truncf %455 : vector<32x32xf32> to vector<32x32xbf16>
    %cst_189 = arith.constant dense<0.000000e+00> : vector<32x32xf32>
    %458 = tpu.matmul %456, %457, %cst_189 {dimension_numbers = #tpu.dot_dimension_numbers<[1], [0], [0], [1], [0, 0, 1, 1], [], []>} : vector<32x32xbf16>, vector<32x32xbf16>, vector<32x32xf32> -> vector<32x32xf32>
    %459 = arith.addf %454, %458 : vector<32x32xf32>
    %460 = vector.broadcast %438 : vector<1x32xf32> to vector<32x32xf32>
    %461 = arith.addf %459, %460 : vector<32x32xf32>
    %462 = arith.negf %461 : vector<32x32xf32>
    %463 = math.exp %462 : vector<32x32xf32>
    %cst_190 = arith.constant 1.000000e+00 : f32
    %464 = vector.broadcast %cst_190 : f32 to vector<32x32xf32>
    %465 = arith.addf %464, %463 : vector<32x32xf32>
    %466 = arith.divf %464, %465 : vector<32x32xf32>
    %467 = arith.mulf %466, %434 : vector<32x32xf32>
    %cst_191 = arith.constant 1.000000e+00 : f32
    %468 = vector.broadcast %cst_191 : f32 to vector<32x32xf32>
    %469 = arith.subf %468, %466 : vector<32x32xf32>
    %470 = arith.mulf %469, %20 : vector<32x32xf32>
    %471 = arith.addf %467, %470 : vector<32x32xf32>
    %472 = vector.extract_strided_slice %440 {offsets = [0, 0], sizes = [32, 32], strides = [1, 1]} : vector<64x32xf32> to vector<32x32xf32>
    %473 = arith.truncf %434 : vector<32x32xf32> to vector<32x32xbf16>
    %474 = arith.truncf %472 : vector<32x32xf32> to vector<32x32xbf16>
    %cst_192 = arith.constant dense<0.000000e+00> : vector<32x32xf32>
    %475 = tpu.matmul %473, %474, %cst_192 {dimension_numbers = #tpu.dot_dimension_numbers<[1], [0], [0], [1], [0, 0, 1, 1], [], []>} : vector<32x32xbf16>, vector<32x32xbf16>, vector<32x32xf32> -> vector<32x32xf32>
    %476 = vector.extract_strided_slice %440 {offsets = [32, 0], sizes = [32, 32], strides = [1, 1]} : vector<64x32xf32> to vector<32x32xf32>
    %477 = arith.truncf %23 : vector<32x32xf32> to vector<32x32xbf16>
    %478 = arith.truncf %476 : vector<32x32xf32> to vector<32x32xbf16>
    %cst_193 = arith.constant dense<0.000000e+00> : vector<32x32xf32>
    %479 = tpu.matmul %477, %478, %cst_193 {dimension_numbers = #tpu.dot_dimension_numbers<[1], [0], [0], [1], [0, 0, 1, 1], [], []>} : vector<32x32xbf16>, vector<32x32xbf16>, vector<32x32xf32> -> vector<32x32xf32>
    %480 = arith.addf %475, %479 : vector<32x32xf32>
    %481 = vector.broadcast %442 : vector<1x32xf32> to vector<32x32xf32>
    %482 = arith.addf %480, %481 : vector<32x32xf32>
    %483 = arith.negf %482 : vector<32x32xf32>
    %484 = math.exp %483 : vector<32x32xf32>
    %cst_194 = arith.constant 1.000000e+00 : f32
    %485 = vector.broadcast %cst_194 : f32 to vector<32x32xf32>
    %486 = arith.addf %485, %484 : vector<32x32xf32>
    %487 = arith.divf %485, %486 : vector<32x32xf32>
    %488 = arith.mulf %487, %434 : vector<32x32xf32>
    %cst_195 = arith.constant 1.000000e+00 : f32
    %489 = vector.broadcast %cst_195 : f32 to vector<32x32xf32>
    %490 = arith.subf %489, %487 : vector<32x32xf32>
    %491 = arith.mulf %490, %23 : vector<32x32xf32>
    %492 = arith.addf %488, %491 : vector<32x32xf32>
    %493 = arith.truncf %471 : vector<32x32xf32> to vector<32x32xbf16>
    %494 = arith.truncf %448 : vector<32x32xf32> to vector<32x32xbf16>
    %cst_196 = arith.constant dense<0.000000e+00> : vector<32x32xf32>
    %495 = tpu.matmul %493, %494, %cst_196 {dimension_numbers = #tpu.dot_dimension_numbers<[1], [0], [0], [1], [0, 0, 1, 1], [], []>} : vector<32x32xbf16>, vector<32x32xbf16>, vector<32x32xf32> -> vector<32x32xf32>
    %496 = arith.addf %471, %495 : vector<32x32xf32>
    %497 = vector.broadcast %450 : vector<1x32xf32> to vector<32x32xf32>
    %498 = arith.addf %496, %497 : vector<32x32xf32>
    %499 = arith.truncf %492 : vector<32x32xf32> to vector<32x32xbf16>
    %500 = arith.truncf %448 : vector<32x32xf32> to vector<32x32xbf16>
    %cst_197 = arith.constant dense<0.000000e+00> : vector<32x32xf32>
    %501 = tpu.matmul %499, %500, %cst_197 {dimension_numbers = #tpu.dot_dimension_numbers<[1], [0], [0], [1], [0, 0, 1, 1], [], []>} : vector<32x32xbf16>, vector<32x32xbf16>, vector<32x32xf32> -> vector<32x32xf32>
    %502 = arith.addf %492, %501 : vector<32x32xf32>
    %503 = vector.broadcast %450 : vector<1x32xf32> to vector<32x32xf32>
    %504 = arith.addf %502, %503 : vector<32x32xf32>
    %cst_198 = arith.constant dense<0.000000e+00> : vector<32xf32>
    %505 = vector.multi_reduction <add>, %498, %cst_198 [1] : vector<32x32xf32> to vector<32xf32>
    %506 = vector.shape_cast %505 : vector<32xf32> to vector<32x1xf32>
    %cst_199 = arith.constant 3.200000e+01 : f32
    %507 = vector.broadcast %cst_199 : f32 to vector<32x1xf32>
    %508 = arith.divf %506, %507 : vector<32x1xf32>
    %509 = vector.broadcast %508 : vector<32x1xf32> to vector<32x32xf32>
    %510 = arith.subf %498, %509 : vector<32x32xf32>
    %511 = arith.mulf %510, %510 : vector<32x32xf32>
    %cst_200 = arith.constant dense<0.000000e+00> : vector<32xf32>
    %512 = vector.multi_reduction <add>, %511, %cst_200 [1] : vector<32x32xf32> to vector<32xf32>
    %513 = vector.shape_cast %512 : vector<32xf32> to vector<32x1xf32>
    %cst_201 = arith.constant 3.200000e+01 : f32
    %514 = vector.broadcast %cst_201 : f32 to vector<32x1xf32>
    %515 = arith.divf %513, %514 : vector<32x1xf32>
    %516 = vector.broadcast %508 : vector<32x1xf32> to vector<32x32xf32>
    %517 = arith.subf %498, %516 : vector<32x32xf32>
    %cst_202 = arith.constant 9.99999974E-6 : f32
    %518 = vector.broadcast %cst_202 : f32 to vector<32x1xf32>
    %519 = arith.addf %515, %518 : vector<32x1xf32>
    %520 = math.rsqrt %519 : vector<32x1xf32>
    %521 = vector.broadcast %520 : vector<32x1xf32> to vector<32x32xf32>
    %522 = arith.mulf %517, %521 : vector<32x32xf32>
    %523 = vector.broadcast %444 : vector<1x32xf32> to vector<32x32xf32>
    %524 = arith.mulf %522, %523 : vector<32x32xf32>
    %525 = vector.broadcast %446 : vector<1x32xf32> to vector<32x32xf32>
    %526 = arith.addf %524, %525 : vector<32x32xf32>
    %cst_203 = arith.constant dense<0.000000e+00> : vector<32xf32>
    %527 = vector.multi_reduction <add>, %504, %cst_203 [1] : vector<32x32xf32> to vector<32xf32>
    %528 = vector.shape_cast %527 : vector<32xf32> to vector<32x1xf32>
    %cst_204 = arith.constant 3.200000e+01 : f32
    %529 = vector.broadcast %cst_204 : f32 to vector<32x1xf32>
    %530 = arith.divf %528, %529 : vector<32x1xf32>
    %531 = vector.broadcast %530 : vector<32x1xf32> to vector<32x32xf32>
    %532 = arith.subf %504, %531 : vector<32x32xf32>
    %533 = arith.mulf %532, %532 : vector<32x32xf32>
    %cst_205 = arith.constant dense<0.000000e+00> : vector<32xf32>
    %534 = vector.multi_reduction <add>, %533, %cst_205 [1] : vector<32x32xf32> to vector<32xf32>
    %535 = vector.shape_cast %534 : vector<32xf32> to vector<32x1xf32>
    %cst_206 = arith.constant 3.200000e+01 : f32
    %536 = vector.broadcast %cst_206 : f32 to vector<32x1xf32>
    %537 = arith.divf %535, %536 : vector<32x1xf32>
    %538 = vector.broadcast %530 : vector<32x1xf32> to vector<32x32xf32>
    %539 = arith.subf %504, %538 : vector<32x32xf32>
    %cst_207 = arith.constant 9.99999974E-6 : f32
    %540 = vector.broadcast %cst_207 : f32 to vector<32x1xf32>
    %541 = arith.addf %537, %540 : vector<32x1xf32>
    %542 = math.rsqrt %541 : vector<32x1xf32>
    %543 = vector.broadcast %542 : vector<32x1xf32> to vector<32x32xf32>
    %544 = arith.mulf %539, %543 : vector<32x32xf32>
    %545 = vector.broadcast %444 : vector<1x32xf32> to vector<32x32xf32>
    %546 = arith.mulf %544, %545 : vector<32x32xf32>
    %547 = vector.broadcast %446 : vector<1x32xf32> to vector<32x32xf32>
    %548 = arith.addf %546, %547 : vector<32x32xf32>
    %549 = vector.extract_strided_slice %440 {offsets = [0, 0], sizes = [32, 32], strides = [1, 1]} : vector<64x32xf32> to vector<32x32xf32>
    %550 = arith.truncf %526 : vector<32x32xf32> to vector<32x32xbf16>
    %551 = arith.truncf %549 : vector<32x32xf32> to vector<32x32xbf16>
    %cst_208 = arith.constant dense<0.000000e+00> : vector<32x32xf32>
    %552 = tpu.matmul %550, %551, %cst_208 {dimension_numbers = #tpu.dot_dimension_numbers<[1], [0], [0], [1], [0, 0, 1, 1], [], []>} : vector<32x32xbf16>, vector<32x32xbf16>, vector<32x32xf32> -> vector<32x32xf32>
    %553 = vector.extract_strided_slice %440 {offsets = [32, 0], sizes = [32, 32], strides = [1, 1]} : vector<64x32xf32> to vector<32x32xf32>
    %554 = arith.truncf %548 : vector<32x32xf32> to vector<32x32xbf16>
    %555 = arith.truncf %553 : vector<32x32xf32> to vector<32x32xbf16>
    %cst_209 = arith.constant dense<0.000000e+00> : vector<32x32xf32>
    %556 = tpu.matmul %554, %555, %cst_209 {dimension_numbers = #tpu.dot_dimension_numbers<[1], [0], [0], [1], [0, 0, 1, 1], [], []>} : vector<32x32xbf16>, vector<32x32xbf16>, vector<32x32xf32> -> vector<32x32xf32>
    %557 = arith.addf %552, %556 : vector<32x32xf32>
    %558 = vector.broadcast %442 : vector<1x32xf32> to vector<32x32xf32>
    %559 = arith.addf %557, %558 : vector<32x32xf32>
    %560 = arith.negf %559 : vector<32x32xf32>
    %561 = math.exp %560 : vector<32x32xf32>
    %cst_210 = arith.constant 1.000000e+00 : f32
    %562 = vector.broadcast %cst_210 : f32 to vector<32x32xf32>
    %563 = arith.addf %562, %561 : vector<32x32xf32>
    %564 = arith.divf %562, %563 : vector<32x32xf32>
    %565 = arith.mulf %564, %526 : vector<32x32xf32>
    %cst_211 = arith.constant 1.000000e+00 : f32
    %566 = vector.broadcast %cst_211 : f32 to vector<32x32xf32>
    %567 = arith.subf %566, %564 : vector<32x32xf32>
    %568 = arith.mulf %567, %548 : vector<32x32xf32>
    %569 = arith.addf %565, %568 : vector<32x32xf32>
    %cst_212 = arith.constant dense<0.000000e+00> : vector<32xf32>
    %570 = vector.multi_reduction <add>, %569, %cst_212 [1] : vector<32x32xf32> to vector<32xf32>
    %571 = vector.shape_cast %570 : vector<32xf32> to vector<32x1xf32>
    %cst_213 = arith.constant 3.200000e+01 : f32
    %572 = vector.broadcast %cst_213 : f32 to vector<32x1xf32>
    %573 = arith.divf %571, %572 : vector<32x1xf32>
    %574 = vector.broadcast %573 : vector<32x1xf32> to vector<32x32xf32>
    %575 = arith.subf %569, %574 : vector<32x32xf32>
    %576 = arith.mulf %575, %575 : vector<32x32xf32>
    %cst_214 = arith.constant dense<0.000000e+00> : vector<32xf32>
    %577 = vector.multi_reduction <add>, %576, %cst_214 [1] : vector<32x32xf32> to vector<32xf32>
    %578 = vector.shape_cast %577 : vector<32xf32> to vector<32x1xf32>
    %cst_215 = arith.constant 3.200000e+01 : f32
    %579 = vector.broadcast %cst_215 : f32 to vector<32x1xf32>
    %580 = arith.divf %578, %579 : vector<32x1xf32>
    %581 = vector.broadcast %573 : vector<32x1xf32> to vector<32x32xf32>
    %582 = arith.subf %569, %581 : vector<32x32xf32>
    %cst_216 = arith.constant 9.99999974E-6 : f32
    %583 = vector.broadcast %cst_216 : f32 to vector<32x1xf32>
    %584 = arith.addf %580, %583 : vector<32x1xf32>
    %585 = math.rsqrt %584 : vector<32x1xf32>
    %586 = vector.broadcast %585 : vector<32x1xf32> to vector<32x32xf32>
    %587 = arith.mulf %582, %586 : vector<32x32xf32>
    %588 = vector.broadcast %444 : vector<1x32xf32> to vector<32x32xf32>
    %589 = arith.mulf %587, %588 : vector<32x32xf32>
    %590 = vector.broadcast %446 : vector<1x32xf32> to vector<32x32xf32>
    %591 = arith.addf %589, %590 : vector<32x32xf32>
    %592 = arith.addf %434, %591 : vector<32x32xf32>
    %593 = tpu.concatenate %592, %2, %5, %8, %11 in 0 : vector<32x32xf32>, vector<32x32xf32>, vector<32x32xf32>, vector<32x32xf32>, vector<32x32xf32> -> vector<160x32xf32>
    %594 = vector.shape_cast %593 : vector<160x32xf32> to vector<10x16x32xf32>
    %c0_217 = arith.constant 0 : index
    %c0_218 = arith.constant 0 : index
    %595 = vector.load %arg13[%c0_217, %c0_218] : memref<1x32xf32, #tpu.memory_space<vmem>>, vector<1x32xf32>
    %596 = vector.shape_cast %595 : vector<1x32xf32> to vector<1x1x32xf32>
    %597 = vector.broadcast %596 : vector<1x1x32xf32> to vector<10x16x32xf32>
    %598 = arith.mulf %594, %597 : vector<10x16x32xf32>
    %cst_219 = arith.constant dense<0.000000e+00> : vector<10x16xf32>
    %599 = vector.multi_reduction <add>, %598, %cst_219 [2] : vector<10x16x32xf32> to vector<10x16xf32>
    %c0_220 = arith.constant 0 : index
    %c0_221 = arith.constant 0 : index
    %600 = vector.load %arg14[%c0_220, %c0_221] : memref<1x1xf32, #tpu.memory_space<vmem>>, vector<1x1xf32>
    %601 = vector.broadcast %600 : vector<1x1xf32> to vector<10x16xf32>
    %602 = arith.addf %599, %601 : vector<10x16xf32>
    %cst_222 = arith.constant dense<0xFF800000> : vector<10xf32>
    %603 = vector.multi_reduction <maximumf>, %602, %cst_222 [1] : vector<10x16xf32> to vector<10xf32>
    %604 = vector.shape_cast %603 : vector<10xf32> to vector<10x1xf32>
    %605 = vector.broadcast %604 : vector<10x1xf32> to vector<10x16xf32>
    %606 = arith.subf %602, %605 : vector<10x16xf32>
    %607 = math.exp %606 : vector<10x16xf32>
    %cst_223 = arith.constant dense<0.000000e+00> : vector<10xf32>
    %608 = vector.multi_reduction <add>, %607, %cst_223 [1] : vector<10x16xf32> to vector<10xf32>
    %609 = vector.shape_cast %608 : vector<10xf32> to vector<10x1xf32>
    %610 = tpu.reciprocal %609 {approx = true} : vector<10x1xf32> -> vector<10x1xf32>
    %611 = vector.broadcast %610 : vector<10x1xf32> to vector<10x16xf32>
    %612 = arith.mulf %607, %611 : vector<10x16xf32>
    %613 = vector.shape_cast %612 : vector<10x16xf32> to vector<10x16x1xf32>
    %614 = vector.broadcast %613 : vector<10x16x1xf32> to vector<10x16x32xf32>
    %615 = arith.mulf %614, %594 : vector<10x16x32xf32>
    %cst_224 = arith.constant dense<0.000000e+00> : vector<10x32xf32>
    %616 = vector.multi_reduction <add>, %615, %cst_224 [1] : vector<10x16x32xf32> to vector<10x32xf32>
    %c0_225 = arith.constant 0 : index
    %c0_226 = arith.constant 0 : index
    %617 = vector.load %arg15[%c0_225, %c0_226] : memref<32x10xf32, #tpu.memory_space<vmem>>, vector<32x10xf32>
    %618 = arith.truncf %616 : vector<10x32xf32> to vector<10x32xbf16>
    %619 = arith.truncf %617 : vector<32x10xf32> to vector<32x10xbf16>
    %cst_227 = arith.constant dense<0.000000e+00> : vector<10x10xf32>
    %620 = tpu.matmul %618, %619, %cst_227 {dimension_numbers = #tpu.dot_dimension_numbers<[1], [0], [0], [1], [0, 0, 1, 1], [], []>} : vector<10x32xbf16>, vector<32x10xbf16>, vector<10x10xf32> -> vector<10x10xf32>
    %c0_228 = arith.constant 0 : index
    %c0_229 = arith.constant 0 : index
    %621 = vector.load %arg16[%c0_228, %c0_229] : memref<1x10xf32, #tpu.memory_space<vmem>>, vector<1x10xf32>
    %622 = vector.broadcast %621 : vector<1x10xf32> to vector<10x10xf32>
    %623 = arith.addf %620, %622 : vector<10x10xf32>
    %624 = vector.shape_cast %623 : vector<10x10xf32> to vector<5x2x10xf32>
    %c0_230 = arith.constant 0 : index
    %c0_231 = arith.constant 0 : index
    %c0_232 = arith.constant 0 : index
    %625 = vector.load %arg17[%c0_230, %c0_231, %c0_232] : memref<5x2x10xf32, #tpu.memory_space<vmem>>, vector<5x2x10xf32>
    tpu.vector_store %arg17[%c0_230, %c0_231, %c0_232], %624 {strides = array<i32>} : memref<5x2x10xf32, #tpu.memory_space<vmem>>, vector<5x2x10xf32>,
    return
  }
}

</mosaic_0001>

<llo_original>
// kernel: transformer_classifier_fwd.12
$region0: #{transformer_classifier_fwd.12}
  #allocation0 [shape = 'u32[]', space=smem, size = 0x4, offset = 0x4, fixed_abs, tag = 'smem constant byte address 0x4 - core index']
  #allocation1 [shape = 'u32[72,128]{1,0:T(1,128)}', space=vmem, size = 0x9000, scoped, tag = 'internal scratch']
  %s0 = inlined_call_operand.vmem [shape: f32[2,2,16,32], index: 0, kind: input, shape index: {}]
  %s1 = inlined_call_operand.vmem [shape: f32[2,32,64], index: 1, kind: input, shape index: {}]
  %s2 = inlined_call_operand.vmem [shape: f32[64,32], index: 2, kind: input, shape index: {}]
  %s3 = inlined_call_operand.vmem [shape: f32[1,32], index: 3, kind: input, shape index: {}]
  %s4 = inlined_call_operand.vmem [shape: f32[2,2,16,32], index: 4, kind: output, shape index: {}]
  %s5 = sld [smem:[#allocation0]]
  $region26: #{transformer_classifier_fwd.12} parent=0
    _
  %s7 = ssub.s32 1, %s5
  %s8 = scalar_select 0, %s7, %s5
  // Predicated region
  $region2: #{transformer_classifier_fwd.12} parent=0 // pred_check
    _
  $region3: #{transformer_classifier_fwd.12} parent=0 // pred_check_branch
    %10 = sbr.rel (0) target = $region5
  $region4: #{transformer_classifier_fwd.12} parent=0 // pred_region
    _
  $region5: #{transformer_classifier_fwd.12} parent=0 // pred_fallthru
    _
  // Predicated region
  $region6: #{transformer_classifier_fwd.12} parent=0 // pred_check
    _
  $region7: #{transformer_classifier_fwd.12} parent=0 // pred_check_branch
    %12 = sbr.rel (0) target = $region9
  $region8: #{transformer_classifier_fwd.12} parent=0 // pred_region
    _
  $region9: #{transformer_classifier_fwd.12} parent=0 // pred_fallthru
    _
  // Predicated region
  $region10: #{transformer_classifier_fwd.12} parent=0 // pred_check
    _
  $region11: #{transformer_classifier_fwd.12} parent=0 // pred_check_branch
    %14 = sbr.rel (0) target = $region13
  $region12: #{transformer_classifier_fwd.12} parent=0 // pred_region
    _
  $region13: #{transformer_classifier_fwd.12} parent=0 // pred_fallthru
    _
  // Predicated region
  $region14: #{transformer_classifier_fwd.12} parent=0 // pred_check
    _
  $region15: #{transformer_classifier_fwd.12} parent=0 // pred_check_branch
    %16 = sbr.rel (0) target = $region17
  $region16: #{transformer_classifier_fwd.12} parent=0 // pred_region
    _
  $region17: #{transformer_classifier_fwd.12} parent=0 // pred_fallthru
    _
  %v18 = vld [vmem:[%s0] sm:$0xff]
  %v19 = vld [vmem:[%s0 + $0x8] sm:$0xff]
  %v20 = vld [vmem:[%s0 + $0x10] sm:$0xff]
  %v21 = vld [vmem:[%s0 + $0x18] sm:$0xff]
  %v22 = vld [vmem:[%s0 + $0x20] sm:$0xff]
  %v23 = vld [vmem:[%s0 + $0x28] sm:$0xff]
  %v24 = vld [vmem:[%s0 + $0x30] sm:$0xff]
  %v25 = vld [vmem:[%s0 + $0x38] sm:$0xff]
  %v26 = vld [vmem:[%s1] sm:$0xff]
  %v27 = vld [vmem:[%s1 + $0x8] sm:$0xff]
  %v28 = vld [vmem:[%s1 + $0x10] sm:$0xff]
  %v29 = vld [vmem:[%s1 + $0x18] sm:$0xff]
  %v30 = vld [vmem:[%s1 + $0x20] sm:$0xff]
  %v31 = vld [vmem:[%s1 + $0x28] sm:$0xff]
  %v32 = vld [vmem:[%s1 + $0x30] sm:$0xff]
  %v33 = vld [vmem:[%s1 + $0x38] sm:$0xff]
  %v34 = vld [vmem:[%s2] sm:$0xff]
  %v35 = vld [vmem:[%s2 + $0x8] sm:$0xff]
  %v36 = vld [vmem:[%s2 + $0x10] sm:$0xff]
  %v37 = vld [vmem:[%s2 + $0x18] sm:$0xff]
  %v38 = vld [vmem:[%s2 + $0x20] sm:$0xff]
  %v39 = vld [vmem:[%s2 + $0x28] sm:$0xff]
  %v40 = vld [vmem:[%s2 + $0x30] sm:$0xff]
  %v41 = vld [vmem:[%s2 + $0x38] sm:$0xff]
  %v42 = vpack.c.bf16 %v27, %v26
  %v43 = vpack.c.bf16 %v29, %v28
  %v44 = vpack.c.bf16 %v31, %v30
  %v45 = vpack.c.bf16 %v33, %v32
  %v46 = vpack.c.bf16 %v35, %v34
  %v47 = vpack.c.bf16 %v37, %v36
  %v48 = vpack.c.bf16 %v39, %v38
  %v49 = vpack.c.bf16 %v41, %v40
  %vm50 = vcmask 523264
  %v52 = vsel %vm50, %v42, 0
  %v55 = vsel %vm50, %v43, 0
  %v58 = vsel %vm50, %v44, 0
  %v61 = vsel %vm50, %v45, 0
  %63 = vmatpush.bf16.msra.mxu0 0
  %64 = vmatpush.bf16.msra.mxu0 0
  %65 = vmatpush.bf16.msra.mxu0 0
  %66 = vmatpush.bf16.msra.mxu0 0
  %67 = vmatpush.bf16.msra.mxu0 %v49
  %68 = vmatpush.bf16.msra.mxu0 %v48
  %69 = vmatpush.bf16.msra.mxu0 %v47
  %70 = vmatpush.bf16.msra.mxu0 %v46
  %71 = vmatmul.bf16.gmra.mxu0 %v52
  %v72 = vpop.f32.mrf.mxu0
  %v73 = vadd.f32 0.0, %v72
  %v74 = vpop.f32.mrf.mxu0
  %v75 = vadd.f32 0.0, %v74
  %76 = vmatmul.bf16.gmra.mxu0 %v55
  %v77 = vpop.f32.mrf.mxu0
  %v78 = vadd.f32 0.0, %v77
  %v79 = vpop.f32.mrf.mxu0
  %v80 = vadd.f32 0.0, %v79
  %81 = vmatmul.bf16.gmra.mxu0 %v58
  %v82 = vpop.f32.mrf.mxu0
  %v83 = vadd.f32 0.0, %v82
  %v84 = vpop.f32.mrf.mxu0
  %v85 = vadd.f32 0.0, %v84
  %86 = vmatmul.bf16.gmra.mxu0 %v61
  %v87 = vpop.f32.mrf.mxu0
  %v88 = vadd.f32 0.0, %v87
  %v89 = vpop.f32.mrf.mxu0
  %v90 = vadd.f32 0.0, %v89
  %91 = vdwg.mxu0
  %v92 = vadd.f32 %v18, %v73
  %v93 = vadd.f32 %v19, %v75
  %v94 = vadd.f32 %v20, %v78
  %v95 = vadd.f32 %v21, %v80
  %v96 = vadd.f32 %v22, %v83
  %v97 = vadd.f32 %v23, %v85
  %v98 = vadd.f32 %v24, %v88
  %v99 = vadd.f32 %v25, %v90
  %v100 = vld [vmem:[%s3] sm:$0x1]
  %v102 = vperm.slane %v100, 0
  %v104 = vadd.f32 %v92, %v102
  %v105 = vadd.f32 %v93, %v102
  %v106 = vadd.f32 %v94, %v102
  %v107 = vadd.f32 %v95, %v102
  %v108 = vadd.f32 %v96, %v102
  %v109 = vadd.f32 %v97, %v102
  %v110 = vadd.f32 %v98, %v102
  %v111 = vadd.f32 %v99, %v102
  %vm112 = vcmask 261120
  %113 = vst.msk [vmem:[%s4] sm:$0xff] %vm112, %v104
  %114 = vst.msk [vmem:[%s4 + $0x8] sm:$0xff] %vm112, %v105
  %115 = vst.msk [vmem:[%s4 + $0x10] sm:$0xff] %vm112, %v106
  %116 = vst.msk [vmem:[%s4 + $0x18] sm:$0xff] %vm112, %v107
  %117 = vst.msk [vmem:[%s4 + $0x20] sm:$0xff] %vm112, %v108
  %118 = vst.msk [vmem:[%s4 + $0x28] sm:$0xff] %vm112, %v109
  %119 = vst.msk [vmem:[%s4 + $0x30] sm:$0xff] %vm112, %v110
  %120 = vst.msk [vmem:[%s4 + $0x38] sm:$0xff] %vm112, %v111
  // Predicated region
  $region18: #{transformer_classifier_fwd.12} parent=0 // pred_check
    _
  $region19: #{transformer_classifier_fwd.12} parent=0 // pred_check_branch
    %122 = sbr.rel (0) target = $region21
  $region20: #{transformer_classifier_fwd.12} parent=0 // pred_region
    _
  $region21: #{transformer_classifier_fwd.12} parent=0 // pred_fallthru
    _
  // Predicated region
  $region22: #{transformer_classifier_fwd.12} parent=0 // pred_check
    _
  $region23: #{transformer_classifier_fwd.12} parent=0 // pred_check_branch
    %124 = sbr.rel (0) target = $region25
  $region24: #{transformer_classifier_fwd.12} parent=0 // pred_region
    _
  $region25: #{transformer_classifier_fwd.12} parent=0 // pred_fallthru
    _

// kernel: transformer_classifier_fwd.10
$region0: #{transformer_classifier_fwd.10}
  #allocation0 [shape = 'u32[]', space=smem, size = 0x4, offset = 0x4, fixed_abs, tag = 'smem constant byte address 0x4 - core index']
  #allocation1 [shape = 'u32[72,128]{1,0:T(1,128)}', space=vmem, size = 0x9000, scoped, tag = 'internal scratch']
  #allocation2 [shape = 'f32[1,1]{1,0:T(1,128)S(1)}', space=vmem, size = 0x200, scoped, tag = 'scoped memory for transformer_classifier_fwd.10']
  %s0 = inlined_call_operand.vmem [shape: f32[2,2,16,32], index: 0, kind: input, shape index: {}]
  %s1 = inlined_call_operand.vmem [shape: f32[1,32], index: 1, kind: input, shape index: {}]
  %s2 = inlined_call_operand.vmem [shape: f32[1,32], index: 2, kind: input, shape index: {}]
  %s3 = inlined_call_operand.vmem [shape: f32[32,128], index: 3, kind: input, shape index: {}]
  %s4 = inlined_call_operand.vmem [shape: f32[32,2], index: 4, kind: input, shape index: {}]
  %s5 = inlined_call_operand.vmem [shape: f32[2,32], index: 5, kind: input, shape index: {}]
  %s6 = inlined_call_operand.vmem [shape: f32[16,16], index: 6, kind: input, shape index: {}]
  %s7 = inlined_call_operand.vmem [shape: f32[16,16], index: 7, kind: input, shape index: {}]
  %s8 = inlined_call_operand.<no memory space> [shape: f32[1,1], index: 8, kind: input, shape index: {}]
  %s9 = inlined_call_operand.vmem [shape: f32[32,32], index: 9, kind: input, shape index: {}]
  %s10 = inlined_call_operand.vmem [shape: f32[1,32], index: 10, kind: input, shape index: {}]
  %s11 = inlined_call_operand.vmem [shape: f32[1,32], index: 11, kind: input, shape index: {}]
  %s12 = inlined_call_operand.vmem [shape: f32[1,32], index: 12, kind: input, shape index: {}]
  %s13 = inlined_call_operand.vmem [shape: f32[32,64], index: 13, kind: input, shape index: {}]
  %s14 = inlined_call_operand.vmem [shape: f32[1,64], index: 14, kind: input, shape index: {}]
  %s15 = inlined_call_operand.vmem [shape: f32[4,2,16,32], index: 15, kind: output, shape index: {0}]
  %s16 = inlined_call_operand.vmem [shape: f32[4,32,64], index: 16, kind: output, shape index: {1}]
  %17 = xla_tuple %s15, %s16
  %s18 = sld [smem:[#allocation0]]
  $region78: #{transformer_classifier_fwd.10} parent=0
    _
  %s20 = ssub.s32 1, %s18
  %s21 = scalar_select 0, %s20, %s18
  %v22 = vstv %s8
  %23 = vst [vmem:[#allocation2] sm:$0x1] %v22
  // Predicated region
  $region2: #{transformer_classifier_fwd.10} parent=0 // pred_check
    _
  $region3: #{transformer_classifier_fwd.10} parent=0 // pred_check_branch
    %25 = sbr.rel (0) target = $region5
  $region4: #{transformer_classifier_fwd.10} parent=0 // pred_region
    _
  $region5: #{transformer_classifier_fwd.10} parent=0 // pred_fallthru
    _
  // Predicated region
  $region6: #{transformer_classifier_fwd.10} parent=0 // pred_check
    _
  $region7: #{transformer_classifier_fwd.10} parent=0 // pred_check_branch
    %27 = sbr.rel (0) target = $region9
  $region8: #{transformer_classifier_fwd.10} parent=0 // pred_region
    _
  $region9: #{transformer_classifier_fwd.10} parent=0 // pred_fallthru
    _
  // Predicated region
  $region10: #{transformer_classifier_fwd.10} parent=0 // pred_check
    _
  $region11: #{transformer_classifier_fwd.10} parent=0 // pred_check_branch
    %29 = sbr.rel (0) target = $region13
  $region12: #{transformer_classifier_fwd.10} parent=0 // pred_region
    _
  $region13: #{transformer_classifier_fwd.10} parent=0 // pred_fallthru
    _
  // Predicated region
  $region14: #{transformer_classifier_fwd.10} parent=0 // pred_check
    _
  $region15: #{transformer_classifier_fwd.10} parent=0 // pred_check_branch
    %31 = sbr.rel (0) target = $region17
  $region16: #{transformer_classifier_fwd.10} parent=0 // pred_region
    _
  $region17: #{transformer_classifier_fwd.10} parent=0 // pred_fallthru
    _
  // Predicated region
  $region18: #{transformer_classifier_fwd.10} parent=0 // pred_check
    _
  $region19: #{transformer_classifier_fwd.10} parent=0 // pred_check_branch
    %33 = sbr.rel (0) target = $region21
  $region20: #{transformer_classifier_fwd.10} parent=0 // pred_region
    _
  $region21: #{transformer_classifier_fwd.10} parent=0 // pred_fallthru
    _
  // Predicated region
  $region22: #{transformer_classifier_fwd.10} parent=0 // pred_check
    _
  $region23: #{transformer_classifier_fwd.10} parent=0 // pred_check_branch
    %35 = sbr.rel (0) target = $region25
  $region24: #{transformer_classifier_fwd.10} parent=0 // pred_region
    _
  $region25: #{transformer_classifier_fwd.10} parent=0 // pred_fallthru
    _
  // Predicated region
  $region26: #{transformer_classifier_fwd.10} parent=0 // pred_check
    _
  $region27: #{transformer_classifier_fwd.10} parent=0 // pred_check_branch
    %37 = sbr.rel (0) target = $region29
  $region28: #{transformer_classifier_fwd.10} parent=0 // pred_region
    _
  $region29: #{transformer_classifier_fwd.10} parent=0 // pred_fallthru
    _
  // Predicated region
  $region30: #{transformer_classifier_fwd.10} parent=0 // pred_check
    _
  $region31: #{transformer_classifier_fwd.10} parent=0 // pred_check_branch
    %39 = sbr.rel (0) target = $region33
  $region32: #{transformer_classifier_fwd.10} parent=0 // pred_region
    _
  $region33: #{transformer_classifier_fwd.10} parent=0 // pred_fallthru
    _
  // Predicated region
  $region34: #{transformer_classifier_fwd.10} parent=0 // pred_check
    _
  $region35: #{transformer_classifier_fwd.10} parent=0 // pred_check_branch
    %41 = sbr.rel (0) target = $region37
  $region36: #{transformer_classifier_fwd.10} parent=0 // pred_region
    _
  $region37: #{transformer_classifier_fwd.10} parent=0 // pred_fallthru
    _
  // Predicated region
  $region38: #{transformer_classifier_fwd.10} parent=0 // pred_check
    _
  $region39: #{transformer_classifier_fwd.10} parent=0 // pred_check_branch
    %43 = sbr.rel (0) target = $region41
  $region40: #{transformer_classifier_fwd.10} parent=0 // pred_region
    _
  $region41: #{transformer_classifier_fwd.10} parent=0 // pred_fallthru
    _
  // Predicated region
  $region42: #{transformer_classifier_fwd.10} parent=0 // pred_check
    _
  $region43: #{transformer_classifier_fwd.10} parent=0 // pred_check_branch
    %45 = sbr.rel (0) target = $region45
  $region44: #{transformer_classifier_fwd.10} parent=0 // pred_region
    _
  $region45: #{transformer_classifier_fwd.10} parent=0 // pred_fallthru
    _
  // Predicated region
  $region46: #{transformer_classifier_fwd.10} parent=0 // pred_check
    _
  $region47: #{transformer_classifier_fwd.10} parent=0 // pred_check_branch
    %47 = sbr.rel (0) target = $region49
  $region48: #{transformer_classifier_fwd.10} parent=0 // pred_region
    _
  $region49: #{transformer_classifier_fwd.10} parent=0 // pred_fallthru
    _
  // Predicated region
  $region50: #{transformer_classifier_fwd.10} parent=0 // pred_check
    _
  $region51: #{transformer_classifier_fwd.10} parent=0 // pred_check_branch
    %49 = sbr.rel (0) target = $region53
  $region52: #{transformer_classifier_fwd.10} parent=0 // pred_region
    _
  $region53: #{transformer_classifier_fwd.10} parent=0 // pred_fallthru
    _
  // Predicated region
  $region54: #{transformer_classifier_fwd.10} parent=0 // pred_check
    _
  $region55: #{transformer_classifier_fwd.10} parent=0 // pred_check_branch
    %51 = sbr.rel (0) target = $region57
  $region56: #{transformer_classifier_fwd.10} parent=0 // pred_region
    _
  $region57: #{transformer_classifier_fwd.10} parent=0 // pred_fallthru
    _
  // Predicated region
  $region58: #{transformer_classifier_fwd.10} parent=0 // pred_check
    _
  $region59: #{transformer_classifier_fwd.10} parent=0 // pred_check_branch
    %53 = sbr.rel (0) target = $region61
  $region60: #{transformer_classifier_fwd.10} parent=0 // pred_region
    _
  $region61: #{transformer_classifier_fwd.10} parent=0 // pred_fallthru
    _
  %v55 = vld [vmem:[%s0] sm:$0xff]
  %v56 = vld [vmem:[%s0 + $0x8] sm:$0xff]
  %v57 = vld [vmem:[%s0 + $0x10] sm:$0xff]
  %v58 = vld [vmem:[%s0 + $0x18] sm:$0xff]
  %v59 = vld [vmem:[%s0 + $0x20] sm:$0xff]
  %v60 = vld [vmem:[%s0 + $0x28] sm:$0xff]
  %v61 = vld [vmem:[%s0 + $0x30] sm:$0xff]
  %v62 = vld [vmem:[%s0 + $0x38] sm:$0xff]
  %v63 = vld [vmem:[%s1] sm:$0x1]
  %v64 = vld [vmem:[%s2] sm:$0x1]
  %vm65 = vcmask 261120
  %v66 = vsel %vm65, %v55, 0.0
  %67 = vadd.xlane.f32.xlu0 %v66
  %v68 = vpop.xlane.xlu0 %67
  %v69 = vsel %vm65, %v56, 0.0
  %70 = vadd.xlane.f32.xlu0 %v69
  %v71 = vpop.xlane.xlu0 %70
  %v72 = vsel %vm65, %v57, 0.0
  %73 = vadd.xlane.f32.xlu0 %v72
  %v74 = vpop.xlane.xlu0 %73
  %v75 = vsel %vm65, %v58, 0.0
  %76 = vadd.xlane.f32.xlu0 %v75
  %v77 = vpop.xlane.xlu0 %76
  %v78 = vsel %vm65, %v59, 0.0
  %79 = vadd.xlane.f32.xlu0 %v78
  %v80 = vpop.xlane.xlu0 %79
  %v81 = vsel %vm65, %v60, 0.0
  %82 = vadd.xlane.f32.xlu0 %v81
  %v83 = vpop.xlane.xlu0 %82
  %v84 = vsel %vm65, %v61, 0.0
  %85 = vadd.xlane.f32.xlu0 %v84
  %v86 = vpop.xlane.xlu0 %85
  %v87 = vsel %vm65, %v62, 0.0
  %88 = vadd.xlane.f32.xlu0 %v87
  %v89 = vpop.xlane.xlu0 %88
  %v90 = vrcp.pop 32.0
  %v91 = vmul.f32 32.0, %v90
  %v92 = vsub.f32 1.0, %v91
  %v93 = vmul.f32 %v90, %v92
  %v94 = vadd.f32 %v90, %v93
  %vm95 = vweird.f32 %v90
  %v96 = vsel %vm95, %v90, %v94
  %v97 = vmul.f32 %v68, %v96
  %v98 = vmul.f32 %v71, %v96
  %v99 = vmul.f32 %v74, %v96
  %v100 = vmul.f32 %v77, %v96
  %v101 = vmul.f32 %v80, %v96
  %v102 = vmul.f32 %v83, %v96
  %v103 = vmul.f32 %v86, %v96
  %v104 = vmul.f32 %v89, %v96
  %v105 = vsub.f32 %v55, %v97
  %v106 = vsub.f32 %v56, %v98
  %v107 = vsub.f32 %v57, %v99
  %v108 = vsub.f32 %v58, %v100
  %v109 = vsub.f32 %v59, %v101
  %v110 = vsub.f32 %v60, %v102
  %v111 = vsub.f32 %v61, %v103
  %v112 = vsub.f32 %v62, %v104
  %v113 = vmul.f32 %v105, %v105
  %v114 = vmul.f32 %v106, %v106
  %v115 = vmul.f32 %v107, %v107
  %v116 = vmul.f32 %v108, %v108
  %v117 = vmul.f32 %v109, %v109
  %v118 = vmul.f32 %v110, %v110
  %v119 = vmul.f32 %v111, %v111
  %v120 = vmul.f32 %v112, %v112
  %v121 = vsel %vm65, %v113, 0.0
  %122 = vadd.xlane.f32.xlu0 %v121
  %v123 = vpop.xlane.xlu0 %122
  %v124 = vsel %vm65, %v114, 0.0
  %125 = vadd.xlane.f32.xlu0 %v124
  %v126 = vpop.xlane.xlu0 %125
  %v127 = vsel %vm65, %v115, 0.0
  %128 = vadd.xlane.f32.xlu0 %v127
  %v129 = vpop.xlane.xlu0 %128
  %v130 = vsel %vm65, %v116, 0.0
  %131 = vadd.xlane.f32.xlu0 %v130
  %v132 = vpop.xlane.xlu0 %131
  %v133 = vsel %vm65, %v117, 0.0
  %134 = vadd.xlane.f32.xlu0 %v133
  %v135 = vpop.xlane.xlu0 %134
  %v136 = vsel %vm65, %v118, 0.0
  %137 = vadd.xlane.f32.xlu0 %v136
  %v138 = vpop.xlane.xlu0 %137
  %v139 = vsel %vm65, %v119, 0.0
  %140 = vadd.xlane.f32.xlu0 %v139
  %v141 = vpop.xlane.xlu0 %140
  %v142 = vsel %vm65, %v120, 0.0
  %143 = vadd.xlane.f32.xlu0 %v142
  %v144 = vpop.xlane.xlu0 %143
  %v145 = vmul.f32 %v123, %v96
  %v146 = vmul.f32 %v126, %v96
  %v147 = vmul.f32 %v129, %v96
  %v148 = vmul.f32 %v132, %v96
  %v149 = vmul.f32 %v135, %v96
  %v150 = vmul.f32 %v138, %v96
  %v151 = vmul.f32 %v141, %v96
  %v152 = vmul.f32 %v144, %v96
  %v153 = vadd.f32 %v145, 1e-05
  %v154 = vadd.f32 %v146, 1e-05
  %v155 = vadd.f32 %v147, 1e-05
  %v156 = vadd.f32 %v148, 1e-05
  %v157 = vadd.f32 %v149, 1e-05
  %v158 = vadd.f32 %v150, 1e-05
  %v159 = vadd.f32 %v151, 1e-05
  %v160 = vadd.f32 %v152, 1e-05
  %v161 = vrsqrt.pop %v153
  %v162 = vmul.f32 %v161, %v153
  %v163 = vmul.f32 %v162, %v161
  %v164 = vmul.f32 0.5, %v163
  %v165 = vsub.f32 1.5, %v164
  %v166 = vmul.f32 %v161, %v165
  %vm167 = vweird.f32 %v153
  %vm168 = vweird.f32 %v161
  %vm169 = vmor %vm167, %vm168
  %v170 = vsel %vm169, %v161, %v166
  %v171 = vrsqrt.pop %v154
  %v172 = vmul.f32 %v171, %v154
  %v173 = vmul.f32 %v172, %v171
  %v174 = vmul.f32 0.5, %v173
  %v175 = vsub.f32 1.5, %v174
  %v176 = vmul.f32 %v171, %v175
  %vm177 = vweird.f32 %v154
  %vm178 = vweird.f32 %v171
  %vm179 = vmor %vm177, %vm178
  %v180 = vsel %vm179, %v171, %v176
  %v181 = vrsqrt.pop %v155
  %v182 = vmul.f32 %v181, %v155
  %v183 = vmul.f32 %v182, %v181
  %v184 = vmul.f32 0.5, %v183
  %v185 = vsub.f32 1.5, %v184
  %v186 = vmul.f32 %v181, %v185
  %vm187 = vweird.f32 %v155
  %vm188 = vweird.f32 %v181
  %vm189 = vmor %vm187, %vm188
  %v190 = vsel %vm189, %v181, %v186
  %v191 = vrsqrt.pop %v156
  %v192 = vmul.f32 %v191, %v156
  %v193 = vmul.f32 %v192, %v191
  %v194 = vmul.f32 0.5, %v193
  %v195 = vsub.f32 1.5, %v194
  %v196 = vmul.f32 %v191, %v195
  %vm197 = vweird.f32 %v156
  %vm198 = vweird.f32 %v191
  %vm199 = vmor %vm197, %vm198
  %v200 = vsel %vm199, %v191, %v196
  %v201 = vrsqrt.pop %v157
  %v202 = vmul.f32 %v201, %v157
  %v203 = vmul.f32 %v202, %v201
  %v204 = vmul.f32 0.5, %v203
  %v205 = vsub.f32 1.5, %v204
  %v206 = vmul.f32 %v201, %v205
  %vm207 = vweird.f32 %v157
  %vm208 = vweird.f32 %v201
  %vm209 = vmor %vm207, %vm208
  %v210 = vsel %vm209, %v201, %v206
  %v211 = vrsqrt.pop %v158
  %v212 = vmul.f32 %v211, %v158
  %v213 = vmul.f32 %v212, %v211
  %v214 = vmul.f32 0.5, %v213
  %v215 = vsub.f32 1.5, %v214
  %v216 = vmul.f32 %v211, %v215
  %vm217 = vweird.f32 %v158
  %vm218 = vweird.f32 %v211
  %vm219 = vmor %vm217, %vm218
  %v220 = vsel %vm219, %v211, %v216
  %v221 = vrsqrt.pop %v159
  %v222 = vmul.f32 %v221, %v159
  %v223 = vmul.f32 %v222, %v221
  %v224 = vmul.f32 0.5, %v223
  %v225 = vsub.f32 1.5, %v224
  %v226 = vmul.f32 %v221, %v225
  %vm227 = vweird.f32 %v159
  %vm228 = vweird.f32 %v221
  %vm229 = vmor %vm227, %vm228
  %v230 = vsel %vm229, %v221, %v226
  %v231 = vrsqrt.pop %v160
  %v232 = vmul.f32 %v231, %v160
  %v233 = vmul.f32 %v232, %v231
  %v234 = vmul.f32 0.5, %v233
  %v235 = vsub.f32 1.5, %v234
  %v236 = vmul.f32 %v231, %v235
  %vm237 = vweird.f32 %v160
  %vm238 = vweird.f32 %v231
  %vm239 = vmor %vm237, %vm238
  %v240 = vsel %vm239, %v231, %v236
  %v241 = vmul.f32 %v105, %v170
  %v242 = vmul.f32 %v106, %v180
  %v243 = vmul.f32 %v107, %v190
  %v244 = vmul.f32 %v108, %v200
  %v245 = vmul.f32 %v109, %v210
  %v246 = vmul.f32 %v110, %v220
  %v247 = vmul.f32 %v111, %v230
  %v248 = vmul.f32 %v112, %v240
  %v250 = vperm.slane %v63, 0
  %v252 = vmul.f32 %v241, %v250
  %v253 = vmul.f32 %v242, %v250
  %v254 = vmul.f32 %v243, %v250
  %v255 = vmul.f32 %v244, %v250
  %v256 = vmul.f32 %v245, %v250
  %v257 = vmul.f32 %v246, %v250
  %v258 = vmul.f32 %v247, %v250
  %v259 = vmul.f32 %v248, %v250
  %v261 = vperm.slane %v64, 0
  %v263 = vadd.f32 %v252, %v261
  %v264 = vadd.f32 %v253, %v261
  %v265 = vadd.f32 %v254, %v261
  %v266 = vadd.f32 %v255, %v261
  %v267 = vadd.f32 %v256, %v261
  %v268 = vadd.f32 %v257, %v261
  %v269 = vadd.f32 %v258, %v261
  %v270 = vadd.f32 %v259, %v261
  %v271 = vld [vmem:[%s3] sm:$0xff]
  %v272 = vld [vmem:[%s3 + $0x8] sm:$0xff]
  %v273 = vld [vmem:[%s3 + $0x10] sm:$0xff]
  %v274 = vld [vmem:[%s3 + $0x18] sm:$0xff]
  %v275 = vpack.c.bf16 %v264, %v263
  %v276 = vpack.c.bf16 %v266, %v265
  %v277 = vpack.c.bf16 %v268, %v267
  %v278 = vpack.c.bf16 %v270, %v269
  %v279 = vpack.c.bf16 %v272, %v271
  %v280 = vpack.c.bf16 %v274, %v273
  %v282 = vsel %vm65, %v275, 0
  %v285 = vsel %vm65, %v276, 0
  %v288 = vsel %vm65, %v277, 0
  %v291 = vsel %vm65, %v278, 0
  %293 = vmatpush.bf16.msra.mxu0 0
  %294 = vmatpush.bf16.msra.mxu0 0
  %295 = vmatpush.bf16.msra.mxu0 0
  %296 = vmatpush.bf16.msra.mxu0 0
  %297 = vmatpush.bf16.msra.mxu0 0
  %298 = vmatpush.bf16.msra.mxu0 0
  %299 = vmatpush.bf16.msra.mxu0 %v280
  %300 = vmatpush.bf16.msra.mxu0 %v279
  %301 = vmatmul.bf16.gmra.mxu0 %v282
  %v302 = vpop.f32.mrf.mxu0
  %v303 = vadd.f32 0.0, %v302
  %v304 = vpop.f32.mrf.mxu0
  %v305 = vadd.f32 0.0, %v304
  %306 = vmatmul.bf16.gmra.mxu0 %v285
  %v307 = vpop.f32.mrf.mxu0
  %v308 = vadd.f32 0.0, %v307
  %v309 = vpop.f32.mrf.mxu0
  %v310 = vadd.f32 0.0, %v309
  %311 = vmatmul.bf16.gmra.mxu0 %v288
  %v312 = vpop.f32.mrf.mxu0
  %v313 = vadd.f32 0.0, %v312
  %v314 = vpop.f32.mrf.mxu0
  %v315 = vadd.f32 0.0, %v314
  %316 = vmatmul.bf16.gmra.mxu0 %v291
  %v317 = vpop.f32.mrf.mxu0
  %v318 = vadd.f32 0.0, %v317
  %v319 = vpop.f32.mrf.mxu0
  %v320 = vadd.f32 0.0, %v319
  %321 = vdwg.mxu0
  %vm322 = vcmask 523520
  %v323 = vsel %vm322, %v303, 0.0
  %v324 = vsel %vm322, %v305, 0.0
  %v325 = vadd.f32 %v323, %v324
  %v326 = vrot.slane %v325, 4
  %v327 = vadd.f32 %v325, %v326
  %v328 = vrot.slane %v327, 2
  %v329 = vadd.f32 %v327, %v328
  %v330 = vrot.slane %v329, 1
  %v331 = vadd.f32 %v329, %v330
  %v332 = vsel %vm322, %v308, 0.0
  %v333 = vsel %vm322, %v310, 0.0
  %v334 = vadd.f32 %v332, %v333
  %v335 = vrot.slane %v334, 4
  %v336 = vadd.f32 %v334, %v335
  %v337 = vrot.slane %v336, 2
  %v338 = vadd.f32 %v336, %v337
  %v339 = vrot.slane %v338, 1
  %v340 = vadd.f32 %v338, %v339
  %v341 = vrcp.pop 16.0
  %v342 = vmul.f32 16.0, %v341
  %v343 = vsub.f32 1.0, %v342
  %v344 = vmul.f32 %v341, %v343
  %v345 = vadd.f32 %v341, %v344
  %vm346 = vweird.f32 %v341
  %v347 = vsel %vm346, %v341, %v345
  %v348 = vmul.f32 %v331, %v347
  %v349 = vmul.f32 %v340, %v347
  %v350 = vsel %vm322, %v303, -inf
  %v351 = vsel %vm322, %v305, -inf
  %v352 = vmax.f32 %v350, %v351
  %v353 = vrot.slane %v352, 4
  %v354 = vmax.f32 %v352, %v353
  %v355 = vrot.slane %v354, 2
  %v356 = vmax.f32 %v354, %v355
  %v357 = vrot.slane %v356, 1
  %v358 = vmax.f32 %v356, %v357
  %v359 = vsel %vm322, %v308, -inf
  %v360 = vsel %vm322, %v310, -inf
  %v361 = vmax.f32 %v359, %v360
  %v362 = vrot.slane %v361, 4
  %v363 = vmax.f32 %v361, %v362
  %v364 = vrot.slane %v363, 2
  %v365 = vmax.f32 %v363, %v364
  %v366 = vrot.slane %v365, 1
  %v367 = vmax.f32 %v365, %v366
  %v368 = vld [vmem:[%s4] sm:$0xff]
  %v369 = vld [vmem:[%s4 + $0x8] sm:$0xff]
  %v370 = vld [vmem:[%s4 + $0x10] sm:$0xff]
  %v371 = vld [vmem:[%s4 + $0x18] sm:$0xff]
  %v372 = vpack.c.bf16 %v348, %v348
  %v373 = vpack.c.bf16 %v349, %v349
  %v374 = vpack.c.bf16 %v369, %v368
  %v375 = vpack.c.bf16 %v371, %v370
  %v378 = vunpack.c.l.b16 %v372
  %v379 = vunpack.c.l.b16 %v373
  %vm380 = vcmask 1041409
  %v381 = vsel %vm380, %v379, %v378
  %v382 = vpack.c.b16 %v381, %v381
  %383 = vrot.lane.b32.xlu0 %v382, 96
  %v384 = vpop.permute.xlu0 %383
  %v386 = vsel %vm65, %v384, 0
  %388 = vmatpush.bf16.msra.mxu0 0
  %389 = vmatpush.bf16.msra.mxu0 0
  %390 = vmatpush.bf16.msra.mxu0 0
  %391 = vmatpush.bf16.msra.mxu0 0
  %392 = vmatpush.bf16.msra.mxu0 0
  %393 = vmatpush.bf16.msra.mxu0 0
  %394 = vmatpush.bf16.msra.mxu0 %v375
  %395 = vmatpush.bf16.msra.mxu0 %v374
  %396 = vmatmul.bf16.gmra.mxu0 %v386
  %v397 = vpop.f32.mrf.mxu0
  %v398 = vadd.f32 0.0, %v397
  %v399 = vpop.f32.mrf.mxu0
  %400 = vdwg.mxu0
  %v401 = vmax.f32 %v398, 0.0
  %v402 = vpack.c.bf16 %v358, %v358
  %v403 = vpack.c.bf16 %v367, %v367
  %v406 = vunpack.c.l.b16 %v402
  %v407 = vunpack.c.l.b16 %v403
  %v408 = vsel %vm380, %v407, %v406
  %v409 = vpack.c.b16 %v408, %v408
  %410 = vrot.lane.b32.xlu0 %v409, 96
  %v411 = vpop.permute.xlu0 %410
  %v413 = vsel %vm65, %v411, 0
  %415 = vmatpush.bf16.msra.mxu0 0
  %416 = vmatpush.bf16.msra.mxu0 0
  %417 = vmatpush.bf16.msra.mxu0 0
  %418 = vmatpush.bf16.msra.mxu0 0
  %419 = vmatpush.bf16.msra.mxu0 0
  %420 = vmatpush.bf16.msra.mxu0 0
  %421 = vmatpush.bf16.msra.mxu0 %v375
  %422 = vmatpush.bf16.msra.mxu0 %v374
  %423 = vmatmul.bf16.gmra.mxu0 %v413
  %v424 = vpop.f32.mrf.mxu0
  %v425 = vadd.f32 0.0, %v424
  %v426 = vpop.f32.mrf.mxu0
  %427 = vdwg.mxu0
  %v428 = vmax.f32 %v425, 0.0
  %v429 = vld [vmem:[%s5] sm:$0x3]
  %v430 = vpack.c.bf16 %v401, %v401
  %v431 = vpack.c.bf16 %v429, %v429
  %vm432 = vcmask 15360
  %v434 = vsel %vm432, %v430, 0
  %vm436 = vcmask 1040384
  %v438 = vsel %vm436, %v431, 0
  %440 = vmatpush.bf16.msra.mxu0 0
  %441 = vmatpush.bf16.msra.mxu0 0
  %442 = vmatpush.bf16.msra.mxu0 0
  %443 = vmatpush.bf16.msra.mxu0 0
  %444 = vmatpush.bf16.msra.mxu0 0
  %445 = vmatpush.bf16.msra.mxu0 0
  %446 = vmatpush.bf16.msra.mxu0 0
  %447 = vmatpush.bf16.msra.mxu0 %v438
  %448 = vmatmul.bf16.gmra.mxu0 %v434
  %v449 = vpop.f32.mrf.mxu0
  %v450 = vadd.f32 0.0, %v449
  %v451 = vpop.f32.mrf.mxu0
  %452 = vdwg.mxu0
  %v453 = vxor.u32 %v450, 2147483648
  %v454 = vmul.f32 %v453, 1.442695
  %v455 = vpow.pop %v454
  %v456 = vadd.f32 %v455, 1.0
  %v457 = vrcp.pop %v456
  %v458 = vmul.f32 %v456, %v457
  %v459 = vsub.f32 1.0, %v458
  %v460 = vmul.f32 %v457, %v459
  %v461 = vadd.f32 %v457, %v460
  %vm462 = vweird.f32 %v456
  %vm463 = vweird.f32 %v457
  %vm464 = vmor %vm462, %vm463
  %v465 = vsel %vm464, %v457, %v461
  %v466 = vand.u32 2147483647, %v456
  %vm467 = vcmp.eq.f32.partialorder %v466, 8.507059e+37
  %v468 = vand.u32 %v456, 2147483648
  %v469 = vor.u32 1.1754944e-38, %v468
  %v470 = vsel %vm467, %v469, %v465
  %v471 = vmul.f32 1.0, %v470
  %v472 = vpack.c.bf16 %v428, %v428
  %v474 = vsel %vm432, %v472, 0
  %476 = vmatpush.bf16.msra.mxu0 0
  %477 = vmatpush.bf16.msra.mxu0 0
  %478 = vmatpush.bf16.msra.mxu0 0
  %479 = vmatpush.bf16.msra.mxu0 0
  %480 = vmatpush.bf16.msra.mxu0 0
  %481 = vmatpush.bf16.msra.mxu0 0
  %482 = vmatpush.bf16.msra.mxu0 0
  %483 = vmatpush.bf16.msra.mxu0 %v438
  %484 = vmatmul.bf16.gmra.mxu0 %v474
  %v485 = vpop.f32.mrf.mxu0
  %v486 = vadd.f32 0.0, %v485
  %v487 = vpop.f32.mrf.mxu0
  %488 = vdwg.mxu0
  %v489 = vxor.u32 %v486, 2147483648
  %v490 = vmul.f32 %v489, 1.442695
  %v491 = vpow.pop %v490
  %v492 = vadd.f32 %v491, 1.0
  %v493 = vrcp.pop %v492
  %v494 = vmul.f32 %v492, %v493
  %v495 = vsub.f32 1.0, %v494
  %v496 = vmul.f32 %v493, %v495
  %v497 = vadd.f32 %v493, %v496
  %vm498 = vweird.f32 %v492
  %vm499 = vweird.f32 %v493
  %vm500 = vmor %vm498, %vm499
  %v501 = vsel %vm500, %v493, %v497
  %v502 = vand.u32 2147483647, %v492
  %vm503 = vcmp.eq.f32.partialorder %v502, 8.507059e+37
  %v504 = vand.u32 %v492, 2147483648
  %v505 = vor.u32 1.1754944e-38, %v504
  %v506 = vsel %vm503, %v505, %v501
  %v507 = vmul.f32 1.0, %v506
  %v508 = vadd.f32 %v471, %v507
  %513 = vrot.lane.b32.xlu0 %v313, 96
  %v514 = vpop.permute.xlu0 %513
  %515 = vrot.lane.b32.xlu0 %v315, 96
  %v516 = vpop.permute.xlu0 %515
  %517 = vrot.lane.b32.xlu0 %v318, 96
  %v518 = vpop.permute.xlu0 %517
  %519 = vrot.lane.b32.xlu0 %v320, 96
  %v520 = vpop.permute.xlu0 %519
  %v525 = vsel %vm65, %v514, 0.0
  %526 = vadd.xlane.f32.xlu0 %v525
  %v527 = vpop.xlane.xlu0 %526
  %v528 = vsel %vm65, %v516, 0.0
  %529 = vadd.xlane.f32.xlu0 %v528
  %v530 = vpop.xlane.xlu0 %529
  %v531 = vsel %vm65, %v518, 0.0
  %532 = vadd.xlane.f32.xlu0 %v531
  %v533 = vpop.xlane.xlu0 %532
  %v534 = vsel %vm65, %v520, 0.0
  %535 = vadd.xlane.f32.xlu0 %v534
  %v536 = vpop.xlane.xlu0 %535
  %v537 = vmul.f32 %v527, %v96
  %v538 = vmul.f32 %v530, %v96
  %v539 = vmul.f32 %v533, %v96
  %v540 = vmul.f32 %v536, %v96
  %v541 = vsel %vm322, %v313, -inf
  %542 = vmax.xlane.f32.xlu0 %v541
  %v543 = vpop.xlane.xlu0 %542
  %v544 = vsel %vm322, %v315, -inf
  %545 = vmax.xlane.f32.xlu0 %v544
  %v546 = vpop.xlane.xlu0 %545
  %v547 = vsel %vm322, %v318, -inf
  %548 = vmax.xlane.f32.xlu0 %v547
  %v549 = vpop.xlane.xlu0 %548
  %v550 = vsel %vm322, %v320, -inf
  %551 = vmax.xlane.f32.xlu0 %v550
  %v552 = vpop.xlane.xlu0 %551
  %v553 = vld [vmem:[%s6] sm:$0xff]
  %v554 = vld [vmem:[%s6 + $0x8] sm:$0xff]
  %v555 = vpack.c.bf16 %v538, %v537
  %v556 = vpack.c.bf16 %v540, %v539
  %v557 = vpack.c.bf16 %v554, %v553
  %v558 = vld [vmem:[%s7] sm:$0xff]
  %v559 = vld [vmem:[%s7 + $0x8] sm:$0xff]
  %v560 = vpack.c.bf16 %v546, %v543
  %v561 = vpack.c.bf16 %v552, %v549
  %v562 = vpack.c.bf16 %v559, %v558
  %v565 = vunpack.c.l.b16 %v560
  %v566 = vunpack.c.h.b16 %v560
  %v567 = vunpack.c.l.b16 %v561
  %v568 = vunpack.c.h.b16 %v561
  %v569 = vlaneseq
  %v570 = vand.u32 %v569, 127
  %v571 = vperm.slane %v565, %v570
  %v572 = vadd.s32 %v570, 4294967288
  %v573 = vperm.slane %v566, %v572
  %vm574 = vcmask 130112
  %v575 = vsel %vm574, %v573, %v571
  %v576 = vperm.slane %v567, %v570
  %v577 = vperm.slane %v568, %v572
  %v578 = vsel %vm574, %v577, %v576
  %v579 = vsel %vm380, %v578, %v575
  %v580 = vpack.c.b16 %v579, %v579
  %vm581 = vcmask 130048
  %v583 = vsel %vm581, %v580, 0
  %585 = vmatpush.bf16.msra.mxu0 0
  %586 = vmatpush.bf16.msra.mxu0 0
  %587 = vmatpush.bf16.msra.mxu0 0
  %588 = vmatpush.bf16.msra.mxu0 0
  %589 = vmatpush.bf16.msra.mxu0 0
  %590 = vmatpush.bf16.msra.mxu0 0
  %591 = vmatpush.bf16.msra.mxu0 0
  %592 = vmatpush.bf16.msra.mxu0 %v562
  %593 = vmatmul.bf16.gmra.mxu0 %v583
  %v594 = vpop.f32.mrf.mxu0
  %v595 = vadd.f32 0.0, %v594
  %v596 = vpop.f32.mrf.mxu0
  %597 = vdwg.mxu0
  %v600 = vunpack.c.l.b16 %v555
  %v601 = vunpack.c.h.b16 %v555
  %v602 = vunpack.c.l.b16 %v556
  %v603 = vunpack.c.h.b16 %v556
  %v604 = vperm.slane %v600, %v570
  %v605 = vperm.slane %v601, %v572
  %v606 = vsel %vm574, %v605, %v604
  %v607 = vperm.slane %v602, %v570
  %v608 = vperm.slane %v603, %v572
  %v609 = vsel %vm574, %v608, %v607
  %v610 = vsel %vm380, %v609, %v606
  %v611 = vpack.c.b16 %v610, %v610
  %v613 = vsel %vm581, %v611, 0
  %615 = vmatpush.bf16.msra.mxu0 0
  %616 = vmatpush.bf16.msra.mxu0 0
  %617 = vmatpush.bf16.msra.mxu0 0
  %618 = vmatpush.bf16.msra.mxu0 0
  %619 = vmatpush.bf16.msra.mxu0 0
  %620 = vmatpush.bf16.msra.mxu0 0
  %621 = vmatpush.bf16.msra.mxu0 0
  %622 = vmatpush.bf16.msra.mxu0 %v557
  %623 = vmatmul.bf16.gmra.mxu0 %v613
  %v624 = vpop.f32.mrf.mxu0
  %v625 = vadd.f32 %v595, %v624
  %v626 = vpop.f32.mrf.mxu0
  %627 = vdwg.mxu0
  %v628 = vld [vmem:[#allocation2] sm:$0x1]
  %v630 = vperm.slane %v628, 0
  %631 = vset.pattern.permute.xlu0 0
  %632 = vperm.xlu0 %631, %v630
  %v633 = vpop.permute.xlu0 %632
  %v635 = vadd.f32 %v625, %v633
  %v636 = vxor.u32 %v635, 2147483648
  %v637 = vmul.f32 %v636, 1.442695
  %v638 = vpow.pop %v637
  %v639 = vadd.f32 %v638, 1.0
  %v640 = vrcp.pop %v639
  %v641 = vmul.f32 %v639, %v640
  %v642 = vsub.f32 1.0, %v641
  %v643 = vmul.f32 %v640, %v642
  %v644 = vadd.f32 %v640, %v643
  %vm645 = vweird.f32 %v639
  %vm646 = vweird.f32 %v640
  %vm647 = vmor %vm645, %vm646
  %v648 = vsel %vm647, %v640, %v644
  %v649 = vand.u32 2147483647, %v639
  %vm650 = vcmp.eq.f32.partialorder %v649, 8.507059e+37
  %v651 = vand.u32 %v639, 2147483648
  %v652 = vor.u32 1.1754944e-38, %v651
  %v653 = vsel %vm650, %v652, %v648
  %v654 = vmul.f32 1.0, %v653
  %v655 = vld [vmem:[%s9] sm:$0xff]
  %v656 = vld [vmem:[%s9 + $0x8] sm:$0xff]
  %v657 = vld [vmem:[%s9 + $0x10] sm:$0xff]
  %v658 = vld [vmem:[%s9 + $0x18] sm:$0xff]
  %v660 = vrot.slane %v508, 1
  %v662 = vadd.f32 %v508, 1.0
  %v663 = vadd.f32 %v660, 1.0
  %v666 = vperm.slane %v662, 0
  %v667 = vperm.slane %v663, 0
  %668 = vrot.lane.b32.xlu0 %v666, 32
  %v669 = vpop.permute.xlu0 %668
  %670 = vrot.lane.b32.xlu0 %v667, 32
  %v671 = vpop.permute.xlu0 %670
  %v674 = vmul.f32 %v303, %v669
  %v675 = vmul.f32 %v305, %v669
  %v676 = vmul.f32 %v308, %v671
  %v677 = vmul.f32 %v310, %v671
  %v678 = vmul.f32 %v674, 0.35355338
  %v679 = vmul.f32 %v675, 0.35355338
  %v680 = vmul.f32 %v676, 0.35355338
  %v681 = vmul.f32 %v677, 0.35355338
  %v682 = vperm.slane %v654, 0
  %v683 = vlaneseq
  %v684 = vshrl.u32 %v683, 7
  %686 = vset.pattern.permute.xlu0 %v684
  %687 = vperm.xlu0 %686, %v682
  %v688 = vpop.permute.xlu0 %687
  %v689 = vlaneseq
  %v690 = vshrl.u32 %v689, 7
  %v691 = vadd.s32 %v690, 8
  %692 = vset.pattern.permute.xlu0 %v691
  %693 = vperm.xlu0 %692, %v682
  %v694 = vpop.permute.xlu0 %693
  %v695 = vperm.slane %v654, 1
  %v696 = vlaneseq
  %v697 = vshrl.u32 %v696, 7
  %699 = vset.pattern.permute.xlu0 %v697
  %700 = vperm.xlu0 %699, %v695
  %v701 = vpop.permute.xlu0 %700
  %v702 = vlaneseq
  %v703 = vshrl.u32 %v702, 7
  %v704 = vadd.s32 %v703, 8
  %705 = vset.pattern.permute.xlu0 %v704
  %706 = vperm.xlu0 %705, %v695
  %v707 = vpop.permute.xlu0 %706
  %v708 = vadd.f32 %v688, 1.0
  %v709 = vadd.f32 %v694, 1.0
  %v710 = vadd.f32 %v701, 1.0
  %v711 = vadd.f32 %v707, 1.0
  %v712 = vmul.f32 %v313, %v708
  %v713 = vmul.f32 %v315, %v709
  %v714 = vmul.f32 %v318, %v710
  %v715 = vmul.f32 %v320, %v711
  %v716 = vmul.f32 %v712, 0.35355338
  %v717 = vmul.f32 %v713, 0.35355338
  %v718 = vmul.f32 %v714, 0.35355338
  %v719 = vmul.f32 %v715, 0.35355338
  %v720 = vpack.c.bf16 %v678, %v678
  %v721 = vpack.c.bf16 %v679, %v679
  %v722 = vpack.c.bf16 %v680, %v680
  %v723 = vpack.c.bf16 %v681, %v681
  %v724 = vpack.c.bf16 %v716, %v716
  %v725 = vpack.c.bf16 %v717, %v717
  %v726 = vpack.c.bf16 %v718, %v718
  %v727 = vpack.c.bf16 %v719, %v719
  %v728 = vpack.c.bf16 %v303, %v303
  %v729 = vpack.c.bf16 %v305, %v305
  %v730 = vpack.c.bf16 %v308, %v308
  %v731 = vpack.c.bf16 %v310, %v310
  %v732 = vpack.c.bf16 %v313, %v313
  %v733 = vpack.c.bf16 %v315, %v315
  %v734 = vpack.c.bf16 %v318, %v318
  %v735 = vpack.c.bf16 %v320, %v320
  %v738 = vunpack.c.l.b16 %v720
  %v739 = vunpack.c.l.b16 %v721
  %v740 = vpack.c.b16 %v739, %v738
  %741 = vrot.lane.b32.xlu0 %v740, 96
  %v742 = vpop.permute.xlu0 %741
  %v745 = vunpack.c.l.b16 %v728
  %v746 = vunpack.c.l.b16 %v729
  %v747 = vpack.c.b16 %v746, %v745
  %748 = vrot.lane.b32.xlu0 %v747, 64
  %v749 = vpop.permute.xlu0 %748
  %vm750 = vcmask 64512
  %v752 = vsel %vm750, %v742, 0
  %v755 = vsel %vm750, %v749, 0
  %757 = vmatpush.bf16.xpose.msra.mxu0 0
  %758 = vmatpush.bf16.xpose.msra.mxu0 0
  %759 = vmatpush.bf16.xpose.msra.mxu0 0
  %760 = vmatpush.bf16.xpose.msra.mxu0 0
  %761 = vmatpush.bf16.xpose.msra.mxu0 0
  %762 = vmatpush.bf16.xpose.msra.mxu0 0
  %763 = vmatpush.bf16.xpose.msra.mxu0 0
  %764 = vmatpush.bf16.xpose.msra.mxu0 %v755
  %765 = vmatmul.bf16.gmra.mxu0 %v752
  %v766 = vpop.f32.mrf.mxu0
  %v767 = vadd.f32 0.0, %v766
  %v768 = vpop.f32.mrf.mxu0
  %v769 = vadd.f32 0.0, %v768
  %770 = vdwg.mxu0
  %v773 = vunpack.c.l.b16 %v722
  %v774 = vunpack.c.l.b16 %v723
  %v775 = vpack.c.b16 %v774, %v773
  %776 = vrot.lane.b32.xlu0 %v775, 96
  %v777 = vpop.permute.xlu0 %776
  %v780 = vunpack.c.l.b16 %v730
  %v781 = vunpack.c.l.b16 %v731
  %v782 = vpack.c.b16 %v781, %v780
  %783 = vrot.lane.b32.xlu0 %v782, 64
  %v784 = vpop.permute.xlu0 %783
  %v786 = vsel %vm750, %v777, 0
  %v789 = vsel %vm750, %v784, 0
  %791 = vmatpush.bf16.xpose.msra.mxu0 0
  %792 = vmatpush.bf16.xpose.msra.mxu0 0
  %793 = vmatpush.bf16.xpose.msra.mxu0 0
  %794 = vmatpush.bf16.xpose.msra.mxu0 0
  %795 = vmatpush.bf16.xpose.msra.mxu0 0
  %796 = vmatpush.bf16.xpose.msra.mxu0 0
  %797 = vmatpush.bf16.xpose.msra.mxu0 0
  %798 = vmatpush.bf16.xpose.msra.mxu0 %v789
  %799 = vmatmul.bf16.gmra.mxu0 %v786
  %v800 = vpop.f32.mrf.mxu0
  %v801 = vadd.f32 0.0, %v800
  %v802 = vpop.f32.mrf.mxu0
  %v803 = vadd.f32 0.0, %v802
  %804 = vdwg.mxu0
  %v807 = vunpack.c.l.b16 %v724
  %v808 = vunpack.c.l.b16 %v725
  %v809 = vpack.c.b16 %v808, %v807
  %810 = vrot.lane.b32.xlu0 %v809, 96
  %v811 = vpop.permute.xlu0 %810
  %v814 = vunpack.c.l.b16 %v732
  %v815 = vunpack.c.l.b16 %v733
  %v816 = vpack.c.b16 %v815, %v814
  %817 = vrot.lane.b32.xlu0 %v816, 64
  %v818 = vpop.permute.xlu0 %817
  %v820 = vsel %vm750, %v811, 0
  %v823 = vsel %vm750, %v818, 0
  %825 = vmatpush.bf16.xpose.msra.mxu0 0
  %826 = vmatpush.bf16.xpose.msra.mxu0 0
  %827 = vmatpush.bf16.xpose.msra.mxu0 0
  %828 = vmatpush.bf16.xpose.msra.mxu0 0
  %829 = vmatpush.bf16.xpose.msra.mxu0 0
  %830 = vmatpush.bf16.xpose.msra.mxu0 0
  %831 = vmatpush.bf16.xpose.msra.mxu0 0
  %832 = vmatpush.bf16.xpose.msra.mxu0 %v823
  %833 = vmatmul.bf16.gmra.mxu0 %v820
  %v834 = vpop.f32.mrf.mxu0
  %v835 = vadd.f32 0.0, %v834
  %v836 = vpop.f32.mrf.mxu0
  %v837 = vadd.f32 0.0, %v836
  %838 = vdwg.mxu0
  %v841 = vunpack.c.l.b16 %v726
  %v842 = vunpack.c.l.b16 %v727
  %v843 = vpack.c.b16 %v842, %v841
  %844 = vrot.lane.b32.xlu0 %v843, 96
  %v845 = vpop.permute.xlu0 %844
  %v848 = vunpack.c.l.b16 %v734
  %v849 = vunpack.c.l.b16 %v735
  %v850 = vpack.c.b16 %v849, %v848
  %851 = vrot.lane.b32.xlu0 %v850, 64
  %v852 = vpop.permute.xlu0 %851
  %v854 = vsel %vm750, %v845, 0
  %v857 = vsel %vm750, %v852, 0
  %859 = vmatpush.bf16.xpose.msra.mxu0 0
  %860 = vmatpush.bf16.xpose.msra.mxu0 0
  %861 = vmatpush.bf16.xpose.msra.mxu0 0
  %862 = vmatpush.bf16.xpose.msra.mxu0 0
  %863 = vmatpush.bf16.xpose.msra.mxu0 0
  %864 = vmatpush.bf16.xpose.msra.mxu0 0
  %865 = vmatpush.bf16.xpose.msra.mxu0 0
  %866 = vmatpush.bf16.xpose.msra.mxu0 %v857
  %867 = vmatmul.bf16.gmra.mxu0 %v854
  %v868 = vpop.f32.mrf.mxu0
  %v869 = vadd.f32 0.0, %v868
  %v870 = vpop.f32.mrf.mxu0
  %v871 = vadd.f32 0.0, %v870
  %872 = vdwg.mxu0
  %v873 = vsel %vm581, %v767, -inf
  %874 = vmax.xlane.f32.xlu0 %v873
  %v875 = vpop.xlane.xlu0 %874
  %v876 = vsel %vm581, %v769, -inf
  %877 = vmax.xlane.f32.xlu0 %v876
  %v878 = vpop.xlane.xlu0 %877
  %v879 = vsel %vm581, %v801, -inf
  %880 = vmax.xlane.f32.xlu0 %v879
  %v881 = vpop.xlane.xlu0 %880
  %v882 = vsel %vm581, %v803, -inf
  %883 = vmax.xlane.f32.xlu0 %v882
  %v884 = vpop.xlane.xlu0 %883
  %v885 = vsel %vm581, %v835, -inf
  %886 = vmax.xlane.f32.xlu0 %v885
  %v887 = vpop.xlane.xlu0 %886
  %v888 = vsel %vm581, %v837, -inf
  %889 = vmax.xlane.f32.xlu0 %v888
  %v890 = vpop.xlane.xlu0 %889
  %v891 = vsel %vm581, %v869, -inf
  %892 = vmax.xlane.f32.xlu0 %v891
  %v893 = vpop.xlane.xlu0 %892
  %v894 = vsel %vm581, %v871, -inf
  %895 = vmax.xlane.f32.xlu0 %v894
  %v896 = vpop.xlane.xlu0 %895
  %v897 = vsub.f32 %v767, %v875
  %v898 = vsub.f32 %v769, %v878
  %v899 = vsub.f32 %v801, %v881
  %v900 = vsub.f32 %v803, %v884
  %v901 = vsub.f32 %v835, %v887
  %v902 = vsub.f32 %v837, %v890
  %v903 = vsub.f32 %v869, %v893
  %v904 = vsub.f32 %v871, %v896
  %v905 = vmul.f32 %v897, 1.442695
  %v906 = vpow.pop %v905
  %v907 = vmul.f32 %v898, 1.442695
  %v908 = vpow.pop %v907
  %v909 = vmul.f32 %v899, 1.442695
  %v910 = vpow.pop %v909
  %v911 = vmul.f32 %v900, 1.442695
  %v912 = vpow.pop %v911
  %v913 = vmul.f32 %v901, 1.442695
  %v914 = vpow.pop %v913
  %v915 = vmul.f32 %v902, 1.442695
  %v916 = vpow.pop %v915
  %v917 = vmul.f32 %v903, 1.442695
  %v918 = vpow.pop %v917
  %v919 = vmul.f32 %v904, 1.442695
  %v920 = vpow.pop %v919
  %v921 = vsel %vm581, %v906, 0.0
  %922 = vadd.xlane.f32.xlu0 %v921
  %v923 = vpop.xlane.xlu0 %922
  %v924 = vsel %vm581, %v908, 0.0
  %925 = vadd.xlane.f32.xlu0 %v924
  %v926 = vpop.xlane.xlu0 %925
  %v927 = vsel %vm581, %v910, 0.0
  %928 = vadd.xlane.f32.xlu0 %v927
  %v929 = vpop.xlane.xlu0 %928
  %v930 = vsel %vm581, %v912, 0.0
  %931 = vadd.xlane.f32.xlu0 %v930
  %v932 = vpop.xlane.xlu0 %931
  %v933 = vsel %vm581, %v914, 0.0
  %934 = vadd.xlane.f32.xlu0 %v933
  %v935 = vpop.xlane.xlu0 %934
  %v936 = vsel %vm581, %v916, 0.0
  %937 = vadd.xlane.f32.xlu0 %v936
  %v938 = vpop.xlane.xlu0 %937
  %v939 = vsel %vm581, %v918, 0.0
  %940 = vadd.xlane.f32.xlu0 %v939
  %v941 = vpop.xlane.xlu0 %940
  %v942 = vsel %vm581, %v920, 0.0
  %943 = vadd.xlane.f32.xlu0 %v942
  %v944 = vpop.xlane.xlu0 %943
  %v945 = vrcp.pop %v923
  %v946 = vrcp.pop %v926
  %v947 = vrcp.pop %v929
  %v948 = vrcp.pop %v932
  %v949 = vrcp.pop %v935
  %v950 = vrcp.pop %v938
  %v951 = vrcp.pop %v941
  %v952 = vrcp.pop %v944
  %v953 = vmul.f32 %v906, %v945
  %v954 = vmul.f32 %v908, %v946
  %v955 = vmul.f32 %v910, %v947
  %v956 = vmul.f32 %v912, %v948
  %v957 = vmul.f32 %v914, %v949
  %v958 = vmul.f32 %v916, %v950
  %v959 = vmul.f32 %v918, %v951
  %v960 = vmul.f32 %v920, %v952
  %v961 = vpack.c.bf16 %v953, %v953
  %v962 = vpack.c.bf16 %v954, %v954
  %v963 = vpack.c.bf16 %v955, %v955
  %v964 = vpack.c.bf16 %v956, %v956
  %v965 = vpack.c.bf16 %v957, %v957
  %v966 = vpack.c.bf16 %v958, %v958
  %v967 = vpack.c.bf16 %v959, %v959
  %v968 = vpack.c.bf16 %v960, %v960
  %v971 = vunpack.c.l.b16 %v961
  %v972 = vunpack.c.l.b16 %v962
  %v973 = vpack.c.b16 %v972, %v971
  %974 = vrot.lane.b32.xlu0 %v747, 32
  %v975 = vpop.permute.xlu0 %974
  %v978 = vsel %vm581, %v973, 0
  %980 = vmatpush.bf16.msra.mxu0 0
  %981 = vmatpush.bf16.msra.mxu0 0
  %982 = vmatpush.bf16.msra.mxu0 0
  %983 = vmatpush.bf16.msra.mxu0 0
  %984 = vmatpush.bf16.msra.mxu0 0
  %985 = vmatpush.bf16.msra.mxu0 0
  %986 = vmatpush.bf16.msra.mxu0 0
  %987 = vmatpush.bf16.msra.mxu0 %v975
  %988 = vmatmul.bf16.gmra.mxu0 %v978
  %v989 = vpop.f32.mrf.mxu0
  %v990 = vadd.f32 0.0, %v989
  %v991 = vpop.f32.mrf.mxu0
  %v992 = vadd.f32 0.0, %v991
  %993 = vdwg.mxu0
  %v996 = vunpack.c.l.b16 %v963
  %v997 = vunpack.c.l.b16 %v964
  %v998 = vpack.c.b16 %v997, %v996
  %999 = vrot.lane.b32.xlu0 %v782, 32
  %v1000 = vpop.permute.xlu0 %999
  %v1003 = vsel %vm581, %v998, 0
  %1005 = vmatpush.bf16.msra.mxu0 0
  %1006 = vmatpush.bf16.msra.mxu0 0
  %1007 = vmatpush.bf16.msra.mxu0 0
  %1008 = vmatpush.bf16.msra.mxu0 0
  %1009 = vmatpush.bf16.msra.mxu0 0
  %1010 = vmatpush.bf16.msra.mxu0 0
  %1011 = vmatpush.bf16.msra.mxu0 0
  %1012 = vmatpush.bf16.msra.mxu0 %v1000
  %1013 = vmatmul.bf16.gmra.mxu0 %v1003
  %v1014 = vpop.f32.mrf.mxu0
  %v1015 = vadd.f32 0.0, %v1014
  %v1016 = vpop.f32.mrf.mxu0
  %v1017 = vadd.f32 0.0, %v1016
  %1018 = vdwg.mxu0
  %v1021 = vunpack.c.l.b16 %v965
  %v1022 = vunpack.c.l.b16 %v966
  %v1023 = vpack.c.b16 %v1022, %v1021
  %v1025 = vsel %vm581, %v1023, 0
  %1027 = vmatpush.bf16.msra.mxu0 0
  %1028 = vmatpush.bf16.msra.mxu0 0
  %1029 = vmatpush.bf16.msra.mxu0 0
  %1030 = vmatpush.bf16.msra.mxu0 0
  %1031 = vmatpush.bf16.msra.mxu0 0
  %1032 = vmatpush.bf16.msra.mxu0 0
  %1033 = vmatpush.bf16.msra.mxu0 0
  %1034 = vmatpush.bf16.msra.mxu0 %v975
  %1035 = vmatmul.bf16.gmra.mxu0 %v1025
  %v1036 = vpop.f32.mrf.mxu0
  %v1037 = vadd.f32 0.0, %v1036
  %v1038 = vpop.f32.mrf.mxu0
  %v1039 = vadd.f32 0.0, %v1038
  %1040 = vdwg.mxu0
  %v1043 = vunpack.c.l.b16 %v967
  %v1044 = vunpack.c.l.b16 %v968
  %v1045 = vpack.c.b16 %v1044, %v1043
  %v1047 = vsel %vm581, %v1045, 0
  %1049 = vmatpush.bf16.msra.mxu0 0
  %1050 = vmatpush.bf16.msra.mxu0 0
  %1051 = vmatpush.bf16.msra.mxu0 0
  %1052 = vmatpush.bf16.msra.mxu0 0
  %1053 = vmatpush.bf16.msra.mxu0 0
  %1054 = vmatpush.bf16.msra.mxu0 0
  %1055 = vmatpush.bf16.msra.mxu0 0
  %1056 = vmatpush.bf16.msra.mxu0 %v1000
  %1057 = vmatmul.bf16.gmra.mxu0 %v1047
  %v1058 = vpop.f32.mrf.mxu0
  %v1059 = vadd.f32 0.0, %v1058
  %v1060 = vpop.f32.mrf.mxu0
  %v1061 = vadd.f32 0.0, %v1060
  %1062 = vdwg.mxu0
  %v1063 = vpack.c.bf16 %v992, %v990
  %v1064 = vpack.c.bf16 %v1017, %v1015
  %v1065 = vpack.c.bf16 %v1039, %v1037
  %v1066 = vpack.c.bf16 %v1061, %v1059
  %v1067 = vpack.c.bf16 %v655, %v655
  %1068 = vrot.lane.b32.xlu0 %v740, 88
  %v1069 = vpop.permute.xlu0 %1068
  %1070 = vrot.lane.b32.xlu0 %v747, 56
  %v1071 = vpop.permute.xlu0 %1070
  %v1073 = vsel %vm750, %v1069, 0
  %v1076 = vsel %vm750, %v1071, 0
  %1078 = vmatpush.bf16.xpose.msra.mxu0 0
  %1079 = vmatpush.bf16.xpose.msra.mxu0 0
  %1080 = vmatpush.bf16.xpose.msra.mxu0 0
  %1081 = vmatpush.bf16.xpose.msra.mxu0 0
  %1082 = vmatpush.bf16.xpose.msra.mxu0 0
  %1083 = vmatpush.bf16.xpose.msra.mxu0 0
  %1084 = vmatpush.bf16.xpose.msra.mxu0 0
  %1085 = vmatpush.bf16.xpose.msra.mxu0 %v1076
  %1086 = vmatmul.bf16.gmra.mxu0 %v1073
  %v1087 = vpop.f32.mrf.mxu0
  %v1088 = vadd.f32 0.0, %v1087
  %v1089 = vpop.f32.mrf.mxu0
  %v1090 = vadd.f32 0.0, %v1089
  %1091 = vdwg.mxu0
  %1092 = vrot.lane.b32.xlu0 %v775, 88
  %v1093 = vpop.permute.xlu0 %1092
  %1094 = vrot.lane.b32.xlu0 %v782, 56
  %v1095 = vpop.permute.xlu0 %1094
  %v1097 = vsel %vm750, %v1093, 0
  %v1100 = vsel %vm750, %v1095, 0
  %1102 = vmatpush.bf16.xpose.msra.mxu0 0
  %1103 = vmatpush.bf16.xpose.msra.mxu0 0
  %1104 = vmatpush.bf16.xpose.msra.mxu0 0
  %1105 = vmatpush.bf16.xpose.msra.mxu0 0
  %1106 = vmatpush.bf16.xpose.msra.mxu0 0
  %1107 = vmatpush.bf16.xpose.msra.mxu0 0
  %1108 = vmatpush.bf16.xpose.msra.mxu0 0
  %1109 = vmatpush.bf16.xpose.msra.mxu0 %v1100
  %1110 = vmatmul.bf16.gmra.mxu0 %v1097
  %v1111 = vpop.f32.mrf.mxu0
  %v1112 = vadd.f32 0.0, %v1111
  %v1113 = vpop.f32.mrf.mxu0
  %v1114 = vadd.f32 0.0, %v1113
  %1115 = vdwg.mxu0
  %1116 = vrot.lane.b32.xlu0 %v809, 88
  %v1117 = vpop.permute.xlu0 %1116
  %1118 = vrot.lane.b32.xlu0 %v816, 56
  %v1119 = vpop.permute.xlu0 %1118
  %v1121 = vsel %vm750, %v1117, 0
  %v1124 = vsel %vm750, %v1119, 0
  %1126 = vmatpush.bf16.xpose.msra.mxu0 0
  %1127 = vmatpush.bf16.xpose.msra.mxu0 0
  %1128 = vmatpush.bf16.xpose.msra.mxu0 0
  %1129 = vmatpush.bf16.xpose.msra.mxu0 0
  %1130 = vmatpush.bf16.xpose.msra.mxu0 0
  %1131 = vmatpush.bf16.xpose.msra.mxu0 0
  %1132 = vmatpush.bf16.xpose.msra.mxu0 0
  %1133 = vmatpush.bf16.xpose.msra.mxu0 %v1124
  %1134 = vmatmul.bf16.gmra.mxu0 %v1121
  %v1135 = vpop.f32.mrf.mxu0
  %v1136 = vadd.f32 0.0, %v1135
  %v1137 = vpop.f32.mrf.mxu0
  %v1138 = vadd.f32 0.0, %v1137
  %1139 = vdwg.mxu0
  %1140 = vrot.lane.b32.xlu0 %v843, 88
  %v1141 = vpop.permute.xlu0 %1140
  %1142 = vrot.lane.b32.xlu0 %v850, 56
  %v1143 = vpop.permute.xlu0 %1142
  %v1145 = vsel %vm750, %v1141, 0
  %v1148 = vsel %vm750, %v1143, 0
  %1150 = vmatpush.bf16.xpose.msra.mxu0 0
  %1151 = vmatpush.bf16.xpose.msra.mxu0 0
  %1152 = vmatpush.bf16.xpose.msra.mxu0 0
  %1153 = vmatpush.bf16.xpose.msra.mxu0 0
  %1154 = vmatpush.bf16.xpose.msra.mxu0 0
  %1155 = vmatpush.bf16.xpose.msra.mxu0 0
  %1156 = vmatpush.bf16.xpose.msra.mxu0 0
  %1157 = vmatpush.bf16.xpose.msra.mxu0 %v1148
  %1158 = vmatmul.bf16.gmra.mxu0 %v1145
  %v1159 = vpop.f32.mrf.mxu0
  %v1160 = vadd.f32 0.0, %v1159
  %v1161 = vpop.f32.mrf.mxu0
  %v1162 = vadd.f32 0.0, %v1161
  %1163 = vdwg.mxu0
  %v1164 = vsel %vm581, %v1088, -inf
  %1165 = vmax.xlane.f32.xlu0 %v1164
  %v1166 = vpop.xlane.xlu0 %1165
  %v1167 = vsel %vm581, %v1090, -inf
  %1168 = vmax.xlane.f32.xlu0 %v1167
  %v1169 = vpop.xlane.xlu0 %1168
  %v1170 = vsel %vm581, %v1112, -inf
  %1171 = vmax.xlane.f32.xlu0 %v1170
  %v1172 = vpop.xlane.xlu0 %1171
  %v1173 = vsel %vm581, %v1114, -inf
  %1174 = vmax.xlane.f32.xlu0 %v1173
  %v1175 = vpop.xlane.xlu0 %1174
  %v1176 = vsel %vm581, %v1136, -inf
  %1177 = vmax.xlane.f32.xlu0 %v1176
  %v1178 = vpop.xlane.xlu0 %1177
  %v1179 = vsel %vm581, %v1138, -inf
  %1180 = vmax.xlane.f32.xlu0 %v1179
  %v1181 = vpop.xlane.xlu0 %1180
  %v1182 = vsel %vm581, %v1160, -inf
  %1183 = vmax.xlane.f32.xlu0 %v1182
  %v1184 = vpop.xlane.xlu0 %1183
  %v1185 = vsel %vm581, %v1162, -inf
  %1186 = vmax.xlane.f32.xlu0 %v1185
  %v1187 = vpop.xlane.xlu0 %1186
  %v1188 = vsub.f32 %v1088, %v1166
  %v1189 = vsub.f32 %v1090, %v1169
  %v1190 = vsub.f32 %v1112, %v1172
  %v1191 = vsub.f32 %v1114, %v1175
  %v1192 = vsub.f32 %v1136, %v1178
  %v1193 = vsub.f32 %v1138, %v1181
  %v1194 = vsub.f32 %v1160, %v1184
  %v1195 = vsub.f32 %v1162, %v1187
  %v1196 = vmul.f32 %v1188, 1.442695
  %v1197 = vpow.pop %v1196
  %v1198 = vmul.f32 %v1189, 1.442695
  %v1199 = vpow.pop %v1198
  %v1200 = vmul.f32 %v1190, 1.442695
  %v1201 = vpow.pop %v1200
  %v1202 = vmul.f32 %v1191, 1.442695
  %v1203 = vpow.pop %v1202
  %v1204 = vmul.f32 %v1192, 1.442695
  %v1205 = vpow.pop %v1204
  %v1206 = vmul.f32 %v1193, 1.442695
  %v1207 = vpow.pop %v1206
  %v1208 = vmul.f32 %v1194, 1.442695
  %v1209 = vpow.pop %v1208
  %v1210 = vmul.f32 %v1195, 1.442695
  %v1211 = vpow.pop %v1210
  %v1212 = vsel %vm581, %v1197, 0.0
  %1213 = vadd.xlane.f32.xlu0 %v1212
  %v1214 = vpop.xlane.xlu0 %1213
  %v1215 = vsel %vm581, %v1199, 0.0
  %1216 = vadd.xlane.f32.xlu0 %v1215
  %v1217 = vpop.xlane.xlu0 %1216
  %v1218 = vsel %vm581, %v1201, 0.0
  %1219 = vadd.xlane.f32.xlu0 %v1218
  %v1220 = vpop.xlane.xlu0 %1219
  %v1221 = vsel %vm581, %v1203, 0.0
  %1222 = vadd.xlane.f32.xlu0 %v1221
  %v1223 = vpop.xlane.xlu0 %1222
  %v1224 = vsel %vm581, %v1205, 0.0
  %1225 = vadd.xlane.f32.xlu0 %v1224
  %v1226 = vpop.xlane.xlu0 %1225
  %v1227 = vsel %vm581, %v1207, 0.0
  %1228 = vadd.xlane.f32.xlu0 %v1227
  %v1229 = vpop.xlane.xlu0 %1228
  %v1230 = vsel %vm581, %v1209, 0.0
  %1231 = vadd.xlane.f32.xlu0 %v1230
  %v1232 = vpop.xlane.xlu0 %1231
  %v1233 = vsel %vm581, %v1211, 0.0
  %1234 = vadd.xlane.f32.xlu0 %v1233
  %v1235 = vpop.xlane.xlu0 %1234
  %v1236 = vrcp.pop %v1214
  %v1237 = vrcp.pop %v1217
  %v1238 = vrcp.pop %v1220
  %v1239 = vrcp.pop %v1223
  %v1240 = vrcp.pop %v1226
  %v1241 = vrcp.pop %v1229
  %v1242 = vrcp.pop %v1232
  %v1243 = vrcp.pop %v1235
  %v1244 = vmul.f32 %v1197, %v1236
  %v1245 = vmul.f32 %v1199, %v1237
  %v1246 = vmul.f32 %v1201, %v1238
  %v1247 = vmul.f32 %v1203, %v1239
  %v1248 = vmul.f32 %v1205, %v1240
  %v1249 = vmul.f32 %v1207, %v1241
  %v1250 = vmul.f32 %v1209, %v1242
  %v1251 = vmul.f32 %v1211, %v1243
  %v1252 = vpack.c.bf16 %v1244, %v1244
  %v1253 = vpack.c.bf16 %v1245, %v1245
  %v1254 = vpack.c.bf16 %v1246, %v1246
  %v1255 = vpack.c.bf16 %v1247, %v1247
  %v1256 = vpack.c.bf16 %v1248, %v1248
  %v1257 = vpack.c.bf16 %v1249, %v1249
  %v1258 = vpack.c.bf16 %v1250, %v1250
  %v1259 = vpack.c.bf16 %v1251, %v1251
  %v1262 = vunpack.c.l.b16 %v1252
  %v1263 = vunpack.c.l.b16 %v1253
  %v1264 = vpack.c.b16 %v1263, %v1262
  %1265 = vrot.lane.b32.xlu0 %v747, 24
  %v1266 = vpop.permute.xlu0 %1265
  %v1269 = vsel %vm581, %v1264, 0
  %1271 = vmatpush.bf16.msra.mxu0 0
  %1272 = vmatpush.bf16.msra.mxu0 0
  %1273 = vmatpush.bf16.msra.mxu0 0
  %1274 = vmatpush.bf16.msra.mxu0 0
  %1275 = vmatpush.bf16.msra.mxu0 0
  %1276 = vmatpush.bf16.msra.mxu0 0
  %1277 = vmatpush.bf16.msra.mxu0 0
  %1278 = vmatpush.bf16.msra.mxu0 %v1266
  %1279 = vmatmul.bf16.gmra.mxu0 %v1269
  %v1280 = vpop.f32.mrf.mxu0
  %v1281 = vadd.f32 0.0, %v1280
  %v1282 = vpop.f32.mrf.mxu0
  %v1283 = vadd.f32 0.0, %v1282
  %1284 = vdwg.mxu0
  %v1287 = vunpack.c.l.b16 %v1254
  %v1288 = vunpack.c.l.b16 %v1255
  %v1289 = vpack.c.b16 %v1288, %v1287
  %1290 = vrot.lane.b32.xlu0 %v782, 24
  %v1291 = vpop.permute.xlu0 %1290
  %v1294 = vsel %vm581, %v1289, 0
  %1296 = vmatpush.bf16.msra.mxu0 0
  %1297 = vmatpush.bf16.msra.mxu0 0
  %1298 = vmatpush.bf16.msra.mxu0 0
  %1299 = vmatpush.bf16.msra.mxu0 0
  %1300 = vmatpush.bf16.msra.mxu0 0
  %1301 = vmatpush.bf16.msra.mxu0 0
  %1302 = vmatpush.bf16.msra.mxu0 0
  %1303 = vmatpush.bf16.msra.mxu0 %v1291
  %1304 = vmatmul.bf16.gmra.mxu0 %v1294
  %v1305 = vpop.f32.mrf.mxu0
  %v1306 = vadd.f32 0.0, %v1305
  %v1307 = vpop.f32.mrf.mxu0
  %v1308 = vadd.f32 0.0, %v1307
  %1309 = vdwg.mxu0
  %v1312 = vunpack.c.l.b16 %v1256
  %v1313 = vunpack.c.l.b16 %v1257
  %v1314 = vpack.c.b16 %v1313, %v1312
  %v1316 = vsel %vm581, %v1314, 0
  %1318 = vmatpush.bf16.msra.mxu0 0
  %1319 = vmatpush.bf16.msra.mxu0 0
  %1320 = vmatpush.bf16.msra.mxu0 0
  %1321 = vmatpush.bf16.msra.mxu0 0
  %1322 = vmatpush.bf16.msra.mxu0 0
  %1323 = vmatpush.bf16.msra.mxu0 0
  %1324 = vmatpush.bf16.msra.mxu0 0
  %1325 = vmatpush.bf16.msra.mxu0 %v1266
  %1326 = vmatmul.bf16.gmra.mxu0 %v1316
  %v1327 = vpop.f32.mrf.mxu0
  %v1328 = vadd.f32 0.0, %v1327
  %v1329 = vpop.f32.mrf.mxu0
  %v1330 = vadd.f32 0.0, %v1329
  %1331 = vdwg.mxu0
  %v1334 = vunpack.c.l.b16 %v1258
  %v1335 = vunpack.c.l.b16 %v1259
  %v1336 = vpack.c.b16 %v1335, %v1334
  %v1338 = vsel %vm581, %v1336, 0
  %1340 = vmatpush.bf16.msra.mxu0 0
  %1341 = vmatpush.bf16.msra.mxu0 0
  %1342 = vmatpush.bf16.msra.mxu0 0
  %1343 = vmatpush.bf16.msra.mxu0 0
  %1344 = vmatpush.bf16.msra.mxu0 0
  %1345 = vmatpush.bf16.msra.mxu0 0
  %1346 = vmatpush.bf16.msra.mxu0 0
  %1347 = vmatpush.bf16.msra.mxu0 %v1291
  %1348 = vmatmul.bf16.gmra.mxu0 %v1338
  %v1349 = vpop.f32.mrf.mxu0
  %v1350 = vadd.f32 0.0, %v1349
  %v1351 = vpop.f32.mrf.mxu0
  %v1352 = vadd.f32 0.0, %v1351
  %1353 = vdwg.mxu0
  %v1354 = vpack.c.bf16 %v1283, %v1281
  %v1355 = vpack.c.bf16 %v1308, %v1306
  %v1356 = vpack.c.bf16 %v1330, %v1328
  %v1357 = vpack.c.bf16 %v1352, %v1350
  %v1358 = vpack.c.bf16 %v656, %v656
  %v1360 = vsel %vm750, %v1354, 0
  %v1363 = vsel %vm750, %v1355, 0
  %v1366 = vsel %vm750, %v1356, 0
  %v1369 = vsel %vm750, %v1357, 0
  %vm1371 = vcmask 1043456
  %v1373 = vsel %vm1371, %v1358, 0
  %1375 = vmatpush.bf16.msra.mxu0 0
  %1376 = vmatpush.bf16.msra.mxu0 0
  %1377 = vmatpush.bf16.msra.mxu0 0
  %1378 = vmatpush.bf16.msra.mxu0 0
  %1379 = vmatpush.bf16.msra.mxu0 0
  %1380 = vmatpush.bf16.msra.mxu0 0
  %1381 = vmatpush.bf16.msra.mxu0 0
  %1382 = vmatpush.bf16.msra.mxu0 %v1373
  %1383 = vmatmul.bf16.gmra.mxu0 %v1360
  %v1384 = vpop.f32.mrf.mxu0
  %v1385 = vadd.f32 0.0, %v1384
  %v1386 = vpop.f32.mrf.mxu0
  %v1387 = vadd.f32 0.0, %v1386
  %1388 = vmatmul.bf16.gmra.mxu0 %v1363
  %v1389 = vpop.f32.mrf.mxu0
  %v1390 = vadd.f32 0.0, %v1389
  %v1391 = vpop.f32.mrf.mxu0
  %v1392 = vadd.f32 0.0, %v1391
  %1393 = vmatmul.bf16.gmra.mxu0 %v1366
  %v1394 = vpop.f32.mrf.mxu0
  %v1395 = vadd.f32 0.0, %v1394
  %v1396 = vpop.f32.mrf.mxu0
  %v1397 = vadd.f32 0.0, %v1396
  %1398 = vmatmul.bf16.gmra.mxu0 %v1369
  %v1399 = vpop.f32.mrf.mxu0
  %v1400 = vadd.f32 0.0, %v1399
  %v1401 = vpop.f32.mrf.mxu0
  %v1402 = vadd.f32 0.0, %v1401
  %1403 = vdwg.mxu0
  %v1405 = vsel %vm750, %v1063, 0
  %v1408 = vsel %vm750, %v1064, 0
  %v1411 = vsel %vm750, %v1065, 0
  %v1414 = vsel %vm750, %v1066, 0
  %v1417 = vsel %vm1371, %v1067, 0
  %1419 = vmatpush.bf16.msra.mxu0 0
  %1420 = vmatpush.bf16.msra.mxu0 0
  %1421 = vmatpush.bf16.msra.mxu0 0
  %1422 = vmatpush.bf16.msra.mxu0 0
  %1423 = vmatpush.bf16.msra.mxu0 0
  %1424 = vmatpush.bf16.msra.mxu0 0
  %1425 = vmatpush.bf16.msra.mxu0 0
  %1426 = vmatpush.bf16.msra.mxu0 %v1417
  %1427 = vmatmul.bf16.gmra.mxu0 %v1405
  %v1428 = vpop.f32.mrf.mxu0
  %v1429 = vadd.f32 %v1385, %v1428
  %v1430 = vpop.f32.mrf.mxu0
  %v1431 = vadd.f32 %v1387, %v1430
  %1432 = vmatmul.bf16.gmra.mxu0 %v1408
  %v1433 = vpop.f32.mrf.mxu0
  %v1434 = vadd.f32 %v1390, %v1433
  %v1435 = vpop.f32.mrf.mxu0
  %v1436 = vadd.f32 %v1392, %v1435
  %1437 = vmatmul.bf16.gmra.mxu0 %v1411
  %v1438 = vpop.f32.mrf.mxu0
  %v1439 = vadd.f32 %v1395, %v1438
  %v1440 = vpop.f32.mrf.mxu0
  %v1441 = vadd.f32 %v1397, %v1440
  %1442 = vmatmul.bf16.gmra.mxu0 %v1414
  %v1443 = vpop.f32.mrf.mxu0
  %v1444 = vadd.f32 %v1400, %v1443
  %v1445 = vpop.f32.mrf.mxu0
  %v1446 = vadd.f32 %v1402, %v1445
  %1447 = vdwg.mxu0
  %1448 = vrot.lane.b32.xlu0 %v740, 80
  %v1449 = vpop.permute.xlu0 %1448
  %1450 = vrot.lane.b32.xlu0 %v747, 48
  %v1451 = vpop.permute.xlu0 %1450
  %v1453 = vsel %vm750, %v1449, 0
  %v1456 = vsel %vm750, %v1451, 0
  %1458 = vmatpush.bf16.xpose.msra.mxu0 0
  %1459 = vmatpush.bf16.xpose.msra.mxu0 0
  %1460 = vmatpush.bf16.xpose.msra.mxu0 0
  %1461 = vmatpush.bf16.xpose.msra.mxu0 0
  %1462 = vmatpush.bf16.xpose.msra.mxu0 0
  %1463 = vmatpush.bf16.xpose.msra.mxu0 0
  %1464 = vmatpush.bf16.xpose.msra.mxu0 0
  %1465 = vmatpush.bf16.xpose.msra.mxu0 %v1456
  %1466 = vmatmul.bf16.gmra.mxu0 %v1453
  %v1467 = vpop.f32.mrf.mxu0
  %v1468 = vadd.f32 0.0, %v1467
  %v1469 = vpop.f32.mrf.mxu0
  %v1470 = vadd.f32 0.0, %v1469
  %1471 = vdwg.mxu0
  %1472 = vrot.lane.b32.xlu0 %v775, 80
  %v1473 = vpop.permute.xlu0 %1472
  %1474 = vrot.lane.b32.xlu0 %v782, 48
  %v1475 = vpop.permute.xlu0 %1474
  %v1477 = vsel %vm750, %v1473, 0
  %v1480 = vsel %vm750, %v1475, 0
  %1482 = vmatpush.bf16.xpose.msra.mxu0 0
  %1483 = vmatpush.bf16.xpose.msra.mxu0 0
  %1484 = vmatpush.bf16.xpose.msra.mxu0 0
  %1485 = vmatpush.bf16.xpose.msra.mxu0 0
  %1486 = vmatpush.bf16.xpose.msra.mxu0 0
  %1487 = vmatpush.bf16.xpose.msra.mxu0 0
  %1488 = vmatpush.bf16.xpose.msra.mxu0 0
  %1489 = vmatpush.bf16.xpose.msra.mxu0 %v1480
  %1490 = vmatmul.bf16.gmra.mxu0 %v1477
  %v1491 = vpop.f32.mrf.mxu0
  %v1492 = vadd.f32 0.0, %v1491
  %v1493 = vpop.f32.mrf.mxu0
  %v1494 = vadd.f32 0.0, %v1493
  %1495 = vdwg.mxu0
  %1496 = vrot.lane.b32.xlu0 %v809, 80
  %v1497 = vpop.permute.xlu0 %1496
  %1498 = vrot.lane.b32.xlu0 %v816, 48
  %v1499 = vpop.permute.xlu0 %1498
  %v1501 = vsel %vm750, %v1497, 0
  %v1504 = vsel %vm750, %v1499, 0
  %1506 = vmatpush.bf16.xpose.msra.mxu0 0
  %1507 = vmatpush.bf16.xpose.msra.mxu0 0
  %1508 = vmatpush.bf16.xpose.msra.mxu0 0
  %1509 = vmatpush.bf16.xpose.msra.mxu0 0
  %1510 = vmatpush.bf16.xpose.msra.mxu0 0
  %1511 = vmatpush.bf16.xpose.msra.mxu0 0
  %1512 = vmatpush.bf16.xpose.msra.mxu0 0
  %1513 = vmatpush.bf16.xpose.msra.mxu0 %v1504
  %1514 = vmatmul.bf16.gmra.mxu0 %v1501
  %v1515 = vpop.f32.mrf.mxu0
  %v1516 = vadd.f32 0.0, %v1515
  %v1517 = vpop.f32.mrf.mxu0
  %v1518 = vadd.f32 0.0, %v1517
  %1519 = vdwg.mxu0
  %1520 = vrot.lane.b32.xlu0 %v843, 80
  %v1521 = vpop.permute.xlu0 %1520
  %1522 = vrot.lane.b32.xlu0 %v850, 48
  %v1523 = vpop.permute.xlu0 %1522
  %v1525 = vsel %vm750, %v1521, 0
  %v1528 = vsel %vm750, %v1523, 0
  %1530 = vmatpush.bf16.xpose.msra.mxu0 0
  %1531 = vmatpush.bf16.xpose.msra.mxu0 0
  %1532 = vmatpush.bf16.xpose.msra.mxu0 0
  %1533 = vmatpush.bf16.xpose.msra.mxu0 0
  %1534 = vmatpush.bf16.xpose.msra.mxu0 0
  %1535 = vmatpush.bf16.xpose.msra.mxu0 0
  %1536 = vmatpush.bf16.xpose.msra.mxu0 0
  %1537 = vmatpush.bf16.xpose.msra.mxu0 %v1528
  %1538 = vmatmul.bf16.gmra.mxu0 %v1525
  %v1539 = vpop.f32.mrf.mxu0
  %v1540 = vadd.f32 0.0, %v1539
  %v1541 = vpop.f32.mrf.mxu0
  %v1542 = vadd.f32 0.0, %v1541
  %1543 = vdwg.mxu0
  %v1544 = vsel %vm581, %v1468, -inf
  %1545 = vmax.xlane.f32.xlu0 %v1544
  %v1546 = vpop.xlane.xlu0 %1545
  %v1547 = vsel %vm581, %v1470, -inf
  %1548 = vmax.xlane.f32.xlu0 %v1547
  %v1549 = vpop.xlane.xlu0 %1548
  %v1550 = vsel %vm581, %v1492, -inf
  %1551 = vmax.xlane.f32.xlu0 %v1550
  %v1552 = vpop.xlane.xlu0 %1551
  %v1553 = vsel %vm581, %v1494, -inf
  %1554 = vmax.xlane.f32.xlu0 %v1553
  %v1555 = vpop.xlane.xlu0 %1554
  %v1556 = vsel %vm581, %v1516, -inf
  %1557 = vmax.xlane.f32.xlu0 %v1556
  %v1558 = vpop.xlane.xlu0 %1557
  %v1559 = vsel %vm581, %v1518, -inf
  %1560 = vmax.xlane.f32.xlu0 %v1559
  %v1561 = vpop.xlane.xlu0 %1560
  %v1562 = vsel %vm581, %v1540, -inf
  %1563 = vmax.xlane.f32.xlu0 %v1562
  %v1564 = vpop.xlane.xlu0 %1563
  %v1565 = vsel %vm581, %v1542, -inf
  %1566 = vmax.xlane.f32.xlu0 %v1565
  %v1567 = vpop.xlane.xlu0 %1566
  %v1568 = vsub.f32 %v1468, %v1546
  %v1569 = vsub.f32 %v1470, %v1549
  %v1570 = vsub.f32 %v1492, %v1552
  %v1571 = vsub.f32 %v1494, %v1555
  %v1572 = vsub.f32 %v1516, %v1558
  %v1573 = vsub.f32 %v1518, %v1561
  %v1574 = vsub.f32 %v1540, %v1564
  %v1575 = vsub.f32 %v1542, %v1567
  %v1576 = vmul.f32 %v1568, 1.442695
  %v1577 = vpow.pop %v1576
  %v1578 = vmul.f32 %v1569, 1.442695
  %v1579 = vpow.pop %v1578
  %v1580 = vmul.f32 %v1570, 1.442695
  %v1581 = vpow.pop %v1580
  %v1582 = vmul.f32 %v1571, 1.442695
  %v1583 = vpow.pop %v1582
  %v1584 = vmul.f32 %v1572, 1.442695
  %v1585 = vpow.pop %v1584
  %v1586 = vmul.f32 %v1573, 1.442695
  %v1587 = vpow.pop %v1586
  %v1588 = vmul.f32 %v1574, 1.442695
  %v1589 = vpow.pop %v1588
  %v1590 = vmul.f32 %v1575, 1.442695
  %v1591 = vpow.pop %v1590
  %v1592 = vsel %vm581, %v1577, 0.0
  %1593 = vadd.xlane.f32.xlu0 %v1592
  %v1594 = vpop.xlane.xlu0 %1593
  %v1595 = vsel %vm581, %v1579, 0.0
  %1596 = vadd.xlane.f32.xlu0 %v1595
  %v1597 = vpop.xlane.xlu0 %1596
  %v1598 = vsel %vm581, %v1581, 0.0
  %1599 = vadd.xlane.f32.xlu0 %v1598
  %v1600 = vpop.xlane.xlu0 %1599
  %v1601 = vsel %vm581, %v1583, 0.0
  %1602 = vadd.xlane.f32.xlu0 %v1601
  %v1603 = vpop.xlane.xlu0 %1602
  %v1604 = vsel %vm581, %v1585, 0.0
  %1605 = vadd.xlane.f32.xlu0 %v1604
  %v1606 = vpop.xlane.xlu0 %1605
  %v1607 = vsel %vm581, %v1587, 0.0
  %1608 = vadd.xlane.f32.xlu0 %v1607
  %v1609 = vpop.xlane.xlu0 %1608
  %v1610 = vsel %vm581, %v1589, 0.0
  %1611 = vadd.xlane.f32.xlu0 %v1610
  %v1612 = vpop.xlane.xlu0 %1611
  %v1613 = vsel %vm581, %v1591, 0.0
  %1614 = vadd.xlane.f32.xlu0 %v1613
  %v1615 = vpop.xlane.xlu0 %1614
  %v1616 = vrcp.pop %v1594
  %v1617 = vrcp.pop %v1597
  %v1618 = vrcp.pop %v1600
  %v1619 = vrcp.pop %v1603
  %v1620 = vrcp.pop %v1606
  %v1621 = vrcp.pop %v1609
  %v1622 = vrcp.pop %v1612
  %v1623 = vrcp.pop %v1615
  %v1624 = vmul.f32 %v1577, %v1616
  %v1625 = vmul.f32 %v1579, %v1617
  %v1626 = vmul.f32 %v1581, %v1618
  %v1627 = vmul.f32 %v1583, %v1619
  %v1628 = vmul.f32 %v1585, %v1620
  %v1629 = vmul.f32 %v1587, %v1621
  %v1630 = vmul.f32 %v1589, %v1622
  %v1631 = vmul.f32 %v1591, %v1623
  %v1632 = vpack.c.bf16 %v1624, %v1624
  %v1633 = vpack.c.bf16 %v1625, %v1625
  %v1634 = vpack.c.bf16 %v1626, %v1626
  %v1635 = vpack.c.bf16 %v1627, %v1627
  %v1636 = vpack.c.bf16 %v1628, %v1628
  %v1637 = vpack.c.bf16 %v1629, %v1629
  %v1638 = vpack.c.bf16 %v1630, %v1630
  %v1639 = vpack.c.bf16 %v1631, %v1631
  %v1642 = vunpack.c.l.b16 %v1632
  %v1643 = vunpack.c.l.b16 %v1633
  %v1644 = vpack.c.b16 %v1643, %v1642
  %1645 = vrot.lane.b32.xlu0 %v747, 16
  %v1646 = vpop.permute.xlu0 %1645
  %v1649 = vsel %vm581, %v1644, 0
  %1651 = vmatpush.bf16.msra.mxu0 0
  %1652 = vmatpush.bf16.msra.mxu0 0
  %1653 = vmatpush.bf16.msra.mxu0 0
  %1654 = vmatpush.bf16.msra.mxu0 0
  %1655 = vmatpush.bf16.msra.mxu0 0
  %1656 = vmatpush.bf16.msra.mxu0 0
  %1657 = vmatpush.bf16.msra.mxu0 0
  %1658 = vmatpush.bf16.msra.mxu0 %v1646
  %1659 = vmatmul.bf16.gmra.mxu0 %v1649
  %v1660 = vpop.f32.mrf.mxu0
  %v1661 = vadd.f32 0.0, %v1660
  %v1662 = vpop.f32.mrf.mxu0
  %v1663 = vadd.f32 0.0, %v1662
  %1664 = vdwg.mxu0
  %v1667 = vunpack.c.l.b16 %v1634
  %v1668 = vunpack.c.l.b16 %v1635
  %v1669 = vpack.c.b16 %v1668, %v1667
  %1670 = vrot.lane.b32.xlu0 %v782, 16
  %v1671 = vpop.permute.xlu0 %1670
  %v1674 = vsel %vm581, %v1669, 0
  %1676 = vmatpush.bf16.msra.mxu0 0
  %1677 = vmatpush.bf16.msra.mxu0 0
  %1678 = vmatpush.bf16.msra.mxu0 0
  %1679 = vmatpush.bf16.msra.mxu0 0
  %1680 = vmatpush.bf16.msra.mxu0 0
  %1681 = vmatpush.bf16.msra.mxu0 0
  %1682 = vmatpush.bf16.msra.mxu0 0
  %1683 = vmatpush.bf16.msra.mxu0 %v1671
  %1684 = vmatmul.bf16.gmra.mxu0 %v1674
  %v1685 = vpop.f32.mrf.mxu0
  %v1686 = vadd.f32 0.0, %v1685
  %v1687 = vpop.f32.mrf.mxu0
  %v1688 = vadd.f32 0.0, %v1687
  %1689 = vdwg.mxu0
  %v1692 = vunpack.c.l.b16 %v1636
  %v1693 = vunpack.c.l.b16 %v1637
  %v1694 = vpack.c.b16 %v1693, %v1692
  %v1696 = vsel %vm581, %v1694, 0
  %1698 = vmatpush.bf16.msra.mxu0 0
  %1699 = vmatpush.bf16.msra.mxu0 0
  %1700 = vmatpush.bf16.msra.mxu0 0
  %1701 = vmatpush.bf16.msra.mxu0 0
  %1702 = vmatpush.bf16.msra.mxu0 0
  %1703 = vmatpush.bf16.msra.mxu0 0
  %1704 = vmatpush.bf16.msra.mxu0 0
  %1705 = vmatpush.bf16.msra.mxu0 %v1646
  %1706 = vmatmul.bf16.gmra.mxu0 %v1696
  %v1707 = vpop.f32.mrf.mxu0
  %v1708 = vadd.f32 0.0, %v1707
  %v1709 = vpop.f32.mrf.mxu0
  %v1710 = vadd.f32 0.0, %v1709
  %1711 = vdwg.mxu0
  %v1714 = vunpack.c.l.b16 %v1638
  %v1715 = vunpack.c.l.b16 %v1639
  %v1716 = vpack.c.b16 %v1715, %v1714
  %v1718 = vsel %vm581, %v1716, 0
  %1720 = vmatpush.bf16.msra.mxu0 0
  %1721 = vmatpush.bf16.msra.mxu0 0
  %1722 = vmatpush.bf16.msra.mxu0 0
  %1723 = vmatpush.bf16.msra.mxu0 0
  %1724 = vmatpush.bf16.msra.mxu0 0
  %1725 = vmatpush.bf16.msra.mxu0 0
  %1726 = vmatpush.bf16.msra.mxu0 0
  %1727 = vmatpush.bf16.msra.mxu0 %v1671
  %1728 = vmatmul.bf16.gmra.mxu0 %v1718
  %v1729 = vpop.f32.mrf.mxu0
  %v1730 = vadd.f32 0.0, %v1729
  %v1731 = vpop.f32.mrf.mxu0
  %v1732 = vadd.f32 0.0, %v1731
  %1733 = vdwg.mxu0
  %v1734 = vpack.c.bf16 %v1663, %v1661
  %v1735 = vpack.c.bf16 %v1688, %v1686
  %v1736 = vpack.c.bf16 %v1710, %v1708
  %v1737 = vpack.c.bf16 %v1732, %v1730
  %v1738 = vpack.c.bf16 %v657, %v657
  %v1740 = vsel %vm750, %v1734, 0
  %v1743 = vsel %vm750, %v1735, 0
  %v1746 = vsel %vm750, %v1736, 0
  %v1749 = vsel %vm750, %v1737, 0
  %v1752 = vsel %vm1371, %v1738, 0
  %1754 = vmatpush.bf16.msra.mxu0 0
  %1755 = vmatpush.bf16.msra.mxu0 0
  %1756 = vmatpush.bf16.msra.mxu0 0
  %1757 = vmatpush.bf16.msra.mxu0 0
  %1758 = vmatpush.bf16.msra.mxu0 0
  %1759 = vmatpush.bf16.msra.mxu0 0
  %1760 = vmatpush.bf16.msra.mxu0 0
  %1761 = vmatpush.bf16.msra.mxu0 %v1752
  %1762 = vmatmul.bf16.gmra.mxu0 %v1740
  %v1763 = vpop.f32.mrf.mxu0
  %v1764 = vadd.f32 0.0, %v1763
  %v1765 = vpop.f32.mrf.mxu0
  %v1766 = vadd.f32 0.0, %v1765
  %1767 = vmatmul.bf16.gmra.mxu0 %v1743
  %v1768 = vpop.f32.mrf.mxu0
  %v1769 = vadd.f32 0.0, %v1768
  %v1770 = vpop.f32.mrf.mxu0
  %v1771 = vadd.f32 0.0, %v1770
  %1772 = vmatmul.bf16.gmra.mxu0 %v1746
  %v1773 = vpop.f32.mrf.mxu0
  %v1774 = vadd.f32 0.0, %v1773
  %v1775 = vpop.f32.mrf.mxu0
  %v1776 = vadd.f32 0.0, %v1775
  %1777 = vmatmul.bf16.gmra.mxu0 %v1749
  %v1778 = vpop.f32.mrf.mxu0
  %v1779 = vadd.f32 0.0, %v1778
  %v1780 = vpop.f32.mrf.mxu0
  %v1781 = vadd.f32 0.0, %v1780
  %1782 = vdwg.mxu0
  %v1783 = vadd.f32 %v1429, %v1764
  %v1784 = vadd.f32 %v1431, %v1766
  %v1785 = vadd.f32 %v1434, %v1769
  %v1786 = vadd.f32 %v1436, %v1771
  %v1787 = vadd.f32 %v1439, %v1774
  %v1788 = vadd.f32 %v1441, %v1776
  %v1789 = vadd.f32 %v1444, %v1779
  %v1790 = vadd.f32 %v1446, %v1781
  %1791 = vrot.lane.b32.xlu0 %v740, 72
  %v1792 = vpop.permute.xlu0 %1791
  %1793 = vrot.lane.b32.xlu0 %v747, 40
  %v1794 = vpop.permute.xlu0 %1793
  %v1796 = vsel %vm750, %v1792, 0
  %v1799 = vsel %vm750, %v1794, 0
  %1801 = vmatpush.bf16.xpose.msra.mxu0 0
  %1802 = vmatpush.bf16.xpose.msra.mxu0 0
  %1803 = vmatpush.bf16.xpose.msra.mxu0 0
  %1804 = vmatpush.bf16.xpose.msra.mxu0 0
  %1805 = vmatpush.bf16.xpose.msra.mxu0 0
  %1806 = vmatpush.bf16.xpose.msra.mxu0 0
  %1807 = vmatpush.bf16.xpose.msra.mxu0 0
  %1808 = vmatpush.bf16.xpose.msra.mxu0 %v1799
  %1809 = vmatmul.bf16.gmra.mxu0 %v1796
  %v1810 = vpop.f32.mrf.mxu0
  %v1811 = vadd.f32 0.0, %v1810
  %v1812 = vpop.f32.mrf.mxu0
  %v1813 = vadd.f32 0.0, %v1812
  %1814 = vdwg.mxu0
  %1815 = vrot.lane.b32.xlu0 %v775, 72
  %v1816 = vpop.permute.xlu0 %1815
  %1817 = vrot.lane.b32.xlu0 %v782, 40
  %v1818 = vpop.permute.xlu0 %1817
  %v1820 = vsel %vm750, %v1816, 0
  %v1823 = vsel %vm750, %v1818, 0
  %1825 = vmatpush.bf16.xpose.msra.mxu0 0
  %1826 = vmatpush.bf16.xpose.msra.mxu0 0
  %1827 = vmatpush.bf16.xpose.msra.mxu0 0
  %1828 = vmatpush.bf16.xpose.msra.mxu0 0
  %1829 = vmatpush.bf16.xpose.msra.mxu0 0
  %1830 = vmatpush.bf16.xpose.msra.mxu0 0
  %1831 = vmatpush.bf16.xpose.msra.mxu0 0
  %1832 = vmatpush.bf16.xpose.msra.mxu0 %v1823
  %1833 = vmatmul.bf16.gmra.mxu0 %v1820
  %v1834 = vpop.f32.mrf.mxu0
  %v1835 = vadd.f32 0.0, %v1834
  %v1836 = vpop.f32.mrf.mxu0
  %v1837 = vadd.f32 0.0, %v1836
  %1838 = vdwg.mxu0
  %1839 = vrot.lane.b32.xlu0 %v809, 72
  %v1840 = vpop.permute.xlu0 %1839
  %1841 = vrot.lane.b32.xlu0 %v816, 40
  %v1842 = vpop.permute.xlu0 %1841
  %v1844 = vsel %vm750, %v1840, 0
  %v1847 = vsel %vm750, %v1842, 0
  %1849 = vmatpush.bf16.xpose.msra.mxu0 0
  %1850 = vmatpush.bf16.xpose.msra.mxu0 0
  %1851 = vmatpush.bf16.xpose.msra.mxu0 0
  %1852 = vmatpush.bf16.xpose.msra.mxu0 0
  %1853 = vmatpush.bf16.xpose.msra.mxu0 0
  %1854 = vmatpush.bf16.xpose.msra.mxu0 0
  %1855 = vmatpush.bf16.xpose.msra.mxu0 0
  %1856 = vmatpush.bf16.xpose.msra.mxu0 %v1847
  %1857 = vmatmul.bf16.gmra.mxu0 %v1844
  %v1858 = vpop.f32.mrf.mxu0
  %v1859 = vadd.f32 0.0, %v1858
  %v1860 = vpop.f32.mrf.mxu0
  %v1861 = vadd.f32 0.0, %v1860
  %1862 = vdwg.mxu0
  %1863 = vrot.lane.b32.xlu0 %v843, 72
  %v1864 = vpop.permute.xlu0 %1863
  %1865 = vrot.lane.b32.xlu0 %v850, 40
  %v1866 = vpop.permute.xlu0 %1865
  %v1868 = vsel %vm750, %v1864, 0
  %v1871 = vsel %vm750, %v1866, 0
  %1873 = vmatpush.bf16.xpose.msra.mxu0 0
  %1874 = vmatpush.bf16.xpose.msra.mxu0 0
  %1875 = vmatpush.bf16.xpose.msra.mxu0 0
  %1876 = vmatpush.bf16.xpose.msra.mxu0 0
  %1877 = vmatpush.bf16.xpose.msra.mxu0 0
  %1878 = vmatpush.bf16.xpose.msra.mxu0 0
  %1879 = vmatpush.bf16.xpose.msra.mxu0 0
  %1880 = vmatpush.bf16.xpose.msra.mxu0 %v1871
  %1881 = vmatmul.bf16.gmra.mxu0 %v1868
  %v1882 = vpop.f32.mrf.mxu0
  %v1883 = vadd.f32 0.0, %v1882
  %v1884 = vpop.f32.mrf.mxu0
  %v1885 = vadd.f32 0.0, %v1884
  %1886 = vdwg.mxu0
  %v1887 = vsel %vm581, %v1811, -inf
  %1888 = vmax.xlane.f32.xlu0 %v1887
  %v1889 = vpop.xlane.xlu0 %1888
  %v1890 = vsel %vm581, %v1813, -inf
  %1891 = vmax.xlane.f32.xlu0 %v1890
  %v1892 = vpop.xlane.xlu0 %1891
  %v1893 = vsel %vm581, %v1835, -inf
  %1894 = vmax.xlane.f32.xlu0 %v1893
  %v1895 = vpop.xlane.xlu0 %1894
  %v1896 = vsel %vm581, %v1837, -inf
  %1897 = vmax.xlane.f32.xlu0 %v1896
  %v1898 = vpop.xlane.xlu0 %1897
  %v1899 = vsel %vm581, %v1859, -inf
  %1900 = vmax.xlane.f32.xlu0 %v1899
  %v1901 = vpop.xlane.xlu0 %1900
  %v1902 = vsel %vm581, %v1861, -inf
  %1903 = vmax.xlane.f32.xlu0 %v1902
  %v1904 = vpop.xlane.xlu0 %1903
  %v1905 = vsel %vm581, %v1883, -inf
  %1906 = vmax.xlane.f32.xlu0 %v1905
  %v1907 = vpop.xlane.xlu0 %1906
  %v1908 = vsel %vm581, %v1885, -inf
  %1909 = vmax.xlane.f32.xlu0 %v1908
  %v1910 = vpop.xlane.xlu0 %1909
  %v1911 = vsub.f32 %v1811, %v1889
  %v1912 = vsub.f32 %v1813, %v1892
  %v1913 = vsub.f32 %v1835, %v1895
  %v1914 = vsub.f32 %v1837, %v1898
  %v1915 = vsub.f32 %v1859, %v1901
  %v1916 = vsub.f32 %v1861, %v1904
  %v1917 = vsub.f32 %v1883, %v1907
  %v1918 = vsub.f32 %v1885, %v1910
  %v1919 = vmul.f32 %v1911, 1.442695
  %v1920 = vpow.pop %v1919
  %v1921 = vmul.f32 %v1912, 1.442695
  %v1922 = vpow.pop %v1921
  %v1923 = vmul.f32 %v1913, 1.442695
  %v1924 = vpow.pop %v1923
  %v1925 = vmul.f32 %v1914, 1.442695
  %v1926 = vpow.pop %v1925
  %v1927 = vmul.f32 %v1915, 1.442695
  %v1928 = vpow.pop %v1927
  %v1929 = vmul.f32 %v1916, 1.442695
  %v1930 = vpow.pop %v1929
  %v1931 = vmul.f32 %v1917, 1.442695
  %v1932 = vpow.pop %v1931
  %v1933 = vmul.f32 %v1918, 1.442695
  %v1934 = vpow.pop %v1933
  %v1935 = vsel %vm581, %v1920, 0.0
  %1936 = vadd.xlane.f32.xlu0 %v1935
  %v1937 = vpop.xlane.xlu0 %1936
  %v1938 = vsel %vm581, %v1922, 0.0
  %1939 = vadd.xlane.f32.xlu0 %v1938
  %v1940 = vpop.xlane.xlu0 %1939
  %v1941 = vsel %vm581, %v1924, 0.0
  %1942 = vadd.xlane.f32.xlu0 %v1941
  %v1943 = vpop.xlane.xlu0 %1942
  %v1944 = vsel %vm581, %v1926, 0.0
  %1945 = vadd.xlane.f32.xlu0 %v1944
  %v1946 = vpop.xlane.xlu0 %1945
  %v1947 = vsel %vm581, %v1928, 0.0
  %1948 = vadd.xlane.f32.xlu0 %v1947
  %v1949 = vpop.xlane.xlu0 %1948
  %v1950 = vsel %vm581, %v1930, 0.0
  %1951 = vadd.xlane.f32.xlu0 %v1950
  %v1952 = vpop.xlane.xlu0 %1951
  %v1953 = vsel %vm581, %v1932, 0.0
  %1954 = vadd.xlane.f32.xlu0 %v1953
  %v1955 = vpop.xlane.xlu0 %1954
  %v1956 = vsel %vm581, %v1934, 0.0
  %1957 = vadd.xlane.f32.xlu0 %v1956
  %v1958 = vpop.xlane.xlu0 %1957
  %v1959 = vrcp.pop %v1937
  %v1960 = vrcp.pop %v1940
  %v1961 = vrcp.pop %v1943
  %v1962 = vrcp.pop %v1946
  %v1963 = vrcp.pop %v1949
  %v1964 = vrcp.pop %v1952
  %v1965 = vrcp.pop %v1955
  %v1966 = vrcp.pop %v1958
  %v1967 = vmul.f32 %v1920, %v1959
  %v1968 = vmul.f32 %v1922, %v1960
  %v1969 = vmul.f32 %v1924, %v1961
  %v1970 = vmul.f32 %v1926, %v1962
  %v1971 = vmul.f32 %v1928, %v1963
  %v1972 = vmul.f32 %v1930, %v1964
  %v1973 = vmul.f32 %v1932, %v1965
  %v1974 = vmul.f32 %v1934, %v1966
  %v1975 = vpack.c.bf16 %v1967, %v1967
  %v1976 = vpack.c.bf16 %v1968, %v1968
  %v1977 = vpack.c.bf16 %v1969, %v1969
  %v1978 = vpack.c.bf16 %v1970, %v1970
  %v1979 = vpack.c.bf16 %v1971, %v1971
  %v1980 = vpack.c.bf16 %v1972, %v1972
  %v1981 = vpack.c.bf16 %v1973, %v1973
  %v1982 = vpack.c.bf16 %v1974, %v1974
  %v1985 = vunpack.c.l.b16 %v1975
  %v1986 = vunpack.c.l.b16 %v1976
  %v1987 = vpack.c.b16 %v1986, %v1985
  %1988 = vrot.lane.b32.xlu0 %v747, 8
  %v1989 = vpop.permute.xlu0 %1988
  %v1992 = vsel %vm581, %v1987, 0
  %1994 = vmatpush.bf16.msra.mxu0 0
  %1995 = vmatpush.bf16.msra.mxu0 0
  %1996 = vmatpush.bf16.msra.mxu0 0
  %1997 = vmatpush.bf16.msra.mxu0 0
  %1998 = vmatpush.bf16.msra.mxu0 0
  %1999 = vmatpush.bf16.msra.mxu0 0
  %2000 = vmatpush.bf16.msra.mxu0 0
  %2001 = vmatpush.bf16.msra.mxu0 %v1989
  %2002 = vmatmul.bf16.gmra.mxu0 %v1992
  %v2003 = vpop.f32.mrf.mxu0
  %v2004 = vadd.f32 0.0, %v2003
  %v2005 = vpop.f32.mrf.mxu0
  %v2006 = vadd.f32 0.0, %v2005
  %2007 = vdwg.mxu0
  %v2010 = vunpack.c.l.b16 %v1977
  %v2011 = vunpack.c.l.b16 %v1978
  %v2012 = vpack.c.b16 %v2011, %v2010
  %2013 = vrot.lane.b32.xlu0 %v782, 8
  %v2014 = vpop.permute.xlu0 %2013
  %v2017 = vsel %vm581, %v2012, 0
  %2019 = vmatpush.bf16.msra.mxu0 0
  %2020 = vmatpush.bf16.msra.mxu0 0
  %2021 = vmatpush.bf16.msra.mxu0 0
  %2022 = vmatpush.bf16.msra.mxu0 0
  %2023 = vmatpush.bf16.msra.mxu0 0
  %2024 = vmatpush.bf16.msra.mxu0 0
  %2025 = vmatpush.bf16.msra.mxu0 0
  %2026 = vmatpush.bf16.msra.mxu0 %v2014
  %2027 = vmatmul.bf16.gmra.mxu0 %v2017
  %v2028 = vpop.f32.mrf.mxu0
  %v2029 = vadd.f32 0.0, %v2028
  %v2030 = vpop.f32.mrf.mxu0
  %v2031 = vadd.f32 0.0, %v2030
  %2032 = vdwg.mxu0
  %v2035 = vunpack.c.l.b16 %v1979
  %v2036 = vunpack.c.l.b16 %v1980
  %v2037 = vpack.c.b16 %v2036, %v2035
  %v2039 = vsel %vm581, %v2037, 0
  %2041 = vmatpush.bf16.msra.mxu0 0
  %2042 = vmatpush.bf16.msra.mxu0 0
  %2043 = vmatpush.bf16.msra.mxu0 0
  %2044 = vmatpush.bf16.msra.mxu0 0
  %2045 = vmatpush.bf16.msra.mxu0 0
  %2046 = vmatpush.bf16.msra.mxu0 0
  %2047 = vmatpush.bf16.msra.mxu0 0
  %2048 = vmatpush.bf16.msra.mxu0 %v1989
  %2049 = vmatmul.bf16.gmra.mxu0 %v2039
  %v2050 = vpop.f32.mrf.mxu0
  %v2051 = vadd.f32 0.0, %v2050
  %v2052 = vpop.f32.mrf.mxu0
  %v2053 = vadd.f32 0.0, %v2052
  %2054 = vdwg.mxu0
  %v2057 = vunpack.c.l.b16 %v1981
  %v2058 = vunpack.c.l.b16 %v1982
  %v2059 = vpack.c.b16 %v2058, %v2057
  %v2061 = vsel %vm581, %v2059, 0
  %2063 = vmatpush.bf16.msra.mxu0 0
  %2064 = vmatpush.bf16.msra.mxu0 0
  %2065 = vmatpush.bf16.msra.mxu0 0
  %2066 = vmatpush.bf16.msra.mxu0 0
  %2067 = vmatpush.bf16.msra.mxu0 0
  %2068 = vmatpush.bf16.msra.mxu0 0
  %2069 = vmatpush.bf16.msra.mxu0 0
  %2070 = vmatpush.bf16.msra.mxu0 %v2014
  %2071 = vmatmul.bf16.gmra.mxu0 %v2061
  %v2072 = vpop.f32.mrf.mxu0
  %v2073 = vadd.f32 0.0, %v2072
  %v2074 = vpop.f32.mrf.mxu0
  %v2075 = vadd.f32 0.0, %v2074
  %2076 = vdwg.mxu0
  %v2077 = vpack.c.bf16 %v2006, %v2004
  %v2078 = vpack.c.bf16 %v2031, %v2029
  %v2079 = vpack.c.bf16 %v2053, %v2051
  %v2080 = vpack.c.bf16 %v2075, %v2073
  %v2081 = vpack.c.bf16 %v658, %v658
  %v2083 = vsel %vm750, %v2077, 0
  %v2086 = vsel %vm750, %v2078, 0
  %v2089 = vsel %vm750, %v2079, 0
  %v2092 = vsel %vm750, %v2080, 0
  %v2095 = vsel %vm1371, %v2081, 0
  %2097 = vmatpush.bf16.msra.mxu0 0
  %2098 = vmatpush.bf16.msra.mxu0 0
  %2099 = vmatpush.bf16.msra.mxu0 0
  %2100 = vmatpush.bf16.msra.mxu0 0
  %2101 = vmatpush.bf16.msra.mxu0 0
  %2102 = vmatpush.bf16.msra.mxu0 0
  %2103 = vmatpush.bf16.msra.mxu0 0
  %2104 = vmatpush.bf16.msra.mxu0 %v2095
  %2105 = vmatmul.bf16.gmra.mxu0 %v2083
  %v2106 = vpop.f32.mrf.mxu0
  %v2107 = vadd.f32 0.0, %v2106
  %v2108 = vpop.f32.mrf.mxu0
  %v2109 = vadd.f32 0.0, %v2108
  %2110 = vmatmul.bf16.gmra.mxu0 %v2086
  %v2111 = vpop.f32.mrf.mxu0
  %v2112 = vadd.f32 0.0, %v2111
  %v2113 = vpop.f32.mrf.mxu0
  %v2114 = vadd.f32 0.0, %v2113
  %2115 = vmatmul.bf16.gmra.mxu0 %v2089
  %v2116 = vpop.f32.mrf.mxu0
  %v2117 = vadd.f32 0.0, %v2116
  %v2118 = vpop.f32.mrf.mxu0
  %v2119 = vadd.f32 0.0, %v2118
  %2120 = vmatmul.bf16.gmra.mxu0 %v2092
  %v2121 = vpop.f32.mrf.mxu0
  %v2122 = vadd.f32 0.0, %v2121
  %v2123 = vpop.f32.mrf.mxu0
  %v2124 = vadd.f32 0.0, %v2123
  %2125 = vdwg.mxu0
  %v2126 = vadd.f32 %v1783, %v2107
  %v2127 = vadd.f32 %v1784, %v2109
  %v2128 = vadd.f32 %v1785, %v2112
  %v2129 = vadd.f32 %v1786, %v2114
  %v2130 = vadd.f32 %v1787, %v2117
  %v2131 = vadd.f32 %v1788, %v2119
  %v2132 = vadd.f32 %v1789, %v2122
  %v2133 = vadd.f32 %v1790, %v2124
  %v2134 = vld [vmem:[%s10] sm:$0x1]
  %v2136 = vperm.slane %v2134, 0
  %v2138 = vadd.f32 %v2126, %v2136
  %v2139 = vadd.f32 %v2127, %v2136
  %v2140 = vadd.f32 %v2128, %v2136
  %v2141 = vadd.f32 %v2129, %v2136
  %v2142 = vadd.f32 %v2130, %v2136
  %v2143 = vadd.f32 %v2131, %v2136
  %v2144 = vadd.f32 %v2132, %v2136
  %v2145 = vadd.f32 %v2133, %v2136
  %v2146 = vpack.c.bf16 %v2139, %v2138
  %v2147 = vpack.c.bf16 %v2141, %v2140
  %v2148 = vpack.c.bf16 %v2143, %v2142
  %v2149 = vpack.c.bf16 %v2145, %v2144
  %v2150 = vpack.c.bf16 %v656, %v655
  %v2151 = vpack.c.bf16 %v658, %v657
  %v2153 = vsel %vm65, %v2146, 0
  %v2156 = vsel %vm65, %v2147, 0
  %v2159 = vsel %vm65, %v2148, 0
  %v2162 = vsel %vm65, %v2149, 0
  %2164 = vmatpush.bf16.msra.mxu0 0
  %2165 = vmatpush.bf16.msra.mxu0 0
  %2166 = vmatpush.bf16.msra.mxu0 0
  %2167 = vmatpush.bf16.msra.mxu0 0
  %2168 = vmatpush.bf16.msra.mxu0 0
  %2169 = vmatpush.bf16.msra.mxu0 0
  %2170 = vmatpush.bf16.msra.mxu0 %v2151
  %2171 = vmatpush.bf16.msra.mxu0 %v2150
  %2172 = vmatmul.bf16.gmra.mxu0 %v2153
  %v2173 = vpop.f32.mrf.mxu0
  %v2174 = vadd.f32 %v2136, %v2173
  %v2175 = vpop.f32.mrf.mxu0
  %v2176 = vadd.f32 %v2136, %v2175
  %2177 = vmatmul.bf16.gmra.mxu0 %v2156
  %v2178 = vpop.f32.mrf.mxu0
  %v2179 = vadd.f32 %v2136, %v2178
  %v2180 = vpop.f32.mrf.mxu0
  %v2181 = vadd.f32 %v2136, %v2180
  %2182 = vmatmul.bf16.gmra.mxu0 %v2159
  %v2183 = vpop.f32.mrf.mxu0
  %v2184 = vadd.f32 %v2136, %v2183
  %v2185 = vpop.f32.mrf.mxu0
  %v2186 = vadd.f32 %v2136, %v2185
  %2187 = vmatmul.bf16.gmra.mxu0 %v2162
  %v2188 = vpop.f32.mrf.mxu0
  %v2189 = vadd.f32 %v2136, %v2188
  %v2190 = vpop.f32.mrf.mxu0
  %v2191 = vadd.f32 %v2136, %v2190
  %2192 = vdwg.mxu0
  %v2193 = vadd.f32 %v55, %v2138
  %v2194 = vadd.f32 %v56, %v2139
  %v2195 = vadd.f32 %v57, %v2140
  %v2196 = vadd.f32 %v58, %v2141
  %v2197 = vadd.f32 %v59, %v2142
  %v2198 = vadd.f32 %v60, %v2143
  %v2199 = vadd.f32 %v61, %v2144
  %v2200 = vadd.f32 %v62, %v2145
  %v2201 = vadd.f32 %v55, %v2174
  %v2202 = vadd.f32 %v56, %v2176
  %v2203 = vadd.f32 %v57, %v2179
  %v2204 = vadd.f32 %v58, %v2181
  %v2205 = vadd.f32 %v59, %v2184
  %v2206 = vadd.f32 %v60, %v2186
  %v2207 = vadd.f32 %v61, %v2189
  %v2208 = vadd.f32 %v62, %v2191
  %v2209 = vld [vmem:[%s11] sm:$0x1]
  %v2210 = vld [vmem:[%s12] sm:$0x1]
  %v2211 = vsel %vm65, %v2193, 0.0
  %2212 = vadd.xlane.f32.xlu0 %v2211
  %v2213 = vpop.xlane.xlu0 %2212
  %v2214 = vsel %vm65, %v2194, 0.0
  %2215 = vadd.xlane.f32.xlu0 %v2214
  %v2216 = vpop.xlane.xlu0 %2215
  %v2217 = vsel %vm65, %v2195, 0.0
  %2218 = vadd.xlane.f32.xlu0 %v2217
  %v2219 = vpop.xlane.xlu0 %2218
  %v2220 = vsel %vm65, %v2196, 0.0
  %2221 = vadd.xlane.f32.xlu0 %v2220
  %v2222 = vpop.xlane.xlu0 %2221
  %v2223 = vsel %vm65, %v2197, 0.0
  %2224 = vadd.xlane.f32.xlu0 %v2223
  %v2225 = vpop.xlane.xlu0 %2224
  %v2226 = vsel %vm65, %v2198, 0.0
  %2227 = vadd.xlane.f32.xlu0 %v2226
  %v2228 = vpop.xlane.xlu0 %2227
  %v2229 = vsel %vm65, %v2199, 0.0
  %2230 = vadd.xlane.f32.xlu0 %v2229
  %v2231 = vpop.xlane.xlu0 %2230
  %v2232 = vsel %vm65, %v2200, 0.0
  %2233 = vadd.xlane.f32.xlu0 %v2232
  %v2234 = vpop.xlane.xlu0 %2233
  %v2235 = vsel %vm65, %v2201, 0.0
  %2236 = vadd.xlane.f32.xlu0 %v2235
  %v2237 = vpop.xlane.xlu0 %2236
  %v2238 = vsel %vm65, %v2202, 0.0
  %2239 = vadd.xlane.f32.xlu0 %v2238
  %v2240 = vpop.xlane.xlu0 %2239
  %v2241 = vsel %vm65, %v2203, 0.0
  %2242 = vadd.xlane.f32.xlu0 %v2241
  %v2243 = vpop.xlane.xlu0 %2242
  %v2244 = vsel %vm65, %v2204, 0.0
  %2245 = vadd.xlane.f32.xlu0 %v2244
  %v2246 = vpop.xlane.xlu0 %2245
  %v2247 = vsel %vm65, %v2205, 0.0
  %2248 = vadd.xlane.f32.xlu0 %v2247
  %v2249 = vpop.xlane.xlu0 %2248
  %v2250 = vsel %vm65, %v2206, 0.0
  %2251 = vadd.xlane.f32.xlu0 %v2250
  %v2252 = vpop.xlane.xlu0 %2251
  %v2253 = vsel %vm65, %v2207, 0.0
  %2254 = vadd.xlane.f32.xlu0 %v2253
  %v2255 = vpop.xlane.xlu0 %2254
  %v2256 = vsel %vm65, %v2208, 0.0
  %2257 = vadd.xlane.f32.xlu0 %v2256
  %v2258 = vpop.xlane.xlu0 %2257
  %v2259 = vmul.f32 %v2213, %v96
  %v2260 = vmul.f32 %v2216, %v96
  %v2261 = vmul.f32 %v2219, %v96
  %v2262 = vmul.f32 %v2222, %v96
  %v2263 = vmul.f32 %v2225, %v96
  %v2264 = vmul.f32 %v2228, %v96
  %v2265 = vmul.f32 %v2231, %v96
  %v2266 = vmul.f32 %v2234, %v96
  %v2267 = vmul.f32 %v2237, %v96
  %v2268 = vmul.f32 %v2240, %v96
  %v2269 = vmul.f32 %v2243, %v96
  %v2270 = vmul.f32 %v2246, %v96
  %v2271 = vmul.f32 %v2249, %v96
  %v2272 = vmul.f32 %v2252, %v96
  %v2273 = vmul.f32 %v2255, %v96
  %v2274 = vmul.f32 %v2258, %v96
  %v2275 = vsub.f32 %v2193, %v2259
  %v2276 = vsub.f32 %v2194, %v2260
  %v2277 = vsub.f32 %v2195, %v2261
  %v2278 = vsub.f32 %v2196, %v2262
  %v2279 = vsub.f32 %v2197, %v2263
  %v2280 = vsub.f32 %v2198, %v2264
  %v2281 = vsub.f32 %v2199, %v2265
  %v2282 = vsub.f32 %v2200, %v2266
  %v2283 = vsub.f32 %v2201, %v2267
  %v2284 = vsub.f32 %v2202, %v2268
  %v2285 = vsub.f32 %v2203, %v2269
  %v2286 = vsub.f32 %v2204, %v2270
  %v2287 = vsub.f32 %v2205, %v2271
  %v2288 = vsub.f32 %v2206, %v2272
  %v2289 = vsub.f32 %v2207, %v2273
  %v2290 = vsub.f32 %v2208, %v2274
  %v2291 = vmul.f32 %v2275, %v2275
  %v2292 = vmul.f32 %v2276, %v2276
  %v2293 = vmul.f32 %v2277, %v2277
  %v2294 = vmul.f32 %v2278, %v2278
  %v2295 = vmul.f32 %v2279, %v2279
  %v2296 = vmul.f32 %v2280, %v2280
  %v2297 = vmul.f32 %v2281, %v2281
  %v2298 = vmul.f32 %v2282, %v2282
  %v2299 = vmul.f32 %v2283, %v2283
  %v2300 = vmul.f32 %v2284, %v2284
  %v2301 = vmul.f32 %v2285, %v2285
  %v2302 = vmul.f32 %v2286, %v2286
  %v2303 = vmul.f32 %v2287, %v2287
  %v2304 = vmul.f32 %v2288, %v2288
  %v2305 = vmul.f32 %v2289, %v2289
  %v2306 = vmul.f32 %v2290, %v2290
  %v2307 = vsel %vm65, %v2291, 0.0
  %2308 = vadd.xlane.f32.xlu0 %v2307
  %v2309 = vpop.xlane.xlu0 %2308
  %v2310 = vsel %vm65, %v2292, 0.0
  %2311 = vadd.xlane.f32.xlu0 %v2310
  %v2312 = vpop.xlane.xlu0 %2311
  %v2313 = vsel %vm65, %v2293, 0.0
  %2314 = vadd.xlane.f32.xlu0 %v2313
  %v2315 = vpop.xlane.xlu0 %2314
  %v2316 = vsel %vm65, %v2294, 0.0
  %2317 = vadd.xlane.f32.xlu0 %v2316
  %v2318 = vpop.xlane.xlu0 %2317
  %v2319 = vsel %vm65, %v2295, 0.0
  %2320 = vadd.xlane.f32.xlu0 %v2319
  %v2321 = vpop.xlane.xlu0 %2320
  %v2322 = vsel %vm65, %v2296, 0.0
  %2323 = vadd.xlane.f32.xlu0 %v2322
  %v2324 = vpop.xlane.xlu0 %2323
  %v2325 = vsel %vm65, %v2297, 0.0
  %2326 = vadd.xlane.f32.xlu0 %v2325
  %v2327 = vpop.xlane.xlu0 %2326
  %v2328 = vsel %vm65, %v2298, 0.0
  %2329 = vadd.xlane.f32.xlu0 %v2328
  %v2330 = vpop.xlane.xlu0 %2329
  %v2331 = vsel %vm65, %v2299, 0.0
  %2332 = vadd.xlane.f32.xlu0 %v2331
  %v2333 = vpop.xlane.xlu0 %2332
  %v2334 = vsel %vm65, %v2300, 0.0
  %2335 = vadd.xlane.f32.xlu0 %v2334
  %v2336 = vpop.xlane.xlu0 %2335
  %v2337 = vsel %vm65, %v2301, 0.0
  %2338 = vadd.xlane.f32.xlu0 %v2337
  %v2339 = vpop.xlane.xlu0 %2338
  %v2340 = vsel %vm65, %v2302, 0.0
  %2341 = vadd.xlane.f32.xlu0 %v2340
  %v2342 = vpop.xlane.xlu0 %2341
  %v2343 = vsel %vm65, %v2303, 0.0
  %2344 = vadd.xlane.f32.xlu0 %v2343
  %v2345 = vpop.xlane.xlu0 %2344
  %v2346 = vsel %vm65, %v2304, 0.0
  %2347 = vadd.xlane.f32.xlu0 %v2346
  %v2348 = vpop.xlane.xlu0 %2347
  %v2349 = vsel %vm65, %v2305, 0.0
  %2350 = vadd.xlane.f32.xlu0 %v2349
  %v2351 = vpop.xlane.xlu0 %2350
  %v2352 = vsel %vm65, %v2306, 0.0
  %2353 = vadd.xlane.f32.xlu0 %v2352
  %v2354 = vpop.xlane.xlu0 %2353
  %v2355 = vmul.f32 %v2309, %v96
  %v2356 = vmul.f32 %v2312, %v96
  %v2357 = vmul.f32 %v2315, %v96
  %v2358 = vmul.f32 %v2318, %v96
  %v2359 = vmul.f32 %v2321, %v96
  %v2360 = vmul.f32 %v2324, %v96
  %v2361 = vmul.f32 %v2327, %v96
  %v2362 = vmul.f32 %v2330, %v96
  %v2363 = vmul.f32 %v2333, %v96
  %v2364 = vmul.f32 %v2336, %v96
  %v2365 = vmul.f32 %v2339, %v96
  %v2366 = vmul.f32 %v2342, %v96
  %v2367 = vmul.f32 %v2345, %v96
  %v2368 = vmul.f32 %v2348, %v96
  %v2369 = vmul.f32 %v2351, %v96
  %v2370 = vmul.f32 %v2354, %v96
  %v2371 = vadd.f32 %v2355, 1e-05
  %v2372 = vadd.f32 %v2356, 1e-05
  %v2373 = vadd.f32 %v2357, 1e-05
  %v2374 = vadd.f32 %v2358, 1e-05
  %v2375 = vadd.f32 %v2359, 1e-05
  %v2376 = vadd.f32 %v2360, 1e-05
  %v2377 = vadd.f32 %v2361, 1e-05
  %v2378 = vadd.f32 %v2362, 1e-05
  %v2379 = vadd.f32 %v2363, 1e-05
  %v2380 = vadd.f32 %v2364, 1e-05
  %v2381 = vadd.f32 %v2365, 1e-05
  %v2382 = vadd.f32 %v2366, 1e-05
  %v2383 = vadd.f32 %v2367, 1e-05
  %v2384 = vadd.f32 %v2368, 1e-05
  %v2385 = vadd.f32 %v2369, 1e-05
  %v2386 = vadd.f32 %v2370, 1e-05
  %v2387 = vrsqrt.pop %v2371
  %v2388 = vmul.f32 %v2387, %v2371
  %v2389 = vmul.f32 %v2388, %v2387
  %v2390 = vmul.f32 0.5, %v2389
  %v2391 = vsub.f32 1.5, %v2390
  %v2392 = vmul.f32 %v2387, %v2391
  %vm2393 = vweird.f32 %v2371
  %vm2394 = vweird.f32 %v2387
  %vm2395 = vmor %vm2393, %vm2394
  %v2396 = vsel %vm2395, %v2387, %v2392
  %v2397 = vrsqrt.pop %v2372
  %v2398 = vmul.f32 %v2397, %v2372
  %v2399 = vmul.f32 %v2398, %v2397
  %v2400 = vmul.f32 0.5, %v2399
  %v2401 = vsub.f32 1.5, %v2400
  %v2402 = vmul.f32 %v2397, %v2401
  %vm2403 = vweird.f32 %v2372
  %vm2404 = vweird.f32 %v2397
  %vm2405 = vmor %vm2403, %vm2404
  %v2406 = vsel %vm2405, %v2397, %v2402
  %v2407 = vrsqrt.pop %v2373
  %v2408 = vmul.f32 %v2407, %v2373
  %v2409 = vmul.f32 %v2408, %v2407
  %v2410 = vmul.f32 0.5, %v2409
  %v2411 = vsub.f32 1.5, %v2410
  %v2412 = vmul.f32 %v2407, %v2411
  %vm2413 = vweird.f32 %v2373
  %vm2414 = vweird.f32 %v2407
  %vm2415 = vmor %vm2413, %vm2414
  %v2416 = vsel %vm2415, %v2407, %v2412
  %v2417 = vrsqrt.pop %v2374
  %v2418 = vmul.f32 %v2417, %v2374
  %v2419 = vmul.f32 %v2418, %v2417
  %v2420 = vmul.f32 0.5, %v2419
  %v2421 = vsub.f32 1.5, %v2420
  %v2422 = vmul.f32 %v2417, %v2421
  %vm2423 = vweird.f32 %v2374
  %vm2424 = vweird.f32 %v2417
  %vm2425 = vmor %vm2423, %vm2424
  %v2426 = vsel %vm2425, %v2417, %v2422
  %v2427 = vrsqrt.pop %v2375
  %v2428 = vmul.f32 %v2427, %v2375
  %v2429 = vmul.f32 %v2428, %v2427
  %v2430 = vmul.f32 0.5, %v2429
  %v2431 = vsub.f32 1.5, %v2430
  %v2432 = vmul.f32 %v2427, %v2431
  %vm2433 = vweird.f32 %v2375
  %vm2434 = vweird.f32 %v2427
  %vm2435 = vmor %vm2433, %vm2434
  %v2436 = vsel %vm2435, %v2427, %v2432
  %v2437 = vrsqrt.pop %v2376
  %v2438 = vmul.f32 %v2437, %v2376
  %v2439 = vmul.f32 %v2438, %v2437
  %v2440 = vmul.f32 0.5, %v2439
  %v2441 = vsub.f32 1.5, %v2440
  %v2442 = vmul.f32 %v2437, %v2441
  %vm2443 = vweird.f32 %v2376
  %vm2444 = vweird.f32 %v2437
  %vm2445 = vmor %vm2443, %vm2444
  %v2446 = vsel %vm2445, %v2437, %v2442
  %v2447 = vrsqrt.pop %v2377
  %v2448 = vmul.f32 %v2447, %v2377
  %v2449 = vmul.f32 %v2448, %v2447
  %v2450 = vmul.f32 0.5, %v2449
  %v2451 = vsub.f32 1.5, %v2450
  %v2452 = vmul.f32 %v2447, %v2451
  %vm2453 = vweird.f32 %v2377
  %vm2454 = vweird.f32 %v2447
  %vm2455 = vmor %vm2453, %vm2454
  %v2456 = vsel %vm2455, %v2447, %v2452
  %v2457 = vrsqrt.pop %v2378
  %v2458 = vmul.f32 %v2457, %v2378
  %v2459 = vmul.f32 %v2458, %v2457
  %v2460 = vmul.f32 0.5, %v2459
  %v2461 = vsub.f32 1.5, %v2460
  %v2462 = vmul.f32 %v2457, %v2461
  %vm2463 = vweird.f32 %v2378
  %vm2464 = vweird.f32 %v2457
  %vm2465 = vmor %vm2463, %vm2464
  %v2466 = vsel %vm2465, %v2457, %v2462
  %v2467 = vrsqrt.pop %v2379
  %v2468 = vmul.f32 %v2467, %v2379
  %v2469 = vmul.f32 %v2468, %v2467
  %v2470 = vmul.f32 0.5, %v2469
  %v2471 = vsub.f32 1.5, %v2470
  %v2472 = vmul.f32 %v2467, %v2471
  %vm2473 = vweird.f32 %v2379
  %vm2474 = vweird.f32 %v2467
  %vm2475 = vmor %vm2473, %vm2474
  %v2476 = vsel %vm2475, %v2467, %v2472
  %v2477 = vrsqrt.pop %v2380
  %v2478 = vmul.f32 %v2477, %v2380
  %v2479 = vmul.f32 %v2478, %v2477
  %v2480 = vmul.f32 0.5, %v2479
  %v2481 = vsub.f32 1.5, %v2480
  %v2482 = vmul.f32 %v2477, %v2481
  %vm2483 = vweird.f32 %v2380
  %vm2484 = vweird.f32 %v2477
  %vm2485 = vmor %vm2483, %vm2484
  %v2486 = vsel %vm2485, %v2477, %v2482
  %v2487 = vrsqrt.pop %v2381
  %v2488 = vmul.f32 %v2487, %v2381
  %v2489 = vmul.f32 %v2488, %v2487
  %v2490 = vmul.f32 0.5, %v2489
  %v2491 = vsub.f32 1.5, %v2490
  %v2492 = vmul.f32 %v2487, %v2491
  %vm2493 = vweird.f32 %v2381
  %vm2494 = vweird.f32 %v2487
  %vm2495 = vmor %vm2493, %vm2494
  %v2496 = vsel %vm2495, %v2487, %v2492
  %v2497 = vrsqrt.pop %v2382
  %v2498 = vmul.f32 %v2497, %v2382
  %v2499 = vmul.f32 %v2498, %v2497
  %v2500 = vmul.f32 0.5, %v2499
  %v2501 = vsub.f32 1.5, %v2500
  %v2502 = vmul.f32 %v2497, %v2501
  %vm2503 = vweird.f32 %v2382
  %vm2504 = vweird.f32 %v2497
  %vm2505 = vmor %vm2503, %vm2504
  %v2506 = vsel %vm2505, %v2497, %v2502
  %v2507 = vrsqrt.pop %v2383
  %v2508 = vmul.f32 %v2507, %v2383
  %v2509 = vmul.f32 %v2508, %v2507
  %v2510 = vmul.f32 0.5, %v2509
  %v2511 = vsub.f32 1.5, %v2510
  %v2512 = vmul.f32 %v2507, %v2511
  %vm2513 = vweird.f32 %v2383
  %vm2514 = vweird.f32 %v2507
  %vm2515 = vmor %vm2513, %vm2514
  %v2516 = vsel %vm2515, %v2507, %v2512
  %v2517 = vrsqrt.pop %v2384
  %v2518 = vmul.f32 %v2517, %v2384
  %v2519 = vmul.f32 %v2518, %v2517
  %v2520 = vmul.f32 0.5, %v2519
  %v2521 = vsub.f32 1.5, %v2520
  %v2522 = vmul.f32 %v2517, %v2521
  %vm2523 = vweird.f32 %v2384
  %vm2524 = vweird.f32 %v2517
  %vm2525 = vmor %vm2523, %vm2524
  %v2526 = vsel %vm2525, %v2517, %v2522
  %v2527 = vrsqrt.pop %v2385
  %v2528 = vmul.f32 %v2527, %v2385
  %v2529 = vmul.f32 %v2528, %v2527
  %v2530 = vmul.f32 0.5, %v2529
  %v2531 = vsub.f32 1.5, %v2530
  %v2532 = vmul.f32 %v2527, %v2531
  %vm2533 = vweird.f32 %v2385
  %vm2534 = vweird.f32 %v2527
  %vm2535 = vmor %vm2533, %vm2534
  %v2536 = vsel %vm2535, %v2527, %v2532
  %v2537 = vrsqrt.pop %v2386
  %v2538 = vmul.f32 %v2537, %v2386
  %v2539 = vmul.f32 %v2538, %v2537
  %v2540 = vmul.f32 0.5, %v2539
  %v2541 = vsub.f32 1.5, %v2540
  %v2542 = vmul.f32 %v2537, %v2541
  %vm2543 = vweird.f32 %v2386
  %vm2544 = vweird.f32 %v2537
  %vm2545 = vmor %vm2543, %vm2544
  %v2546 = vsel %vm2545, %v2537, %v2542
  %v2547 = vmul.f32 %v2275, %v2396
  %v2548 = vmul.f32 %v2276, %v2406
  %v2549 = vmul.f32 %v2277, %v2416
  %v2550 = vmul.f32 %v2278, %v2426
  %v2551 = vmul.f32 %v2279, %v2436
  %v2552 = vmul.f32 %v2280, %v2446
  %v2553 = vmul.f32 %v2281, %v2456
  %v2554 = vmul.f32 %v2282, %v2466
  %v2555 = vmul.f32 %v2283, %v2476
  %v2556 = vmul.f32 %v2284, %v2486
  %v2557 = vmul.f32 %v2285, %v2496
  %v2558 = vmul.f32 %v2286, %v2506
  %v2559 = vmul.f32 %v2287, %v2516
  %v2560 = vmul.f32 %v2288, %v2526
  %v2561 = vmul.f32 %v2289, %v2536
  %v2562 = vmul.f32 %v2290, %v2546
  %v2564 = vperm.slane %v2209, 0
  %v2566 = vmul.f32 %v2547, %v2564
  %v2567 = vmul.f32 %v2548, %v2564
  %v2568 = vmul.f32 %v2549, %v2564
  %v2569 = vmul.f32 %v2550, %v2564
  %v2570 = vmul.f32 %v2551, %v2564
  %v2571 = vmul.f32 %v2552, %v2564
  %v2572 = vmul.f32 %v2553, %v2564
  %v2573 = vmul.f32 %v2554, %v2564
  %v2574 = vmul.f32 %v2555, %v2564
  %v2575 = vmul.f32 %v2556, %v2564
  %v2576 = vmul.f32 %v2557, %v2564
  %v2577 = vmul.f32 %v2558, %v2564
  %v2578 = vmul.f32 %v2559, %v2564
  %v2579 = vmul.f32 %v2560, %v2564
  %v2580 = vmul.f32 %v2561, %v2564
  %v2581 = vmul.f32 %v2562, %v2564
  %v2583 = vperm.slane %v2210, 0
  %v2585 = vadd.f32 %v2566, %v2583
  %v2586 = vadd.f32 %v2567, %v2583
  %v2587 = vadd.f32 %v2568, %v2583
  %v2588 = vadd.f32 %v2569, %v2583
  %v2589 = vadd.f32 %v2570, %v2583
  %v2590 = vadd.f32 %v2571, %v2583
  %v2591 = vadd.f32 %v2572, %v2583
  %v2592 = vadd.f32 %v2573, %v2583
  %v2593 = vadd.f32 %v2574, %v2583
  %v2594 = vadd.f32 %v2575, %v2583
  %v2595 = vadd.f32 %v2576, %v2583
  %v2596 = vadd.f32 %v2577, %v2583
  %v2597 = vadd.f32 %v2578, %v2583
  %v2598 = vadd.f32 %v2579, %v2583
  %v2599 = vadd.f32 %v2580, %v2583
  %v2600 = vadd.f32 %v2581, %v2583
  %2601 = vst.msk [vmem:[%s15] sm:$0xff] %vm65, %v2585
  %2602 = vst.msk [vmem:[%s15 + $0x8] sm:$0xff] %vm65, %v2586
  %2603 = vst.msk [vmem:[%s15 + $0x10] sm:$0xff] %vm65, %v2587
  %2604 = vst.msk [vmem:[%s15 + $0x18] sm:$0xff] %vm65, %v2588
  %2605 = vst.msk [vmem:[%s15 + $0x20] sm:$0xff] %vm65, %v2589
  %2606 = vst.msk [vmem:[%s15 + $0x28] sm:$0xff] %vm65, %v2590
  %2607 = vst.msk [vmem:[%s15 + $0x30] sm:$0xff] %vm65, %v2591
  %2608 = vst.msk [vmem:[%s15 + $0x38] sm:$0xff] %vm65, %v2592
  %2609 = vst.msk [vmem:[%s15 + $0x40] sm:$0xff] %vm65, %v2593
  %2610 = vst.msk [vmem:[%s15 + $0x48] sm:$0xff] %vm65, %v2594
  %2611 = vst.msk [vmem:[%s15 + $0x50] sm:$0xff] %vm65, %v2595
  %2612 = vst.msk [vmem:[%s15 + $0x58] sm:$0xff] %vm65, %v2596
  %2613 = vst.msk [vmem:[%s15 + $0x60] sm:$0xff] %vm65, %v2597
  %2614 = vst.msk [vmem:[%s15 + $0x68] sm:$0xff] %vm65, %v2598
  %2615 = vst.msk [vmem:[%s15 + $0x70] sm:$0xff] %vm65, %v2599
  %2616 = vst.msk [vmem:[%s15 + $0x78] sm:$0xff] %vm65, %v2600
  %v2617 = vld [vmem:[%s13] sm:$0xff]
  %v2618 = vld [vmem:[%s13 + $0x8] sm:$0xff]
  %v2619 = vld [vmem:[%s13 + $0x10] sm:$0xff]
  %v2620 = vld [vmem:[%s13 + $0x18] sm:$0xff]
  %v2621 = vpack.c.bf16 %v2586, %v2585
  %v2622 = vpack.c.bf16 %v2588, %v2587
  %v2623 = vpack.c.bf16 %v2590, %v2589
  %v2624 = vpack.c.bf16 %v2592, %v2591
  %v2625 = vpack.c.bf16 %v2594, %v2593
  %v2626 = vpack.c.bf16 %v2596, %v2595
  %v2627 = vpack.c.bf16 %v2598, %v2597
  %v2628 = vpack.c.bf16 %v2600, %v2599
  %v2629 = vpack.c.bf16 %v2618, %v2617
  %v2630 = vpack.c.bf16 %v2620, %v2619
  %v2631 = vld [vmem:[%s14] sm:$0x1]
  %v2633 = vperm.slane %v2631, 0
  %v2636 = vsel %vm65, %v2621, 0
  %v2639 = vsel %vm65, %v2622, 0
  %v2642 = vsel %vm65, %v2623, 0
  %v2645 = vsel %vm65, %v2624, 0
  %v2648 = vsel %vm65, %v2625, 0
  %v2651 = vsel %vm65, %v2626, 0
  %v2654 = vsel %vm65, %v2627, 0
  %v2657 = vsel %vm65, %v2628, 0
  %2659 = vmatpush.bf16.msra.mxu0 0
  %2660 = vmatpush.bf16.msra.mxu0 0
  %2661 = vmatpush.bf16.msra.mxu0 0
  %2662 = vmatpush.bf16.msra.mxu0 0
  %2663 = vmatpush.bf16.msra.mxu0 0
  %2664 = vmatpush.bf16.msra.mxu0 0
  %2665 = vmatpush.bf16.msra.mxu0 %v2630
  %2666 = vmatpush.bf16.msra.mxu0 %v2629
  %2667 = vmatmul.bf16.gmra.mxu0 %v2636
  %v2668 = vpop.f32.mrf.mxu0
  %v2669 = vadd.f32 %v2633, %v2668
  %v2670 = vpop.f32.mrf.mxu0
  %v2671 = vadd.f32 %v2633, %v2670
  %2672 = vmatmul.bf16.gmra.mxu0 %v2639
  %v2673 = vpop.f32.mrf.mxu0
  %v2674 = vadd.f32 %v2633, %v2673
  %v2675 = vpop.f32.mrf.mxu0
  %v2676 = vadd.f32 %v2633, %v2675
  %2677 = vmatmul.bf16.gmra.mxu0 %v2642
  %v2678 = vpop.f32.mrf.mxu0
  %v2679 = vadd.f32 %v2633, %v2678
  %v2680 = vpop.f32.mrf.mxu0
  %v2681 = vadd.f32 %v2633, %v2680
  %2682 = vmatmul.bf16.gmra.mxu0 %v2645
  %v2683 = vpop.f32.mrf.mxu0
  %v2684 = vadd.f32 %v2633, %v2683
  %v2685 = vpop.f32.mrf.mxu0
  %v2686 = vadd.f32 %v2633, %v2685
  %2687 = vmatmul.bf16.gmra.mxu0 %v2648
  %v2688 = vpop.f32.mrf.mxu0
  %v2689 = vadd.f32 %v2633, %v2688
  %v2690 = vpop.f32.mrf.mxu0
  %v2691 = vadd.f32 %v2633, %v2690
  %2692 = vmatmul.bf16.gmra.mxu0 %v2651
  %v2693 = vpop.f32.mrf.mxu0
  %v2694 = vadd.f32 %v2633, %v2693
  %v2695 = vpop.f32.mrf.mxu0
  %v2696 = vadd.f32 %v2633, %v2695
  %2697 = vmatmul.bf16.gmra.mxu0 %v2654
  %v2698 = vpop.f32.mrf.mxu0
  %v2699 = vadd.f32 %v2633, %v2698
  %v2700 = vpop.f32.mrf.mxu0
  %v2701 = vadd.f32 %v2633, %v2700
  %2702 = vmatmul.bf16.gmra.mxu0 %v2657
  %v2703 = vpop.f32.mrf.mxu0
  %v2704 = vadd.f32 %v2633, %v2703
  %v2705 = vpop.f32.mrf.mxu0
  %v2706 = vadd.f32 %v2633, %v2705
  %2707 = vdwg.mxu0
  %vm2708 = vcmask 523264
  %2709 = vst.msk [vmem:[%s16] sm:$0xff] %vm2708, %v2669
  %2710 = vst.msk [vmem:[%s16 + $0x8] sm:$0xff] %vm2708, %v2671
  %2711 = vst.msk [vmem:[%s16 + $0x10] sm:$0xff] %vm2708, %v2674
  %2712 = vst.msk [vmem:[%s16 + $0x18] sm:$0xff] %vm2708, %v2676
  %2713 = vst.msk [vmem:[%s16 + $0x20] sm:$0xff] %vm2708, %v2679
  %2714 = vst.msk [vmem:[%s16 + $0x28] sm:$0xff] %vm2708, %v2681
  %2715 = vst.msk [vmem:[%s16 + $0x30] sm:$0xff] %vm2708, %v2684
  %2716 = vst.msk [vmem:[%s16 + $0x38] sm:$0xff] %vm2708, %v2686
  %2717 = vst.msk [vmem:[%s16 + $0x40] sm:$0xff] %vm2708, %v2689
  %2718 = vst.msk [vmem:[%s16 + $0x48] sm:$0xff] %vm2708, %v2691
  %2719 = vst.msk [vmem:[%s16 + $0x50] sm:$0xff] %vm2708, %v2694
  %2720 = vst.msk [vmem:[%s16 + $0x58] sm:$0xff] %vm2708, %v2696
  %2721 = vst.msk [vmem:[%s16 + $0x60] sm:$0xff] %vm2708, %v2699
  %2722 = vst.msk [vmem:[%s16 + $0x68] sm:$0xff] %vm2708, %v2701
  %2723 = vst.msk [vmem:[%s16 + $0x70] sm:$0xff] %vm2708, %v2704
  %2724 = vst.msk [vmem:[%s16 + $0x78] sm:$0xff] %vm2708, %v2706
  // Predicated region
  $region62: #{transformer_classifier_fwd.10} parent=0 // pred_check
    _
  $region63: #{transformer_classifier_fwd.10} parent=0 // pred_check_branch
    %2726 = sbr.rel (0) target = $region65
  $region64: #{transformer_classifier_fwd.10} parent=0 // pred_region
    _
  $region65: #{transformer_classifier_fwd.10} parent=0 // pred_fallthru
    _
  // Predicated region
  $region66: #{transformer_classifier_fwd.10} parent=0 // pred_check
    _
  $region67: #{transformer_classifier_fwd.10} parent=0 // pred_check_branch
    %2728 = sbr.rel (0) target = $region69
  $region68: #{transformer_classifier_fwd.10} parent=0 // pred_region
    _
  $region69: #{transformer_classifier_fwd.10} parent=0 // pred_fallthru
    _
  // Predicated region
  $region70: #{transformer_classifier_fwd.10} parent=0 // pred_check
    _
  $region71: #{transformer_classifier_fwd.10} parent=0 // pred_check_branch
    %2730 = sbr.rel (0) target = $region73
  $region72: #{transformer_classifier_fwd.10} parent=0 // pred_region
    _
  $region73: #{transformer_classifier_fwd.10} parent=0 // pred_fallthru
    _
  // Predicated region
  $region74: #{transformer_classifier_fwd.10} parent=0 // pred_check
    _
  $region75: #{transformer_classifier_fwd.10} parent=0 // pred_check_branch
    %2732 = sbr.rel (0) target = $region77
  $region76: #{transformer_classifier_fwd.10} parent=0 // pred_region
    _
  $region77: #{transformer_classifier_fwd.10} parent=0 // pred_fallthru
    _

// kernel: transformer_classifier_fwd.11
$region0: #{transformer_classifier_fwd.11}
  #allocation0 [shape = 'u32[]', space=smem, size = 0x4, offset = 0x4, fixed_abs, tag = 'smem constant byte address 0x4 - core index']
  #allocation1 [shape = 'u32[72,128]{1,0:T(1,128)}', space=vmem, size = 0x9000, scoped, tag = 'internal scratch']
  %s0 = inlined_call_operand.vmem [shape: f32[4,2,16,32], index: 0, kind: input, shape index: {}]
  %s1 = inlined_call_operand.vmem [shape: f32[4,32,64], index: 1, kind: input, shape index: {}]
  %s2 = inlined_call_operand.vmem [shape: f32[64,32], index: 2, kind: input, shape index: {}]
  %s3 = inlined_call_operand.vmem [shape: f32[1,32], index: 3, kind: input, shape index: {}]
  %s4 = inlined_call_operand.vmem [shape: f32[1,32], index: 4, kind: input, shape index: {}]
  %s5 = inlined_call_operand.vmem [shape: f32[1,32], index: 5, kind: input, shape index: {}]
  %s6 = inlined_call_operand.vmem [shape: f32[32,128], index: 6, kind: input, shape index: {}]
  %s7 = inlined_call_operand.vmem [shape: f32[32,32], index: 7, kind: input, shape index: {}]
  %s8 = inlined_call_operand.vmem [shape: f32[1,32], index: 8, kind: input, shape index: {}]
  %s9 = inlined_call_operand.vmem [shape: f32[32,64], index: 9, kind: input, shape index: {}]
  %s10 = inlined_call_operand.vmem [shape: f32[1,64], index: 10, kind: input, shape index: {}]
  %s11 = inlined_call_operand.vmem [shape: f32[2,2,16,32], index: 11, kind: output, shape index: {0}]
  %s12 = inlined_call_operand.vmem [shape: f32[2,2,16,32], index: 12, kind: output, shape index: {1}]
  %s13 = inlined_call_operand.vmem [shape: f32[2,32,64], index: 13, kind: output, shape index: {2}]
  %14 = xla_tuple %s11, %s12, %s13
  %s15 = sld [smem:[#allocation0]]
  $region70: #{transformer_classifier_fwd.11} parent=0
    _
  %s17 = ssub.s32 1, %s15
  %s18 = scalar_select 0, %s17, %s15
  // Predicated region
  $region2: #{transformer_classifier_fwd.11} parent=0 // pred_check
    _
  $region3: #{transformer_classifier_fwd.11} parent=0 // pred_check_branch
    %20 = sbr.rel (0) target = $region5
  $region4: #{transformer_classifier_fwd.11} parent=0 // pred_region
    _
  $region5: #{transformer_classifier_fwd.11} parent=0 // pred_fallthru
    _
  // Predicated region
  $region6: #{transformer_classifier_fwd.11} parent=0 // pred_check
    _
  $region7: #{transformer_classifier_fwd.11} parent=0 // pred_check_branch
    %22 = sbr.rel (0) target = $region9
  $region8: #{transformer_classifier_fwd.11} parent=0 // pred_region
    _
  $region9: #{transformer_classifier_fwd.11} parent=0 // pred_fallthru
    _
  // Predicated region
  $region10: #{transformer_classifier_fwd.11} parent=0 // pred_check
    _
  $region11: #{transformer_classifier_fwd.11} parent=0 // pred_check_branch
    %24 = sbr.rel (0) target = $region13
  $region12: #{transformer_classifier_fwd.11} parent=0 // pred_region
    _
  $region13: #{transformer_classifier_fwd.11} parent=0 // pred_fallthru
    _
  // Predicated region
  $region14: #{transformer_classifier_fwd.11} parent=0 // pred_check
    _
  $region15: #{transformer_classifier_fwd.11} parent=0 // pred_check_branch
    %26 = sbr.rel (0) target = $region17
  $region16: #{transformer_classifier_fwd.11} parent=0 // pred_region
    _
  $region17: #{transformer_classifier_fwd.11} parent=0 // pred_fallthru
    _
  // Predicated region
  $region18: #{transformer_classifier_fwd.11} parent=0 // pred_check
    _
  $region19: #{transformer_classifier_fwd.11} parent=0 // pred_check_branch
    %28 = sbr.rel (0) target = $region21
  $region20: #{transformer_classifier_fwd.11} parent=0 // pred_region
    _
  $region21: #{transformer_classifier_fwd.11} parent=0 // pred_fallthru
    _
  // Predicated region
  $region22: #{transformer_classifier_fwd.11} parent=0 // pred_check
    _
  $region23: #{transformer_classifier_fwd.11} parent=0 // pred_check_branch
    %30 = sbr.rel (0) target = $region25
  $region24: #{transformer_classifier_fwd.11} parent=0 // pred_region
    _
  $region25: #{transformer_classifier_fwd.11} parent=0 // pred_fallthru
    _
  // Predicated region
  $region26: #{transformer_classifier_fwd.11} parent=0 // pred_check
    _
  $region27: #{transformer_classifier_fwd.11} parent=0 // pred_check_branch
    %32 = sbr.rel (0) target = $region29
  $region28: #{transformer_classifier_fwd.11} parent=0 // pred_region
    _
  $region29: #{transformer_classifier_fwd.11} parent=0 // pred_fallthru
    _
  // Predicated region
  $region30: #{transformer_classifier_fwd.11} parent=0 // pred_check
    _
  $region31: #{transformer_classifier_fwd.11} parent=0 // pred_check_branch
    %34 = sbr.rel (0) target = $region33
  $region32: #{transformer_classifier_fwd.11} parent=0 // pred_region
    _
  $region33: #{transformer_classifier_fwd.11} parent=0 // pred_fallthru
    _
  // Predicated region
  $region34: #{transformer_classifier_fwd.11} parent=0 // pred_check
    _
  $region35: #{transformer_classifier_fwd.11} parent=0 // pred_check_branch
    %36 = sbr.rel (0) target = $region37
  $region36: #{transformer_classifier_fwd.11} parent=0 // pred_region
    _
  $region37: #{transformer_classifier_fwd.11} parent=0 // pred_fallthru
    _
  // Predicated region
  $region38: #{transformer_classifier_fwd.11} parent=0 // pred_check
    _
  $region39: #{transformer_classifier_fwd.11} parent=0 // pred_check_branch
    %38 = sbr.rel (0) target = $region41
  $region40: #{transformer_classifier_fwd.11} parent=0 // pred_region
    _
  $region41: #{transformer_classifier_fwd.11} parent=0 // pred_fallthru
    _
  // Predicated region
  $region42: #{transformer_classifier_fwd.11} parent=0 // pred_check
    _
  $region43: #{transformer_classifier_fwd.11} parent=0 // pred_check_branch
    %40 = sbr.rel (0) target = $region45
  $region44: #{transformer_classifier_fwd.11} parent=0 // pred_region
    _
  $region45: #{transformer_classifier_fwd.11} parent=0 // pred_fallthru
    _
  %v42 = vld [vmem:[%s0] sm:$0xff]
  %v43 = vld [vmem:[%s0 + $0x8] sm:$0xff]
  %v44 = vld [vmem:[%s0 + $0x10] sm:$0xff]
  %v45 = vld [vmem:[%s0 + $0x18] sm:$0xff]
  %v46 = vld [vmem:[%s0 + $0x20] sm:$0xff]
  %v47 = vld [vmem:[%s0 + $0x28] sm:$0xff]
  %v48 = vld [vmem:[%s0 + $0x30] sm:$0xff]
  %v49 = vld [vmem:[%s0 + $0x38] sm:$0xff]
  %v50 = vld [vmem:[%s0 + $0x40] sm:$0xff]
  %v51 = vld [vmem:[%s0 + $0x48] sm:$0xff]
  %v52 = vld [vmem:[%s0 + $0x50] sm:$0xff]
  %v53 = vld [vmem:[%s0 + $0x58] sm:$0xff]
  %v54 = vld [vmem:[%s0 + $0x60] sm:$0xff]
  %v55 = vld [vmem:[%s0 + $0x68] sm:$0xff]
  %v56 = vld [vmem:[%s0 + $0x70] sm:$0xff]
  %v57 = vld [vmem:[%s0 + $0x78] sm:$0xff]
  %v58 = vld [vmem:[%s1] sm:$0xff]
  %v59 = vld [vmem:[%s1 + $0x8] sm:$0xff]
  %v60 = vld [vmem:[%s1 + $0x10] sm:$0xff]
  %v61 = vld [vmem:[%s1 + $0x18] sm:$0xff]
  %v62 = vld [vmem:[%s1 + $0x20] sm:$0xff]
  %v63 = vld [vmem:[%s1 + $0x28] sm:$0xff]
  %v64 = vld [vmem:[%s1 + $0x30] sm:$0xff]
  %v65 = vld [vmem:[%s1 + $0x38] sm:$0xff]
  %v66 = vld [vmem:[%s1 + $0x40] sm:$0xff]
  %v67 = vld [vmem:[%s1 + $0x48] sm:$0xff]
  %v68 = vld [vmem:[%s1 + $0x50] sm:$0xff]
  %v69 = vld [vmem:[%s1 + $0x58] sm:$0xff]
  %v70 = vld [vmem:[%s1 + $0x60] sm:$0xff]
  %v71 = vld [vmem:[%s1 + $0x68] sm:$0xff]
  %v72 = vld [vmem:[%s1 + $0x70] sm:$0xff]
  %v73 = vld [vmem:[%s1 + $0x78] sm:$0xff]
  %v74 = vld [vmem:[%s2] sm:$0xff]
  %v75 = vld [vmem:[%s2 + $0x8] sm:$0xff]
  %v76 = vld [vmem:[%s2 + $0x10] sm:$0xff]
  %v77 = vld [vmem:[%s2 + $0x18] sm:$0xff]
  %v78 = vld [vmem:[%s2 + $0x20] sm:$0xff]
  %v79 = vld [vmem:[%s2 + $0x28] sm:$0xff]
  %v80 = vld [vmem:[%s2 + $0x30] sm:$0xff]
  %v81 = vld [vmem:[%s2 + $0x38] sm:$0xff]
  %v82 = vpack.c.bf16 %v59, %v58
  %v83 = vpack.c.bf16 %v61, %v60
  %v84 = vpack.c.bf16 %v63, %v62
  %v85 = vpack.c.bf16 %v65, %v64
  %v86 = vpack.c.bf16 %v67, %v66
  %v87 = vpack.c.bf16 %v69, %v68
  %v88 = vpack.c.bf16 %v71, %v70
  %v89 = vpack.c.bf16 %v73, %v72
  %v90 = vpack.c.bf16 %v75, %v74
  %v91 = vpack.c.bf16 %v77, %v76
  %v92 = vpack.c.bf16 %v79, %v78
  %v93 = vpack.c.bf16 %v81, %v80
  %vm94 = vcmask 523264
  %v96 = vsel %vm94, %v82, 0
  %v99 = vsel %vm94, %v83, 0
  %v102 = vsel %vm94, %v84, 0
  %v105 = vsel %vm94, %v85, 0
  %v108 = vsel %vm94, %v86, 0
  %v111 = vsel %vm94, %v87, 0
  %v114 = vsel %vm94, %v88, 0
  %v117 = vsel %vm94, %v89, 0
  %119 = vmatpush.bf16.msra.mxu0 0
  %120 = vmatpush.bf16.msra.mxu0 0
  %121 = vmatpush.bf16.msra.mxu0 0
  %122 = vmatpush.bf16.msra.mxu0 0
  %123 = vmatpush.bf16.msra.mxu0 %v93
  %124 = vmatpush.bf16.msra.mxu0 %v92
  %125 = vmatpush.bf16.msra.mxu0 %v91
  %126 = vmatpush.bf16.msra.mxu0 %v90
  %127 = vmatmul.bf16.gmra.mxu0 %v96
  %v128 = vpop.f32.mrf.mxu0
  %v129 = vadd.f32 0.0, %v128
  %v130 = vpop.f32.mrf.mxu0
  %v131 = vadd.f32 0.0, %v130
  %132 = vmatmul.bf16.gmra.mxu0 %v99
  %v133 = vpop.f32.mrf.mxu0
  %v134 = vadd.f32 0.0, %v133
  %v135 = vpop.f32.mrf.mxu0
  %v136 = vadd.f32 0.0, %v135
  %137 = vmatmul.bf16.gmra.mxu0 %v102
  %v138 = vpop.f32.mrf.mxu0
  %v139 = vadd.f32 0.0, %v138
  %v140 = vpop.f32.mrf.mxu0
  %v141 = vadd.f32 0.0, %v140
  %142 = vmatmul.bf16.gmra.mxu0 %v105
  %v143 = vpop.f32.mrf.mxu0
  %v144 = vadd.f32 0.0, %v143
  %v145 = vpop.f32.mrf.mxu0
  %v146 = vadd.f32 0.0, %v145
  %147 = vmatmul.bf16.gmra.mxu0 %v108
  %v148 = vpop.f32.mrf.mxu0
  %v149 = vadd.f32 0.0, %v148
  %v150 = vpop.f32.mrf.mxu0
  %v151 = vadd.f32 0.0, %v150
  %152 = vmatmul.bf16.gmra.mxu0 %v111
  %v153 = vpop.f32.mrf.mxu0
  %v154 = vadd.f32 0.0, %v153
  %v155 = vpop.f32.mrf.mxu0
  %v156 = vadd.f32 0.0, %v155
  %157 = vmatmul.bf16.gmra.mxu0 %v114
  %v158 = vpop.f32.mrf.mxu0
  %v159 = vadd.f32 0.0, %v158
  %v160 = vpop.f32.mrf.mxu0
  %v161 = vadd.f32 0.0, %v160
  %162 = vmatmul.bf16.gmra.mxu0 %v117
  %v163 = vpop.f32.mrf.mxu0
  %v164 = vadd.f32 0.0, %v163
  %v165 = vpop.f32.mrf.mxu0
  %v166 = vadd.f32 0.0, %v165
  %167 = vdwg.mxu0
  %v168 = vadd.f32 %v42, %v129
  %v169 = vadd.f32 %v43, %v131
  %v170 = vadd.f32 %v44, %v134
  %v171 = vadd.f32 %v45, %v136
  %v172 = vadd.f32 %v46, %v139
  %v173 = vadd.f32 %v47, %v141
  %v174 = vadd.f32 %v48, %v144
  %v175 = vadd.f32 %v49, %v146
  %v176 = vadd.f32 %v50, %v149
  %v177 = vadd.f32 %v51, %v151
  %v178 = vadd.f32 %v52, %v154
  %v179 = vadd.f32 %v53, %v156
  %v180 = vadd.f32 %v54, %v159
  %v181 = vadd.f32 %v55, %v161
  %v182 = vadd.f32 %v56, %v164
  %v183 = vadd.f32 %v57, %v166
  %v184 = vld [vmem:[%s3] sm:$0x1]
  %v186 = vperm.slane %v184, 0
  %v188 = vadd.f32 %v168, %v186
  %v189 = vadd.f32 %v169, %v186
  %v190 = vadd.f32 %v170, %v186
  %v191 = vadd.f32 %v171, %v186
  %v192 = vadd.f32 %v172, %v186
  %v193 = vadd.f32 %v173, %v186
  %v194 = vadd.f32 %v174, %v186
  %v195 = vadd.f32 %v175, %v186
  %v196 = vadd.f32 %v176, %v186
  %v197 = vadd.f32 %v177, %v186
  %v198 = vadd.f32 %v178, %v186
  %v199 = vadd.f32 %v179, %v186
  %v200 = vadd.f32 %v180, %v186
  %v201 = vadd.f32 %v181, %v186
  %v202 = vadd.f32 %v182, %v186
  %v203 = vadd.f32 %v183, %v186
  %vm204 = vcmask 261120
  %205 = vst.msk [vmem:[%s11] sm:$0xff] %vm204, %v196
  %206 = vst.msk [vmem:[%s11 + $0x8] sm:$0xff] %vm204, %v197
  %207 = vst.msk [vmem:[%s11 + $0x10] sm:$0xff] %vm204, %v198
  %208 = vst.msk [vmem:[%s11 + $0x18] sm:$0xff] %vm204, %v199
  %209 = vst.msk [vmem:[%s11 + $0x20] sm:$0xff] %vm204, %v200
  %210 = vst.msk [vmem:[%s11 + $0x28] sm:$0xff] %vm204, %v201
  %211 = vst.msk [vmem:[%s11 + $0x30] sm:$0xff] %vm204, %v202
  %212 = vst.msk [vmem:[%s11 + $0x38] sm:$0xff] %vm204, %v203
  %v213 = vld [vmem:[%s4] sm:$0x1]
  %v214 = vld [vmem:[%s5] sm:$0x1]
  %v215 = vsel %vm204, %v188, 0.0
  %216 = vadd.xlane.f32.xlu0 %v215
  %v217 = vpop.xlane.xlu0 %216
  %v218 = vsel %vm204, %v189, 0.0
  %219 = vadd.xlane.f32.xlu0 %v218
  %v220 = vpop.xlane.xlu0 %219
  %v221 = vsel %vm204, %v190, 0.0
  %222 = vadd.xlane.f32.xlu0 %v221
  %v223 = vpop.xlane.xlu0 %222
  %v224 = vsel %vm204, %v191, 0.0
  %225 = vadd.xlane.f32.xlu0 %v224
  %v226 = vpop.xlane.xlu0 %225
  %v227 = vsel %vm204, %v192, 0.0
  %228 = vadd.xlane.f32.xlu0 %v227
  %v229 = vpop.xlane.xlu0 %228
  %v230 = vsel %vm204, %v193, 0.0
  %231 = vadd.xlane.f32.xlu0 %v230
  %v232 = vpop.xlane.xlu0 %231
  %v233 = vsel %vm204, %v194, 0.0
  %234 = vadd.xlane.f32.xlu0 %v233
  %v235 = vpop.xlane.xlu0 %234
  %v236 = vsel %vm204, %v195, 0.0
  %237 = vadd.xlane.f32.xlu0 %v236
  %v238 = vpop.xlane.xlu0 %237
  %v239 = vrcp.pop 32.0
  %v240 = vmul.f32 32.0, %v239
  %v241 = vsub.f32 1.0, %v240
  %v242 = vmul.f32 %v239, %v241
  %v243 = vadd.f32 %v239, %v242
  %vm244 = vweird.f32 %v239
  %v245 = vsel %vm244, %v239, %v243
  %v246 = vmul.f32 %v217, %v245
  %v247 = vmul.f32 %v220, %v245
  %v248 = vmul.f32 %v223, %v245
  %v249 = vmul.f32 %v226, %v245
  %v250 = vmul.f32 %v229, %v245
  %v251 = vmul.f32 %v232, %v245
  %v252 = vmul.f32 %v235, %v245
  %v253 = vmul.f32 %v238, %v245
  %v254 = vsub.f32 %v188, %v246
  %v255 = vsub.f32 %v189, %v247
  %v256 = vsub.f32 %v190, %v248
  %v257 = vsub.f32 %v191, %v249
  %v258 = vsub.f32 %v192, %v250
  %v259 = vsub.f32 %v193, %v251
  %v260 = vsub.f32 %v194, %v252
  %v261 = vsub.f32 %v195, %v253
  %v262 = vmul.f32 %v254, %v254
  %v263 = vmul.f32 %v255, %v255
  %v264 = vmul.f32 %v256, %v256
  %v265 = vmul.f32 %v257, %v257
  %v266 = vmul.f32 %v258, %v258
  %v267 = vmul.f32 %v259, %v259
  %v268 = vmul.f32 %v260, %v260
  %v269 = vmul.f32 %v261, %v261
  %v270 = vsel %vm204, %v262, 0.0
  %271 = vadd.xlane.f32.xlu0 %v270
  %v272 = vpop.xlane.xlu0 %271
  %v273 = vsel %vm204, %v263, 0.0
  %274 = vadd.xlane.f32.xlu0 %v273
  %v275 = vpop.xlane.xlu0 %274
  %v276 = vsel %vm204, %v264, 0.0
  %277 = vadd.xlane.f32.xlu0 %v276
  %v278 = vpop.xlane.xlu0 %277
  %v279 = vsel %vm204, %v265, 0.0
  %280 = vadd.xlane.f32.xlu0 %v279
  %v281 = vpop.xlane.xlu0 %280
  %v282 = vsel %vm204, %v266, 0.0
  %283 = vadd.xlane.f32.xlu0 %v282
  %v284 = vpop.xlane.xlu0 %283
  %v285 = vsel %vm204, %v267, 0.0
  %286 = vadd.xlane.f32.xlu0 %v285
  %v287 = vpop.xlane.xlu0 %286
  %v288 = vsel %vm204, %v268, 0.0
  %289 = vadd.xlane.f32.xlu0 %v288
  %v290 = vpop.xlane.xlu0 %289
  %v291 = vsel %vm204, %v269, 0.0
  %292 = vadd.xlane.f32.xlu0 %v291
  %v293 = vpop.xlane.xlu0 %292
  %v294 = vmul.f32 %v272, %v245
  %v295 = vmul.f32 %v275, %v245
  %v296 = vmul.f32 %v278, %v245
  %v297 = vmul.f32 %v281, %v245
  %v298 = vmul.f32 %v284, %v245
  %v299 = vmul.f32 %v287, %v245
  %v300 = vmul.f32 %v290, %v245
  %v301 = vmul.f32 %v293, %v245
  %v302 = vadd.f32 %v294, 1e-05
  %v303 = vadd.f32 %v295, 1e-05
  %v304 = vadd.f32 %v296, 1e-05
  %v305 = vadd.f32 %v297, 1e-05
  %v306 = vadd.f32 %v298, 1e-05
  %v307 = vadd.f32 %v299, 1e-05
  %v308 = vadd.f32 %v300, 1e-05
  %v309 = vadd.f32 %v301, 1e-05
  %v310 = vrsqrt.pop %v302
  %v311 = vmul.f32 %v310, %v302
  %v312 = vmul.f32 %v311, %v310
  %v313 = vmul.f32 0.5, %v312
  %v314 = vsub.f32 1.5, %v313
  %v315 = vmul.f32 %v310, %v314
  %vm316 = vweird.f32 %v302
  %vm317 = vweird.f32 %v310
  %vm318 = vmor %vm316, %vm317
  %v319 = vsel %vm318, %v310, %v315
  %v320 = vrsqrt.pop %v303
  %v321 = vmul.f32 %v320, %v303
  %v322 = vmul.f32 %v321, %v320
  %v323 = vmul.f32 0.5, %v322
  %v324 = vsub.f32 1.5, %v323
  %v325 = vmul.f32 %v320, %v324
  %vm326 = vweird.f32 %v303
  %vm327 = vweird.f32 %v320
  %vm328 = vmor %vm326, %vm327
  %v329 = vsel %vm328, %v320, %v325
  %v330 = vrsqrt.pop %v304
  %v331 = vmul.f32 %v330, %v304
  %v332 = vmul.f32 %v331, %v330
  %v333 = vmul.f32 0.5, %v332
  %v334 = vsub.f32 1.5, %v333
  %v335 = vmul.f32 %v330, %v334
  %vm336 = vweird.f32 %v304
  %vm337 = vweird.f32 %v330
  %vm338 = vmor %vm336, %vm337
  %v339 = vsel %vm338, %v330, %v335
  %v340 = vrsqrt.pop %v305
  %v341 = vmul.f32 %v340, %v305
  %v342 = vmul.f32 %v341, %v340
  %v343 = vmul.f32 0.5, %v342
  %v344 = vsub.f32 1.5, %v343
  %v345 = vmul.f32 %v340, %v344
  %vm346 = vweird.f32 %v305
  %vm347 = vweird.f32 %v340
  %vm348 = vmor %vm346, %vm347
  %v349 = vsel %vm348, %v340, %v345
  %v350 = vrsqrt.pop %v306
  %v351 = vmul.f32 %v350, %v306
  %v352 = vmul.f32 %v351, %v350
  %v353 = vmul.f32 0.5, %v352
  %v354 = vsub.f32 1.5, %v353
  %v355 = vmul.f32 %v350, %v354
  %vm356 = vweird.f32 %v306
  %vm357 = vweird.f32 %v350
  %vm358 = vmor %vm356, %vm357
  %v359 = vsel %vm358, %v350, %v355
  %v360 = vrsqrt.pop %v307
  %v361 = vmul.f32 %v360, %v307
  %v362 = vmul.f32 %v361, %v360
  %v363 = vmul.f32 0.5, %v362
  %v364 = vsub.f32 1.5, %v363
  %v365 = vmul.f32 %v360, %v364
  %vm366 = vweird.f32 %v307
  %vm367 = vweird.f32 %v360
  %vm368 = vmor %vm366, %vm367
  %v369 = vsel %vm368, %v360, %v365
  %v370 = vrsqrt.pop %v308
  %v371 = vmul.f32 %v370, %v308
  %v372 = vmul.f32 %v371, %v370
  %v373 = vmul.f32 0.5, %v372
  %v374 = vsub.f32 1.5, %v373
  %v375 = vmul.f32 %v370, %v374
  %vm376 = vweird.f32 %v308
  %vm377 = vweird.f32 %v370
  %vm378 = vmor %vm376, %vm377
  %v379 = vsel %vm378, %v370, %v375
  %v380 = vrsqrt.pop %v309
  %v381 = vmul.f32 %v380, %v309
  %v382 = vmul.f32 %v381, %v380
  %v383 = vmul.f32 0.5, %v382
  %v384 = vsub.f32 1.5, %v383
  %v385 = vmul.f32 %v380, %v384
  %vm386 = vweird.f32 %v309
  %vm387 = vweird.f32 %v380
  %vm388 = vmor %vm386, %vm387
  %v389 = vsel %vm388, %v380, %v385
  %v390 = vmul.f32 %v254, %v319
  %v391 = vmul.f32 %v255, %v329
  %v392 = vmul.f32 %v256, %v339
  %v393 = vmul.f32 %v257, %v349
  %v394 = vmul.f32 %v258, %v359
  %v395 = vmul.f32 %v259, %v369
  %v396 = vmul.f32 %v260, %v379
  %v397 = vmul.f32 %v261, %v389
  %v399 = vperm.slane %v213, 0
  %v401 = vmul.f32 %v390, %v399
  %v402 = vmul.f32 %v391, %v399
  %v403 = vmul.f32 %v392, %v399
  %v404 = vmul.f32 %v393, %v399
  %v405 = vmul.f32 %v394, %v399
  %v406 = vmul.f32 %v395, %v399
  %v407 = vmul.f32 %v396, %v399
  %v408 = vmul.f32 %v397, %v399
  %v410 = vperm.slane %v214, 0
  %v412 = vadd.f32 %v401, %v410
  %v413 = vadd.f32 %v402, %v410
  %v414 = vadd.f32 %v403, %v410
  %v415 = vadd.f32 %v404, %v410
  %v416 = vadd.f32 %v405, %v410
  %v417 = vadd.f32 %v406, %v410
  %v418 = vadd.f32 %v407, %v410
  %v419 = vadd.f32 %v408, %v410
  %v420 = vld [vmem:[%s6] sm:$0xff]
  %v421 = vld [vmem:[%s6 + $0x8] sm:$0xff]
  %v422 = vld [vmem:[%s6 + $0x10] sm:$0xff]
  %v423 = vld [vmem:[%s6 + $0x18] sm:$0xff]
  %v424 = vpack.c.bf16 %v413, %v412
  %v425 = vpack.c.bf16 %v415, %v414
  %v426 = vpack.c.bf16 %v417, %v416
  %v427 = vpack.c.bf16 %v419, %v418
  %v428 = vpack.c.bf16 %v421, %v420
  %v429 = vpack.c.bf16 %v423, %v422
  %v431 = vsel %vm204, %v424, 0
  %v434 = vsel %vm204, %v425, 0
  %v437 = vsel %vm204, %v426, 0
  %v440 = vsel %vm204, %v427, 0
  %442 = vmatpush.bf16.msra.mxu0 0
  %443 = vmatpush.bf16.msra.mxu0 0
  %444 = vmatpush.bf16.msra.mxu0 0
  %445 = vmatpush.bf16.msra.mxu0 0
  %446 = vmatpush.bf16.msra.mxu0 0
  %447 = vmatpush.bf16.msra.mxu0 0
  %448 = vmatpush.bf16.msra.mxu0 %v429
  %449 = vmatpush.bf16.msra.mxu0 %v428
  %450 = vmatmul.bf16.gmra.mxu0 %v431
  %v451 = vpop.f32.mrf.mxu0
  %v452 = vadd.f32 0.0, %v451
  %v453 = vpop.f32.mrf.mxu0
  %v454 = vadd.f32 0.0, %v453
  %455 = vmatmul.bf16.gmra.mxu0 %v434
  %v456 = vpop.f32.mrf.mxu0
  %v457 = vadd.f32 0.0, %v456
  %v458 = vpop.f32.mrf.mxu0
  %v459 = vadd.f32 0.0, %v458
  %460 = vmatmul.bf16.gmra.mxu0 %v437
  %v461 = vpop.f32.mrf.mxu0
  %v462 = vadd.f32 0.0, %v461
  %v463 = vpop.f32.mrf.mxu0
  %v464 = vadd.f32 0.0, %v463
  %465 = vmatmul.bf16.gmra.mxu0 %v440
  %v466 = vpop.f32.mrf.mxu0
  %v467 = vadd.f32 0.0, %v466
  %v468 = vpop.f32.mrf.mxu0
  %v469 = vadd.f32 0.0, %v468
  %470 = vdwg.mxu0
  %v471 = vld [vmem:[%s7] sm:$0xff]
  %v472 = vld [vmem:[%s7 + $0x8] sm:$0xff]
  %v473 = vld [vmem:[%s7 + $0x10] sm:$0xff]
  %v474 = vld [vmem:[%s7 + $0x18] sm:$0xff]
  %v475 = vmul.f32 %v452, 0.35355338
  %v476 = vmul.f32 %v454, 0.35355338
  %v477 = vmul.f32 %v457, 0.35355338
  %v478 = vmul.f32 %v459, 0.35355338
  %v479 = vmul.f32 %v462, 0.35355338
  %v480 = vmul.f32 %v464, 0.35355338
  %v481 = vmul.f32 %v467, 0.35355338
  %v482 = vmul.f32 %v469, 0.35355338
  %v483 = vmul.f32 %v462, -0.35355338
  %v484 = vmul.f32 %v464, -0.35355338
  %v485 = vmul.f32 %v467, -0.35355338
  %v486 = vmul.f32 %v469, -0.35355338
  %v487 = vmul.f32 %v452, -0.35355338
  %v488 = vmul.f32 %v454, -0.35355338
  %v489 = vmul.f32 %v457, -0.35355338
  %v490 = vmul.f32 %v459, -0.35355338
  %495 = vrot.lane.b32.xlu0 %v483, 32
  %v496 = vpop.permute.xlu0 %495
  %497 = vrot.lane.b32.xlu0 %v484, 32
  %v498 = vpop.permute.xlu0 %497
  %499 = vrot.lane.b32.xlu0 %v485, 32
  %v500 = vpop.permute.xlu0 %499
  %501 = vrot.lane.b32.xlu0 %v486, 32
  %v502 = vpop.permute.xlu0 %501
  %511 = vrot.lane.b32.xlu0 %v487, 32
  %v512 = vpop.permute.xlu0 %511
  %513 = vrot.lane.b32.xlu0 %v488, 32
  %v514 = vpop.permute.xlu0 %513
  %515 = vrot.lane.b32.xlu0 %v489, 32
  %v516 = vpop.permute.xlu0 %515
  %517 = vrot.lane.b32.xlu0 %v490, 32
  %v518 = vpop.permute.xlu0 %517
  %v523 = vpack.c.bf16 %v475, %v475
  %v524 = vpack.c.bf16 %v476, %v476
  %v525 = vpack.c.bf16 %v477, %v477
  %v526 = vpack.c.bf16 %v478, %v478
  %v527 = vpack.c.bf16 %v479, %v479
  %v528 = vpack.c.bf16 %v480, %v480
  %v529 = vpack.c.bf16 %v481, %v481
  %v530 = vpack.c.bf16 %v482, %v482
  %v531 = vpack.c.bf16 %v496, %v496
  %v532 = vpack.c.bf16 %v498, %v498
  %v533 = vpack.c.bf16 %v500, %v500
  %v534 = vpack.c.bf16 %v502, %v502
  %v535 = vpack.c.bf16 %v512, %v512
  %v536 = vpack.c.bf16 %v514, %v514
  %v537 = vpack.c.bf16 %v516, %v516
  %v538 = vpack.c.bf16 %v518, %v518
  %v539 = vpack.c.bf16 %v452, %v452
  %v540 = vpack.c.bf16 %v454, %v454
  %v541 = vpack.c.bf16 %v457, %v457
  %v542 = vpack.c.bf16 %v459, %v459
  %v543 = vpack.c.bf16 %v462, %v462
  %v544 = vpack.c.bf16 %v464, %v464
  %v545 = vpack.c.bf16 %v467, %v467
  %v546 = vpack.c.bf16 %v469, %v469
  %v549 = vunpack.c.l.b16 %v523
  %v550 = vunpack.c.l.b16 %v524
  %v551 = vpack.c.b16 %v550, %v549
  %552 = vrot.lane.b32.xlu0 %v551, 96
  %v553 = vpop.permute.xlu0 %552
  %v556 = vunpack.c.l.b16 %v539
  %v557 = vunpack.c.l.b16 %v540
  %v558 = vpack.c.b16 %v557, %v556
  %559 = vrot.lane.b32.xlu0 %v558, 64
  %v560 = vpop.permute.xlu0 %559
  %vm561 = vcmask 64512
  %v563 = vsel %vm561, %v553, 0
  %v566 = vsel %vm561, %v560, 0
  %568 = vmatpush.bf16.xpose.msra.mxu0 0
  %569 = vmatpush.bf16.xpose.msra.mxu0 0
  %570 = vmatpush.bf16.xpose.msra.mxu0 0
  %571 = vmatpush.bf16.xpose.msra.mxu0 0
  %572 = vmatpush.bf16.xpose.msra.mxu0 0
  %573 = vmatpush.bf16.xpose.msra.mxu0 0
  %574 = vmatpush.bf16.xpose.msra.mxu0 0
  %575 = vmatpush.bf16.xpose.msra.mxu0 %v566
  %576 = vmatmul.bf16.gmra.mxu0 %v563
  %v577 = vpop.f32.mrf.mxu0
  %v578 = vadd.f32 0.0, %v577
  %v579 = vpop.f32.mrf.mxu0
  %v580 = vadd.f32 0.0, %v579
  %581 = vdwg.mxu0
  %v584 = vunpack.c.l.b16 %v525
  %v585 = vunpack.c.l.b16 %v526
  %v586 = vpack.c.b16 %v585, %v584
  %587 = vrot.lane.b32.xlu0 %v586, 96
  %v588 = vpop.permute.xlu0 %587
  %v591 = vunpack.c.l.b16 %v541
  %v592 = vunpack.c.l.b16 %v542
  %v593 = vpack.c.b16 %v592, %v591
  %594 = vrot.lane.b32.xlu0 %v593, 64
  %v595 = vpop.permute.xlu0 %594
  %v597 = vsel %vm561, %v588, 0
  %v600 = vsel %vm561, %v595, 0
  %602 = vmatpush.bf16.xpose.msra.mxu0 0
  %603 = vmatpush.bf16.xpose.msra.mxu0 0
  %604 = vmatpush.bf16.xpose.msra.mxu0 0
  %605 = vmatpush.bf16.xpose.msra.mxu0 0
  %606 = vmatpush.bf16.xpose.msra.mxu0 0
  %607 = vmatpush.bf16.xpose.msra.mxu0 0
  %608 = vmatpush.bf16.xpose.msra.mxu0 0
  %609 = vmatpush.bf16.xpose.msra.mxu0 %v600
  %610 = vmatmul.bf16.gmra.mxu0 %v597
  %v611 = vpop.f32.mrf.mxu0
  %v612 = vadd.f32 0.0, %v611
  %v613 = vpop.f32.mrf.mxu0
  %v614 = vadd.f32 0.0, %v613
  %615 = vdwg.mxu0
  %v618 = vunpack.c.l.b16 %v527
  %v619 = vunpack.c.l.b16 %v528
  %v620 = vpack.c.b16 %v619, %v618
  %621 = vrot.lane.b32.xlu0 %v620, 96
  %v622 = vpop.permute.xlu0 %621
  %v625 = vunpack.c.l.b16 %v543
  %v626 = vunpack.c.l.b16 %v544
  %v627 = vpack.c.b16 %v626, %v625
  %628 = vrot.lane.b32.xlu0 %v627, 64
  %v629 = vpop.permute.xlu0 %628
  %v631 = vsel %vm561, %v622, 0
  %v634 = vsel %vm561, %v629, 0
  %636 = vmatpush.bf16.xpose.msra.mxu0 0
  %637 = vmatpush.bf16.xpose.msra.mxu0 0
  %638 = vmatpush.bf16.xpose.msra.mxu0 0
  %639 = vmatpush.bf16.xpose.msra.mxu0 0
  %640 = vmatpush.bf16.xpose.msra.mxu0 0
  %641 = vmatpush.bf16.xpose.msra.mxu0 0
  %642 = vmatpush.bf16.xpose.msra.mxu0 0
  %643 = vmatpush.bf16.xpose.msra.mxu0 %v634
  %644 = vmatmul.bf16.gmra.mxu0 %v631
  %v645 = vpop.f32.mrf.mxu0
  %v646 = vadd.f32 0.0, %v645
  %v647 = vpop.f32.mrf.mxu0
  %v648 = vadd.f32 0.0, %v647
  %649 = vdwg.mxu0
  %v652 = vunpack.c.l.b16 %v529
  %v653 = vunpack.c.l.b16 %v530
  %v654 = vpack.c.b16 %v653, %v652
  %655 = vrot.lane.b32.xlu0 %v654, 96
  %v656 = vpop.permute.xlu0 %655
  %v659 = vunpack.c.l.b16 %v545
  %v660 = vunpack.c.l.b16 %v546
  %v661 = vpack.c.b16 %v660, %v659
  %662 = vrot.lane.b32.xlu0 %v661, 64
  %v663 = vpop.permute.xlu0 %662
  %v665 = vsel %vm561, %v656, 0
  %v668 = vsel %vm561, %v663, 0
  %670 = vmatpush.bf16.xpose.msra.mxu0 0
  %671 = vmatpush.bf16.xpose.msra.mxu0 0
  %672 = vmatpush.bf16.xpose.msra.mxu0 0
  %673 = vmatpush.bf16.xpose.msra.mxu0 0
  %674 = vmatpush.bf16.xpose.msra.mxu0 0
  %675 = vmatpush.bf16.xpose.msra.mxu0 0
  %676 = vmatpush.bf16.xpose.msra.mxu0 0
  %677 = vmatpush.bf16.xpose.msra.mxu0 %v668
  %678 = vmatmul.bf16.gmra.mxu0 %v665
  %v679 = vpop.f32.mrf.mxu0
  %v680 = vadd.f32 0.0, %v679
  %v681 = vpop.f32.mrf.mxu0
  %v682 = vadd.f32 0.0, %v681
  %683 = vdwg.mxu0
  %v686 = vunpack.c.l.b16 %v531
  %v687 = vunpack.c.l.b16 %v532
  %v688 = vpack.c.b16 %v687, %v686
  %689 = vrot.lane.b32.xlu0 %v688, 96
  %v690 = vpop.permute.xlu0 %689
  %v692 = vsel %vm561, %v690, 0
  %694 = vmatpush.bf16.xpose.msra.mxu0 0
  %695 = vmatpush.bf16.xpose.msra.mxu0 0
  %696 = vmatpush.bf16.xpose.msra.mxu0 0
  %697 = vmatpush.bf16.xpose.msra.mxu0 0
  %698 = vmatpush.bf16.xpose.msra.mxu0 0
  %699 = vmatpush.bf16.xpose.msra.mxu0 0
  %700 = vmatpush.bf16.xpose.msra.mxu0 0
  %701 = vmatpush.bf16.xpose.msra.mxu0 %v566
  %702 = vmatmul.bf16.gmra.mxu0 %v692
  %v703 = vpop.f32.mrf.mxu0
  %v704 = vadd.f32 0.0, %v703
  %v705 = vpop.f32.mrf.mxu0
  %v706 = vadd.f32 0.0, %v705
  %707 = vdwg.mxu0
  %v710 = vunpack.c.l.b16 %v533
  %v711 = vunpack.c.l.b16 %v534
  %v712 = vpack.c.b16 %v711, %v710
  %713 = vrot.lane.b32.xlu0 %v712, 96
  %v714 = vpop.permute.xlu0 %713
  %v716 = vsel %vm561, %v714, 0
  %718 = vmatpush.bf16.xpose.msra.mxu0 0
  %719 = vmatpush.bf16.xpose.msra.mxu0 0
  %720 = vmatpush.bf16.xpose.msra.mxu0 0
  %721 = vmatpush.bf16.xpose.msra.mxu0 0
  %722 = vmatpush.bf16.xpose.msra.mxu0 0
  %723 = vmatpush.bf16.xpose.msra.mxu0 0
  %724 = vmatpush.bf16.xpose.msra.mxu0 0
  %725 = vmatpush.bf16.xpose.msra.mxu0 %v600
  %726 = vmatmul.bf16.gmra.mxu0 %v716
  %v727 = vpop.f32.mrf.mxu0
  %v728 = vadd.f32 0.0, %v727
  %v729 = vpop.f32.mrf.mxu0
  %v730 = vadd.f32 0.0, %v729
  %731 = vdwg.mxu0
  %v734 = vunpack.c.l.b16 %v535
  %v735 = vunpack.c.l.b16 %v536
  %v736 = vpack.c.b16 %v735, %v734
  %737 = vrot.lane.b32.xlu0 %v736, 96
  %v738 = vpop.permute.xlu0 %737
  %v740 = vsel %vm561, %v738, 0
  %742 = vmatpush.bf16.xpose.msra.mxu0 0
  %743 = vmatpush.bf16.xpose.msra.mxu0 0
  %744 = vmatpush.bf16.xpose.msra.mxu0 0
  %745 = vmatpush.bf16.xpose.msra.mxu0 0
  %746 = vmatpush.bf16.xpose.msra.mxu0 0
  %747 = vmatpush.bf16.xpose.msra.mxu0 0
  %748 = vmatpush.bf16.xpose.msra.mxu0 0
  %749 = vmatpush.bf16.xpose.msra.mxu0 %v634
  %750 = vmatmul.bf16.gmra.mxu0 %v740
  %v751 = vpop.f32.mrf.mxu0
  %v752 = vadd.f32 0.0, %v751
  %v753 = vpop.f32.mrf.mxu0
  %v754 = vadd.f32 0.0, %v753
  %755 = vdwg.mxu0
  %v758 = vunpack.c.l.b16 %v537
  %v759 = vunpack.c.l.b16 %v538
  %v760 = vpack.c.b16 %v759, %v758
  %761 = vrot.lane.b32.xlu0 %v760, 96
  %v762 = vpop.permute.xlu0 %761
  %v764 = vsel %vm561, %v762, 0
  %766 = vmatpush.bf16.xpose.msra.mxu0 0
  %767 = vmatpush.bf16.xpose.msra.mxu0 0
  %768 = vmatpush.bf16.xpose.msra.mxu0 0
  %769 = vmatpush.bf16.xpose.msra.mxu0 0
  %770 = vmatpush.bf16.xpose.msra.mxu0 0
  %771 = vmatpush.bf16.xpose.msra.mxu0 0
  %772 = vmatpush.bf16.xpose.msra.mxu0 0
  %773 = vmatpush.bf16.xpose.msra.mxu0 %v668
  %774 = vmatmul.bf16.gmra.mxu0 %v764
  %v775 = vpop.f32.mrf.mxu0
  %v776 = vadd.f32 0.0, %v775
  %v777 = vpop.f32.mrf.mxu0
  %v778 = vadd.f32 0.0, %v777
  %779 = vdwg.mxu0
  %vm780 = vcmask 130048
  %v781 = vsel %vm780, %v578, -inf
  %782 = vmax.xlane.f32.xlu0 %v781
  %v783 = vpop.xlane.xlu0 %782
  %v784 = vsel %vm780, %v580, -inf
  %785 = vmax.xlane.f32.xlu0 %v784
  %v786 = vpop.xlane.xlu0 %785
  %v787 = vsel %vm780, %v612, -inf
  %788 = vmax.xlane.f32.xlu0 %v787
  %v789 = vpop.xlane.xlu0 %788
  %v790 = vsel %vm780, %v614, -inf
  %791 = vmax.xlane.f32.xlu0 %v790
  %v792 = vpop.xlane.xlu0 %791
  %v793 = vsel %vm780, %v646, -inf
  %794 = vmax.xlane.f32.xlu0 %v793
  %v795 = vpop.xlane.xlu0 %794
  %v796 = vsel %vm780, %v648, -inf
  %797 = vmax.xlane.f32.xlu0 %v796
  %v798 = vpop.xlane.xlu0 %797
  %v799 = vsel %vm780, %v680, -inf
  %800 = vmax.xlane.f32.xlu0 %v799
  %v801 = vpop.xlane.xlu0 %800
  %v802 = vsel %vm780, %v682, -inf
  %803 = vmax.xlane.f32.xlu0 %v802
  %v804 = vpop.xlane.xlu0 %803
  %v805 = vsel %vm780, %v704, -inf
  %806 = vmax.xlane.f32.xlu0 %v805
  %v807 = vpop.xlane.xlu0 %806
  %v808 = vsel %vm780, %v706, -inf
  %809 = vmax.xlane.f32.xlu0 %v808
  %v810 = vpop.xlane.xlu0 %809
  %v811 = vsel %vm780, %v728, -inf
  %812 = vmax.xlane.f32.xlu0 %v811
  %v813 = vpop.xlane.xlu0 %812
  %v814 = vsel %vm780, %v730, -inf
  %815 = vmax.xlane.f32.xlu0 %v814
  %v816 = vpop.xlane.xlu0 %815
  %v817 = vsel %vm780, %v752, -inf
  %818 = vmax.xlane.f32.xlu0 %v817
  %v819 = vpop.xlane.xlu0 %818
  %v820 = vsel %vm780, %v754, -inf
  %821 = vmax.xlane.f32.xlu0 %v820
  %v822 = vpop.xlane.xlu0 %821
  %v823 = vsel %vm780, %v776, -inf
  %824 = vmax.xlane.f32.xlu0 %v823
  %v825 = vpop.xlane.xlu0 %824
  %v826 = vsel %vm780, %v778, -inf
  %827 = vmax.xlane.f32.xlu0 %v826
  %v828 = vpop.xlane.xlu0 %827
  %v829 = vsub.f32 %v578, %v783
  %v830 = vsub.f32 %v580, %v786
  %v831 = vsub.f32 %v612, %v789
  %v832 = vsub.f32 %v614, %v792
  %v833 = vsub.f32 %v646, %v795
  %v834 = vsub.f32 %v648, %v798
  %v835 = vsub.f32 %v680, %v801
  %v836 = vsub.f32 %v682, %v804
  %v837 = vsub.f32 %v704, %v807
  %v838 = vsub.f32 %v706, %v810
  %v839 = vsub.f32 %v728, %v813
  %v840 = vsub.f32 %v730, %v816
  %v841 = vsub.f32 %v752, %v819
  %v842 = vsub.f32 %v754, %v822
  %v843 = vsub.f32 %v776, %v825
  %v844 = vsub.f32 %v778, %v828
  %v845 = vmul.f32 %v829, 1.442695
  %v846 = vpow.pop %v845
  %v847 = vmul.f32 %v830, 1.442695
  %v848 = vpow.pop %v847
  %v849 = vmul.f32 %v831, 1.442695
  %v850 = vpow.pop %v849
  %v851 = vmul.f32 %v832, 1.442695
  %v852 = vpow.pop %v851
  %v853 = vmul.f32 %v833, 1.442695
  %v854 = vpow.pop %v853
  %v855 = vmul.f32 %v834, 1.442695
  %v856 = vpow.pop %v855
  %v857 = vmul.f32 %v835, 1.442695
  %v858 = vpow.pop %v857
  %v859 = vmul.f32 %v836, 1.442695
  %v860 = vpow.pop %v859
  %v861 = vmul.f32 %v837, 1.442695
  %v862 = vpow.pop %v861
  %v863 = vmul.f32 %v838, 1.442695
  %v864 = vpow.pop %v863
  %v865 = vmul.f32 %v839, 1.442695
  %v866 = vpow.pop %v865
  %v867 = vmul.f32 %v840, 1.442695
  %v868 = vpow.pop %v867
  %v869 = vmul.f32 %v841, 1.442695
  %v870 = vpow.pop %v869
  %v871 = vmul.f32 %v842, 1.442695
  %v872 = vpow.pop %v871
  %v873 = vmul.f32 %v843, 1.442695
  %v874 = vpow.pop %v873
  %v875 = vmul.f32 %v844, 1.442695
  %v876 = vpow.pop %v875
  %v877 = vsel %vm780, %v846, 0.0
  %878 = vadd.xlane.f32.xlu0 %v877
  %v879 = vpop.xlane.xlu0 %878
  %v880 = vsel %vm780, %v848, 0.0
  %881 = vadd.xlane.f32.xlu0 %v880
  %v882 = vpop.xlane.xlu0 %881
  %v883 = vsel %vm780, %v850, 0.0
  %884 = vadd.xlane.f32.xlu0 %v883
  %v885 = vpop.xlane.xlu0 %884
  %v886 = vsel %vm780, %v852, 0.0
  %887 = vadd.xlane.f32.xlu0 %v886
  %v888 = vpop.xlane.xlu0 %887
  %v889 = vsel %vm780, %v854, 0.0
  %890 = vadd.xlane.f32.xlu0 %v889
  %v891 = vpop.xlane.xlu0 %890
  %v892 = vsel %vm780, %v856, 0.0
  %893 = vadd.xlane.f32.xlu0 %v892
  %v894 = vpop.xlane.xlu0 %893
  %v895 = vsel %vm780, %v858, 0.0
  %896 = vadd.xlane.f32.xlu0 %v895
  %v897 = vpop.xlane.xlu0 %896
  %v898 = vsel %vm780, %v860, 0.0
  %899 = vadd.xlane.f32.xlu0 %v898
  %v900 = vpop.xlane.xlu0 %899
  %v901 = vsel %vm780, %v862, 0.0
  %902 = vadd.xlane.f32.xlu0 %v901
  %v903 = vpop.xlane.xlu0 %902
  %v904 = vsel %vm780, %v864, 0.0
  %905 = vadd.xlane.f32.xlu0 %v904
  %v906 = vpop.xlane.xlu0 %905
  %v907 = vsel %vm780, %v866, 0.0
  %908 = vadd.xlane.f32.xlu0 %v907
  %v909 = vpop.xlane.xlu0 %908
  %v910 = vsel %vm780, %v868, 0.0
  %911 = vadd.xlane.f32.xlu0 %v910
  %v912 = vpop.xlane.xlu0 %911
  %v913 = vsel %vm780, %v870, 0.0
  %914 = vadd.xlane.f32.xlu0 %v913
  %v915 = vpop.xlane.xlu0 %914
  %v916 = vsel %vm780, %v872, 0.0
  %917 = vadd.xlane.f32.xlu0 %v916
  %v918 = vpop.xlane.xlu0 %917
  %v919 = vsel %vm780, %v874, 0.0
  %920 = vadd.xlane.f32.xlu0 %v919
  %v921 = vpop.xlane.xlu0 %920
  %v922 = vsel %vm780, %v876, 0.0
  %923 = vadd.xlane.f32.xlu0 %v922
  %v924 = vpop.xlane.xlu0 %923
  %v925 = vrcp.pop %v879
  %v926 = vrcp.pop %v882
  %v927 = vrcp.pop %v885
  %v928 = vrcp.pop %v888
  %v929 = vrcp.pop %v891
  %v930 = vrcp.pop %v894
  %v931 = vrcp.pop %v897
  %v932 = vrcp.pop %v900
  %v933 = vrcp.pop %v903
  %v934 = vrcp.pop %v906
  %v935 = vrcp.pop %v909
  %v936 = vrcp.pop %v912
  %v937 = vrcp.pop %v915
  %v938 = vrcp.pop %v918
  %v939 = vrcp.pop %v921
  %v940 = vrcp.pop %v924
  %v941 = vmul.f32 %v846, %v925
  %v942 = vmul.f32 %v848, %v926
  %v943 = vmul.f32 %v850, %v927
  %v944 = vmul.f32 %v852, %v928
  %v945 = vmul.f32 %v854, %v929
  %v946 = vmul.f32 %v856, %v930
  %v947 = vmul.f32 %v858, %v931
  %v948 = vmul.f32 %v860, %v932
  %v949 = vmul.f32 %v862, %v933
  %v950 = vmul.f32 %v864, %v934
  %v951 = vmul.f32 %v866, %v935
  %v952 = vmul.f32 %v868, %v936
  %v953 = vmul.f32 %v870, %v937
  %v954 = vmul.f32 %v872, %v938
  %v955 = vmul.f32 %v874, %v939
  %v956 = vmul.f32 %v876, %v940
  %v957 = vpack.c.bf16 %v941, %v941
  %v958 = vpack.c.bf16 %v942, %v942
  %v959 = vpack.c.bf16 %v943, %v943
  %v960 = vpack.c.bf16 %v944, %v944
  %v961 = vpack.c.bf16 %v945, %v945
  %v962 = vpack.c.bf16 %v946, %v946
  %v963 = vpack.c.bf16 %v947, %v947
  %v964 = vpack.c.bf16 %v948, %v948
  %v965 = vpack.c.bf16 %v949, %v949
  %v966 = vpack.c.bf16 %v950, %v950
  %v967 = vpack.c.bf16 %v951, %v951
  %v968 = vpack.c.bf16 %v952, %v952
  %v969 = vpack.c.bf16 %v953, %v953
  %v970 = vpack.c.bf16 %v954, %v954
  %v971 = vpack.c.bf16 %v955, %v955
  %v972 = vpack.c.bf16 %v956, %v956
  %v975 = vunpack.c.l.b16 %v957
  %v976 = vunpack.c.l.b16 %v958
  %v977 = vpack.c.b16 %v976, %v975
  %978 = vrot.lane.b32.xlu0 %v558, 32
  %v979 = vpop.permute.xlu0 %978
  %v982 = vsel %vm780, %v977, 0
  %984 = vmatpush.bf16.msra.mxu0 0
  %985 = vmatpush.bf16.msra.mxu0 0
  %986 = vmatpush.bf16.msra.mxu0 0
  %987 = vmatpush.bf16.msra.mxu0 0
  %988 = vmatpush.bf16.msra.mxu0 0
  %989 = vmatpush.bf16.msra.mxu0 0
  %990 = vmatpush.bf16.msra.mxu0 0
  %991 = vmatpush.bf16.msra.mxu0 %v979
  %992 = vmatmul.bf16.gmra.mxu0 %v982
  %v993 = vpop.f32.mrf.mxu0
  %v994 = vadd.f32 0.0, %v993
  %v995 = vpop.f32.mrf.mxu0
  %v996 = vadd.f32 0.0, %v995
  %997 = vdwg.mxu0
  %v1000 = vunpack.c.l.b16 %v959
  %v1001 = vunpack.c.l.b16 %v960
  %v1002 = vpack.c.b16 %v1001, %v1000
  %1003 = vrot.lane.b32.xlu0 %v593, 32
  %v1004 = vpop.permute.xlu0 %1003
  %v1007 = vsel %vm780, %v1002, 0
  %1009 = vmatpush.bf16.msra.mxu0 0
  %1010 = vmatpush.bf16.msra.mxu0 0
  %1011 = vmatpush.bf16.msra.mxu0 0
  %1012 = vmatpush.bf16.msra.mxu0 0
  %1013 = vmatpush.bf16.msra.mxu0 0
  %1014 = vmatpush.bf16.msra.mxu0 0
  %1015 = vmatpush.bf16.msra.mxu0 0
  %1016 = vmatpush.bf16.msra.mxu0 %v1004
  %1017 = vmatmul.bf16.gmra.mxu0 %v1007
  %v1018 = vpop.f32.mrf.mxu0
  %v1019 = vadd.f32 0.0, %v1018
  %v1020 = vpop.f32.mrf.mxu0
  %v1021 = vadd.f32 0.0, %v1020
  %1022 = vdwg.mxu0
  %v1025 = vunpack.c.l.b16 %v961
  %v1026 = vunpack.c.l.b16 %v962
  %v1027 = vpack.c.b16 %v1026, %v1025
  %v1029 = vsel %vm780, %v1027, 0
  %1031 = vmatpush.bf16.msra.mxu0 0
  %1032 = vmatpush.bf16.msra.mxu0 0
  %1033 = vmatpush.bf16.msra.mxu0 0
  %1034 = vmatpush.bf16.msra.mxu0 0
  %1035 = vmatpush.bf16.msra.mxu0 0
  %1036 = vmatpush.bf16.msra.mxu0 0
  %1037 = vmatpush.bf16.msra.mxu0 0
  %1038 = vmatpush.bf16.msra.mxu0 %v979
  %1039 = vmatmul.bf16.gmra.mxu0 %v1029
  %v1040 = vpop.f32.mrf.mxu0
  %v1041 = vadd.f32 0.0, %v1040
  %v1042 = vpop.f32.mrf.mxu0
  %v1043 = vadd.f32 0.0, %v1042
  %1044 = vdwg.mxu0
  %v1047 = vunpack.c.l.b16 %v963
  %v1048 = vunpack.c.l.b16 %v964
  %v1049 = vpack.c.b16 %v1048, %v1047
  %v1051 = vsel %vm780, %v1049, 0
  %1053 = vmatpush.bf16.msra.mxu0 0
  %1054 = vmatpush.bf16.msra.mxu0 0
  %1055 = vmatpush.bf16.msra.mxu0 0
  %1056 = vmatpush.bf16.msra.mxu0 0
  %1057 = vmatpush.bf16.msra.mxu0 0
  %1058 = vmatpush.bf16.msra.mxu0 0
  %1059 = vmatpush.bf16.msra.mxu0 0
  %1060 = vmatpush.bf16.msra.mxu0 %v1004
  %1061 = vmatmul.bf16.gmra.mxu0 %v1051
  %v1062 = vpop.f32.mrf.mxu0
  %v1063 = vadd.f32 0.0, %v1062
  %v1064 = vpop.f32.mrf.mxu0
  %v1065 = vadd.f32 0.0, %v1064
  %1066 = vdwg.mxu0
  %v1069 = vunpack.c.l.b16 %v965
  %v1070 = vunpack.c.l.b16 %v966
  %v1071 = vpack.c.b16 %v1070, %v1069
  %v1073 = vsel %vm780, %v1071, 0
  %1075 = vmatpush.bf16.msra.mxu0 0
  %1076 = vmatpush.bf16.msra.mxu0 0
  %1077 = vmatpush.bf16.msra.mxu0 0
  %1078 = vmatpush.bf16.msra.mxu0 0
  %1079 = vmatpush.bf16.msra.mxu0 0
  %1080 = vmatpush.bf16.msra.mxu0 0
  %1081 = vmatpush.bf16.msra.mxu0 0
  %1082 = vmatpush.bf16.msra.mxu0 %v979
  %1083 = vmatmul.bf16.gmra.mxu0 %v1073
  %v1084 = vpop.f32.mrf.mxu0
  %v1085 = vadd.f32 0.0, %v1084
  %v1086 = vpop.f32.mrf.mxu0
  %v1087 = vadd.f32 0.0, %v1086
  %1088 = vdwg.mxu0
  %v1091 = vunpack.c.l.b16 %v967
  %v1092 = vunpack.c.l.b16 %v968
  %v1093 = vpack.c.b16 %v1092, %v1091
  %v1095 = vsel %vm780, %v1093, 0
  %1097 = vmatpush.bf16.msra.mxu0 0
  %1098 = vmatpush.bf16.msra.mxu0 0
  %1099 = vmatpush.bf16.msra.mxu0 0
  %1100 = vmatpush.bf16.msra.mxu0 0
  %1101 = vmatpush.bf16.msra.mxu0 0
  %1102 = vmatpush.bf16.msra.mxu0 0
  %1103 = vmatpush.bf16.msra.mxu0 0
  %1104 = vmatpush.bf16.msra.mxu0 %v1004
  %1105 = vmatmul.bf16.gmra.mxu0 %v1095
  %v1106 = vpop.f32.mrf.mxu0
  %v1107 = vadd.f32 0.0, %v1106
  %v1108 = vpop.f32.mrf.mxu0
  %v1109 = vadd.f32 0.0, %v1108
  %1110 = vdwg.mxu0
  %v1113 = vunpack.c.l.b16 %v969
  %v1114 = vunpack.c.l.b16 %v970
  %v1115 = vpack.c.b16 %v1114, %v1113
  %v1117 = vsel %vm780, %v1115, 0
  %1119 = vmatpush.bf16.msra.mxu0 0
  %1120 = vmatpush.bf16.msra.mxu0 0
  %1121 = vmatpush.bf16.msra.mxu0 0
  %1122 = vmatpush.bf16.msra.mxu0 0
  %1123 = vmatpush.bf16.msra.mxu0 0
  %1124 = vmatpush.bf16.msra.mxu0 0
  %1125 = vmatpush.bf16.msra.mxu0 0
  %1126 = vmatpush.bf16.msra.mxu0 %v979
  %1127 = vmatmul.bf16.gmra.mxu0 %v1117
  %v1128 = vpop.f32.mrf.mxu0
  %v1129 = vadd.f32 0.0, %v1128
  %v1130 = vpop.f32.mrf.mxu0
  %v1131 = vadd.f32 0.0, %v1130
  %1132 = vdwg.mxu0
  %v1135 = vunpack.c.l.b16 %v971
  %v1136 = vunpack.c.l.b16 %v972
  %v1137 = vpack.c.b16 %v1136, %v1135
  %v1139 = vsel %vm780, %v1137, 0
  %1141 = vmatpush.bf16.msra.mxu0 0
  %1142 = vmatpush.bf16.msra.mxu0 0
  %1143 = vmatpush.bf16.msra.mxu0 0
  %1144 = vmatpush.bf16.msra.mxu0 0
  %1145 = vmatpush.bf16.msra.mxu0 0
  %1146 = vmatpush.bf16.msra.mxu0 0
  %1147 = vmatpush.bf16.msra.mxu0 0
  %1148 = vmatpush.bf16.msra.mxu0 %v1004
  %1149 = vmatmul.bf16.gmra.mxu0 %v1139
  %v1150 = vpop.f32.mrf.mxu0
  %v1151 = vadd.f32 0.0, %v1150
  %v1152 = vpop.f32.mrf.mxu0
  %v1153 = vadd.f32 0.0, %v1152
  %1154 = vdwg.mxu0
  %v1155 = vadd.f32 %v994, %v1085
  %v1156 = vadd.f32 %v996, %v1087
  %v1157 = vadd.f32 %v1019, %v1107
  %v1158 = vadd.f32 %v1021, %v1109
  %v1159 = vadd.f32 %v1041, %v1129
  %v1160 = vadd.f32 %v1043, %v1131
  %v1161 = vadd.f32 %v1063, %v1151
  %v1162 = vadd.f32 %v1065, %v1153
  %v1163 = vpack.c.bf16 %v1156, %v1155
  %v1164 = vpack.c.bf16 %v1158, %v1157
  %v1165 = vpack.c.bf16 %v1160, %v1159
  %v1166 = vpack.c.bf16 %v1162, %v1161
  %v1167 = vpack.c.bf16 %v471, %v471
  %1168 = vrot.lane.b32.xlu0 %v551, 88
  %v1169 = vpop.permute.xlu0 %1168
  %1170 = vrot.lane.b32.xlu0 %v558, 56
  %v1171 = vpop.permute.xlu0 %1170
  %v1173 = vsel %vm561, %v1169, 0
  %v1176 = vsel %vm561, %v1171, 0
  %1178 = vmatpush.bf16.xpose.msra.mxu0 0
  %1179 = vmatpush.bf16.xpose.msra.mxu0 0
  %1180 = vmatpush.bf16.xpose.msra.mxu0 0
  %1181 = vmatpush.bf16.xpose.msra.mxu0 0
  %1182 = vmatpush.bf16.xpose.msra.mxu0 0
  %1183 = vmatpush.bf16.xpose.msra.mxu0 0
  %1184 = vmatpush.bf16.xpose.msra.mxu0 0
  %1185 = vmatpush.bf16.xpose.msra.mxu0 %v1176
  %1186 = vmatmul.bf16.gmra.mxu0 %v1173
  %v1187 = vpop.f32.mrf.mxu0
  %v1188 = vadd.f32 0.0, %v1187
  %v1189 = vpop.f32.mrf.mxu0
  %v1190 = vadd.f32 0.0, %v1189
  %1191 = vdwg.mxu0
  %1192 = vrot.lane.b32.xlu0 %v586, 88
  %v1193 = vpop.permute.xlu0 %1192
  %1194 = vrot.lane.b32.xlu0 %v593, 56
  %v1195 = vpop.permute.xlu0 %1194
  %v1197 = vsel %vm561, %v1193, 0
  %v1200 = vsel %vm561, %v1195, 0
  %1202 = vmatpush.bf16.xpose.msra.mxu0 0
  %1203 = vmatpush.bf16.xpose.msra.mxu0 0
  %1204 = vmatpush.bf16.xpose.msra.mxu0 0
  %1205 = vmatpush.bf16.xpose.msra.mxu0 0
  %1206 = vmatpush.bf16.xpose.msra.mxu0 0
  %1207 = vmatpush.bf16.xpose.msra.mxu0 0
  %1208 = vmatpush.bf16.xpose.msra.mxu0 0
  %1209 = vmatpush.bf16.xpose.msra.mxu0 %v1200
  %1210 = vmatmul.bf16.gmra.mxu0 %v1197
  %v1211 = vpop.f32.mrf.mxu0
  %v1212 = vadd.f32 0.0, %v1211
  %v1213 = vpop.f32.mrf.mxu0
  %v1214 = vadd.f32 0.0, %v1213
  %1215 = vdwg.mxu0
  %1216 = vrot.lane.b32.xlu0 %v620, 88
  %v1217 = vpop.permute.xlu0 %1216
  %1218 = vrot.lane.b32.xlu0 %v627, 56
  %v1219 = vpop.permute.xlu0 %1218
  %v1221 = vsel %vm561, %v1217, 0
  %v1224 = vsel %vm561, %v1219, 0
  %1226 = vmatpush.bf16.xpose.msra.mxu0 0
  %1227 = vmatpush.bf16.xpose.msra.mxu0 0
  %1228 = vmatpush.bf16.xpose.msra.mxu0 0
  %1229 = vmatpush.bf16.xpose.msra.mxu0 0
  %1230 = vmatpush.bf16.xpose.msra.mxu0 0
  %1231 = vmatpush.bf16.xpose.msra.mxu0 0
  %1232 = vmatpush.bf16.xpose.msra.mxu0 0
  %1233 = vmatpush.bf16.xpose.msra.mxu0 %v1224
  %1234 = vmatmul.bf16.gmra.mxu0 %v1221
  %v1235 = vpop.f32.mrf.mxu0
  %v1236 = vadd.f32 0.0, %v1235
  %v1237 = vpop.f32.mrf.mxu0
  %v1238 = vadd.f32 0.0, %v1237
  %1239 = vdwg.mxu0
  %1240 = vrot.lane.b32.xlu0 %v654, 88
  %v1241 = vpop.permute.xlu0 %1240
  %1242 = vrot.lane.b32.xlu0 %v661, 56
  %v1243 = vpop.permute.xlu0 %1242
  %v1245 = vsel %vm561, %v1241, 0
  %v1248 = vsel %vm561, %v1243, 0
  %1250 = vmatpush.bf16.xpose.msra.mxu0 0
  %1251 = vmatpush.bf16.xpose.msra.mxu0 0
  %1252 = vmatpush.bf16.xpose.msra.mxu0 0
  %1253 = vmatpush.bf16.xpose.msra.mxu0 0
  %1254 = vmatpush.bf16.xpose.msra.mxu0 0
  %1255 = vmatpush.bf16.xpose.msra.mxu0 0
  %1256 = vmatpush.bf16.xpose.msra.mxu0 0
  %1257 = vmatpush.bf16.xpose.msra.mxu0 %v1248
  %1258 = vmatmul.bf16.gmra.mxu0 %v1245
  %v1259 = vpop.f32.mrf.mxu0
  %v1260 = vadd.f32 0.0, %v1259
  %v1261 = vpop.f32.mrf.mxu0
  %v1262 = vadd.f32 0.0, %v1261
  %1263 = vdwg.mxu0
  %1264 = vrot.lane.b32.xlu0 %v688, 88
  %v1265 = vpop.permute.xlu0 %1264
  %v1267 = vsel %vm561, %v1265, 0
  %1269 = vmatpush.bf16.xpose.msra.mxu0 0
  %1270 = vmatpush.bf16.xpose.msra.mxu0 0
  %1271 = vmatpush.bf16.xpose.msra.mxu0 0
  %1272 = vmatpush.bf16.xpose.msra.mxu0 0
  %1273 = vmatpush.bf16.xpose.msra.mxu0 0
  %1274 = vmatpush.bf16.xpose.msra.mxu0 0
  %1275 = vmatpush.bf16.xpose.msra.mxu0 0
  %1276 = vmatpush.bf16.xpose.msra.mxu0 %v1176
  %1277 = vmatmul.bf16.gmra.mxu0 %v1267
  %v1278 = vpop.f32.mrf.mxu0
  %v1279 = vadd.f32 0.0, %v1278
  %v1280 = vpop.f32.mrf.mxu0
  %v1281 = vadd.f32 0.0, %v1280
  %1282 = vdwg.mxu0
  %1283 = vrot.lane.b32.xlu0 %v712, 88
  %v1284 = vpop.permute.xlu0 %1283
  %v1286 = vsel %vm561, %v1284, 0
  %1288 = vmatpush.bf16.xpose.msra.mxu0 0
  %1289 = vmatpush.bf16.xpose.msra.mxu0 0
  %1290 = vmatpush.bf16.xpose.msra.mxu0 0
  %1291 = vmatpush.bf16.xpose.msra.mxu0 0
  %1292 = vmatpush.bf16.xpose.msra.mxu0 0
  %1293 = vmatpush.bf16.xpose.msra.mxu0 0
  %1294 = vmatpush.bf16.xpose.msra.mxu0 0
  %1295 = vmatpush.bf16.xpose.msra.mxu0 %v1200
  %1296 = vmatmul.bf16.gmra.mxu0 %v1286
  %v1297 = vpop.f32.mrf.mxu0
  %v1298 = vadd.f32 0.0, %v1297
  %v1299 = vpop.f32.mrf.mxu0
  %v1300 = vadd.f32 0.0, %v1299
  %1301 = vdwg.mxu0
  %1302 = vrot.lane.b32.xlu0 %v736, 88
  %v1303 = vpop.permute.xlu0 %1302
  %v1305 = vsel %vm561, %v1303, 0
  %1307 = vmatpush.bf16.xpose.msra.mxu0 0
  %1308 = vmatpush.bf16.xpose.msra.mxu0 0
  %1309 = vmatpush.bf16.xpose.msra.mxu0 0
  %1310 = vmatpush.bf16.xpose.msra.mxu0 0
  %1311 = vmatpush.bf16.xpose.msra.mxu0 0
  %1312 = vmatpush.bf16.xpose.msra.mxu0 0
  %1313 = vmatpush.bf16.xpose.msra.mxu0 0
  %1314 = vmatpush.bf16.xpose.msra.mxu0 %v1224
  %1315 = vmatmul.bf16.gmra.mxu0 %v1305
  %v1316 = vpop.f32.mrf.mxu0
  %v1317 = vadd.f32 0.0, %v1316
  %v1318 = vpop.f32.mrf.mxu0
  %v1319 = vadd.f32 0.0, %v1318
  %1320 = vdwg.mxu0
  %1321 = vrot.lane.b32.xlu0 %v760, 88
  %v1322 = vpop.permute.xlu0 %1321
  %v1324 = vsel %vm561, %v1322, 0
  %1326 = vmatpush.bf16.xpose.msra.mxu0 0
  %1327 = vmatpush.bf16.xpose.msra.mxu0 0
  %1328 = vmatpush.bf16.xpose.msra.mxu0 0
  %1329 = vmatpush.bf16.xpose.msra.mxu0 0
  %1330 = vmatpush.bf16.xpose.msra.mxu0 0
  %1331 = vmatpush.bf16.xpose.msra.mxu0 0
  %1332 = vmatpush.bf16.xpose.msra.mxu0 0
  %1333 = vmatpush.bf16.xpose.msra.mxu0 %v1248
  %1334 = vmatmul.bf16.gmra.mxu0 %v1324
  %v1335 = vpop.f32.mrf.mxu0
  %v1336 = vadd.f32 0.0, %v1335
  %v1337 = vpop.f32.mrf.mxu0
  %v1338 = vadd.f32 0.0, %v1337
  %1339 = vdwg.mxu0
  %v1340 = vsel %vm780, %v1188, -inf
  %1341 = vmax.xlane.f32.xlu0 %v1340
  %v1342 = vpop.xlane.xlu0 %1341
  %v1343 = vsel %vm780, %v1190, -inf
  %1344 = vmax.xlane.f32.xlu0 %v1343
  %v1345 = vpop.xlane.xlu0 %1344
  %v1346 = vsel %vm780, %v1212, -inf
  %1347 = vmax.xlane.f32.xlu0 %v1346
  %v1348 = vpop.xlane.xlu0 %1347
  %v1349 = vsel %vm780, %v1214, -inf
  %1350 = vmax.xlane.f32.xlu0 %v1349
  %v1351 = vpop.xlane.xlu0 %1350
  %v1352 = vsel %vm780, %v1236, -inf
  %1353 = vmax.xlane.f32.xlu0 %v1352
  %v1354 = vpop.xlane.xlu0 %1353
  %v1355 = vsel %vm780, %v1238, -inf
  %1356 = vmax.xlane.f32.xlu0 %v1355
  %v1357 = vpop.xlane.xlu0 %1356
  %v1358 = vsel %vm780, %v1260, -inf
  %1359 = vmax.xlane.f32.xlu0 %v1358
  %v1360 = vpop.xlane.xlu0 %1359
  %v1361 = vsel %vm780, %v1262, -inf
  %1362 = vmax.xlane.f32.xlu0 %v1361
  %v1363 = vpop.xlane.xlu0 %1362
  %v1364 = vsel %vm780, %v1279, -inf
  %1365 = vmax.xlane.f32.xlu0 %v1364
  %v1366 = vpop.xlane.xlu0 %1365
  %v1367 = vsel %vm780, %v1281, -inf
  %1368 = vmax.xlane.f32.xlu0 %v1367
  %v1369 = vpop.xlane.xlu0 %1368
  %v1370 = vsel %vm780, %v1298, -inf
  %1371 = vmax.xlane.f32.xlu0 %v1370
  %v1372 = vpop.xlane.xlu0 %1371
  %v1373 = vsel %vm780, %v1300, -inf
  %1374 = vmax.xlane.f32.xlu0 %v1373
  %v1375 = vpop.xlane.xlu0 %1374
  %v1376 = vsel %vm780, %v1317, -inf
  %1377 = vmax.xlane.f32.xlu0 %v1376
  %v1378 = vpop.xlane.xlu0 %1377
  %v1379 = vsel %vm780, %v1319, -inf
  %1380 = vmax.xlane.f32.xlu0 %v1379
  %v1381 = vpop.xlane.xlu0 %1380
  %v1382 = vsel %vm780, %v1336, -inf
  %1383 = vmax.xlane.f32.xlu0 %v1382
  %v1384 = vpop.xlane.xlu0 %1383
  %v1385 = vsel %vm780, %v1338, -inf
  %1386 = vmax.xlane.f32.xlu0 %v1385
  %v1387 = vpop.xlane.xlu0 %1386
  %v1388 = vsub.f32 %v1188, %v1342
  %v1389 = vsub.f32 %v1190, %v1345
  %v1390 = vsub.f32 %v1212, %v1348
  %v1391 = vsub.f32 %v1214, %v1351
  %v1392 = vsub.f32 %v1236, %v1354
  %v1393 = vsub.f32 %v1238, %v1357
  %v1394 = vsub.f32 %v1260, %v1360
  %v1395 = vsub.f32 %v1262, %v1363
  %v1396 = vsub.f32 %v1279, %v1366
  %v1397 = vsub.f32 %v1281, %v1369
  %v1398 = vsub.f32 %v1298, %v1372
  %v1399 = vsub.f32 %v1300, %v1375
  %v1400 = vsub.f32 %v1317, %v1378
  %v1401 = vsub.f32 %v1319, %v1381
  %v1402 = vsub.f32 %v1336, %v1384
  %v1403 = vsub.f32 %v1338, %v1387
  %v1404 = vmul.f32 %v1388, 1.442695
  %v1405 = vpow.pop %v1404
  %v1406 = vmul.f32 %v1389, 1.442695
  %v1407 = vpow.pop %v1406
  %v1408 = vmul.f32 %v1390, 1.442695
  %v1409 = vpow.pop %v1408
  %v1410 = vmul.f32 %v1391, 1.442695
  %v1411 = vpow.pop %v1410
  %v1412 = vmul.f32 %v1392, 1.442695
  %v1413 = vpow.pop %v1412
  %v1414 = vmul.f32 %v1393, 1.442695
  %v1415 = vpow.pop %v1414
  %v1416 = vmul.f32 %v1394, 1.442695
  %v1417 = vpow.pop %v1416
  %v1418 = vmul.f32 %v1395, 1.442695
  %v1419 = vpow.pop %v1418
  %v1420 = vmul.f32 %v1396, 1.442695
  %v1421 = vpow.pop %v1420
  %v1422 = vmul.f32 %v1397, 1.442695
  %v1423 = vpow.pop %v1422
  %v1424 = vmul.f32 %v1398, 1.442695
  %v1425 = vpow.pop %v1424
  %v1426 = vmul.f32 %v1399, 1.442695
  %v1427 = vpow.pop %v1426
  %v1428 = vmul.f32 %v1400, 1.442695
  %v1429 = vpow.pop %v1428
  %v1430 = vmul.f32 %v1401, 1.442695
  %v1431 = vpow.pop %v1430
  %v1432 = vmul.f32 %v1402, 1.442695
  %v1433 = vpow.pop %v1432
  %v1434 = vmul.f32 %v1403, 1.442695
  %v1435 = vpow.pop %v1434
  %v1436 = vsel %vm780, %v1405, 0.0
  %1437 = vadd.xlane.f32.xlu0 %v1436
  %v1438 = vpop.xlane.xlu0 %1437
  %v1439 = vsel %vm780, %v1407, 0.0
  %1440 = vadd.xlane.f32.xlu0 %v1439
  %v1441 = vpop.xlane.xlu0 %1440
  %v1442 = vsel %vm780, %v1409, 0.0
  %1443 = vadd.xlane.f32.xlu0 %v1442
  %v1444 = vpop.xlane.xlu0 %1443
  %v1445 = vsel %vm780, %v1411, 0.0
  %1446 = vadd.xlane.f32.xlu0 %v1445
  %v1447 = vpop.xlane.xlu0 %1446
  %v1448 = vsel %vm780, %v1413, 0.0
  %1449 = vadd.xlane.f32.xlu0 %v1448
  %v1450 = vpop.xlane.xlu0 %1449
  %v1451 = vsel %vm780, %v1415, 0.0
  %1452 = vadd.xlane.f32.xlu0 %v1451
  %v1453 = vpop.xlane.xlu0 %1452
  %v1454 = vsel %vm780, %v1417, 0.0
  %1455 = vadd.xlane.f32.xlu0 %v1454
  %v1456 = vpop.xlane.xlu0 %1455
  %v1457 = vsel %vm780, %v1419, 0.0
  %1458 = vadd.xlane.f32.xlu0 %v1457
  %v1459 = vpop.xlane.xlu0 %1458
  %v1460 = vsel %vm780, %v1421, 0.0
  %1461 = vadd.xlane.f32.xlu0 %v1460
  %v1462 = vpop.xlane.xlu0 %1461
  %v1463 = vsel %vm780, %v1423, 0.0
  %1464 = vadd.xlane.f32.xlu0 %v1463
  %v1465 = vpop.xlane.xlu0 %1464
  %v1466 = vsel %vm780, %v1425, 0.0
  %1467 = vadd.xlane.f32.xlu0 %v1466
  %v1468 = vpop.xlane.xlu0 %1467
  %v1469 = vsel %vm780, %v1427, 0.0
  %1470 = vadd.xlane.f32.xlu0 %v1469
  %v1471 = vpop.xlane.xlu0 %1470
  %v1472 = vsel %vm780, %v1429, 0.0
  %1473 = vadd.xlane.f32.xlu0 %v1472
  %v1474 = vpop.xlane.xlu0 %1473
  %v1475 = vsel %vm780, %v1431, 0.0
  %1476 = vadd.xlane.f32.xlu0 %v1475
  %v1477 = vpop.xlane.xlu0 %1476
  %v1478 = vsel %vm780, %v1433, 0.0
  %1479 = vadd.xlane.f32.xlu0 %v1478
  %v1480 = vpop.xlane.xlu0 %1479
  %v1481 = vsel %vm780, %v1435, 0.0
  %1482 = vadd.xlane.f32.xlu0 %v1481
  %v1483 = vpop.xlane.xlu0 %1482
  %v1484 = vrcp.pop %v1438
  %v1485 = vrcp.pop %v1441
  %v1486 = vrcp.pop %v1444
  %v1487 = vrcp.pop %v1447
  %v1488 = vrcp.pop %v1450
  %v1489 = vrcp.pop %v1453
  %v1490 = vrcp.pop %v1456
  %v1491 = vrcp.pop %v1459
  %v1492 = vrcp.pop %v1462
  %v1493 = vrcp.pop %v1465
  %v1494 = vrcp.pop %v1468
  %v1495 = vrcp.pop %v1471
  %v1496 = vrcp.pop %v1474
  %v1497 = vrcp.pop %v1477
  %v1498 = vrcp.pop %v1480
  %v1499 = vrcp.pop %v1483
  %v1500 = vmul.f32 %v1405, %v1484
  %v1501 = vmul.f32 %v1407, %v1485
  %v1502 = vmul.f32 %v1409, %v1486
  %v1503 = vmul.f32 %v1411, %v1487
  %v1504 = vmul.f32 %v1413, %v1488
  %v1505 = vmul.f32 %v1415, %v1489
  %v1506 = vmul.f32 %v1417, %v1490
  %v1507 = vmul.f32 %v1419, %v1491
  %v1508 = vmul.f32 %v1421, %v1492
  %v1509 = vmul.f32 %v1423, %v1493
  %v1510 = vmul.f32 %v1425, %v1494
  %v1511 = vmul.f32 %v1427, %v1495
  %v1512 = vmul.f32 %v1429, %v1496
  %v1513 = vmul.f32 %v1431, %v1497
  %v1514 = vmul.f32 %v1433, %v1498
  %v1515 = vmul.f32 %v1435, %v1499
  %v1516 = vpack.c.bf16 %v1500, %v1500
  %v1517 = vpack.c.bf16 %v1501, %v1501
  %v1518 = vpack.c.bf16 %v1502, %v1502
  %v1519 = vpack.c.bf16 %v1503, %v1503
  %v1520 = vpack.c.bf16 %v1504, %v1504
  %v1521 = vpack.c.bf16 %v1505, %v1505
  %v1522 = vpack.c.bf16 %v1506, %v1506
  %v1523 = vpack.c.bf16 %v1507, %v1507
  %v1524 = vpack.c.bf16 %v1508, %v1508
  %v1525 = vpack.c.bf16 %v1509, %v1509
  %v1526 = vpack.c.bf16 %v1510, %v1510
  %v1527 = vpack.c.bf16 %v1511, %v1511
  %v1528 = vpack.c.bf16 %v1512, %v1512
  %v1529 = vpack.c.bf16 %v1513, %v1513
  %v1530 = vpack.c.bf16 %v1514, %v1514
  %v1531 = vpack.c.bf16 %v1515, %v1515
  %v1534 = vunpack.c.l.b16 %v1516
  %v1535 = vunpack.c.l.b16 %v1517
  %v1536 = vpack.c.b16 %v1535, %v1534
  %1537 = vrot.lane.b32.xlu0 %v558, 24
  %v1538 = vpop.permute.xlu0 %1537
  %v1541 = vsel %vm780, %v1536, 0
  %1543 = vmatpush.bf16.msra.mxu0 0
  %1544 = vmatpush.bf16.msra.mxu0 0
  %1545 = vmatpush.bf16.msra.mxu0 0
  %1546 = vmatpush.bf16.msra.mxu0 0
  %1547 = vmatpush.bf16.msra.mxu0 0
  %1548 = vmatpush.bf16.msra.mxu0 0
  %1549 = vmatpush.bf16.msra.mxu0 0
  %1550 = vmatpush.bf16.msra.mxu0 %v1538
  %1551 = vmatmul.bf16.gmra.mxu0 %v1541
  %v1552 = vpop.f32.mrf.mxu0
  %v1553 = vadd.f32 0.0, %v1552
  %v1554 = vpop.f32.mrf.mxu0
  %v1555 = vadd.f32 0.0, %v1554
  %1556 = vdwg.mxu0
  %v1559 = vunpack.c.l.b16 %v1518
  %v1560 = vunpack.c.l.b16 %v1519
  %v1561 = vpack.c.b16 %v1560, %v1559
  %1562 = vrot.lane.b32.xlu0 %v593, 24
  %v1563 = vpop.permute.xlu0 %1562
  %v1566 = vsel %vm780, %v1561, 0
  %1568 = vmatpush.bf16.msra.mxu0 0
  %1569 = vmatpush.bf16.msra.mxu0 0
  %1570 = vmatpush.bf16.msra.mxu0 0
  %1571 = vmatpush.bf16.msra.mxu0 0
  %1572 = vmatpush.bf16.msra.mxu0 0
  %1573 = vmatpush.bf16.msra.mxu0 0
  %1574 = vmatpush.bf16.msra.mxu0 0
  %1575 = vmatpush.bf16.msra.mxu0 %v1563
  %1576 = vmatmul.bf16.gmra.mxu0 %v1566
  %v1577 = vpop.f32.mrf.mxu0
  %v1578 = vadd.f32 0.0, %v1577
  %v1579 = vpop.f32.mrf.mxu0
  %v1580 = vadd.f32 0.0, %v1579
  %1581 = vdwg.mxu0
  %v1584 = vunpack.c.l.b16 %v1520
  %v1585 = vunpack.c.l.b16 %v1521
  %v1586 = vpack.c.b16 %v1585, %v1584
  %v1588 = vsel %vm780, %v1586, 0
  %1590 = vmatpush.bf16.msra.mxu0 0
  %1591 = vmatpush.bf16.msra.mxu0 0
  %1592 = vmatpush.bf16.msra.mxu0 0
  %1593 = vmatpush.bf16.msra.mxu0 0
  %1594 = vmatpush.bf16.msra.mxu0 0
  %1595 = vmatpush.bf16.msra.mxu0 0
  %1596 = vmatpush.bf16.msra.mxu0 0
  %1597 = vmatpush.bf16.msra.mxu0 %v1538
  %1598 = vmatmul.bf16.gmra.mxu0 %v1588
  %v1599 = vpop.f32.mrf.mxu0
  %v1600 = vadd.f32 0.0, %v1599
  %v1601 = vpop.f32.mrf.mxu0
  %v1602 = vadd.f32 0.0, %v1601
  %1603 = vdwg.mxu0
  %v1606 = vunpack.c.l.b16 %v1522
  %v1607 = vunpack.c.l.b16 %v1523
  %v1608 = vpack.c.b16 %v1607, %v1606
  %v1610 = vsel %vm780, %v1608, 0
  %1612 = vmatpush.bf16.msra.mxu0 0
  %1613 = vmatpush.bf16.msra.mxu0 0
  %1614 = vmatpush.bf16.msra.mxu0 0
  %1615 = vmatpush.bf16.msra.mxu0 0
  %1616 = vmatpush.bf16.msra.mxu0 0
  %1617 = vmatpush.bf16.msra.mxu0 0
  %1618 = vmatpush.bf16.msra.mxu0 0
  %1619 = vmatpush.bf16.msra.mxu0 %v1563
  %1620 = vmatmul.bf16.gmra.mxu0 %v1610
  %v1621 = vpop.f32.mrf.mxu0
  %v1622 = vadd.f32 0.0, %v1621
  %v1623 = vpop.f32.mrf.mxu0
  %v1624 = vadd.f32 0.0, %v1623
  %1625 = vdwg.mxu0
  %v1628 = vunpack.c.l.b16 %v1524
  %v1629 = vunpack.c.l.b16 %v1525
  %v1630 = vpack.c.b16 %v1629, %v1628
  %v1632 = vsel %vm780, %v1630, 0
  %1634 = vmatpush.bf16.msra.mxu0 0
  %1635 = vmatpush.bf16.msra.mxu0 0
  %1636 = vmatpush.bf16.msra.mxu0 0
  %1637 = vmatpush.bf16.msra.mxu0 0
  %1638 = vmatpush.bf16.msra.mxu0 0
  %1639 = vmatpush.bf16.msra.mxu0 0
  %1640 = vmatpush.bf16.msra.mxu0 0
  %1641 = vmatpush.bf16.msra.mxu0 %v1538
  %1642 = vmatmul.bf16.gmra.mxu0 %v1632
  %v1643 = vpop.f32.mrf.mxu0
  %v1644 = vadd.f32 0.0, %v1643
  %v1645 = vpop.f32.mrf.mxu0
  %v1646 = vadd.f32 0.0, %v1645
  %1647 = vdwg.mxu0
  %v1650 = vunpack.c.l.b16 %v1526
  %v1651 = vunpack.c.l.b16 %v1527
  %v1652 = vpack.c.b16 %v1651, %v1650
  %v1654 = vsel %vm780, %v1652, 0
  %1656 = vmatpush.bf16.msra.mxu0 0
  %1657 = vmatpush.bf16.msra.mxu0 0
  %1658 = vmatpush.bf16.msra.mxu0 0
  %1659 = vmatpush.bf16.msra.mxu0 0
  %1660 = vmatpush.bf16.msra.mxu0 0
  %1661 = vmatpush.bf16.msra.mxu0 0
  %1662 = vmatpush.bf16.msra.mxu0 0
  %1663 = vmatpush.bf16.msra.mxu0 %v1563
  %1664 = vmatmul.bf16.gmra.mxu0 %v1654
  %v1665 = vpop.f32.mrf.mxu0
  %v1666 = vadd.f32 0.0, %v1665
  %v1667 = vpop.f32.mrf.mxu0
  %v1668 = vadd.f32 0.0, %v1667
  %1669 = vdwg.mxu0
  %v1672 = vunpack.c.l.b16 %v1528
  %v1673 = vunpack.c.l.b16 %v1529
  %v1674 = vpack.c.b16 %v1673, %v1672
  %v1676 = vsel %vm780, %v1674, 0
  %1678 = vmatpush.bf16.msra.mxu0 0
  %1679 = vmatpush.bf16.msra.mxu0 0
  %1680 = vmatpush.bf16.msra.mxu0 0
  %1681 = vmatpush.bf16.msra.mxu0 0
  %1682 = vmatpush.bf16.msra.mxu0 0
  %1683 = vmatpush.bf16.msra.mxu0 0
  %1684 = vmatpush.bf16.msra.mxu0 0
  %1685 = vmatpush.bf16.msra.mxu0 %v1538
  %1686 = vmatmul.bf16.gmra.mxu0 %v1676
  %v1687 = vpop.f32.mrf.mxu0
  %v1688 = vadd.f32 0.0, %v1687
  %v1689 = vpop.f32.mrf.mxu0
  %v1690 = vadd.f32 0.0, %v1689
  %1691 = vdwg.mxu0
  %v1694 = vunpack.c.l.b16 %v1530
  %v1695 = vunpack.c.l.b16 %v1531
  %v1696 = vpack.c.b16 %v1695, %v1694
  %v1698 = vsel %vm780, %v1696, 0
  %1700 = vmatpush.bf16.msra.mxu0 0
  %1701 = vmatpush.bf16.msra.mxu0 0
  %1702 = vmatpush.bf16.msra.mxu0 0
  %1703 = vmatpush.bf16.msra.mxu0 0
  %1704 = vmatpush.bf16.msra.mxu0 0
  %1705 = vmatpush.bf16.msra.mxu0 0
  %1706 = vmatpush.bf16.msra.mxu0 0
  %1707 = vmatpush.bf16.msra.mxu0 %v1563
  %1708 = vmatmul.bf16.gmra.mxu0 %v1698
  %v1709 = vpop.f32.mrf.mxu0
  %v1710 = vadd.f32 0.0, %v1709
  %v1711 = vpop.f32.mrf.mxu0
  %v1712 = vadd.f32 0.0, %v1711
  %1713 = vdwg.mxu0
  %v1714 = vadd.f32 %v1553, %v1644
  %v1715 = vadd.f32 %v1555, %v1646
  %v1716 = vadd.f32 %v1578, %v1666
  %v1717 = vadd.f32 %v1580, %v1668
  %v1718 = vadd.f32 %v1600, %v1688
  %v1719 = vadd.f32 %v1602, %v1690
  %v1720 = vadd.f32 %v1622, %v1710
  %v1721 = vadd.f32 %v1624, %v1712
  %v1722 = vpack.c.bf16 %v1715, %v1714
  %v1723 = vpack.c.bf16 %v1717, %v1716
  %v1724 = vpack.c.bf16 %v1719, %v1718
  %v1725 = vpack.c.bf16 %v1721, %v1720
  %v1726 = vpack.c.bf16 %v472, %v472
  %v1728 = vsel %vm561, %v1722, 0
  %v1731 = vsel %vm561, %v1723, 0
  %v1734 = vsel %vm561, %v1724, 0
  %v1737 = vsel %vm561, %v1725, 0
  %vm1739 = vcmask 1043456
  %v1741 = vsel %vm1739, %v1726, 0
  %1743 = vmatpush.bf16.msra.mxu0 0
  %1744 = vmatpush.bf16.msra.mxu0 0
  %1745 = vmatpush.bf16.msra.mxu0 0
  %1746 = vmatpush.bf16.msra.mxu0 0
  %1747 = vmatpush.bf16.msra.mxu0 0
  %1748 = vmatpush.bf16.msra.mxu0 0
  %1749 = vmatpush.bf16.msra.mxu0 0
  %1750 = vmatpush.bf16.msra.mxu0 %v1741
  %1751 = vmatmul.bf16.gmra.mxu0 %v1728
  %v1752 = vpop.f32.mrf.mxu0
  %v1753 = vadd.f32 0.0, %v1752
  %v1754 = vpop.f32.mrf.mxu0
  %v1755 = vadd.f32 0.0, %v1754
  %1756 = vmatmul.bf16.gmra.mxu0 %v1731
  %v1757 = vpop.f32.mrf.mxu0
  %v1758 = vadd.f32 0.0, %v1757
  %v1759 = vpop.f32.mrf.mxu0
  %v1760 = vadd.f32 0.0, %v1759
  %1761 = vmatmul.bf16.gmra.mxu0 %v1734
  %v1762 = vpop.f32.mrf.mxu0
  %v1763 = vadd.f32 0.0, %v1762
  %v1764 = vpop.f32.mrf.mxu0
  %v1765 = vadd.f32 0.0, %v1764
  %1766 = vmatmul.bf16.gmra.mxu0 %v1737
  %v1767 = vpop.f32.mrf.mxu0
  %v1768 = vadd.f32 0.0, %v1767
  %v1769 = vpop.f32.mrf.mxu0
  %v1770 = vadd.f32 0.0, %v1769
  %1771 = vdwg.mxu0
  %v1773 = vsel %vm561, %v1163, 0
  %v1776 = vsel %vm561, %v1164, 0
  %v1779 = vsel %vm561, %v1165, 0
  %v1782 = vsel %vm561, %v1166, 0
  %v1785 = vsel %vm1739, %v1167, 0
  %1787 = vmatpush.bf16.msra.mxu0 0
  %1788 = vmatpush.bf16.msra.mxu0 0
  %1789 = vmatpush.bf16.msra.mxu0 0
  %1790 = vmatpush.bf16.msra.mxu0 0
  %1791 = vmatpush.bf16.msra.mxu0 0
  %1792 = vmatpush.bf16.msra.mxu0 0
  %1793 = vmatpush.bf16.msra.mxu0 0
  %1794 = vmatpush.bf16.msra.mxu0 %v1785
  %1795 = vmatmul.bf16.gmra.mxu0 %v1773
  %v1796 = vpop.f32.mrf.mxu0
  %v1797 = vadd.f32 %v1753, %v1796
  %v1798 = vpop.f32.mrf.mxu0
  %v1799 = vadd.f32 %v1755, %v1798
  %1800 = vmatmul.bf16.gmra.mxu0 %v1776
  %v1801 = vpop.f32.mrf.mxu0
  %v1802 = vadd.f32 %v1758, %v1801
  %v1803 = vpop.f32.mrf.mxu0
  %v1804 = vadd.f32 %v1760, %v1803
  %1805 = vmatmul.bf16.gmra.mxu0 %v1779
  %v1806 = vpop.f32.mrf.mxu0
  %v1807 = vadd.f32 %v1763, %v1806
  %v1808 = vpop.f32.mrf.mxu0
  %v1809 = vadd.f32 %v1765, %v1808
  %1810 = vmatmul.bf16.gmra.mxu0 %v1782
  %v1811 = vpop.f32.mrf.mxu0
  %v1812 = vadd.f32 %v1768, %v1811
  %v1813 = vpop.f32.mrf.mxu0
  %v1814 = vadd.f32 %v1770, %v1813
  %1815 = vdwg.mxu0
  %1816 = vrot.lane.b32.xlu0 %v551, 80
  %v1817 = vpop.permute.xlu0 %1816
  %1818 = vrot.lane.b32.xlu0 %v558, 48
  %v1819 = vpop.permute.xlu0 %1818
  %v1821 = vsel %vm561, %v1817, 0
  %v1824 = vsel %vm561, %v1819, 0
  %1826 = vmatpush.bf16.xpose.msra.mxu0 0
  %1827 = vmatpush.bf16.xpose.msra.mxu0 0
  %1828 = vmatpush.bf16.xpose.msra.mxu0 0
  %1829 = vmatpush.bf16.xpose.msra.mxu0 0
  %1830 = vmatpush.bf16.xpose.msra.mxu0 0
  %1831 = vmatpush.bf16.xpose.msra.mxu0 0
  %1832 = vmatpush.bf16.xpose.msra.mxu0 0
  %1833 = vmatpush.bf16.xpose.msra.mxu0 %v1824
  %1834 = vmatmul.bf16.gmra.mxu0 %v1821
  %v1835 = vpop.f32.mrf.mxu0
  %v1836 = vadd.f32 0.0, %v1835
  %v1837 = vpop.f32.mrf.mxu0
  %v1838 = vadd.f32 0.0, %v1837
  %1839 = vdwg.mxu0
  %1840 = vrot.lane.b32.xlu0 %v586, 80
  %v1841 = vpop.permute.xlu0 %1840
  %1842 = vrot.lane.b32.xlu0 %v593, 48
  %v1843 = vpop.permute.xlu0 %1842
  %v1845 = vsel %vm561, %v1841, 0
  %v1848 = vsel %vm561, %v1843, 0
  %1850 = vmatpush.bf16.xpose.msra.mxu0 0
  %1851 = vmatpush.bf16.xpose.msra.mxu0 0
  %1852 = vmatpush.bf16.xpose.msra.mxu0 0
  %1853 = vmatpush.bf16.xpose.msra.mxu0 0
  %1854 = vmatpush.bf16.xpose.msra.mxu0 0
  %1855 = vmatpush.bf16.xpose.msra.mxu0 0
  %1856 = vmatpush.bf16.xpose.msra.mxu0 0
  %1857 = vmatpush.bf16.xpose.msra.mxu0 %v1848
  %1858 = vmatmul.bf16.gmra.mxu0 %v1845
  %v1859 = vpop.f32.mrf.mxu0
  %v1860 = vadd.f32 0.0, %v1859
  %v1861 = vpop.f32.mrf.mxu0
  %v1862 = vadd.f32 0.0, %v1861
  %1863 = vdwg.mxu0
  %1864 = vrot.lane.b32.xlu0 %v620, 80
  %v1865 = vpop.permute.xlu0 %1864
  %1866 = vrot.lane.b32.xlu0 %v627, 48
  %v1867 = vpop.permute.xlu0 %1866
  %v1869 = vsel %vm561, %v1865, 0
  %v1872 = vsel %vm561, %v1867, 0
  %1874 = vmatpush.bf16.xpose.msra.mxu0 0
  %1875 = vmatpush.bf16.xpose.msra.mxu0 0
  %1876 = vmatpush.bf16.xpose.msra.mxu0 0
  %1877 = vmatpush.bf16.xpose.msra.mxu0 0
  %1878 = vmatpush.bf16.xpose.msra.mxu0 0
  %1879 = vmatpush.bf16.xpose.msra.mxu0 0
  %1880 = vmatpush.bf16.xpose.msra.mxu0 0
  %1881 = vmatpush.bf16.xpose.msra.mxu0 %v1872
  %1882 = vmatmul.bf16.gmra.mxu0 %v1869
  %v1883 = vpop.f32.mrf.mxu0
  %v1884 = vadd.f32 0.0, %v1883
  %v1885 = vpop.f32.mrf.mxu0
  %v1886 = vadd.f32 0.0, %v1885
  %1887 = vdwg.mxu0
  %1888 = vrot.lane.b32.xlu0 %v654, 80
  %v1889 = vpop.permute.xlu0 %1888
  %1890 = vrot.lane.b32.xlu0 %v661, 48
  %v1891 = vpop.permute.xlu0 %1890
  %v1893 = vsel %vm561, %v1889, 0
  %v1896 = vsel %vm561, %v1891, 0
  %1898 = vmatpush.bf16.xpose.msra.mxu0 0
  %1899 = vmatpush.bf16.xpose.msra.mxu0 0
  %1900 = vmatpush.bf16.xpose.msra.mxu0 0
  %1901 = vmatpush.bf16.xpose.msra.mxu0 0
  %1902 = vmatpush.bf16.xpose.msra.mxu0 0
  %1903 = vmatpush.bf16.xpose.msra.mxu0 0
  %1904 = vmatpush.bf16.xpose.msra.mxu0 0
  %1905 = vmatpush.bf16.xpose.msra.mxu0 %v1896
  %1906 = vmatmul.bf16.gmra.mxu0 %v1893
  %v1907 = vpop.f32.mrf.mxu0
  %v1908 = vadd.f32 0.0, %v1907
  %v1909 = vpop.f32.mrf.mxu0
  %v1910 = vadd.f32 0.0, %v1909
  %1911 = vdwg.mxu0
  %1912 = vrot.lane.b32.xlu0 %v688, 80
  %v1913 = vpop.permute.xlu0 %1912
  %v1915 = vsel %vm561, %v1913, 0
  %1917 = vmatpush.bf16.xpose.msra.mxu0 0
  %1918 = vmatpush.bf16.xpose.msra.mxu0 0
  %1919 = vmatpush.bf16.xpose.msra.mxu0 0
  %1920 = vmatpush.bf16.xpose.msra.mxu0 0
  %1921 = vmatpush.bf16.xpose.msra.mxu0 0
  %1922 = vmatpush.bf16.xpose.msra.mxu0 0
  %1923 = vmatpush.bf16.xpose.msra.mxu0 0
  %1924 = vmatpush.bf16.xpose.msra.mxu0 %v1824
  %1925 = vmatmul.bf16.gmra.mxu0 %v1915
  %v1926 = vpop.f32.mrf.mxu0
  %v1927 = vadd.f32 0.0, %v1926
  %v1928 = vpop.f32.mrf.mxu0
  %v1929 = vadd.f32 0.0, %v1928
  %1930 = vdwg.mxu0
  %1931 = vrot.lane.b32.xlu0 %v712, 80
  %v1932 = vpop.permute.xlu0 %1931
  %v1934 = vsel %vm561, %v1932, 0
  %1936 = vmatpush.bf16.xpose.msra.mxu0 0
  %1937 = vmatpush.bf16.xpose.msra.mxu0 0
  %1938 = vmatpush.bf16.xpose.msra.mxu0 0
  %1939 = vmatpush.bf16.xpose.msra.mxu0 0
  %1940 = vmatpush.bf16.xpose.msra.mxu0 0
  %1941 = vmatpush.bf16.xpose.msra.mxu0 0
  %1942 = vmatpush.bf16.xpose.msra.mxu0 0
  %1943 = vmatpush.bf16.xpose.msra.mxu0 %v1848
  %1944 = vmatmul.bf16.gmra.mxu0 %v1934
  %v1945 = vpop.f32.mrf.mxu0
  %v1946 = vadd.f32 0.0, %v1945
  %v1947 = vpop.f32.mrf.mxu0
  %v1948 = vadd.f32 0.0, %v1947
  %1949 = vdwg.mxu0
  %1950 = vrot.lane.b32.xlu0 %v736, 80
  %v1951 = vpop.permute.xlu0 %1950
  %v1953 = vsel %vm561, %v1951, 0
  %1955 = vmatpush.bf16.xpose.msra.mxu0 0
  %1956 = vmatpush.bf16.xpose.msra.mxu0 0
  %1957 = vmatpush.bf16.xpose.msra.mxu0 0
  %1958 = vmatpush.bf16.xpose.msra.mxu0 0
  %1959 = vmatpush.bf16.xpose.msra.mxu0 0
  %1960 = vmatpush.bf16.xpose.msra.mxu0 0
  %1961 = vmatpush.bf16.xpose.msra.mxu0 0
  %1962 = vmatpush.bf16.xpose.msra.mxu0 %v1872
  %1963 = vmatmul.bf16.gmra.mxu0 %v1953
  %v1964 = vpop.f32.mrf.mxu0
  %v1965 = vadd.f32 0.0, %v1964
  %v1966 = vpop.f32.mrf.mxu0
  %v1967 = vadd.f32 0.0, %v1966
  %1968 = vdwg.mxu0
  %1969 = vrot.lane.b32.xlu0 %v760, 80
  %v1970 = vpop.permute.xlu0 %1969
  %v1972 = vsel %vm561, %v1970, 0
  %1974 = vmatpush.bf16.xpose.msra.mxu0 0
  %1975 = vmatpush.bf16.xpose.msra.mxu0 0
  %1976 = vmatpush.bf16.xpose.msra.mxu0 0
  %1977 = vmatpush.bf16.xpose.msra.mxu0 0
  %1978 = vmatpush.bf16.xpose.msra.mxu0 0
  %1979 = vmatpush.bf16.xpose.msra.mxu0 0
  %1980 = vmatpush.bf16.xpose.msra.mxu0 0
  %1981 = vmatpush.bf16.xpose.msra.mxu0 %v1896
  %1982 = vmatmul.bf16.gmra.mxu0 %v1972
  %v1983 = vpop.f32.mrf.mxu0
  %v1984 = vadd.f32 0.0, %v1983
  %v1985 = vpop.f32.mrf.mxu0
  %v1986 = vadd.f32 0.0, %v1985
  %1987 = vdwg.mxu0
  %v1988 = vsel %vm780, %v1836, -inf
  %1989 = vmax.xlane.f32.xlu0 %v1988
  %v1990 = vpop.xlane.xlu0 %1989
  %v1991 = vsel %vm780, %v1838, -inf
  %1992 = vmax.xlane.f32.xlu0 %v1991
  %v1993 = vpop.xlane.xlu0 %1992
  %v1994 = vsel %vm780, %v1860, -inf
  %1995 = vmax.xlane.f32.xlu0 %v1994
  %v1996 = vpop.xlane.xlu0 %1995
  %v1997 = vsel %vm780, %v1862, -inf
  %1998 = vmax.xlane.f32.xlu0 %v1997
  %v1999 = vpop.xlane.xlu0 %1998
  %v2000 = vsel %vm780, %v1884, -inf
  %2001 = vmax.xlane.f32.xlu0 %v2000
  %v2002 = vpop.xlane.xlu0 %2001
  %v2003 = vsel %vm780, %v1886, -inf
  %2004 = vmax.xlane.f32.xlu0 %v2003
  %v2005 = vpop.xlane.xlu0 %2004
  %v2006 = vsel %vm780, %v1908, -inf
  %2007 = vmax.xlane.f32.xlu0 %v2006
  %v2008 = vpop.xlane.xlu0 %2007
  %v2009 = vsel %vm780, %v1910, -inf
  %2010 = vmax.xlane.f32.xlu0 %v2009
  %v2011 = vpop.xlane.xlu0 %2010
  %v2012 = vsel %vm780, %v1927, -inf
  %2013 = vmax.xlane.f32.xlu0 %v2012
  %v2014 = vpop.xlane.xlu0 %2013
  %v2015 = vsel %vm780, %v1929, -inf
  %2016 = vmax.xlane.f32.xlu0 %v2015
  %v2017 = vpop.xlane.xlu0 %2016
  %v2018 = vsel %vm780, %v1946, -inf
  %2019 = vmax.xlane.f32.xlu0 %v2018
  %v2020 = vpop.xlane.xlu0 %2019
  %v2021 = vsel %vm780, %v1948, -inf
  %2022 = vmax.xlane.f32.xlu0 %v2021
  %v2023 = vpop.xlane.xlu0 %2022
  %v2024 = vsel %vm780, %v1965, -inf
  %2025 = vmax.xlane.f32.xlu0 %v2024
  %v2026 = vpop.xlane.xlu0 %2025
  %v2027 = vsel %vm780, %v1967, -inf
  %2028 = vmax.xlane.f32.xlu0 %v2027
  %v2029 = vpop.xlane.xlu0 %2028
  %v2030 = vsel %vm780, %v1984, -inf
  %2031 = vmax.xlane.f32.xlu0 %v2030
  %v2032 = vpop.xlane.xlu0 %2031
  %v2033 = vsel %vm780, %v1986, -inf
  %2034 = vmax.xlane.f32.xlu0 %v2033
  %v2035 = vpop.xlane.xlu0 %2034
  %v2036 = vsub.f32 %v1836, %v1990
  %v2037 = vsub.f32 %v1838, %v1993
  %v2038 = vsub.f32 %v1860, %v1996
  %v2039 = vsub.f32 %v1862, %v1999
  %v2040 = vsub.f32 %v1884, %v2002
  %v2041 = vsub.f32 %v1886, %v2005
  %v2042 = vsub.f32 %v1908, %v2008
  %v2043 = vsub.f32 %v1910, %v2011
  %v2044 = vsub.f32 %v1927, %v2014
  %v2045 = vsub.f32 %v1929, %v2017
  %v2046 = vsub.f32 %v1946, %v2020
  %v2047 = vsub.f32 %v1948, %v2023
  %v2048 = vsub.f32 %v1965, %v2026
  %v2049 = vsub.f32 %v1967, %v2029
  %v2050 = vsub.f32 %v1984, %v2032
  %v2051 = vsub.f32 %v1986, %v2035
  %v2052 = vmul.f32 %v2036, 1.442695
  %v2053 = vpow.pop %v2052
  %v2054 = vmul.f32 %v2037, 1.442695
  %v2055 = vpow.pop %v2054
  %v2056 = vmul.f32 %v2038, 1.442695
  %v2057 = vpow.pop %v2056
  %v2058 = vmul.f32 %v2039, 1.442695
  %v2059 = vpow.pop %v2058
  %v2060 = vmul.f32 %v2040, 1.442695
  %v2061 = vpow.pop %v2060
  %v2062 = vmul.f32 %v2041, 1.442695
  %v2063 = vpow.pop %v2062
  %v2064 = vmul.f32 %v2042, 1.442695
  %v2065 = vpow.pop %v2064
  %v2066 = vmul.f32 %v2043, 1.442695
  %v2067 = vpow.pop %v2066
  %v2068 = vmul.f32 %v2044, 1.442695
  %v2069 = vpow.pop %v2068
  %v2070 = vmul.f32 %v2045, 1.442695
  %v2071 = vpow.pop %v2070
  %v2072 = vmul.f32 %v2046, 1.442695
  %v2073 = vpow.pop %v2072
  %v2074 = vmul.f32 %v2047, 1.442695
  %v2075 = vpow.pop %v2074
  %v2076 = vmul.f32 %v2048, 1.442695
  %v2077 = vpow.pop %v2076
  %v2078 = vmul.f32 %v2049, 1.442695
  %v2079 = vpow.pop %v2078
  %v2080 = vmul.f32 %v2050, 1.442695
  %v2081 = vpow.pop %v2080
  %v2082 = vmul.f32 %v2051, 1.442695
  %v2083 = vpow.pop %v2082
  %v2084 = vsel %vm780, %v2053, 0.0
  %2085 = vadd.xlane.f32.xlu0 %v2084
  %v2086 = vpop.xlane.xlu0 %2085
  %v2087 = vsel %vm780, %v2055, 0.0
  %2088 = vadd.xlane.f32.xlu0 %v2087
  %v2089 = vpop.xlane.xlu0 %2088
  %v2090 = vsel %vm780, %v2057, 0.0
  %2091 = vadd.xlane.f32.xlu0 %v2090
  %v2092 = vpop.xlane.xlu0 %2091
  %v2093 = vsel %vm780, %v2059, 0.0
  %2094 = vadd.xlane.f32.xlu0 %v2093
  %v2095 = vpop.xlane.xlu0 %2094
  %v2096 = vsel %vm780, %v2061, 0.0
  %2097 = vadd.xlane.f32.xlu0 %v2096
  %v2098 = vpop.xlane.xlu0 %2097
  %v2099 = vsel %vm780, %v2063, 0.0
  %2100 = vadd.xlane.f32.xlu0 %v2099
  %v2101 = vpop.xlane.xlu0 %2100
  %v2102 = vsel %vm780, %v2065, 0.0
  %2103 = vadd.xlane.f32.xlu0 %v2102
  %v2104 = vpop.xlane.xlu0 %2103
  %v2105 = vsel %vm780, %v2067, 0.0
  %2106 = vadd.xlane.f32.xlu0 %v2105
  %v2107 = vpop.xlane.xlu0 %2106
  %v2108 = vsel %vm780, %v2069, 0.0
  %2109 = vadd.xlane.f32.xlu0 %v2108
  %v2110 = vpop.xlane.xlu0 %2109
  %v2111 = vsel %vm780, %v2071, 0.0
  %2112 = vadd.xlane.f32.xlu0 %v2111
  %v2113 = vpop.xlane.xlu0 %2112
  %v2114 = vsel %vm780, %v2073, 0.0
  %2115 = vadd.xlane.f32.xlu0 %v2114
  %v2116 = vpop.xlane.xlu0 %2115
  %v2117 = vsel %vm780, %v2075, 0.0
  %2118 = vadd.xlane.f32.xlu0 %v2117
  %v2119 = vpop.xlane.xlu0 %2118
  %v2120 = vsel %vm780, %v2077, 0.0
  %2121 = vadd.xlane.f32.xlu0 %v2120
  %v2122 = vpop.xlane.xlu0 %2121
  %v2123 = vsel %vm780, %v2079, 0.0
  %2124 = vadd.xlane.f32.xlu0 %v2123
  %v2125 = vpop.xlane.xlu0 %2124
  %v2126 = vsel %vm780, %v2081, 0.0
  %2127 = vadd.xlane.f32.xlu0 %v2126
  %v2128 = vpop.xlane.xlu0 %2127
  %v2129 = vsel %vm780, %v2083, 0.0
  %2130 = vadd.xlane.f32.xlu0 %v2129
  %v2131 = vpop.xlane.xlu0 %2130
  %v2132 = vrcp.pop %v2086
  %v2133 = vrcp.pop %v2089
  %v2134 = vrcp.pop %v2092
  %v2135 = vrcp.pop %v2095
  %v2136 = vrcp.pop %v2098
  %v2137 = vrcp.pop %v2101
  %v2138 = vrcp.pop %v2104
  %v2139 = vrcp.pop %v2107
  %v2140 = vrcp.pop %v2110
  %v2141 = vrcp.pop %v2113
  %v2142 = vrcp.pop %v2116
  %v2143 = vrcp.pop %v2119
  %v2144 = vrcp.pop %v2122
  %v2145 = vrcp.pop %v2125
  %v2146 = vrcp.pop %v2128
  %v2147 = vrcp.pop %v2131
  %v2148 = vmul.f32 %v2053, %v2132
  %v2149 = vmul.f32 %v2055, %v2133
  %v2150 = vmul.f32 %v2057, %v2134
  %v2151 = vmul.f32 %v2059, %v2135
  %v2152 = vmul.f32 %v2061, %v2136
  %v2153 = vmul.f32 %v2063, %v2137
  %v2154 = vmul.f32 %v2065, %v2138
  %v2155 = vmul.f32 %v2067, %v2139
  %v2156 = vmul.f32 %v2069, %v2140
  %v2157 = vmul.f32 %v2071, %v2141
  %v2158 = vmul.f32 %v2073, %v2142
  %v2159 = vmul.f32 %v2075, %v2143
  %v2160 = vmul.f32 %v2077, %v2144
  %v2161 = vmul.f32 %v2079, %v2145
  %v2162 = vmul.f32 %v2081, %v2146
  %v2163 = vmul.f32 %v2083, %v2147
  %v2164 = vpack.c.bf16 %v2148, %v2148
  %v2165 = vpack.c.bf16 %v2149, %v2149
  %v2166 = vpack.c.bf16 %v2150, %v2150
  %v2167 = vpack.c.bf16 %v2151, %v2151
  %v2168 = vpack.c.bf16 %v2152, %v2152
  %v2169 = vpack.c.bf16 %v2153, %v2153
  %v2170 = vpack.c.bf16 %v2154, %v2154
  %v2171 = vpack.c.bf16 %v2155, %v2155
  %v2172 = vpack.c.bf16 %v2156, %v2156
  %v2173 = vpack.c.bf16 %v2157, %v2157
  %v2174 = vpack.c.bf16 %v2158, %v2158
  %v2175 = vpack.c.bf16 %v2159, %v2159
  %v2176 = vpack.c.bf16 %v2160, %v2160
  %v2177 = vpack.c.bf16 %v2161, %v2161
  %v2178 = vpack.c.bf16 %v2162, %v2162
  %v2179 = vpack.c.bf16 %v2163, %v2163
  %v2182 = vunpack.c.l.b16 %v2164
  %v2183 = vunpack.c.l.b16 %v2165
  %v2184 = vpack.c.b16 %v2183, %v2182
  %2185 = vrot.lane.b32.xlu0 %v558, 16
  %v2186 = vpop.permute.xlu0 %2185
  %v2189 = vsel %vm780, %v2184, 0
  %2191 = vmatpush.bf16.msra.mxu0 0
  %2192 = vmatpush.bf16.msra.mxu0 0
  %2193 = vmatpush.bf16.msra.mxu0 0
  %2194 = vmatpush.bf16.msra.mxu0 0
  %2195 = vmatpush.bf16.msra.mxu0 0
  %2196 = vmatpush.bf16.msra.mxu0 0
  %2197 = vmatpush.bf16.msra.mxu0 0
  %2198 = vmatpush.bf16.msra.mxu0 %v2186
  %2199 = vmatmul.bf16.gmra.mxu0 %v2189
  %v2200 = vpop.f32.mrf.mxu0
  %v2201 = vadd.f32 0.0, %v2200
  %v2202 = vpop.f32.mrf.mxu0
  %v2203 = vadd.f32 0.0, %v2202
  %2204 = vdwg.mxu0
  %v2207 = vunpack.c.l.b16 %v2166
  %v2208 = vunpack.c.l.b16 %v2167
  %v2209 = vpack.c.b16 %v2208, %v2207
  %2210 = vrot.lane.b32.xlu0 %v593, 16
  %v2211 = vpop.permute.xlu0 %2210
  %v2214 = vsel %vm780, %v2209, 0
  %2216 = vmatpush.bf16.msra.mxu0 0
  %2217 = vmatpush.bf16.msra.mxu0 0
  %2218 = vmatpush.bf16.msra.mxu0 0
  %2219 = vmatpush.bf16.msra.mxu0 0
  %2220 = vmatpush.bf16.msra.mxu0 0
  %2221 = vmatpush.bf16.msra.mxu0 0
  %2222 = vmatpush.bf16.msra.mxu0 0
  %2223 = vmatpush.bf16.msra.mxu0 %v2211
  %2224 = vmatmul.bf16.gmra.mxu0 %v2214
  %v2225 = vpop.f32.mrf.mxu0
  %v2226 = vadd.f32 0.0, %v2225
  %v2227 = vpop.f32.mrf.mxu0
  %v2228 = vadd.f32 0.0, %v2227
  %2229 = vdwg.mxu0
  %v2232 = vunpack.c.l.b16 %v2168
  %v2233 = vunpack.c.l.b16 %v2169
  %v2234 = vpack.c.b16 %v2233, %v2232
  %v2236 = vsel %vm780, %v2234, 0
  %2238 = vmatpush.bf16.msra.mxu0 0
  %2239 = vmatpush.bf16.msra.mxu0 0
  %2240 = vmatpush.bf16.msra.mxu0 0
  %2241 = vmatpush.bf16.msra.mxu0 0
  %2242 = vmatpush.bf16.msra.mxu0 0
  %2243 = vmatpush.bf16.msra.mxu0 0
  %2244 = vmatpush.bf16.msra.mxu0 0
  %2245 = vmatpush.bf16.msra.mxu0 %v2186
  %2246 = vmatmul.bf16.gmra.mxu0 %v2236
  %v2247 = vpop.f32.mrf.mxu0
  %v2248 = vadd.f32 0.0, %v2247
  %v2249 = vpop.f32.mrf.mxu0
  %v2250 = vadd.f32 0.0, %v2249
  %2251 = vdwg.mxu0
  %v2254 = vunpack.c.l.b16 %v2170
  %v2255 = vunpack.c.l.b16 %v2171
  %v2256 = vpack.c.b16 %v2255, %v2254
  %v2258 = vsel %vm780, %v2256, 0
  %2260 = vmatpush.bf16.msra.mxu0 0
  %2261 = vmatpush.bf16.msra.mxu0 0
  %2262 = vmatpush.bf16.msra.mxu0 0
  %2263 = vmatpush.bf16.msra.mxu0 0
  %2264 = vmatpush.bf16.msra.mxu0 0
  %2265 = vmatpush.bf16.msra.mxu0 0
  %2266 = vmatpush.bf16.msra.mxu0 0
  %2267 = vmatpush.bf16.msra.mxu0 %v2211
  %2268 = vmatmul.bf16.gmra.mxu0 %v2258
  %v2269 = vpop.f32.mrf.mxu0
  %v2270 = vadd.f32 0.0, %v2269
  %v2271 = vpop.f32.mrf.mxu0
  %v2272 = vadd.f32 0.0, %v2271
  %2273 = vdwg.mxu0
  %v2276 = vunpack.c.l.b16 %v2172
  %v2277 = vunpack.c.l.b16 %v2173
  %v2278 = vpack.c.b16 %v2277, %v2276
  %v2280 = vsel %vm780, %v2278, 0
  %2282 = vmatpush.bf16.msra.mxu0 0
  %2283 = vmatpush.bf16.msra.mxu0 0
  %2284 = vmatpush.bf16.msra.mxu0 0
  %2285 = vmatpush.bf16.msra.mxu0 0
  %2286 = vmatpush.bf16.msra.mxu0 0
  %2287 = vmatpush.bf16.msra.mxu0 0
  %2288 = vmatpush.bf16.msra.mxu0 0
  %2289 = vmatpush.bf16.msra.mxu0 %v2186
  %2290 = vmatmul.bf16.gmra.mxu0 %v2280
  %v2291 = vpop.f32.mrf.mxu0
  %v2292 = vadd.f32 0.0, %v2291
  %v2293 = vpop.f32.mrf.mxu0
  %v2294 = vadd.f32 0.0, %v2293
  %2295 = vdwg.mxu0
  %v2298 = vunpack.c.l.b16 %v2174
  %v2299 = vunpack.c.l.b16 %v2175
  %v2300 = vpack.c.b16 %v2299, %v2298
  %v2302 = vsel %vm780, %v2300, 0
  %2304 = vmatpush.bf16.msra.mxu0 0
  %2305 = vmatpush.bf16.msra.mxu0 0
  %2306 = vmatpush.bf16.msra.mxu0 0
  %2307 = vmatpush.bf16.msra.mxu0 0
  %2308 = vmatpush.bf16.msra.mxu0 0
  %2309 = vmatpush.bf16.msra.mxu0 0
  %2310 = vmatpush.bf16.msra.mxu0 0
  %2311 = vmatpush.bf16.msra.mxu0 %v2211
  %2312 = vmatmul.bf16.gmra.mxu0 %v2302
  %v2313 = vpop.f32.mrf.mxu0
  %v2314 = vadd.f32 0.0, %v2313
  %v2315 = vpop.f32.mrf.mxu0
  %v2316 = vadd.f32 0.0, %v2315
  %2317 = vdwg.mxu0
  %v2320 = vunpack.c.l.b16 %v2176
  %v2321 = vunpack.c.l.b16 %v2177
  %v2322 = vpack.c.b16 %v2321, %v2320
  %v2324 = vsel %vm780, %v2322, 0
  %2326 = vmatpush.bf16.msra.mxu0 0
  %2327 = vmatpush.bf16.msra.mxu0 0
  %2328 = vmatpush.bf16.msra.mxu0 0
  %2329 = vmatpush.bf16.msra.mxu0 0
  %2330 = vmatpush.bf16.msra.mxu0 0
  %2331 = vmatpush.bf16.msra.mxu0 0
  %2332 = vmatpush.bf16.msra.mxu0 0
  %2333 = vmatpush.bf16.msra.mxu0 %v2186
  %2334 = vmatmul.bf16.gmra.mxu0 %v2324
  %v2335 = vpop.f32.mrf.mxu0
  %v2336 = vadd.f32 0.0, %v2335
  %v2337 = vpop.f32.mrf.mxu0
  %v2338 = vadd.f32 0.0, %v2337
  %2339 = vdwg.mxu0
  %v2342 = vunpack.c.l.b16 %v2178
  %v2343 = vunpack.c.l.b16 %v2179
  %v2344 = vpack.c.b16 %v2343, %v2342
  %v2346 = vsel %vm780, %v2344, 0
  %2348 = vmatpush.bf16.msra.mxu0 0
  %2349 = vmatpush.bf16.msra.mxu0 0
  %2350 = vmatpush.bf16.msra.mxu0 0
  %2351 = vmatpush.bf16.msra.mxu0 0
  %2352 = vmatpush.bf16.msra.mxu0 0
  %2353 = vmatpush.bf16.msra.mxu0 0
  %2354 = vmatpush.bf16.msra.mxu0 0
  %2355 = vmatpush.bf16.msra.mxu0 %v2211
  %2356 = vmatmul.bf16.gmra.mxu0 %v2346
  %v2357 = vpop.f32.mrf.mxu0
  %v2358 = vadd.f32 0.0, %v2357
  %v2359 = vpop.f32.mrf.mxu0
  %v2360 = vadd.f32 0.0, %v2359
  %2361 = vdwg.mxu0
  %v2362 = vadd.f32 %v2201, %v2292
  %v2363 = vadd.f32 %v2203, %v2294
  %v2364 = vadd.f32 %v2226, %v2314
  %v2365 = vadd.f32 %v2228, %v2316
  %v2366 = vadd.f32 %v2248, %v2336
  %v2367 = vadd.f32 %v2250, %v2338
  %v2368 = vadd.f32 %v2270, %v2358
  %v2369 = vadd.f32 %v2272, %v2360
  %v2370 = vpack.c.bf16 %v2363, %v2362
  %v2371 = vpack.c.bf16 %v2365, %v2364
  %v2372 = vpack.c.bf16 %v2367, %v2366
  %v2373 = vpack.c.bf16 %v2369, %v2368
  %v2374 = vpack.c.bf16 %v473, %v473
  %v2376 = vsel %vm561, %v2370, 0
  %v2379 = vsel %vm561, %v2371, 0
  %v2382 = vsel %vm561, %v2372, 0
  %v2385 = vsel %vm561, %v2373, 0
  %v2388 = vsel %vm1739, %v2374, 0
  %2390 = vmatpush.bf16.msra.mxu0 0
  %2391 = vmatpush.bf16.msra.mxu0 0
  %2392 = vmatpush.bf16.msra.mxu0 0
  %2393 = vmatpush.bf16.msra.mxu0 0
  %2394 = vmatpush.bf16.msra.mxu0 0
  %2395 = vmatpush.bf16.msra.mxu0 0
  %2396 = vmatpush.bf16.msra.mxu0 0
  %2397 = vmatpush.bf16.msra.mxu0 %v2388
  %2398 = vmatmul.bf16.gmra.mxu0 %v2376
  %v2399 = vpop.f32.mrf.mxu0
  %v2400 = vadd.f32 0.0, %v2399
  %v2401 = vpop.f32.mrf.mxu0
  %v2402 = vadd.f32 0.0, %v2401
  %2403 = vmatmul.bf16.gmra.mxu0 %v2379
  %v2404 = vpop.f32.mrf.mxu0
  %v2405 = vadd.f32 0.0, %v2404
  %v2406 = vpop.f32.mrf.mxu0
  %v2407 = vadd.f32 0.0, %v2406
  %2408 = vmatmul.bf16.gmra.mxu0 %v2382
  %v2409 = vpop.f32.mrf.mxu0
  %v2410 = vadd.f32 0.0, %v2409
  %v2411 = vpop.f32.mrf.mxu0
  %v2412 = vadd.f32 0.0, %v2411
  %2413 = vmatmul.bf16.gmra.mxu0 %v2385
  %v2414 = vpop.f32.mrf.mxu0
  %v2415 = vadd.f32 0.0, %v2414
  %v2416 = vpop.f32.mrf.mxu0
  %v2417 = vadd.f32 0.0, %v2416
  %2418 = vdwg.mxu0
  %v2419 = vadd.f32 %v1797, %v2400
  %v2420 = vadd.f32 %v1799, %v2402
  %v2421 = vadd.f32 %v1802, %v2405
  %v2422 = vadd.f32 %v1804, %v2407
  %v2423 = vadd.f32 %v1807, %v2410
  %v2424 = vadd.f32 %v1809, %v2412
  %v2425 = vadd.f32 %v1812, %v2415
  %v2426 = vadd.f32 %v1814, %v2417
  %2427 = vrot.lane.b32.xlu0 %v551, 72
  %v2428 = vpop.permute.xlu0 %2427
  %2429 = vrot.lane.b32.xlu0 %v558, 40
  %v2430 = vpop.permute.xlu0 %2429
  %v2432 = vsel %vm561, %v2428, 0
  %v2435 = vsel %vm561, %v2430, 0
  %2437 = vmatpush.bf16.xpose.msra.mxu0 0
  %2438 = vmatpush.bf16.xpose.msra.mxu0 0
  %2439 = vmatpush.bf16.xpose.msra.mxu0 0
  %2440 = vmatpush.bf16.xpose.msra.mxu0 0
  %2441 = vmatpush.bf16.xpose.msra.mxu0 0
  %2442 = vmatpush.bf16.xpose.msra.mxu0 0
  %2443 = vmatpush.bf16.xpose.msra.mxu0 0
  %2444 = vmatpush.bf16.xpose.msra.mxu0 %v2435
  %2445 = vmatmul.bf16.gmra.mxu0 %v2432
  %v2446 = vpop.f32.mrf.mxu0
  %v2447 = vadd.f32 0.0, %v2446
  %v2448 = vpop.f32.mrf.mxu0
  %v2449 = vadd.f32 0.0, %v2448
  %2450 = vdwg.mxu0
  %2451 = vrot.lane.b32.xlu0 %v586, 72
  %v2452 = vpop.permute.xlu0 %2451
  %2453 = vrot.lane.b32.xlu0 %v593, 40
  %v2454 = vpop.permute.xlu0 %2453
  %v2456 = vsel %vm561, %v2452, 0
  %v2459 = vsel %vm561, %v2454, 0
  %2461 = vmatpush.bf16.xpose.msra.mxu0 0
  %2462 = vmatpush.bf16.xpose.msra.mxu0 0
  %2463 = vmatpush.bf16.xpose.msra.mxu0 0
  %2464 = vmatpush.bf16.xpose.msra.mxu0 0
  %2465 = vmatpush.bf16.xpose.msra.mxu0 0
  %2466 = vmatpush.bf16.xpose.msra.mxu0 0
  %2467 = vmatpush.bf16.xpose.msra.mxu0 0
  %2468 = vmatpush.bf16.xpose.msra.mxu0 %v2459
  %2469 = vmatmul.bf16.gmra.mxu0 %v2456
  %v2470 = vpop.f32.mrf.mxu0
  %v2471 = vadd.f32 0.0, %v2470
  %v2472 = vpop.f32.mrf.mxu0
  %v2473 = vadd.f32 0.0, %v2472
  %2474 = vdwg.mxu0
  %2475 = vrot.lane.b32.xlu0 %v620, 72
  %v2476 = vpop.permute.xlu0 %2475
  %2477 = vrot.lane.b32.xlu0 %v627, 40
  %v2478 = vpop.permute.xlu0 %2477
  %v2480 = vsel %vm561, %v2476, 0
  %v2483 = vsel %vm561, %v2478, 0
  %2485 = vmatpush.bf16.xpose.msra.mxu0 0
  %2486 = vmatpush.bf16.xpose.msra.mxu0 0
  %2487 = vmatpush.bf16.xpose.msra.mxu0 0
  %2488 = vmatpush.bf16.xpose.msra.mxu0 0
  %2489 = vmatpush.bf16.xpose.msra.mxu0 0
  %2490 = vmatpush.bf16.xpose.msra.mxu0 0
  %2491 = vmatpush.bf16.xpose.msra.mxu0 0
  %2492 = vmatpush.bf16.xpose.msra.mxu0 %v2483
  %2493 = vmatmul.bf16.gmra.mxu0 %v2480
  %v2494 = vpop.f32.mrf.mxu0
  %v2495 = vadd.f32 0.0, %v2494
  %v2496 = vpop.f32.mrf.mxu0
  %v2497 = vadd.f32 0.0, %v2496
  %2498 = vdwg.mxu0
  %2499 = vrot.lane.b32.xlu0 %v654, 72
  %v2500 = vpop.permute.xlu0 %2499
  %2501 = vrot.lane.b32.xlu0 %v661, 40
  %v2502 = vpop.permute.xlu0 %2501
  %v2504 = vsel %vm561, %v2500, 0
  %v2507 = vsel %vm561, %v2502, 0
  %2509 = vmatpush.bf16.xpose.msra.mxu0 0
  %2510 = vmatpush.bf16.xpose.msra.mxu0 0
  %2511 = vmatpush.bf16.xpose.msra.mxu0 0
  %2512 = vmatpush.bf16.xpose.msra.mxu0 0
  %2513 = vmatpush.bf16.xpose.msra.mxu0 0
  %2514 = vmatpush.bf16.xpose.msra.mxu0 0
  %2515 = vmatpush.bf16.xpose.msra.mxu0 0
  %2516 = vmatpush.bf16.xpose.msra.mxu0 %v2507
  %2517 = vmatmul.bf16.gmra.mxu0 %v2504
  %v2518 = vpop.f32.mrf.mxu0
  %v2519 = vadd.f32 0.0, %v2518
  %v2520 = vpop.f32.mrf.mxu0
  %v2521 = vadd.f32 0.0, %v2520
  %2522 = vdwg.mxu0
  %2523 = vrot.lane.b32.xlu0 %v688, 72
  %v2524 = vpop.permute.xlu0 %2523
  %v2526 = vsel %vm561, %v2524, 0
  %2528 = vmatpush.bf16.xpose.msra.mxu0 0
  %2529 = vmatpush.bf16.xpose.msra.mxu0 0
  %2530 = vmatpush.bf16.xpose.msra.mxu0 0
  %2531 = vmatpush.bf16.xpose.msra.mxu0 0
  %2532 = vmatpush.bf16.xpose.msra.mxu0 0
  %2533 = vmatpush.bf16.xpose.msra.mxu0 0
  %2534 = vmatpush.bf16.xpose.msra.mxu0 0
  %2535 = vmatpush.bf16.xpose.msra.mxu0 %v2435
  %2536 = vmatmul.bf16.gmra.mxu0 %v2526
  %v2537 = vpop.f32.mrf.mxu0
  %v2538 = vadd.f32 0.0, %v2537
  %v2539 = vpop.f32.mrf.mxu0
  %v2540 = vadd.f32 0.0, %v2539
  %2541 = vdwg.mxu0
  %2542 = vrot.lane.b32.xlu0 %v712, 72
  %v2543 = vpop.permute.xlu0 %2542
  %v2545 = vsel %vm561, %v2543, 0
  %2547 = vmatpush.bf16.xpose.msra.mxu0 0
  %2548 = vmatpush.bf16.xpose.msra.mxu0 0
  %2549 = vmatpush.bf16.xpose.msra.mxu0 0
  %2550 = vmatpush.bf16.xpose.msra.mxu0 0
  %2551 = vmatpush.bf16.xpose.msra.mxu0 0
  %2552 = vmatpush.bf16.xpose.msra.mxu0 0
  %2553 = vmatpush.bf16.xpose.msra.mxu0 0
  %2554 = vmatpush.bf16.xpose.msra.mxu0 %v2459
  %2555 = vmatmul.bf16.gmra.mxu0 %v2545
  %v2556 = vpop.f32.mrf.mxu0
  %v2557 = vadd.f32 0.0, %v2556
  %v2558 = vpop.f32.mrf.mxu0
  %v2559 = vadd.f32 0.0, %v2558
  %2560 = vdwg.mxu0
  %2561 = vrot.lane.b32.xlu0 %v736, 72
  %v2562 = vpop.permute.xlu0 %2561
  %v2564 = vsel %vm561, %v2562, 0
  %2566 = vmatpush.bf16.xpose.msra.mxu0 0
  %2567 = vmatpush.bf16.xpose.msra.mxu0 0
  %2568 = vmatpush.bf16.xpose.msra.mxu0 0
  %2569 = vmatpush.bf16.xpose.msra.mxu0 0
  %2570 = vmatpush.bf16.xpose.msra.mxu0 0
  %2571 = vmatpush.bf16.xpose.msra.mxu0 0
  %2572 = vmatpush.bf16.xpose.msra.mxu0 0
  %2573 = vmatpush.bf16.xpose.msra.mxu0 %v2483
  %2574 = vmatmul.bf16.gmra.mxu0 %v2564
  %v2575 = vpop.f32.mrf.mxu0
  %v2576 = vadd.f32 0.0, %v2575
  %v2577 = vpop.f32.mrf.mxu0
  %v2578 = vadd.f32 0.0, %v2577
  %2579 = vdwg.mxu0
  %2580 = vrot.lane.b32.xlu0 %v760, 72
  %v2581 = vpop.permute.xlu0 %2580
  %v2583 = vsel %vm561, %v2581, 0
  %2585 = vmatpush.bf16.xpose.msra.mxu0 0
  %2586 = vmatpush.bf16.xpose.msra.mxu0 0
  %2587 = vmatpush.bf16.xpose.msra.mxu0 0
  %2588 = vmatpush.bf16.xpose.msra.mxu0 0
  %2589 = vmatpush.bf16.xpose.msra.mxu0 0
  %2590 = vmatpush.bf16.xpose.msra.mxu0 0
  %2591 = vmatpush.bf16.xpose.msra.mxu0 0
  %2592 = vmatpush.bf16.xpose.msra.mxu0 %v2507
  %2593 = vmatmul.bf16.gmra.mxu0 %v2583
  %v2594 = vpop.f32.mrf.mxu0
  %v2595 = vadd.f32 0.0, %v2594
  %v2596 = vpop.f32.mrf.mxu0
  %v2597 = vadd.f32 0.0, %v2596
  %2598 = vdwg.mxu0
  %v2599 = vsel %vm780, %v2447, -inf
  %2600 = vmax.xlane.f32.xlu0 %v2599
  %v2601 = vpop.xlane.xlu0 %2600
  %v2602 = vsel %vm780, %v2449, -inf
  %2603 = vmax.xlane.f32.xlu0 %v2602
  %v2604 = vpop.xlane.xlu0 %2603
  %v2605 = vsel %vm780, %v2471, -inf
  %2606 = vmax.xlane.f32.xlu0 %v2605
  %v2607 = vpop.xlane.xlu0 %2606
  %v2608 = vsel %vm780, %v2473, -inf
  %2609 = vmax.xlane.f32.xlu0 %v2608
  %v2610 = vpop.xlane.xlu0 %2609
  %v2611 = vsel %vm780, %v2495, -inf
  %2612 = vmax.xlane.f32.xlu0 %v2611
  %v2613 = vpop.xlane.xlu0 %2612
  %v2614 = vsel %vm780, %v2497, -inf
  %2615 = vmax.xlane.f32.xlu0 %v2614
  %v2616 = vpop.xlane.xlu0 %2615
  %v2617 = vsel %vm780, %v2519, -inf
  %2618 = vmax.xlane.f32.xlu0 %v2617
  %v2619 = vpop.xlane.xlu0 %2618
  %v2620 = vsel %vm780, %v2521, -inf
  %2621 = vmax.xlane.f32.xlu0 %v2620
  %v2622 = vpop.xlane.xlu0 %2621
  %v2623 = vsel %vm780, %v2538, -inf
  %2624 = vmax.xlane.f32.xlu0 %v2623
  %v2625 = vpop.xlane.xlu0 %2624
  %v2626 = vsel %vm780, %v2540, -inf
  %2627 = vmax.xlane.f32.xlu0 %v2626
  %v2628 = vpop.xlane.xlu0 %2627
  %v2629 = vsel %vm780, %v2557, -inf
  %2630 = vmax.xlane.f32.xlu0 %v2629
  %v2631 = vpop.xlane.xlu0 %2630
  %v2632 = vsel %vm780, %v2559, -inf
  %2633 = vmax.xlane.f32.xlu0 %v2632
  %v2634 = vpop.xlane.xlu0 %2633
  %v2635 = vsel %vm780, %v2576, -inf
  %2636 = vmax.xlane.f32.xlu0 %v2635
  %v2637 = vpop.xlane.xlu0 %2636
  %v2638 = vsel %vm780, %v2578, -inf
  %2639 = vmax.xlane.f32.xlu0 %v2638
  %v2640 = vpop.xlane.xlu0 %2639
  %v2641 = vsel %vm780, %v2595, -inf
  %2642 = vmax.xlane.f32.xlu0 %v2641
  %v2643 = vpop.xlane.xlu0 %2642
  %v2644 = vsel %vm780, %v2597, -inf
  %2645 = vmax.xlane.f32.xlu0 %v2644
  %v2646 = vpop.xlane.xlu0 %2645
  %v2647 = vsub.f32 %v2447, %v2601
  %v2648 = vsub.f32 %v2449, %v2604
  %v2649 = vsub.f32 %v2471, %v2607
  %v2650 = vsub.f32 %v2473, %v2610
  %v2651 = vsub.f32 %v2495, %v2613
  %v2652 = vsub.f32 %v2497, %v2616
  %v2653 = vsub.f32 %v2519, %v2619
  %v2654 = vsub.f32 %v2521, %v2622
  %v2655 = vsub.f32 %v2538, %v2625
  %v2656 = vsub.f32 %v2540, %v2628
  %v2657 = vsub.f32 %v2557, %v2631
  %v2658 = vsub.f32 %v2559, %v2634
  %v2659 = vsub.f32 %v2576, %v2637
  %v2660 = vsub.f32 %v2578, %v2640
  %v2661 = vsub.f32 %v2595, %v2643
  %v2662 = vsub.f32 %v2597, %v2646
  %v2663 = vmul.f32 %v2647, 1.442695
  %v2664 = vpow.pop %v2663
  %v2665 = vmul.f32 %v2648, 1.442695
  %v2666 = vpow.pop %v2665
  %v2667 = vmul.f32 %v2649, 1.442695
  %v2668 = vpow.pop %v2667
  %v2669 = vmul.f32 %v2650, 1.442695
  %v2670 = vpow.pop %v2669
  %v2671 = vmul.f32 %v2651, 1.442695
  %v2672 = vpow.pop %v2671
  %v2673 = vmul.f32 %v2652, 1.442695
  %v2674 = vpow.pop %v2673
  %v2675 = vmul.f32 %v2653, 1.442695
  %v2676 = vpow.pop %v2675
  %v2677 = vmul.f32 %v2654, 1.442695
  %v2678 = vpow.pop %v2677
  %v2679 = vmul.f32 %v2655, 1.442695
  %v2680 = vpow.pop %v2679
  %v2681 = vmul.f32 %v2656, 1.442695
  %v2682 = vpow.pop %v2681
  %v2683 = vmul.f32 %v2657, 1.442695
  %v2684 = vpow.pop %v2683
  %v2685 = vmul.f32 %v2658, 1.442695
  %v2686 = vpow.pop %v2685
  %v2687 = vmul.f32 %v2659, 1.442695
  %v2688 = vpow.pop %v2687
  %v2689 = vmul.f32 %v2660, 1.442695
  %v2690 = vpow.pop %v2689
  %v2691 = vmul.f32 %v2661, 1.442695
  %v2692 = vpow.pop %v2691
  %v2693 = vmul.f32 %v2662, 1.442695
  %v2694 = vpow.pop %v2693
  %v2695 = vsel %vm780, %v2664, 0.0
  %2696 = vadd.xlane.f32.xlu0 %v2695
  %v2697 = vpop.xlane.xlu0 %2696
  %v2698 = vsel %vm780, %v2666, 0.0
  %2699 = vadd.xlane.f32.xlu0 %v2698
  %v2700 = vpop.xlane.xlu0 %2699
  %v2701 = vsel %vm780, %v2668, 0.0
  %2702 = vadd.xlane.f32.xlu0 %v2701
  %v2703 = vpop.xlane.xlu0 %2702
  %v2704 = vsel %vm780, %v2670, 0.0
  %2705 = vadd.xlane.f32.xlu0 %v2704
  %v2706 = vpop.xlane.xlu0 %2705
  %v2707 = vsel %vm780, %v2672, 0.0
  %2708 = vadd.xlane.f32.xlu0 %v2707
  %v2709 = vpop.xlane.xlu0 %2708
  %v2710 = vsel %vm780, %v2674, 0.0
  %2711 = vadd.xlane.f32.xlu0 %v2710
  %v2712 = vpop.xlane.xlu0 %2711
  %v2713 = vsel %vm780, %v2676, 0.0
  %2714 = vadd.xlane.f32.xlu0 %v2713
  %v2715 = vpop.xlane.xlu0 %2714
  %v2716 = vsel %vm780, %v2678, 0.0
  %2717 = vadd.xlane.f32.xlu0 %v2716
  %v2718 = vpop.xlane.xlu0 %2717
  %v2719 = vsel %vm780, %v2680, 0.0
  %2720 = vadd.xlane.f32.xlu0 %v2719
  %v2721 = vpop.xlane.xlu0 %2720
  %v2722 = vsel %vm780, %v2682, 0.0
  %2723 = vadd.xlane.f32.xlu0 %v2722
  %v2724 = vpop.xlane.xlu0 %2723
  %v2725 = vsel %vm780, %v2684, 0.0
  %2726 = vadd.xlane.f32.xlu0 %v2725
  %v2727 = vpop.xlane.xlu0 %2726
  %v2728 = vsel %vm780, %v2686, 0.0
  %2729 = vadd.xlane.f32.xlu0 %v2728
  %v2730 = vpop.xlane.xlu0 %2729
  %v2731 = vsel %vm780, %v2688, 0.0
  %2732 = vadd.xlane.f32.xlu0 %v2731
  %v2733 = vpop.xlane.xlu0 %2732
  %v2734 = vsel %vm780, %v2690, 0.0
  %2735 = vadd.xlane.f32.xlu0 %v2734
  %v2736 = vpop.xlane.xlu0 %2735
  %v2737 = vsel %vm780, %v2692, 0.0
  %2738 = vadd.xlane.f32.xlu0 %v2737
  %v2739 = vpop.xlane.xlu0 %2738
  %v2740 = vsel %vm780, %v2694, 0.0
  %2741 = vadd.xlane.f32.xlu0 %v2740
  %v2742 = vpop.xlane.xlu0 %2741
  %v2743 = vrcp.pop %v2697
  %v2744 = vrcp.pop %v2700
  %v2745 = vrcp.pop %v2703
  %v2746 = vrcp.pop %v2706
  %v2747 = vrcp.pop %v2709
  %v2748 = vrcp.pop %v2712
  %v2749 = vrcp.pop %v2715
  %v2750 = vrcp.pop %v2718
  %v2751 = vrcp.pop %v2721
  %v2752 = vrcp.pop %v2724
  %v2753 = vrcp.pop %v2727
  %v2754 = vrcp.pop %v2730
  %v2755 = vrcp.pop %v2733
  %v2756 = vrcp.pop %v2736
  %v2757 = vrcp.pop %v2739
  %v2758 = vrcp.pop %v2742
  %v2759 = vmul.f32 %v2664, %v2743
  %v2760 = vmul.f32 %v2666, %v2744
  %v2761 = vmul.f32 %v2668, %v2745
  %v2762 = vmul.f32 %v2670, %v2746
  %v2763 = vmul.f32 %v2672, %v2747
  %v2764 = vmul.f32 %v2674, %v2748
  %v2765 = vmul.f32 %v2676, %v2749
  %v2766 = vmul.f32 %v2678, %v2750
  %v2767 = vmul.f32 %v2680, %v2751
  %v2768 = vmul.f32 %v2682, %v2752
  %v2769 = vmul.f32 %v2684, %v2753
  %v2770 = vmul.f32 %v2686, %v2754
  %v2771 = vmul.f32 %v2688, %v2755
  %v2772 = vmul.f32 %v2690, %v2756
  %v2773 = vmul.f32 %v2692, %v2757
  %v2774 = vmul.f32 %v2694, %v2758
  %v2775 = vpack.c.bf16 %v2759, %v2759
  %v2776 = vpack.c.bf16 %v2760, %v2760
  %v2777 = vpack.c.bf16 %v2761, %v2761
  %v2778 = vpack.c.bf16 %v2762, %v2762
  %v2779 = vpack.c.bf16 %v2763, %v2763
  %v2780 = vpack.c.bf16 %v2764, %v2764
  %v2781 = vpack.c.bf16 %v2765, %v2765
  %v2782 = vpack.c.bf16 %v2766, %v2766
  %v2783 = vpack.c.bf16 %v2767, %v2767
  %v2784 = vpack.c.bf16 %v2768, %v2768
  %v2785 = vpack.c.bf16 %v2769, %v2769
  %v2786 = vpack.c.bf16 %v2770, %v2770
  %v2787 = vpack.c.bf16 %v2771, %v2771
  %v2788 = vpack.c.bf16 %v2772, %v2772
  %v2789 = vpack.c.bf16 %v2773, %v2773
  %v2790 = vpack.c.bf16 %v2774, %v2774
  %v2793 = vunpack.c.l.b16 %v2775
  %v2794 = vunpack.c.l.b16 %v2776
  %v2795 = vpack.c.b16 %v2794, %v2793
  %2796 = vrot.lane.b32.xlu0 %v558, 8
  %v2797 = vpop.permute.xlu0 %2796
  %v2800 = vsel %vm780, %v2795, 0
  %2802 = vmatpush.bf16.msra.mxu0 0
  %2803 = vmatpush.bf16.msra.mxu0 0
  %2804 = vmatpush.bf16.msra.mxu0 0
  %2805 = vmatpush.bf16.msra.mxu0 0
  %2806 = vmatpush.bf16.msra.mxu0 0
  %2807 = vmatpush.bf16.msra.mxu0 0
  %2808 = vmatpush.bf16.msra.mxu0 0
  %2809 = vmatpush.bf16.msra.mxu0 %v2797
  %2810 = vmatmul.bf16.gmra.mxu0 %v2800
  %v2811 = vpop.f32.mrf.mxu0
  %v2812 = vadd.f32 0.0, %v2811
  %v2813 = vpop.f32.mrf.mxu0
  %v2814 = vadd.f32 0.0, %v2813
  %2815 = vdwg.mxu0
  %v2818 = vunpack.c.l.b16 %v2777
  %v2819 = vunpack.c.l.b16 %v2778
  %v2820 = vpack.c.b16 %v2819, %v2818
  %2821 = vrot.lane.b32.xlu0 %v593, 8
  %v2822 = vpop.permute.xlu0 %2821
  %v2825 = vsel %vm780, %v2820, 0
  %2827 = vmatpush.bf16.msra.mxu0 0
  %2828 = vmatpush.bf16.msra.mxu0 0
  %2829 = vmatpush.bf16.msra.mxu0 0
  %2830 = vmatpush.bf16.msra.mxu0 0
  %2831 = vmatpush.bf16.msra.mxu0 0
  %2832 = vmatpush.bf16.msra.mxu0 0
  %2833 = vmatpush.bf16.msra.mxu0 0
  %2834 = vmatpush.bf16.msra.mxu0 %v2822
  %2835 = vmatmul.bf16.gmra.mxu0 %v2825
  %v2836 = vpop.f32.mrf.mxu0
  %v2837 = vadd.f32 0.0, %v2836
  %v2838 = vpop.f32.mrf.mxu0
  %v2839 = vadd.f32 0.0, %v2838
  %2840 = vdwg.mxu0
  %v2843 = vunpack.c.l.b16 %v2779
  %v2844 = vunpack.c.l.b16 %v2780
  %v2845 = vpack.c.b16 %v2844, %v2843
  %v2847 = vsel %vm780, %v2845, 0
  %2849 = vmatpush.bf16.msra.mxu0 0
  %2850 = vmatpush.bf16.msra.mxu0 0
  %2851 = vmatpush.bf16.msra.mxu0 0
  %2852 = vmatpush.bf16.msra.mxu0 0
  %2853 = vmatpush.bf16.msra.mxu0 0
  %2854 = vmatpush.bf16.msra.mxu0 0
  %2855 = vmatpush.bf16.msra.mxu0 0
  %2856 = vmatpush.bf16.msra.mxu0 %v2797
  %2857 = vmatmul.bf16.gmra.mxu0 %v2847
  %v2858 = vpop.f32.mrf.mxu0
  %v2859 = vadd.f32 0.0, %v2858
  %v2860 = vpop.f32.mrf.mxu0
  %v2861 = vadd.f32 0.0, %v2860
  %2862 = vdwg.mxu0
  %v2865 = vunpack.c.l.b16 %v2781
  %v2866 = vunpack.c.l.b16 %v2782
  %v2867 = vpack.c.b16 %v2866, %v2865
  %v2869 = vsel %vm780, %v2867, 0
  %2871 = vmatpush.bf16.msra.mxu0 0
  %2872 = vmatpush.bf16.msra.mxu0 0
  %2873 = vmatpush.bf16.msra.mxu0 0
  %2874 = vmatpush.bf16.msra.mxu0 0
  %2875 = vmatpush.bf16.msra.mxu0 0
  %2876 = vmatpush.bf16.msra.mxu0 0
  %2877 = vmatpush.bf16.msra.mxu0 0
  %2878 = vmatpush.bf16.msra.mxu0 %v2822
  %2879 = vmatmul.bf16.gmra.mxu0 %v2869
  %v2880 = vpop.f32.mrf.mxu0
  %v2881 = vadd.f32 0.0, %v2880
  %v2882 = vpop.f32.mrf.mxu0
  %v2883 = vadd.f32 0.0, %v2882
  %2884 = vdwg.mxu0
  %v2887 = vunpack.c.l.b16 %v2783
  %v2888 = vunpack.c.l.b16 %v2784
  %v2889 = vpack.c.b16 %v2888, %v2887
  %v2891 = vsel %vm780, %v2889, 0
  %2893 = vmatpush.bf16.msra.mxu0 0
  %2894 = vmatpush.bf16.msra.mxu0 0
  %2895 = vmatpush.bf16.msra.mxu0 0
  %2896 = vmatpush.bf16.msra.mxu0 0
  %2897 = vmatpush.bf16.msra.mxu0 0
  %2898 = vmatpush.bf16.msra.mxu0 0
  %2899 = vmatpush.bf16.msra.mxu0 0
  %2900 = vmatpush.bf16.msra.mxu0 %v2797
  %2901 = vmatmul.bf16.gmra.mxu0 %v2891
  %v2902 = vpop.f32.mrf.mxu0
  %v2903 = vadd.f32 0.0, %v2902
  %v2904 = vpop.f32.mrf.mxu0
  %v2905 = vadd.f32 0.0, %v2904
  %2906 = vdwg.mxu0
  %v2909 = vunpack.c.l.b16 %v2785
  %v2910 = vunpack.c.l.b16 %v2786
  %v2911 = vpack.c.b16 %v2910, %v2909
  %v2913 = vsel %vm780, %v2911, 0
  %2915 = vmatpush.bf16.msra.mxu0 0
  %2916 = vmatpush.bf16.msra.mxu0 0
  %2917 = vmatpush.bf16.msra.mxu0 0
  %2918 = vmatpush.bf16.msra.mxu0 0
  %2919 = vmatpush.bf16.msra.mxu0 0
  %2920 = vmatpush.bf16.msra.mxu0 0
  %2921 = vmatpush.bf16.msra.mxu0 0
  %2922 = vmatpush.bf16.msra.mxu0 %v2822
  %2923 = vmatmul.bf16.gmra.mxu0 %v2913
  %v2924 = vpop.f32.mrf.mxu0
  %v2925 = vadd.f32 0.0, %v2924
  %v2926 = vpop.f32.mrf.mxu0
  %v2927 = vadd.f32 0.0, %v2926
  %2928 = vdwg.mxu0
  %v2931 = vunpack.c.l.b16 %v2787
  %v2932 = vunpack.c.l.b16 %v2788
  %v2933 = vpack.c.b16 %v2932, %v2931
  %v2935 = vsel %vm780, %v2933, 0
  %2937 = vmatpush.bf16.msra.mxu0 0
  %2938 = vmatpush.bf16.msra.mxu0 0
  %2939 = vmatpush.bf16.msra.mxu0 0
  %2940 = vmatpush.bf16.msra.mxu0 0
  %2941 = vmatpush.bf16.msra.mxu0 0
  %2942 = vmatpush.bf16.msra.mxu0 0
  %2943 = vmatpush.bf16.msra.mxu0 0
  %2944 = vmatpush.bf16.msra.mxu0 %v2797
  %2945 = vmatmul.bf16.gmra.mxu0 %v2935
  %v2946 = vpop.f32.mrf.mxu0
  %v2947 = vadd.f32 0.0, %v2946
  %v2948 = vpop.f32.mrf.mxu0
  %v2949 = vadd.f32 0.0, %v2948
  %2950 = vdwg.mxu0
  %v2953 = vunpack.c.l.b16 %v2789
  %v2954 = vunpack.c.l.b16 %v2790
  %v2955 = vpack.c.b16 %v2954, %v2953
  %v2957 = vsel %vm780, %v2955, 0
  %2959 = vmatpush.bf16.msra.mxu0 0
  %2960 = vmatpush.bf16.msra.mxu0 0
  %2961 = vmatpush.bf16.msra.mxu0 0
  %2962 = vmatpush.bf16.msra.mxu0 0
  %2963 = vmatpush.bf16.msra.mxu0 0
  %2964 = vmatpush.bf16.msra.mxu0 0
  %2965 = vmatpush.bf16.msra.mxu0 0
  %2966 = vmatpush.bf16.msra.mxu0 %v2822
  %2967 = vmatmul.bf16.gmra.mxu0 %v2957
  %v2968 = vpop.f32.mrf.mxu0
  %v2969 = vadd.f32 0.0, %v2968
  %v2970 = vpop.f32.mrf.mxu0
  %v2971 = vadd.f32 0.0, %v2970
  %2972 = vdwg.mxu0
  %v2973 = vadd.f32 %v2812, %v2903
  %v2974 = vadd.f32 %v2814, %v2905
  %v2975 = vadd.f32 %v2837, %v2925
  %v2976 = vadd.f32 %v2839, %v2927
  %v2977 = vadd.f32 %v2859, %v2947
  %v2978 = vadd.f32 %v2861, %v2949
  %v2979 = vadd.f32 %v2881, %v2969
  %v2980 = vadd.f32 %v2883, %v2971
  %v2981 = vpack.c.bf16 %v2974, %v2973
  %v2982 = vpack.c.bf16 %v2976, %v2975
  %v2983 = vpack.c.bf16 %v2978, %v2977
  %v2984 = vpack.c.bf16 %v2980, %v2979
  %v2985 = vpack.c.bf16 %v474, %v474
  %v2987 = vsel %vm561, %v2981, 0
  %v2990 = vsel %vm561, %v2982, 0
  %v2993 = vsel %vm561, %v2983, 0
  %v2996 = vsel %vm561, %v2984, 0
  %v2999 = vsel %vm1739, %v2985, 0
  %3001 = vmatpush.bf16.msra.mxu0 0
  %3002 = vmatpush.bf16.msra.mxu0 0
  %3003 = vmatpush.bf16.msra.mxu0 0
  %3004 = vmatpush.bf16.msra.mxu0 0
  %3005 = vmatpush.bf16.msra.mxu0 0
  %3006 = vmatpush.bf16.msra.mxu0 0
  %3007 = vmatpush.bf16.msra.mxu0 0
  %3008 = vmatpush.bf16.msra.mxu0 %v2999
  %3009 = vmatmul.bf16.gmra.mxu0 %v2987
  %v3010 = vpop.f32.mrf.mxu0
  %v3011 = vadd.f32 0.0, %v3010
  %v3012 = vpop.f32.mrf.mxu0
  %v3013 = vadd.f32 0.0, %v3012
  %3014 = vmatmul.bf16.gmra.mxu0 %v2990
  %v3015 = vpop.f32.mrf.mxu0
  %v3016 = vadd.f32 0.0, %v3015
  %v3017 = vpop.f32.mrf.mxu0
  %v3018 = vadd.f32 0.0, %v3017
  %3019 = vmatmul.bf16.gmra.mxu0 %v2993
  %v3020 = vpop.f32.mrf.mxu0
  %v3021 = vadd.f32 0.0, %v3020
  %v3022 = vpop.f32.mrf.mxu0
  %v3023 = vadd.f32 0.0, %v3022
  %3024 = vmatmul.bf16.gmra.mxu0 %v2996
  %v3025 = vpop.f32.mrf.mxu0
  %v3026 = vadd.f32 0.0, %v3025
  %v3027 = vpop.f32.mrf.mxu0
  %v3028 = vadd.f32 0.0, %v3027
  %3029 = vdwg.mxu0
  %v3030 = vadd.f32 %v2419, %v3011
  %v3031 = vadd.f32 %v2420, %v3013
  %v3032 = vadd.f32 %v2421, %v3016
  %v3033 = vadd.f32 %v2422, %v3018
  %v3034 = vadd.f32 %v2423, %v3021
  %v3035 = vadd.f32 %v2424, %v3023
  %v3036 = vadd.f32 %v2425, %v3026
  %v3037 = vadd.f32 %v2426, %v3028
  %v3038 = vld [vmem:[%s8] sm:$0x1]
  %v3040 = vperm.slane %v3038, 0
  %v3042 = vadd.f32 %v3030, %v3040
  %v3043 = vadd.f32 %v3031, %v3040
  %v3044 = vadd.f32 %v3032, %v3040
  %v3045 = vadd.f32 %v3033, %v3040
  %v3046 = vadd.f32 %v3034, %v3040
  %v3047 = vadd.f32 %v3035, %v3040
  %v3048 = vadd.f32 %v3036, %v3040
  %v3049 = vadd.f32 %v3037, %v3040
  %3050 = vst.msk [vmem:[%s12] sm:$0xff] %vm204, %v3042
  %3051 = vst.msk [vmem:[%s12 + $0x8] sm:$0xff] %vm204, %v3043
  %3052 = vst.msk [vmem:[%s12 + $0x10] sm:$0xff] %vm204, %v3044
  %3053 = vst.msk [vmem:[%s12 + $0x18] sm:$0xff] %vm204, %v3045
  %3054 = vst.msk [vmem:[%s12 + $0x20] sm:$0xff] %vm204, %v3046
  %3055 = vst.msk [vmem:[%s12 + $0x28] sm:$0xff] %vm204, %v3047
  %3056 = vst.msk [vmem:[%s12 + $0x30] sm:$0xff] %vm204, %v3048
  %3057 = vst.msk [vmem:[%s12 + $0x38] sm:$0xff] %vm204, %v3049
  %v3058 = vld [vmem:[%s9] sm:$0xff]
  %v3059 = vld [vmem:[%s9 + $0x8] sm:$0xff]
  %v3060 = vld [vmem:[%s9 + $0x10] sm:$0xff]
  %v3061 = vld [vmem:[%s9 + $0x18] sm:$0xff]
  %v3062 = vpack.c.bf16 %v3043, %v3042
  %v3063 = vpack.c.bf16 %v3045, %v3044
  %v3064 = vpack.c.bf16 %v3047, %v3046
  %v3065 = vpack.c.bf16 %v3049, %v3048
  %v3066 = vpack.c.bf16 %v3059, %v3058
  %v3067 = vpack.c.bf16 %v3061, %v3060
  %v3068 = vld [vmem:[%s10] sm:$0x1]
  %v3070 = vperm.slane %v3068, 0
  %v3073 = vsel %vm204, %v3062, 0
  %v3076 = vsel %vm204, %v3063, 0
  %v3079 = vsel %vm204, %v3064, 0
  %v3082 = vsel %vm204, %v3065, 0
  %3084 = vmatpush.bf16.msra.mxu0 0
  %3085 = vmatpush.bf16.msra.mxu0 0
  %3086 = vmatpush.bf16.msra.mxu0 0
  %3087 = vmatpush.bf16.msra.mxu0 0
  %3088 = vmatpush.bf16.msra.mxu0 0
  %3089 = vmatpush.bf16.msra.mxu0 0
  %3090 = vmatpush.bf16.msra.mxu0 %v3067
  %3091 = vmatpush.bf16.msra.mxu0 %v3066
  %3092 = vmatmul.bf16.gmra.mxu0 %v3073
  %v3093 = vpop.f32.mrf.mxu0
  %v3094 = vadd.f32 %v3070, %v3093
  %v3095 = vpop.f32.mrf.mxu0
  %v3096 = vadd.f32 %v3070, %v3095
  %3097 = vmatmul.bf16.gmra.mxu0 %v3076
  %v3098 = vpop.f32.mrf.mxu0
  %v3099 = vadd.f32 %v3070, %v3098
  %v3100 = vpop.f32.mrf.mxu0
  %v3101 = vadd.f32 %v3070, %v3100
  %3102 = vmatmul.bf16.gmra.mxu0 %v3079
  %v3103 = vpop.f32.mrf.mxu0
  %v3104 = vadd.f32 %v3070, %v3103
  %v3105 = vpop.f32.mrf.mxu0
  %v3106 = vadd.f32 %v3070, %v3105
  %3107 = vmatmul.bf16.gmra.mxu0 %v3082
  %v3108 = vpop.f32.mrf.mxu0
  %v3109 = vadd.f32 %v3070, %v3108
  %v3110 = vpop.f32.mrf.mxu0
  %v3111 = vadd.f32 %v3070, %v3110
  %3112 = vdwg.mxu0
  %3113 = vst.msk [vmem:[%s13] sm:$0xff] %vm94, %v3094
  %3114 = vst.msk [vmem:[%s13 + $0x8] sm:$0xff] %vm94, %v3096
  %3115 = vst.msk [vmem:[%s13 + $0x10] sm:$0xff] %vm94, %v3099
  %3116 = vst.msk [vmem:[%s13 + $0x18] sm:$0xff] %vm94, %v3101
  %3117 = vst.msk [vmem:[%s13 + $0x20] sm:$0xff] %vm94, %v3104
  %3118 = vst.msk [vmem:[%s13 + $0x28] sm:$0xff] %vm94, %v3106
  %3119 = vst.msk [vmem:[%s13 + $0x30] sm:$0xff] %vm94, %v3109
  %3120 = vst.msk [vmem:[%s13 + $0x38] sm:$0xff] %vm94, %v3111
  // Predicated region
  $region46: #{transformer_classifier_fwd.11} parent=0 // pred_check
    _
  $region47: #{transformer_classifier_fwd.11} parent=0 // pred_check_branch
    %3122 = sbr.rel (0) target = $region49
  $region48: #{transformer_classifier_fwd.11} parent=0 // pred_region
    _
  $region49: #{transformer_classifier_fwd.11} parent=0 // pred_fallthru
    _
  // Predicated region
  $region50: #{transformer_classifier_fwd.11} parent=0 // pred_check
    _
  $region51: #{transformer_classifier_fwd.11} parent=0 // pred_check_branch
    %3124 = sbr.rel (0) target = $region53
  $region52: #{transformer_classifier_fwd.11} parent=0 // pred_region
    _
  $region53: #{transformer_classifier_fwd.11} parent=0 // pred_fallthru
    _
  // Predicated region
  $region54: #{transformer_classifier_fwd.11} parent=0 // pred_check
    _
  $region55: #{transformer_classifier_fwd.11} parent=0 // pred_check_branch
    %3126 = sbr.rel (0) target = $region57
  $region56: #{transformer_classifier_fwd.11} parent=0 // pred_region
    _
  $region57: #{transformer_classifier_fwd.11} parent=0 // pred_fallthru
    _
  // Predicated region
  $region58: #{transformer_classifier_fwd.11} parent=0 // pred_check
    _
  $region59: #{transformer_classifier_fwd.11} parent=0 // pred_check_branch
    %3128 = sbr.rel (0) target = $region61
  $region60: #{transformer_classifier_fwd.11} parent=0 // pred_region
    _
  $region61: #{transformer_classifier_fwd.11} parent=0 // pred_fallthru
    _
  // Predicated region
  $region62: #{transformer_classifier_fwd.11} parent=0 // pred_check
    _
  $region63: #{transformer_classifier_fwd.11} parent=0 // pred_check_branch
    %3130 = sbr.rel (0) target = $region65
  $region64: #{transformer_classifier_fwd.11} parent=0 // pred_region
    _
  $region65: #{transformer_classifier_fwd.11} parent=0 // pred_fallthru
    _
  // Predicated region
  $region66: #{transformer_classifier_fwd.11} parent=0 // pred_check
    _
  $region67: #{transformer_classifier_fwd.11} parent=0 // pred_check_branch
    %3132 = sbr.rel (0) target = $region69
  $region68: #{transformer_classifier_fwd.11} parent=0 // pred_region
    _
  $region69: #{transformer_classifier_fwd.11} parent=0 // pred_fallthru
    _

// kernel: transformer_classifier_fwd.19
$region0: #{transformer_classifier_fwd.19}
  #allocation0 [shape = 'u32[]', space=smem, size = 0x4, offset = 0x4, fixed_abs, tag = 'smem constant byte address 0x4 - core index']
  #allocation1 [shape = 'u32[72,128]{1,0:T(1,128)}', space=vmem, size = 0x9000, scoped, tag = 'internal scratch']
  #allocation2 [shape = 'f32[1,1]{1,0:T(1,128)S(1)}', space=vmem, size = 0x200, scoped, tag = 'scoped memory for transformer_classifier_fwd.19']
  %s0 = inlined_call_operand.vmem [shape: f32[8,2,16,32], index: 0, kind: input, shape index: {}]
  %s1 = inlined_call_operand.vmem [shape: f32[64,32], index: 1, kind: input, shape index: {}]
  %s2 = inlined_call_operand.vmem [shape: f32[1,32], index: 2, kind: input, shape index: {}]
  %s3 = inlined_call_operand.vmem [shape: f32[1,32], index: 3, kind: input, shape index: {}]
  %s4 = inlined_call_operand.vmem [shape: f32[1,32], index: 4, kind: input, shape index: {}]
  %s5 = inlined_call_operand.vmem [shape: f32[3,64,32], index: 5, kind: input, shape index: {}]
  %s6 = inlined_call_operand.vmem [shape: f32[3,1,32], index: 6, kind: input, shape index: {}]
  %s7 = inlined_call_operand.vmem [shape: f32[3,64,32], index: 7, kind: input, shape index: {}]
  %s8 = inlined_call_operand.vmem [shape: f32[3,1,32], index: 8, kind: input, shape index: {}]
  %s9 = inlined_call_operand.vmem [shape: f32[3,1,32], index: 9, kind: input, shape index: {}]
  %s10 = inlined_call_operand.vmem [shape: f32[3,1,32], index: 10, kind: input, shape index: {}]
  %s11 = inlined_call_operand.vmem [shape: f32[3,32,32], index: 11, kind: input, shape index: {}]
  %s12 = inlined_call_operand.vmem [shape: f32[3,1,32], index: 12, kind: input, shape index: {}]
  %s13 = inlined_call_operand.vmem [shape: f32[1,32], index: 13, kind: input, shape index: {}]
  %s14 = inlined_call_operand.<no memory space> [shape: f32[1,1], index: 14, kind: input, shape index: {}]
  %s15 = inlined_call_operand.vmem [shape: f32[32,10], index: 15, kind: input, shape index: {}]
  %s16 = inlined_call_operand.vmem [shape: f32[1,10], index: 16, kind: input, shape index: {}]
  %s17 = inlined_call_operand.vmem [shape: f32[5,2,10], index: 17, kind: output, shape index: {}]
  %s18 = sld [smem:[#allocation0]]
  $region78: #{transformer_classifier_fwd.19} parent=0
    _
  %s20 = ssub.s32 1, %s18
  %s21 = scalar_select 0, %s20, %s18
  %v22 = vstv %s14
  %23 = vst [vmem:[#allocation2] sm:$0x1] %v22
  // Predicated region
  $region2: #{transformer_classifier_fwd.19} parent=0 // pred_check
    _
  $region3: #{transformer_classifier_fwd.19} parent=0 // pred_check_branch
    %25 = sbr.rel (0) target = $region5
  $region4: #{transformer_classifier_fwd.19} parent=0 // pred_region
    _
  $region5: #{transformer_classifier_fwd.19} parent=0 // pred_fallthru
    _
  // Predicated region
  $region6: #{transformer_classifier_fwd.19} parent=0 // pred_check
    _
  $region7: #{transformer_classifier_fwd.19} parent=0 // pred_check_branch
    %27 = sbr.rel (0) target = $region9
  $region8: #{transformer_classifier_fwd.19} parent=0 // pred_region
    _
  $region9: #{transformer_classifier_fwd.19} parent=0 // pred_fallthru
    _
  // Predicated region
  $region10: #{transformer_classifier_fwd.19} parent=0 // pred_check
    _
  $region11: #{transformer_classifier_fwd.19} parent=0 // pred_check_branch
    %29 = sbr.rel (0) target = $region13
  $region12: #{transformer_classifier_fwd.19} parent=0 // pred_region
    _
  $region13: #{transformer_classifier_fwd.19} parent=0 // pred_fallthru
    _
  // Predicated region
  $region14: #{transformer_classifier_fwd.19} parent=0 // pred_check
    _
  $region15: #{transformer_classifier_fwd.19} parent=0 // pred_check_branch
    %31 = sbr.rel (0) target = $region17
  $region16: #{transformer_classifier_fwd.19} parent=0 // pred_region
    _
  $region17: #{transformer_classifier_fwd.19} parent=0 // pred_fallthru
    _
  // Predicated region
  $region18: #{transformer_classifier_fwd.19} parent=0 // pred_check
    _
  $region19: #{transformer_classifier_fwd.19} parent=0 // pred_check_branch
    %33 = sbr.rel (0) target = $region21
  $region20: #{transformer_classifier_fwd.19} parent=0 // pred_region
    _
  $region21: #{transformer_classifier_fwd.19} parent=0 // pred_fallthru
    _
  // Predicated region
  $region22: #{transformer_classifier_fwd.19} parent=0 // pred_check
    _
  $region23: #{transformer_classifier_fwd.19} parent=0 // pred_check_branch
    %35 = sbr.rel (0) target = $region25
  $region24: #{transformer_classifier_fwd.19} parent=0 // pred_region
    _
  $region25: #{transformer_classifier_fwd.19} parent=0 // pred_fallthru
    _
  // Predicated region
  $region26: #{transformer_classifier_fwd.19} parent=0 // pred_check
    _
  $region27: #{transformer_classifier_fwd.19} parent=0 // pred_check_branch
    %37 = sbr.rel (0) target = $region29
  $region28: #{transformer_classifier_fwd.19} parent=0 // pred_region
    _
  $region29: #{transformer_classifier_fwd.19} parent=0 // pred_fallthru
    _
  // Predicated region
  $region30: #{transformer_classifier_fwd.19} parent=0 // pred_check
    _
  $region31: #{transformer_classifier_fwd.19} parent=0 // pred_check_branch
    %39 = sbr.rel (0) target = $region33
  $region32: #{transformer_classifier_fwd.19} parent=0 // pred_region
    _
  $region33: #{transformer_classifier_fwd.19} parent=0 // pred_fallthru
    _
  // Predicated region
  $region34: #{transformer_classifier_fwd.19} parent=0 // pred_check
    _
  $region35: #{transformer_classifier_fwd.19} parent=0 // pred_check_branch
    %41 = sbr.rel (0) target = $region37
  $region36: #{transformer_classifier_fwd.19} parent=0 // pred_region
    _
  $region37: #{transformer_classifier_fwd.19} parent=0 // pred_fallthru
    _
  // Predicated region
  $region38: #{transformer_classifier_fwd.19} parent=0 // pred_check
    _
  $region39: #{transformer_classifier_fwd.19} parent=0 // pred_check_branch
    %43 = sbr.rel (0) target = $region41
  $region40: #{transformer_classifier_fwd.19} parent=0 // pred_region
    _
  $region41: #{transformer_classifier_fwd.19} parent=0 // pred_fallthru
    _
  // Predicated region
  $region42: #{transformer_classifier_fwd.19} parent=0 // pred_check
    _
  $region43: #{transformer_classifier_fwd.19} parent=0 // pred_check_branch
    %45 = sbr.rel (0) target = $region45
  $region44: #{transformer_classifier_fwd.19} parent=0 // pred_region
    _
  $region45: #{transformer_classifier_fwd.19} parent=0 // pred_fallthru
    _
  // Predicated region
  $region46: #{transformer_classifier_fwd.19} parent=0 // pred_check
    _
  $region47: #{transformer_classifier_fwd.19} parent=0 // pred_check_branch
    %47 = sbr.rel (0) target = $region49
  $region48: #{transformer_classifier_fwd.19} parent=0 // pred_region
    _
  $region49: #{transformer_classifier_fwd.19} parent=0 // pred_fallthru
    _
  // Predicated region
  $region50: #{transformer_classifier_fwd.19} parent=0 // pred_check
    _
  $region51: #{transformer_classifier_fwd.19} parent=0 // pred_check_branch
    %49 = sbr.rel (0) target = $region53
  $region52: #{transformer_classifier_fwd.19} parent=0 // pred_region
    _
  $region53: #{transformer_classifier_fwd.19} parent=0 // pred_fallthru
    _
  // Predicated region
  $region54: #{transformer_classifier_fwd.19} parent=0 // pred_check
    _
  $region55: #{transformer_classifier_fwd.19} parent=0 // pred_check_branch
    %51 = sbr.rel (0) target = $region57
  $region56: #{transformer_classifier_fwd.19} parent=0 // pred_region
    _
  $region57: #{transformer_classifier_fwd.19} parent=0 // pred_fallthru
    _
  // Predicated region
  $region58: #{transformer_classifier_fwd.19} parent=0 // pred_check
    _
  $region59: #{transformer_classifier_fwd.19} parent=0 // pred_check_branch
    %53 = sbr.rel (0) target = $region61
  $region60: #{transformer_classifier_fwd.19} parent=0 // pred_region
    _
  $region61: #{transformer_classifier_fwd.19} parent=0 // pred_fallthru
    _
  // Predicated region
  $region62: #{transformer_classifier_fwd.19} parent=0 // pred_check
    _
  $region63: #{transformer_classifier_fwd.19} parent=0 // pred_check_branch
    %55 = sbr.rel (0) target = $region65
  $region64: #{transformer_classifier_fwd.19} parent=0 // pred_region
    _
  $region65: #{transformer_classifier_fwd.19} parent=0 // pred_fallthru
    _
  // Predicated region
  $region66: #{transformer_classifier_fwd.19} parent=0 // pred_check
    _
  $region67: #{transformer_classifier_fwd.19} parent=0 // pred_check_branch
    %57 = sbr.rel (0) target = $region69
  $region68: #{transformer_classifier_fwd.19} parent=0 // pred_region
    _
  $region69: #{transformer_classifier_fwd.19} parent=0 // pred_fallthru
    _
  %v59 = vld [vmem:[%s0] sm:$0xff]
  %v60 = vld [vmem:[%s0 + $0x8] sm:$0xff]
  %v61 = vld [vmem:[%s0 + $0x10] sm:$0xff]
  %v62 = vld [vmem:[%s0 + $0x18] sm:$0xff]
  %s63 = scalar_lea.vmem %s0, 32
  %v64 = vld [vmem:[%s63] sm:$0xff]
  %v65 = vld [vmem:[%s63 + $0x8] sm:$0xff]
  %v66 = vld [vmem:[%s63 + $0x10] sm:$0xff]
  %v67 = vld [vmem:[%s63 + $0x18] sm:$0xff]
  %s68 = scalar_lea.vmem %s0, 64
  %v69 = vld [vmem:[%s68] sm:$0xff]
  %v70 = vld [vmem:[%s68 + $0x8] sm:$0xff]
  %v71 = vld [vmem:[%s68 + $0x10] sm:$0xff]
  %v72 = vld [vmem:[%s68 + $0x18] sm:$0xff]
  %s73 = scalar_lea.vmem %s0, 96
  %v74 = vld [vmem:[%s73] sm:$0xff]
  %v75 = vld [vmem:[%s73 + $0x8] sm:$0xff]
  %v76 = vld [vmem:[%s73 + $0x10] sm:$0xff]
  %v77 = vld [vmem:[%s73 + $0x18] sm:$0xff]
  %s78 = scalar_lea.vmem %s0, 128
  %v79 = vld [vmem:[%s78] sm:$0xff]
  %v80 = vld [vmem:[%s78 + $0x8] sm:$0xff]
  %v81 = vld [vmem:[%s78 + $0x10] sm:$0xff]
  %v82 = vld [vmem:[%s78 + $0x18] sm:$0xff]
  %s83 = scalar_lea.vmem %s0, 160
  %v84 = vld [vmem:[%s83] sm:$0xff]
  %v85 = vld [vmem:[%s83 + $0x8] sm:$0xff]
  %v86 = vld [vmem:[%s83 + $0x10] sm:$0xff]
  %v87 = vld [vmem:[%s83 + $0x18] sm:$0xff]
  %s88 = scalar_lea.vmem %s0, 192
  %v89 = vld [vmem:[%s88] sm:$0xff]
  %v90 = vld [vmem:[%s88 + $0x8] sm:$0xff]
  %v91 = vld [vmem:[%s88 + $0x10] sm:$0xff]
  %v92 = vld [vmem:[%s88 + $0x18] sm:$0xff]
  %s93 = scalar_lea.vmem %s0, 224
  %v94 = vld [vmem:[%s93] sm:$0xff]
  %v95 = vld [vmem:[%s93 + $0x8] sm:$0xff]
  %v96 = vld [vmem:[%s93 + $0x10] sm:$0xff]
  %v97 = vld [vmem:[%s93 + $0x18] sm:$0xff]
  %v98 = vld [vmem:[%s1] sm:$0xff]
  %v99 = vld [vmem:[%s1 + $0x8] sm:$0xff]
  %v100 = vld [vmem:[%s1 + $0x10] sm:$0xff]
  %v101 = vld [vmem:[%s1 + $0x18] sm:$0xff]
  %v102 = vld [vmem:[%s1 + $0x20] sm:$0xff]
  %v103 = vld [vmem:[%s1 + $0x28] sm:$0xff]
  %v104 = vld [vmem:[%s1 + $0x30] sm:$0xff]
  %v105 = vld [vmem:[%s1 + $0x38] sm:$0xff]
  %v106 = vld [vmem:[%s2] sm:$0x1]
  %v107 = vpack.c.bf16 %v60, %v59
  %v108 = vpack.c.bf16 %v62, %v61
  %v109 = vpack.c.bf16 %v99, %v98
  %v110 = vpack.c.bf16 %v101, %v100
  %v111 = vpack.c.bf16 %v65, %v64
  %v112 = vpack.c.bf16 %v67, %v66
  %v113 = vpack.c.bf16 %v103, %v102
  %v114 = vpack.c.bf16 %v105, %v104
  %vm115 = vcmask 261120
  %v117 = vsel %vm115, %v111, 0
  %v120 = vsel %vm115, %v112, 0
  %122 = vmatpush.bf16.msra.mxu0 0
  %123 = vmatpush.bf16.msra.mxu0 0
  %124 = vmatpush.bf16.msra.mxu0 0
  %125 = vmatpush.bf16.msra.mxu0 0
  %126 = vmatpush.bf16.msra.mxu0 0
  %127 = vmatpush.bf16.msra.mxu0 0
  %128 = vmatpush.bf16.msra.mxu0 %v114
  %129 = vmatpush.bf16.msra.mxu0 %v113
  %130 = vmatmul.bf16.gmra.mxu0 %v117
  %v131 = vpop.f32.mrf.mxu0
  %v132 = vadd.f32 0.0, %v131
  %v133 = vpop.f32.mrf.mxu0
  %v134 = vadd.f32 0.0, %v133
  %135 = vmatmul.bf16.gmra.mxu0 %v120
  %v136 = vpop.f32.mrf.mxu0
  %v137 = vadd.f32 0.0, %v136
  %v138 = vpop.f32.mrf.mxu0
  %v139 = vadd.f32 0.0, %v138
  %140 = vdwg.mxu0
  %v142 = vsel %vm115, %v107, 0
  %v145 = vsel %vm115, %v108, 0
  %147 = vmatpush.bf16.msra.mxu0 0
  %148 = vmatpush.bf16.msra.mxu0 0
  %149 = vmatpush.bf16.msra.mxu0 0
  %150 = vmatpush.bf16.msra.mxu0 0
  %151 = vmatpush.bf16.msra.mxu0 0
  %152 = vmatpush.bf16.msra.mxu0 0
  %153 = vmatpush.bf16.msra.mxu0 %v110
  %154 = vmatpush.bf16.msra.mxu0 %v109
  %155 = vmatmul.bf16.gmra.mxu0 %v142
  %v156 = vpop.f32.mrf.mxu0
  %v157 = vadd.f32 %v132, %v156
  %v158 = vpop.f32.mrf.mxu0
  %v159 = vadd.f32 %v134, %v158
  %160 = vmatmul.bf16.gmra.mxu0 %v145
  %v161 = vpop.f32.mrf.mxu0
  %v162 = vadd.f32 %v137, %v161
  %v163 = vpop.f32.mrf.mxu0
  %v164 = vadd.f32 %v139, %v163
  %165 = vdwg.mxu0
  %v167 = vperm.slane %v106, 0
  %v169 = vadd.f32 %v157, %v167
  %v170 = vadd.f32 %v159, %v167
  %v171 = vadd.f32 %v162, %v167
  %v172 = vadd.f32 %v164, %v167
  %v173 = vxor.u32 %v169, 2147483648
  %v174 = vxor.u32 %v170, 2147483648
  %v175 = vxor.u32 %v171, 2147483648
  %v176 = vxor.u32 %v172, 2147483648
  %v177 = vmul.f32 %v173, 1.442695
  %v178 = vpow.pop %v177
  %v179 = vmul.f32 %v174, 1.442695
  %v180 = vpow.pop %v179
  %v181 = vmul.f32 %v175, 1.442695
  %v182 = vpow.pop %v181
  %v183 = vmul.f32 %v176, 1.442695
  %v184 = vpow.pop %v183
  %v185 = vadd.f32 %v178, 1.0
  %v186 = vadd.f32 %v180, 1.0
  %v187 = vadd.f32 %v182, 1.0
  %v188 = vadd.f32 %v184, 1.0
  %v189 = vrcp.pop %v185
  %v190 = vmul.f32 %v185, %v189
  %v191 = vsub.f32 1.0, %v190
  %v192 = vmul.f32 %v189, %v191
  %v193 = vadd.f32 %v189, %v192
  %vm194 = vweird.f32 %v185
  %vm195 = vweird.f32 %v189
  %vm196 = vmor %vm194, %vm195
  %v197 = vsel %vm196, %v189, %v193
  %v198 = vand.u32 2147483647, %v185
  %vm199 = vcmp.eq.f32.partialorder %v198, 8.507059e+37
  %v200 = vand.u32 %v185, 2147483648
  %v201 = vor.u32 1.1754944e-38, %v200
  %v202 = vsel %vm199, %v201, %v197
  %v203 = vmul.f32 1.0, %v202
  %v204 = vrcp.pop %v186
  %v205 = vmul.f32 %v186, %v204
  %v206 = vsub.f32 1.0, %v205
  %v207 = vmul.f32 %v204, %v206
  %v208 = vadd.f32 %v204, %v207
  %vm209 = vweird.f32 %v186
  %vm210 = vweird.f32 %v204
  %vm211 = vmor %vm209, %vm210
  %v212 = vsel %vm211, %v204, %v208
  %v213 = vand.u32 2147483647, %v186
  %vm214 = vcmp.eq.f32.partialorder %v213, 8.507059e+37
  %v215 = vand.u32 %v186, 2147483648
  %v216 = vor.u32 1.1754944e-38, %v215
  %v217 = vsel %vm214, %v216, %v212
  %v218 = vmul.f32 1.0, %v217
  %v219 = vrcp.pop %v187
  %v220 = vmul.f32 %v187, %v219
  %v221 = vsub.f32 1.0, %v220
  %v222 = vmul.f32 %v219, %v221
  %v223 = vadd.f32 %v219, %v222
  %vm224 = vweird.f32 %v187
  %vm225 = vweird.f32 %v219
  %vm226 = vmor %vm224, %vm225
  %v227 = vsel %vm226, %v219, %v223
  %v228 = vand.u32 2147483647, %v187
  %vm229 = vcmp.eq.f32.partialorder %v228, 8.507059e+37
  %v230 = vand.u32 %v187, 2147483648
  %v231 = vor.u32 1.1754944e-38, %v230
  %v232 = vsel %vm229, %v231, %v227
  %v233 = vmul.f32 1.0, %v232
  %v234 = vrcp.pop %v188
  %v235 = vmul.f32 %v188, %v234
  %v236 = vsub.f32 1.0, %v235
  %v237 = vmul.f32 %v234, %v236
  %v238 = vadd.f32 %v234, %v237
  %vm239 = vweird.f32 %v188
  %vm240 = vweird.f32 %v234
  %vm241 = vmor %vm239, %vm240
  %v242 = vsel %vm241, %v234, %v238
  %v243 = vand.u32 2147483647, %v188
  %vm244 = vcmp.eq.f32.partialorder %v243, 8.507059e+37
  %v245 = vand.u32 %v188, 2147483648
  %v246 = vor.u32 1.1754944e-38, %v245
  %v247 = vsel %vm244, %v246, %v242
  %v248 = vmul.f32 1.0, %v247
  %v249 = vmul.f32 %v203, %v59
  %v250 = vmul.f32 %v218, %v60
  %v251 = vmul.f32 %v233, %v61
  %v252 = vmul.f32 %v248, %v62
  %v253 = vsub.f32 1.0, %v203
  %v254 = vsub.f32 1.0, %v218
  %v255 = vsub.f32 1.0, %v233
  %v256 = vsub.f32 1.0, %v248
  %v257 = vmul.f32 %v253, %v64
  %v258 = vmul.f32 %v254, %v65
  %v259 = vmul.f32 %v255, %v66
  %v260 = vmul.f32 %v256, %v67
  %v261 = vadd.f32 %v249, %v257
  %v262 = vadd.f32 %v250, %v258
  %v263 = vadd.f32 %v251, %v259
  %v264 = vadd.f32 %v252, %v260
  %v265 = vld [vmem:[%s3] sm:$0x1]
  %v266 = vld [vmem:[%s4] sm:$0x1]
  %v267 = vsel %vm115, %v261, 0.0
  %268 = vadd.xlane.f32.xlu0 %v267
  %v269 = vpop.xlane.xlu0 %268
  %v270 = vsel %vm115, %v262, 0.0
  %271 = vadd.xlane.f32.xlu0 %v270
  %v272 = vpop.xlane.xlu0 %271
  %v273 = vsel %vm115, %v263, 0.0
  %274 = vadd.xlane.f32.xlu0 %v273
  %v275 = vpop.xlane.xlu0 %274
  %v276 = vsel %vm115, %v264, 0.0
  %277 = vadd.xlane.f32.xlu0 %v276
  %v278 = vpop.xlane.xlu0 %277
  %v279 = vrcp.pop 32.0
  %v280 = vmul.f32 32.0, %v279
  %v281 = vsub.f32 1.0, %v280
  %v282 = vmul.f32 %v279, %v281
  %v283 = vadd.f32 %v279, %v282
  %vm284 = vweird.f32 %v279
  %v285 = vsel %vm284, %v279, %v283
  %v286 = vmul.f32 %v269, %v285
  %v287 = vmul.f32 %v272, %v285
  %v288 = vmul.f32 %v275, %v285
  %v289 = vmul.f32 %v278, %v285
  %v290 = vsub.f32 %v261, %v286
  %v291 = vsub.f32 %v262, %v287
  %v292 = vsub.f32 %v263, %v288
  %v293 = vsub.f32 %v264, %v289
  %v294 = vmul.f32 %v290, %v290
  %v295 = vmul.f32 %v291, %v291
  %v296 = vmul.f32 %v292, %v292
  %v297 = vmul.f32 %v293, %v293
  %v298 = vsel %vm115, %v294, 0.0
  %299 = vadd.xlane.f32.xlu0 %v298
  %v300 = vpop.xlane.xlu0 %299
  %v301 = vsel %vm115, %v295, 0.0
  %302 = vadd.xlane.f32.xlu0 %v301
  %v303 = vpop.xlane.xlu0 %302
  %v304 = vsel %vm115, %v296, 0.0
  %305 = vadd.xlane.f32.xlu0 %v304
  %v306 = vpop.xlane.xlu0 %305
  %v307 = vsel %vm115, %v297, 0.0
  %308 = vadd.xlane.f32.xlu0 %v307
  %v309 = vpop.xlane.xlu0 %308
  %v310 = vmul.f32 %v300, %v285
  %v311 = vmul.f32 %v303, %v285
  %v312 = vmul.f32 %v306, %v285
  %v313 = vmul.f32 %v309, %v285
  %v314 = vadd.f32 %v310, 1e-05
  %v315 = vadd.f32 %v311, 1e-05
  %v316 = vadd.f32 %v312, 1e-05
  %v317 = vadd.f32 %v313, 1e-05
  %v318 = vrsqrt.pop %v314
  %v319 = vmul.f32 %v318, %v314
  %v320 = vmul.f32 %v319, %v318
  %v321 = vmul.f32 0.5, %v320
  %v322 = vsub.f32 1.5, %v321
  %v323 = vmul.f32 %v318, %v322
  %vm324 = vweird.f32 %v314
  %vm325 = vweird.f32 %v318
  %vm326 = vmor %vm324, %vm325
  %v327 = vsel %vm326, %v318, %v323
  %v328 = vrsqrt.pop %v315
  %v329 = vmul.f32 %v328, %v315
  %v330 = vmul.f32 %v329, %v328
  %v331 = vmul.f32 0.5, %v330
  %v332 = vsub.f32 1.5, %v331
  %v333 = vmul.f32 %v328, %v332
  %vm334 = vweird.f32 %v315
  %vm335 = vweird.f32 %v328
  %vm336 = vmor %vm334, %vm335
  %v337 = vsel %vm336, %v328, %v333
  %v338 = vrsqrt.pop %v316
  %v339 = vmul.f32 %v338, %v316
  %v340 = vmul.f32 %v339, %v338
  %v341 = vmul.f32 0.5, %v340
  %v342 = vsub.f32 1.5, %v341
  %v343 = vmul.f32 %v338, %v342
  %vm344 = vweird.f32 %v316
  %vm345 = vweird.f32 %v338
  %vm346 = vmor %vm344, %vm345
  %v347 = vsel %vm346, %v338, %v343
  %v348 = vrsqrt.pop %v317
  %v349 = vmul.f32 %v348, %v317
  %v350 = vmul.f32 %v349, %v348
  %v351 = vmul.f32 0.5, %v350
  %v352 = vsub.f32 1.5, %v351
  %v353 = vmul.f32 %v348, %v352
  %vm354 = vweird.f32 %v317
  %vm355 = vweird.f32 %v348
  %vm356 = vmor %vm354, %vm355
  %v357 = vsel %vm356, %v348, %v353
  %v358 = vmul.f32 %v290, %v327
  %v359 = vmul.f32 %v291, %v337
  %v360 = vmul.f32 %v292, %v347
  %v361 = vmul.f32 %v293, %v357
  %v363 = vperm.slane %v265, 0
  %v365 = vmul.f32 %v358, %v363
  %v366 = vmul.f32 %v359, %v363
  %v367 = vmul.f32 %v360, %v363
  %v368 = vmul.f32 %v361, %v363
  %v370 = vperm.slane %v266, 0
  %v372 = vadd.f32 %v365, %v370
  %v373 = vadd.f32 %v366, %v370
  %v374 = vadd.f32 %v367, %v370
  %v375 = vadd.f32 %v368, %v370
  %v376 = vld [vmem:[%s5] sm:$0xff]
  %v377 = vld [vmem:[%s5 + $0x8] sm:$0xff]
  %v378 = vld [vmem:[%s5 + $0x10] sm:$0xff]
  %v379 = vld [vmem:[%s5 + $0x18] sm:$0xff]
  %v380 = vld [vmem:[%s5 + $0x20] sm:$0xff]
  %v381 = vld [vmem:[%s5 + $0x28] sm:$0xff]
  %v382 = vld [vmem:[%s5 + $0x30] sm:$0xff]
  %v383 = vld [vmem:[%s5 + $0x38] sm:$0xff]
  %v384 = vld [vmem:[%s6] sm:$0x1]
  %v385 = vld [vmem:[%s7] sm:$0xff]
  %v386 = vld [vmem:[%s7 + $0x8] sm:$0xff]
  %v387 = vld [vmem:[%s7 + $0x10] sm:$0xff]
  %v388 = vld [vmem:[%s7 + $0x18] sm:$0xff]
  %v389 = vld [vmem:[%s7 + $0x20] sm:$0xff]
  %v390 = vld [vmem:[%s7 + $0x28] sm:$0xff]
  %v391 = vld [vmem:[%s7 + $0x30] sm:$0xff]
  %v392 = vld [vmem:[%s7 + $0x38] sm:$0xff]
  %v393 = vld [vmem:[%s8] sm:$0x1]
  %v394 = vld [vmem:[%s9] sm:$0x1]
  %v395 = vld [vmem:[%s10] sm:$0x1]
  %v396 = vld [vmem:[%s11] sm:$0xff]
  %v397 = vld [vmem:[%s11 + $0x8] sm:$0xff]
  %v398 = vld [vmem:[%s11 + $0x10] sm:$0xff]
  %v399 = vld [vmem:[%s11 + $0x18] sm:$0xff]
  %v400 = vld [vmem:[%s12] sm:$0x1]
  %v401 = vpack.c.bf16 %v373, %v372
  %v402 = vpack.c.bf16 %v375, %v374
  %v403 = vpack.c.bf16 %v377, %v376
  %v404 = vpack.c.bf16 %v379, %v378
  %v405 = vpack.c.bf16 %v70, %v69
  %v406 = vpack.c.bf16 %v72, %v71
  %v407 = vpack.c.bf16 %v381, %v380
  %v408 = vpack.c.bf16 %v383, %v382
  %v410 = vsel %vm115, %v405, 0
  %v413 = vsel %vm115, %v406, 0
  %415 = vmatpush.bf16.msra.mxu0 0
  %416 = vmatpush.bf16.msra.mxu0 0
  %417 = vmatpush.bf16.msra.mxu0 0
  %418 = vmatpush.bf16.msra.mxu0 0
  %419 = vmatpush.bf16.msra.mxu0 0
  %420 = vmatpush.bf16.msra.mxu0 0
  %421 = vmatpush.bf16.msra.mxu0 %v408
  %422 = vmatpush.bf16.msra.mxu0 %v407
  %423 = vmatmul.bf16.gmra.mxu0 %v410
  %v424 = vpop.f32.mrf.mxu0
  %v425 = vadd.f32 0.0, %v424
  %v426 = vpop.f32.mrf.mxu0
  %v427 = vadd.f32 0.0, %v426
  %428 = vmatmul.bf16.gmra.mxu0 %v413
  %v429 = vpop.f32.mrf.mxu0
  %v430 = vadd.f32 0.0, %v429
  %v431 = vpop.f32.mrf.mxu0
  %v432 = vadd.f32 0.0, %v431
  %433 = vdwg.mxu0
  %v435 = vsel %vm115, %v401, 0
  %v438 = vsel %vm115, %v402, 0
  %440 = vmatpush.bf16.msra.mxu0 0
  %441 = vmatpush.bf16.msra.mxu0 0
  %442 = vmatpush.bf16.msra.mxu0 0
  %443 = vmatpush.bf16.msra.mxu0 0
  %444 = vmatpush.bf16.msra.mxu0 0
  %445 = vmatpush.bf16.msra.mxu0 0
  %446 = vmatpush.bf16.msra.mxu0 %v404
  %447 = vmatpush.bf16.msra.mxu0 %v403
  %448 = vmatmul.bf16.gmra.mxu0 %v435
  %v449 = vpop.f32.mrf.mxu0
  %v450 = vadd.f32 %v425, %v449
  %v451 = vpop.f32.mrf.mxu0
  %v452 = vadd.f32 %v427, %v451
  %453 = vmatmul.bf16.gmra.mxu0 %v438
  %v454 = vpop.f32.mrf.mxu0
  %v455 = vadd.f32 %v430, %v454
  %v456 = vpop.f32.mrf.mxu0
  %v457 = vadd.f32 %v432, %v456
  %458 = vdwg.mxu0
  %v460 = vperm.slane %v384, 0
  %v462 = vadd.f32 %v450, %v460
  %v463 = vadd.f32 %v452, %v460
  %v464 = vadd.f32 %v455, %v460
  %v465 = vadd.f32 %v457, %v460
  %v466 = vxor.u32 %v462, 2147483648
  %v467 = vxor.u32 %v463, 2147483648
  %v468 = vxor.u32 %v464, 2147483648
  %v469 = vxor.u32 %v465, 2147483648
  %v470 = vmul.f32 %v466, 1.442695
  %v471 = vpow.pop %v470
  %v472 = vmul.f32 %v467, 1.442695
  %v473 = vpow.pop %v472
  %v474 = vmul.f32 %v468, 1.442695
  %v475 = vpow.pop %v474
  %v476 = vmul.f32 %v469, 1.442695
  %v477 = vpow.pop %v476
  %v478 = vadd.f32 %v471, 1.0
  %v479 = vadd.f32 %v473, 1.0
  %v480 = vadd.f32 %v475, 1.0
  %v481 = vadd.f32 %v477, 1.0
  %v482 = vrcp.pop %v478
  %v483 = vmul.f32 %v478, %v482
  %v484 = vsub.f32 1.0, %v483
  %v485 = vmul.f32 %v482, %v484
  %v486 = vadd.f32 %v482, %v485
  %vm487 = vweird.f32 %v478
  %vm488 = vweird.f32 %v482
  %vm489 = vmor %vm487, %vm488
  %v490 = vsel %vm489, %v482, %v486
  %v491 = vand.u32 2147483647, %v478
  %vm492 = vcmp.eq.f32.partialorder %v491, 8.507059e+37
  %v493 = vand.u32 %v478, 2147483648
  %v494 = vor.u32 1.1754944e-38, %v493
  %v495 = vsel %vm492, %v494, %v490
  %v496 = vmul.f32 1.0, %v495
  %v497 = vrcp.pop %v479
  %v498 = vmul.f32 %v479, %v497
  %v499 = vsub.f32 1.0, %v498
  %v500 = vmul.f32 %v497, %v499
  %v501 = vadd.f32 %v497, %v500
  %vm502 = vweird.f32 %v479
  %vm503 = vweird.f32 %v497
  %vm504 = vmor %vm502, %vm503
  %v505 = vsel %vm504, %v497, %v501
  %v506 = vand.u32 2147483647, %v479
  %vm507 = vcmp.eq.f32.partialorder %v506, 8.507059e+37
  %v508 = vand.u32 %v479, 2147483648
  %v509 = vor.u32 1.1754944e-38, %v508
  %v510 = vsel %vm507, %v509, %v505
  %v511 = vmul.f32 1.0, %v510
  %v512 = vrcp.pop %v480
  %v513 = vmul.f32 %v480, %v512
  %v514 = vsub.f32 1.0, %v513
  %v515 = vmul.f32 %v512, %v514
  %v516 = vadd.f32 %v512, %v515
  %vm517 = vweird.f32 %v480
  %vm518 = vweird.f32 %v512
  %vm519 = vmor %vm517, %vm518
  %v520 = vsel %vm519, %v512, %v516
  %v521 = vand.u32 2147483647, %v480
  %vm522 = vcmp.eq.f32.partialorder %v521, 8.507059e+37
  %v523 = vand.u32 %v480, 2147483648
  %v524 = vor.u32 1.1754944e-38, %v523
  %v525 = vsel %vm522, %v524, %v520
  %v526 = vmul.f32 1.0, %v525
  %v527 = vrcp.pop %v481
  %v528 = vmul.f32 %v481, %v527
  %v529 = vsub.f32 1.0, %v528
  %v530 = vmul.f32 %v527, %v529
  %v531 = vadd.f32 %v527, %v530
  %vm532 = vweird.f32 %v481
  %vm533 = vweird.f32 %v527
  %vm534 = vmor %vm532, %vm533
  %v535 = vsel %vm534, %v527, %v531
  %v536 = vand.u32 2147483647, %v481
  %vm537 = vcmp.eq.f32.partialorder %v536, 8.507059e+37
  %v538 = vand.u32 %v481, 2147483648
  %v539 = vor.u32 1.1754944e-38, %v538
  %v540 = vsel %vm537, %v539, %v535
  %v541 = vmul.f32 1.0, %v540
  %v542 = vmul.f32 %v496, %v372
  %v543 = vmul.f32 %v511, %v373
  %v544 = vmul.f32 %v526, %v374
  %v545 = vmul.f32 %v541, %v375
  %v546 = vsub.f32 1.0, %v496
  %v547 = vsub.f32 1.0, %v511
  %v548 = vsub.f32 1.0, %v526
  %v549 = vsub.f32 1.0, %v541
  %v550 = vmul.f32 %v546, %v69
  %v551 = vmul.f32 %v547, %v70
  %v552 = vmul.f32 %v548, %v71
  %v553 = vmul.f32 %v549, %v72
  %v554 = vadd.f32 %v542, %v550
  %v555 = vadd.f32 %v543, %v551
  %v556 = vadd.f32 %v544, %v552
  %v557 = vadd.f32 %v545, %v553
  %v558 = vpack.c.bf16 %v386, %v385
  %v559 = vpack.c.bf16 %v388, %v387
  %v560 = vpack.c.bf16 %v75, %v74
  %v561 = vpack.c.bf16 %v77, %v76
  %v562 = vpack.c.bf16 %v390, %v389
  %v563 = vpack.c.bf16 %v392, %v391
  %v565 = vsel %vm115, %v560, 0
  %v568 = vsel %vm115, %v561, 0
  %570 = vmatpush.bf16.msra.mxu0 0
  %571 = vmatpush.bf16.msra.mxu0 0
  %572 = vmatpush.bf16.msra.mxu0 0
  %573 = vmatpush.bf16.msra.mxu0 0
  %574 = vmatpush.bf16.msra.mxu0 0
  %575 = vmatpush.bf16.msra.mxu0 0
  %576 = vmatpush.bf16.msra.mxu0 %v563
  %577 = vmatpush.bf16.msra.mxu0 %v562
  %578 = vmatmul.bf16.gmra.mxu0 %v565
  %v579 = vpop.f32.mrf.mxu0
  %v580 = vadd.f32 0.0, %v579
  %v581 = vpop.f32.mrf.mxu0
  %v582 = vadd.f32 0.0, %v581
  %583 = vmatmul.bf16.gmra.mxu0 %v568
  %v584 = vpop.f32.mrf.mxu0
  %v585 = vadd.f32 0.0, %v584
  %v586 = vpop.f32.mrf.mxu0
  %v587 = vadd.f32 0.0, %v586
  %588 = vdwg.mxu0
  %589 = vmatpush.bf16.msra.mxu0 0
  %590 = vmatpush.bf16.msra.mxu0 0
  %591 = vmatpush.bf16.msra.mxu0 0
  %592 = vmatpush.bf16.msra.mxu0 0
  %593 = vmatpush.bf16.msra.mxu0 0
  %594 = vmatpush.bf16.msra.mxu0 0
  %595 = vmatpush.bf16.msra.mxu0 %v559
  %596 = vmatpush.bf16.msra.mxu0 %v558
  %597 = vmatmul.bf16.gmra.mxu0 %v435
  %v598 = vpop.f32.mrf.mxu0
  %v599 = vadd.f32 %v580, %v598
  %v600 = vpop.f32.mrf.mxu0
  %v601 = vadd.f32 %v582, %v600
  %602 = vmatmul.bf16.gmra.mxu0 %v438
  %v603 = vpop.f32.mrf.mxu0
  %v604 = vadd.f32 %v585, %v603
  %v605 = vpop.f32.mrf.mxu0
  %v606 = vadd.f32 %v587, %v605
  %607 = vdwg.mxu0
  %v609 = vperm.slane %v393, 0
  %v611 = vadd.f32 %v599, %v609
  %v612 = vadd.f32 %v601, %v609
  %v613 = vadd.f32 %v604, %v609
  %v614 = vadd.f32 %v606, %v609
  %v615 = vxor.u32 %v611, 2147483648
  %v616 = vxor.u32 %v612, 2147483648
  %v617 = vxor.u32 %v613, 2147483648
  %v618 = vxor.u32 %v614, 2147483648
  %v619 = vmul.f32 %v615, 1.442695
  %v620 = vpow.pop %v619
  %v621 = vmul.f32 %v616, 1.442695
  %v622 = vpow.pop %v621
  %v623 = vmul.f32 %v617, 1.442695
  %v624 = vpow.pop %v623
  %v625 = vmul.f32 %v618, 1.442695
  %v626 = vpow.pop %v625
  %v627 = vadd.f32 %v620, 1.0
  %v628 = vadd.f32 %v622, 1.0
  %v629 = vadd.f32 %v624, 1.0
  %v630 = vadd.f32 %v626, 1.0
  %v631 = vrcp.pop %v627
  %v632 = vmul.f32 %v627, %v631
  %v633 = vsub.f32 1.0, %v632
  %v634 = vmul.f32 %v631, %v633
  %v635 = vadd.f32 %v631, %v634
  %vm636 = vweird.f32 %v627
  %vm637 = vweird.f32 %v631
  %vm638 = vmor %vm636, %vm637
  %v639 = vsel %vm638, %v631, %v635
  %v640 = vand.u32 2147483647, %v627
  %vm641 = vcmp.eq.f32.partialorder %v640, 8.507059e+37
  %v642 = vand.u32 %v627, 2147483648
  %v643 = vor.u32 1.1754944e-38, %v642
  %v644 = vsel %vm641, %v643, %v639
  %v645 = vmul.f32 1.0, %v644
  %v646 = vrcp.pop %v628
  %v647 = vmul.f32 %v628, %v646
  %v648 = vsub.f32 1.0, %v647
  %v649 = vmul.f32 %v646, %v648
  %v650 = vadd.f32 %v646, %v649
  %vm651 = vweird.f32 %v628
  %vm652 = vweird.f32 %v646
  %vm653 = vmor %vm651, %vm652
  %v654 = vsel %vm653, %v646, %v650
  %v655 = vand.u32 2147483647, %v628
  %vm656 = vcmp.eq.f32.partialorder %v655, 8.507059e+37
  %v657 = vand.u32 %v628, 2147483648
  %v658 = vor.u32 1.1754944e-38, %v657
  %v659 = vsel %vm656, %v658, %v654
  %v660 = vmul.f32 1.0, %v659
  %v661 = vrcp.pop %v629
  %v662 = vmul.f32 %v629, %v661
  %v663 = vsub.f32 1.0, %v662
  %v664 = vmul.f32 %v661, %v663
  %v665 = vadd.f32 %v661, %v664
  %vm666 = vweird.f32 %v629
  %vm667 = vweird.f32 %v661
  %vm668 = vmor %vm666, %vm667
  %v669 = vsel %vm668, %v661, %v665
  %v670 = vand.u32 2147483647, %v629
  %vm671 = vcmp.eq.f32.partialorder %v670, 8.507059e+37
  %v672 = vand.u32 %v629, 2147483648
  %v673 = vor.u32 1.1754944e-38, %v672
  %v674 = vsel %vm671, %v673, %v669
  %v675 = vmul.f32 1.0, %v674
  %v676 = vrcp.pop %v630
  %v677 = vmul.f32 %v630, %v676
  %v678 = vsub.f32 1.0, %v677
  %v679 = vmul.f32 %v676, %v678
  %v680 = vadd.f32 %v676, %v679
  %vm681 = vweird.f32 %v630
  %vm682 = vweird.f32 %v676
  %vm683 = vmor %vm681, %vm682
  %v684 = vsel %vm683, %v676, %v680
  %v685 = vand.u32 2147483647, %v630
  %vm686 = vcmp.eq.f32.partialorder %v685, 8.507059e+37
  %v687 = vand.u32 %v630, 2147483648
  %v688 = vor.u32 1.1754944e-38, %v687
  %v689 = vsel %vm686, %v688, %v684
  %v690 = vmul.f32 1.0, %v689
  %v691 = vmul.f32 %v645, %v372
  %v692 = vmul.f32 %v660, %v373
  %v693 = vmul.f32 %v675, %v374
  %v694 = vmul.f32 %v690, %v375
  %v695 = vsub.f32 1.0, %v645
  %v696 = vsub.f32 1.0, %v660
  %v697 = vsub.f32 1.0, %v675
  %v698 = vsub.f32 1.0, %v690
  %v699 = vmul.f32 %v695, %v74
  %v700 = vmul.f32 %v696, %v75
  %v701 = vmul.f32 %v697, %v76
  %v702 = vmul.f32 %v698, %v77
  %v703 = vadd.f32 %v691, %v699
  %v704 = vadd.f32 %v692, %v700
  %v705 = vadd.f32 %v693, %v701
  %v706 = vadd.f32 %v694, %v702
  %v707 = vpack.c.bf16 %v555, %v554
  %v708 = vpack.c.bf16 %v557, %v556
  %v709 = vpack.c.bf16 %v397, %v396
  %v710 = vpack.c.bf16 %v399, %v398
  %v712 = vsel %vm115, %v707, 0
  %v715 = vsel %vm115, %v708, 0
  %717 = vmatpush.bf16.msra.mxu0 0
  %718 = vmatpush.bf16.msra.mxu0 0
  %719 = vmatpush.bf16.msra.mxu0 0
  %720 = vmatpush.bf16.msra.mxu0 0
  %721 = vmatpush.bf16.msra.mxu0 0
  %722 = vmatpush.bf16.msra.mxu0 0
  %723 = vmatpush.bf16.msra.mxu0 %v710
  %724 = vmatpush.bf16.msra.mxu0 %v709
  %725 = vmatmul.bf16.gmra.mxu0 %v712
  %v726 = vpop.f32.mrf.mxu0
  %v727 = vadd.f32 0.0, %v726
  %v728 = vpop.f32.mrf.mxu0
  %v729 = vadd.f32 0.0, %v728
  %730 = vmatmul.bf16.gmra.mxu0 %v715
  %v731 = vpop.f32.mrf.mxu0
  %v732 = vadd.f32 0.0, %v731
  %v733 = vpop.f32.mrf.mxu0
  %v734 = vadd.f32 0.0, %v733
  %735 = vdwg.mxu0
  %v736 = vadd.f32 %v554, %v727
  %v737 = vadd.f32 %v555, %v729
  %v738 = vadd.f32 %v556, %v732
  %v739 = vadd.f32 %v557, %v734
  %v741 = vperm.slane %v400, 0
  %v743 = vadd.f32 %v736, %v741
  %v744 = vadd.f32 %v737, %v741
  %v745 = vadd.f32 %v738, %v741
  %v746 = vadd.f32 %v739, %v741
  %v747 = vpack.c.bf16 %v704, %v703
  %v748 = vpack.c.bf16 %v706, %v705
  %v750 = vsel %vm115, %v747, 0
  %v753 = vsel %vm115, %v748, 0
  %755 = vmatpush.bf16.msra.mxu0 0
  %756 = vmatpush.bf16.msra.mxu0 0
  %757 = vmatpush.bf16.msra.mxu0 0
  %758 = vmatpush.bf16.msra.mxu0 0
  %759 = vmatpush.bf16.msra.mxu0 0
  %760 = vmatpush.bf16.msra.mxu0 0
  %761 = vmatpush.bf16.msra.mxu0 %v710
  %762 = vmatpush.bf16.msra.mxu0 %v709
  %763 = vmatmul.bf16.gmra.mxu0 %v750
  %v764 = vpop.f32.mrf.mxu0
  %v765 = vadd.f32 0.0, %v764
  %v766 = vpop.f32.mrf.mxu0
  %v767 = vadd.f32 0.0, %v766
  %768 = vmatmul.bf16.gmra.mxu0 %v753
  %v769 = vpop.f32.mrf.mxu0
  %v770 = vadd.f32 0.0, %v769
  %v771 = vpop.f32.mrf.mxu0
  %v772 = vadd.f32 0.0, %v771
  %773 = vdwg.mxu0
  %v774 = vadd.f32 %v703, %v765
  %v775 = vadd.f32 %v704, %v767
  %v776 = vadd.f32 %v705, %v770
  %v777 = vadd.f32 %v706, %v772
  %v778 = vadd.f32 %v774, %v741
  %v779 = vadd.f32 %v775, %v741
  %v780 = vadd.f32 %v776, %v741
  %v781 = vadd.f32 %v777, %v741
  %v782 = vsel %vm115, %v743, 0.0
  %783 = vadd.xlane.f32.xlu0 %v782
  %v784 = vpop.xlane.xlu0 %783
  %v785 = vsel %vm115, %v744, 0.0
  %786 = vadd.xlane.f32.xlu0 %v785
  %v787 = vpop.xlane.xlu0 %786
  %v788 = vsel %vm115, %v745, 0.0
  %789 = vadd.xlane.f32.xlu0 %v788
  %v790 = vpop.xlane.xlu0 %789
  %v791 = vsel %vm115, %v746, 0.0
  %792 = vadd.xlane.f32.xlu0 %v791
  %v793 = vpop.xlane.xlu0 %792
  %v794 = vmul.f32 %v784, %v285
  %v795 = vmul.f32 %v787, %v285
  %v796 = vmul.f32 %v790, %v285
  %v797 = vmul.f32 %v793, %v285
  %v798 = vsub.f32 %v743, %v794
  %v799 = vsub.f32 %v744, %v795
  %v800 = vsub.f32 %v745, %v796
  %v801 = vsub.f32 %v746, %v797
  %v802 = vmul.f32 %v798, %v798
  %v803 = vmul.f32 %v799, %v799
  %v804 = vmul.f32 %v800, %v800
  %v805 = vmul.f32 %v801, %v801
  %v806 = vsel %vm115, %v802, 0.0
  %807 = vadd.xlane.f32.xlu0 %v806
  %v808 = vpop.xlane.xlu0 %807
  %v809 = vsel %vm115, %v803, 0.0
  %810 = vadd.xlane.f32.xlu0 %v809
  %v811 = vpop.xlane.xlu0 %810
  %v812 = vsel %vm115, %v804, 0.0
  %813 = vadd.xlane.f32.xlu0 %v812
  %v814 = vpop.xlane.xlu0 %813
  %v815 = vsel %vm115, %v805, 0.0
  %816 = vadd.xlane.f32.xlu0 %v815
  %v817 = vpop.xlane.xlu0 %816
  %v818 = vmul.f32 %v808, %v285
  %v819 = vmul.f32 %v811, %v285
  %v820 = vmul.f32 %v814, %v285
  %v821 = vmul.f32 %v817, %v285
  %v822 = vadd.f32 %v818, 1e-05
  %v823 = vadd.f32 %v819, 1e-05
  %v824 = vadd.f32 %v820, 1e-05
  %v825 = vadd.f32 %v821, 1e-05
  %v826 = vrsqrt.pop %v822
  %v827 = vmul.f32 %v826, %v822
  %v828 = vmul.f32 %v827, %v826
  %v829 = vmul.f32 0.5, %v828
  %v830 = vsub.f32 1.5, %v829
  %v831 = vmul.f32 %v826, %v830
  %vm832 = vweird.f32 %v822
  %vm833 = vweird.f32 %v826
  %vm834 = vmor %vm832, %vm833
  %v835 = vsel %vm834, %v826, %v831
  %v836 = vrsqrt.pop %v823
  %v837 = vmul.f32 %v836, %v823
  %v838 = vmul.f32 %v837, %v836
  %v839 = vmul.f32 0.5, %v838
  %v840 = vsub.f32 1.5, %v839
  %v841 = vmul.f32 %v836, %v840
  %vm842 = vweird.f32 %v823
  %vm843 = vweird.f32 %v836
  %vm844 = vmor %vm842, %vm843
  %v845 = vsel %vm844, %v836, %v841
  %v846 = vrsqrt.pop %v824
  %v847 = vmul.f32 %v846, %v824
  %v848 = vmul.f32 %v847, %v846
  %v849 = vmul.f32 0.5, %v848
  %v850 = vsub.f32 1.5, %v849
  %v851 = vmul.f32 %v846, %v850
  %vm852 = vweird.f32 %v824
  %vm853 = vweird.f32 %v846
  %vm854 = vmor %vm852, %vm853
  %v855 = vsel %vm854, %v846, %v851
  %v856 = vrsqrt.pop %v825
  %v857 = vmul.f32 %v856, %v825
  %v858 = vmul.f32 %v857, %v856
  %v859 = vmul.f32 0.5, %v858
  %v860 = vsub.f32 1.5, %v859
  %v861 = vmul.f32 %v856, %v860
  %vm862 = vweird.f32 %v825
  %vm863 = vweird.f32 %v856
  %vm864 = vmor %vm862, %vm863
  %v865 = vsel %vm864, %v856, %v861
  %v866 = vmul.f32 %v798, %v835
  %v867 = vmul.f32 %v799, %v845
  %v868 = vmul.f32 %v800, %v855
  %v869 = vmul.f32 %v801, %v865
  %v871 = vperm.slane %v394, 0
  %v873 = vmul.f32 %v866, %v871
  %v874 = vmul.f32 %v867, %v871
  %v875 = vmul.f32 %v868, %v871
  %v876 = vmul.f32 %v869, %v871
  %v878 = vperm.slane %v395, 0
  %v880 = vadd.f32 %v873, %v878
  %v881 = vadd.f32 %v874, %v878
  %v882 = vadd.f32 %v875, %v878
  %v883 = vadd.f32 %v876, %v878
  %v884 = vsel %vm115, %v778, 0.0
  %885 = vadd.xlane.f32.xlu0 %v884
  %v886 = vpop.xlane.xlu0 %885
  %v887 = vsel %vm115, %v779, 0.0
  %888 = vadd.xlane.f32.xlu0 %v887
  %v889 = vpop.xlane.xlu0 %888
  %v890 = vsel %vm115, %v780, 0.0
  %891 = vadd.xlane.f32.xlu0 %v890
  %v892 = vpop.xlane.xlu0 %891
  %v893 = vsel %vm115, %v781, 0.0
  %894 = vadd.xlane.f32.xlu0 %v893
  %v895 = vpop.xlane.xlu0 %894
  %v896 = vmul.f32 %v886, %v285
  %v897 = vmul.f32 %v889, %v285
  %v898 = vmul.f32 %v892, %v285
  %v899 = vmul.f32 %v895, %v285
  %v900 = vsub.f32 %v778, %v896
  %v901 = vsub.f32 %v779, %v897
  %v902 = vsub.f32 %v780, %v898
  %v903 = vsub.f32 %v781, %v899
  %v904 = vmul.f32 %v900, %v900
  %v905 = vmul.f32 %v901, %v901
  %v906 = vmul.f32 %v902, %v902
  %v907 = vmul.f32 %v903, %v903
  %v908 = vsel %vm115, %v904, 0.0
  %909 = vadd.xlane.f32.xlu0 %v908
  %v910 = vpop.xlane.xlu0 %909
  %v911 = vsel %vm115, %v905, 0.0
  %912 = vadd.xlane.f32.xlu0 %v911
  %v913 = vpop.xlane.xlu0 %912
  %v914 = vsel %vm115, %v906, 0.0
  %915 = vadd.xlane.f32.xlu0 %v914
  %v916 = vpop.xlane.xlu0 %915
  %v917 = vsel %vm115, %v907, 0.0
  %918 = vadd.xlane.f32.xlu0 %v917
  %v919 = vpop.xlane.xlu0 %918
  %v920 = vmul.f32 %v910, %v285
  %v921 = vmul.f32 %v913, %v285
  %v922 = vmul.f32 %v916, %v285
  %v923 = vmul.f32 %v919, %v285
  %v924 = vadd.f32 %v920, 1e-05
  %v925 = vadd.f32 %v921, 1e-05
  %v926 = vadd.f32 %v922, 1e-05
  %v927 = vadd.f32 %v923, 1e-05
  %v928 = vrsqrt.pop %v924
  %v929 = vmul.f32 %v928, %v924
  %v930 = vmul.f32 %v929, %v928
  %v931 = vmul.f32 0.5, %v930
  %v932 = vsub.f32 1.5, %v931
  %v933 = vmul.f32 %v928, %v932
  %vm934 = vweird.f32 %v924
  %vm935 = vweird.f32 %v928
  %vm936 = vmor %vm934, %vm935
  %v937 = vsel %vm936, %v928, %v933
  %v938 = vrsqrt.pop %v925
  %v939 = vmul.f32 %v938, %v925
  %v940 = vmul.f32 %v939, %v938
  %v941 = vmul.f32 0.5, %v940
  %v942 = vsub.f32 1.5, %v941
  %v943 = vmul.f32 %v938, %v942
  %vm944 = vweird.f32 %v925
  %vm945 = vweird.f32 %v938
  %vm946 = vmor %vm944, %vm945
  %v947 = vsel %vm946, %v938, %v943
  %v948 = vrsqrt.pop %v926
  %v949 = vmul.f32 %v948, %v926
  %v950 = vmul.f32 %v949, %v948
  %v951 = vmul.f32 0.5, %v950
  %v952 = vsub.f32 1.5, %v951
  %v953 = vmul.f32 %v948, %v952
  %vm954 = vweird.f32 %v926
  %vm955 = vweird.f32 %v948
  %vm956 = vmor %vm954, %vm955
  %v957 = vsel %vm956, %v948, %v953
  %v958 = vrsqrt.pop %v927
  %v959 = vmul.f32 %v958, %v927
  %v960 = vmul.f32 %v959, %v958
  %v961 = vmul.f32 0.5, %v960
  %v962 = vsub.f32 1.5, %v961
  %v963 = vmul.f32 %v958, %v962
  %vm964 = vweird.f32 %v927
  %vm965 = vweird.f32 %v958
  %vm966 = vmor %vm964, %vm965
  %v967 = vsel %vm966, %v958, %v963
  %v968 = vmul.f32 %v900, %v937
  %v969 = vmul.f32 %v901, %v947
  %v970 = vmul.f32 %v902, %v957
  %v971 = vmul.f32 %v903, %v967
  %v972 = vmul.f32 %v968, %v871
  %v973 = vmul.f32 %v969, %v871
  %v974 = vmul.f32 %v970, %v871
  %v975 = vmul.f32 %v971, %v871
  %v976 = vadd.f32 %v972, %v878
  %v977 = vadd.f32 %v973, %v878
  %v978 = vadd.f32 %v974, %v878
  %v979 = vadd.f32 %v975, %v878
  %v980 = vpack.c.bf16 %v881, %v880
  %v981 = vpack.c.bf16 %v883, %v882
  %v982 = vpack.c.bf16 %v977, %v976
  %v983 = vpack.c.bf16 %v979, %v978
  %v985 = vsel %vm115, %v982, 0
  %v988 = vsel %vm115, %v983, 0
  %990 = vmatpush.bf16.msra.mxu0 0
  %991 = vmatpush.bf16.msra.mxu0 0
  %992 = vmatpush.bf16.msra.mxu0 0
  %993 = vmatpush.bf16.msra.mxu0 0
  %994 = vmatpush.bf16.msra.mxu0 0
  %995 = vmatpush.bf16.msra.mxu0 0
  %996 = vmatpush.bf16.msra.mxu0 %v563
  %997 = vmatpush.bf16.msra.mxu0 %v562
  %998 = vmatmul.bf16.gmra.mxu0 %v985
  %v999 = vpop.f32.mrf.mxu0
  %v1000 = vadd.f32 0.0, %v999
  %v1001 = vpop.f32.mrf.mxu0
  %v1002 = vadd.f32 0.0, %v1001
  %1003 = vmatmul.bf16.gmra.mxu0 %v988
  %v1004 = vpop.f32.mrf.mxu0
  %v1005 = vadd.f32 0.0, %v1004
  %v1006 = vpop.f32.mrf.mxu0
  %v1007 = vadd.f32 0.0, %v1006
  %1008 = vdwg.mxu0
  %v1010 = vsel %vm115, %v980, 0
  %v1013 = vsel %vm115, %v981, 0
  %1015 = vmatpush.bf16.msra.mxu0 0
  %1016 = vmatpush.bf16.msra.mxu0 0
  %1017 = vmatpush.bf16.msra.mxu0 0
  %1018 = vmatpush.bf16.msra.mxu0 0
  %1019 = vmatpush.bf16.msra.mxu0 0
  %1020 = vmatpush.bf16.msra.mxu0 0
  %1021 = vmatpush.bf16.msra.mxu0 %v559
  %1022 = vmatpush.bf16.msra.mxu0 %v558
  %1023 = vmatmul.bf16.gmra.mxu0 %v1010
  %v1024 = vpop.f32.mrf.mxu0
  %v1025 = vadd.f32 %v1000, %v1024
  %v1026 = vpop.f32.mrf.mxu0
  %v1027 = vadd.f32 %v1002, %v1026
  %1028 = vmatmul.bf16.gmra.mxu0 %v1013
  %v1029 = vpop.f32.mrf.mxu0
  %v1030 = vadd.f32 %v1005, %v1029
  %v1031 = vpop.f32.mrf.mxu0
  %v1032 = vadd.f32 %v1007, %v1031
  %1033 = vdwg.mxu0
  %v1034 = vadd.f32 %v1025, %v609
  %v1035 = vadd.f32 %v1027, %v609
  %v1036 = vadd.f32 %v1030, %v609
  %v1037 = vadd.f32 %v1032, %v609
  %v1038 = vxor.u32 %v1034, 2147483648
  %v1039 = vxor.u32 %v1035, 2147483648
  %v1040 = vxor.u32 %v1036, 2147483648
  %v1041 = vxor.u32 %v1037, 2147483648
  %v1042 = vmul.f32 %v1038, 1.442695
  %v1043 = vpow.pop %v1042
  %v1044 = vmul.f32 %v1039, 1.442695
  %v1045 = vpow.pop %v1044
  %v1046 = vmul.f32 %v1040, 1.442695
  %v1047 = vpow.pop %v1046
  %v1048 = vmul.f32 %v1041, 1.442695
  %v1049 = vpow.pop %v1048
  %v1050 = vadd.f32 %v1043, 1.0
  %v1051 = vadd.f32 %v1045, 1.0
  %v1052 = vadd.f32 %v1047, 1.0
  %v1053 = vadd.f32 %v1049, 1.0
  %v1054 = vrcp.pop %v1050
  %v1055 = vmul.f32 %v1050, %v1054
  %v1056 = vsub.f32 1.0, %v1055
  %v1057 = vmul.f32 %v1054, %v1056
  %v1058 = vadd.f32 %v1054, %v1057
  %vm1059 = vweird.f32 %v1050
  %vm1060 = vweird.f32 %v1054
  %vm1061 = vmor %vm1059, %vm1060
  %v1062 = vsel %vm1061, %v1054, %v1058
  %v1063 = vand.u32 2147483647, %v1050
  %vm1064 = vcmp.eq.f32.partialorder %v1063, 8.507059e+37
  %v1065 = vand.u32 %v1050, 2147483648
  %v1066 = vor.u32 1.1754944e-38, %v1065
  %v1067 = vsel %vm1064, %v1066, %v1062
  %v1068 = vmul.f32 1.0, %v1067
  %v1069 = vrcp.pop %v1051
  %v1070 = vmul.f32 %v1051, %v1069
  %v1071 = vsub.f32 1.0, %v1070
  %v1072 = vmul.f32 %v1069, %v1071
  %v1073 = vadd.f32 %v1069, %v1072
  %vm1074 = vweird.f32 %v1051
  %vm1075 = vweird.f32 %v1069
  %vm1076 = vmor %vm1074, %vm1075
  %v1077 = vsel %vm1076, %v1069, %v1073
  %v1078 = vand.u32 2147483647, %v1051
  %vm1079 = vcmp.eq.f32.partialorder %v1078, 8.507059e+37
  %v1080 = vand.u32 %v1051, 2147483648
  %v1081 = vor.u32 1.1754944e-38, %v1080
  %v1082 = vsel %vm1079, %v1081, %v1077
  %v1083 = vmul.f32 1.0, %v1082
  %v1084 = vrcp.pop %v1052
  %v1085 = vmul.f32 %v1052, %v1084
  %v1086 = vsub.f32 1.0, %v1085
  %v1087 = vmul.f32 %v1084, %v1086
  %v1088 = vadd.f32 %v1084, %v1087
  %vm1089 = vweird.f32 %v1052
  %vm1090 = vweird.f32 %v1084
  %vm1091 = vmor %vm1089, %vm1090
  %v1092 = vsel %vm1091, %v1084, %v1088
  %v1093 = vand.u32 2147483647, %v1052
  %vm1094 = vcmp.eq.f32.partialorder %v1093, 8.507059e+37
  %v1095 = vand.u32 %v1052, 2147483648
  %v1096 = vor.u32 1.1754944e-38, %v1095
  %v1097 = vsel %vm1094, %v1096, %v1092
  %v1098 = vmul.f32 1.0, %v1097
  %v1099 = vrcp.pop %v1053
  %v1100 = vmul.f32 %v1053, %v1099
  %v1101 = vsub.f32 1.0, %v1100
  %v1102 = vmul.f32 %v1099, %v1101
  %v1103 = vadd.f32 %v1099, %v1102
  %vm1104 = vweird.f32 %v1053
  %vm1105 = vweird.f32 %v1099
  %vm1106 = vmor %vm1104, %vm1105
  %v1107 = vsel %vm1106, %v1099, %v1103
  %v1108 = vand.u32 2147483647, %v1053
  %vm1109 = vcmp.eq.f32.partialorder %v1108, 8.507059e+37
  %v1110 = vand.u32 %v1053, 2147483648
  %v1111 = vor.u32 1.1754944e-38, %v1110
  %v1112 = vsel %vm1109, %v1111, %v1107
  %v1113 = vmul.f32 1.0, %v1112
  %v1114 = vmul.f32 %v1068, %v880
  %v1115 = vmul.f32 %v1083, %v881
  %v1116 = vmul.f32 %v1098, %v882
  %v1117 = vmul.f32 %v1113, %v883
  %v1118 = vsub.f32 1.0, %v1068
  %v1119 = vsub.f32 1.0, %v1083
  %v1120 = vsub.f32 1.0, %v1098
  %v1121 = vsub.f32 1.0, %v1113
  %v1122 = vmul.f32 %v1118, %v976
  %v1123 = vmul.f32 %v1119, %v977
  %v1124 = vmul.f32 %v1120, %v978
  %v1125 = vmul.f32 %v1121, %v979
  %v1126 = vadd.f32 %v1114, %v1122
  %v1127 = vadd.f32 %v1115, %v1123
  %v1128 = vadd.f32 %v1116, %v1124
  %v1129 = vadd.f32 %v1117, %v1125
  %v1130 = vsel %vm115, %v1126, 0.0
  %1131 = vadd.xlane.f32.xlu0 %v1130
  %v1132 = vpop.xlane.xlu0 %1131
  %v1133 = vsel %vm115, %v1127, 0.0
  %1134 = vadd.xlane.f32.xlu0 %v1133
  %v1135 = vpop.xlane.xlu0 %1134
  %v1136 = vsel %vm115, %v1128, 0.0
  %1137 = vadd.xlane.f32.xlu0 %v1136
  %v1138 = vpop.xlane.xlu0 %1137
  %v1139 = vsel %vm115, %v1129, 0.0
  %1140 = vadd.xlane.f32.xlu0 %v1139
  %v1141 = vpop.xlane.xlu0 %1140
  %v1142 = vmul.f32 %v1132, %v285
  %v1143 = vmul.f32 %v1135, %v285
  %v1144 = vmul.f32 %v1138, %v285
  %v1145 = vmul.f32 %v1141, %v285
  %v1146 = vsub.f32 %v1126, %v1142
  %v1147 = vsub.f32 %v1127, %v1143
  %v1148 = vsub.f32 %v1128, %v1144
  %v1149 = vsub.f32 %v1129, %v1145
  %v1150 = vmul.f32 %v1146, %v1146
  %v1151 = vmul.f32 %v1147, %v1147
  %v1152 = vmul.f32 %v1148, %v1148
  %v1153 = vmul.f32 %v1149, %v1149
  %v1154 = vsel %vm115, %v1150, 0.0
  %1155 = vadd.xlane.f32.xlu0 %v1154
  %v1156 = vpop.xlane.xlu0 %1155
  %v1157 = vsel %vm115, %v1151, 0.0
  %1158 = vadd.xlane.f32.xlu0 %v1157
  %v1159 = vpop.xlane.xlu0 %1158
  %v1160 = vsel %vm115, %v1152, 0.0
  %1161 = vadd.xlane.f32.xlu0 %v1160
  %v1162 = vpop.xlane.xlu0 %1161
  %v1163 = vsel %vm115, %v1153, 0.0
  %1164 = vadd.xlane.f32.xlu0 %v1163
  %v1165 = vpop.xlane.xlu0 %1164
  %v1166 = vmul.f32 %v1156, %v285
  %v1167 = vmul.f32 %v1159, %v285
  %v1168 = vmul.f32 %v1162, %v285
  %v1169 = vmul.f32 %v1165, %v285
  %v1170 = vadd.f32 %v1166, 1e-05
  %v1171 = vadd.f32 %v1167, 1e-05
  %v1172 = vadd.f32 %v1168, 1e-05
  %v1173 = vadd.f32 %v1169, 1e-05
  %v1174 = vrsqrt.pop %v1170
  %v1175 = vmul.f32 %v1174, %v1170
  %v1176 = vmul.f32 %v1175, %v1174
  %v1177 = vmul.f32 0.5, %v1176
  %v1178 = vsub.f32 1.5, %v1177
  %v1179 = vmul.f32 %v1174, %v1178
  %vm1180 = vweird.f32 %v1170
  %vm1181 = vweird.f32 %v1174
  %vm1182 = vmor %vm1180, %vm1181
  %v1183 = vsel %vm1182, %v1174, %v1179
  %v1184 = vrsqrt.pop %v1171
  %v1185 = vmul.f32 %v1184, %v1171
  %v1186 = vmul.f32 %v1185, %v1184
  %v1187 = vmul.f32 0.5, %v1186
  %v1188 = vsub.f32 1.5, %v1187
  %v1189 = vmul.f32 %v1184, %v1188
  %vm1190 = vweird.f32 %v1171
  %vm1191 = vweird.f32 %v1184
  %vm1192 = vmor %vm1190, %vm1191
  %v1193 = vsel %vm1192, %v1184, %v1189
  %v1194 = vrsqrt.pop %v1172
  %v1195 = vmul.f32 %v1194, %v1172
  %v1196 = vmul.f32 %v1195, %v1194
  %v1197 = vmul.f32 0.5, %v1196
  %v1198 = vsub.f32 1.5, %v1197
  %v1199 = vmul.f32 %v1194, %v1198
  %vm1200 = vweird.f32 %v1172
  %vm1201 = vweird.f32 %v1194
  %vm1202 = vmor %vm1200, %vm1201
  %v1203 = vsel %vm1202, %v1194, %v1199
  %v1204 = vrsqrt.pop %v1173
  %v1205 = vmul.f32 %v1204, %v1173
  %v1206 = vmul.f32 %v1205, %v1204
  %v1207 = vmul.f32 0.5, %v1206
  %v1208 = vsub.f32 1.5, %v1207
  %v1209 = vmul.f32 %v1204, %v1208
  %vm1210 = vweird.f32 %v1173
  %vm1211 = vweird.f32 %v1204
  %vm1212 = vmor %vm1210, %vm1211
  %v1213 = vsel %vm1212, %v1204, %v1209
  %v1214 = vmul.f32 %v1146, %v1183
  %v1215 = vmul.f32 %v1147, %v1193
  %v1216 = vmul.f32 %v1148, %v1203
  %v1217 = vmul.f32 %v1149, %v1213
  %v1218 = vmul.f32 %v1214, %v871
  %v1219 = vmul.f32 %v1215, %v871
  %v1220 = vmul.f32 %v1216, %v871
  %v1221 = vmul.f32 %v1217, %v871
  %v1222 = vadd.f32 %v1218, %v878
  %v1223 = vadd.f32 %v1219, %v878
  %v1224 = vadd.f32 %v1220, %v878
  %v1225 = vadd.f32 %v1221, %v878
  %v1226 = vadd.f32 %v372, %v1222
  %v1227 = vadd.f32 %v373, %v1223
  %v1228 = vadd.f32 %v374, %v1224
  %v1229 = vadd.f32 %v375, %v1225
  %v1230 = vsel %vm115, %v1226, 0.0
  %1231 = vadd.xlane.f32.xlu0 %v1230
  %v1232 = vpop.xlane.xlu0 %1231
  %v1233 = vsel %vm115, %v1227, 0.0
  %1234 = vadd.xlane.f32.xlu0 %v1233
  %v1235 = vpop.xlane.xlu0 %1234
  %v1236 = vsel %vm115, %v1228, 0.0
  %1237 = vadd.xlane.f32.xlu0 %v1236
  %v1238 = vpop.xlane.xlu0 %1237
  %v1239 = vsel %vm115, %v1229, 0.0
  %1240 = vadd.xlane.f32.xlu0 %v1239
  %v1241 = vpop.xlane.xlu0 %1240
  %v1242 = vmul.f32 %v1232, %v285
  %v1243 = vmul.f32 %v1235, %v285
  %v1244 = vmul.f32 %v1238, %v285
  %v1245 = vmul.f32 %v1241, %v285
  %v1246 = vsub.f32 %v1226, %v1242
  %v1247 = vsub.f32 %v1227, %v1243
  %v1248 = vsub.f32 %v1228, %v1244
  %v1249 = vsub.f32 %v1229, %v1245
  %v1250 = vmul.f32 %v1246, %v1246
  %v1251 = vmul.f32 %v1247, %v1247
  %v1252 = vmul.f32 %v1248, %v1248
  %v1253 = vmul.f32 %v1249, %v1249
  %v1254 = vsel %vm115, %v1250, 0.0
  %1255 = vadd.xlane.f32.xlu0 %v1254
  %v1256 = vpop.xlane.xlu0 %1255
  %v1257 = vsel %vm115, %v1251, 0.0
  %1258 = vadd.xlane.f32.xlu0 %v1257
  %v1259 = vpop.xlane.xlu0 %1258
  %v1260 = vsel %vm115, %v1252, 0.0
  %1261 = vadd.xlane.f32.xlu0 %v1260
  %v1262 = vpop.xlane.xlu0 %1261
  %v1263 = vsel %vm115, %v1253, 0.0
  %1264 = vadd.xlane.f32.xlu0 %v1263
  %v1265 = vpop.xlane.xlu0 %1264
  %v1266 = vmul.f32 %v1256, %v285
  %v1267 = vmul.f32 %v1259, %v285
  %v1268 = vmul.f32 %v1262, %v285
  %v1269 = vmul.f32 %v1265, %v285
  %v1270 = vadd.f32 %v1266, 1e-05
  %v1271 = vadd.f32 %v1267, 1e-05
  %v1272 = vadd.f32 %v1268, 1e-05
  %v1273 = vadd.f32 %v1269, 1e-05
  %v1274 = vrsqrt.pop %v1270
  %v1275 = vmul.f32 %v1274, %v1270
  %v1276 = vmul.f32 %v1275, %v1274
  %v1277 = vmul.f32 0.5, %v1276
  %v1278 = vsub.f32 1.5, %v1277
  %v1279 = vmul.f32 %v1274, %v1278
  %vm1280 = vweird.f32 %v1270
  %vm1281 = vweird.f32 %v1274
  %vm1282 = vmor %vm1280, %vm1281
  %v1283 = vsel %vm1282, %v1274, %v1279
  %v1284 = vrsqrt.pop %v1271
  %v1285 = vmul.f32 %v1284, %v1271
  %v1286 = vmul.f32 %v1285, %v1284
  %v1287 = vmul.f32 0.5, %v1286
  %v1288 = vsub.f32 1.5, %v1287
  %v1289 = vmul.f32 %v1284, %v1288
  %vm1290 = vweird.f32 %v1271
  %vm1291 = vweird.f32 %v1284
  %vm1292 = vmor %vm1290, %vm1291
  %v1293 = vsel %vm1292, %v1284, %v1289
  %v1294 = vrsqrt.pop %v1272
  %v1295 = vmul.f32 %v1294, %v1272
  %v1296 = vmul.f32 %v1295, %v1294
  %v1297 = vmul.f32 0.5, %v1296
  %v1298 = vsub.f32 1.5, %v1297
  %v1299 = vmul.f32 %v1294, %v1298
  %vm1300 = vweird.f32 %v1272
  %vm1301 = vweird.f32 %v1294
  %vm1302 = vmor %vm1300, %vm1301
  %v1303 = vsel %vm1302, %v1294, %v1299
  %v1304 = vrsqrt.pop %v1273
  %v1305 = vmul.f32 %v1304, %v1273
  %v1306 = vmul.f32 %v1305, %v1304
  %v1307 = vmul.f32 0.5, %v1306
  %v1308 = vsub.f32 1.5, %v1307
  %v1309 = vmul.f32 %v1304, %v1308
  %vm1310 = vweird.f32 %v1273
  %vm1311 = vweird.f32 %v1304
  %vm1312 = vmor %vm1310, %vm1311
  %v1313 = vsel %vm1312, %v1304, %v1309
  %v1314 = vmul.f32 %v1246, %v1283
  %v1315 = vmul.f32 %v1247, %v1293
  %v1316 = vmul.f32 %v1248, %v1303
  %v1317 = vmul.f32 %v1249, %v1313
  %v1318 = vmul.f32 %v1314, %v363
  %v1319 = vmul.f32 %v1315, %v363
  %v1320 = vmul.f32 %v1316, %v363
  %v1321 = vmul.f32 %v1317, %v363
  %v1322 = vadd.f32 %v1318, %v370
  %v1323 = vadd.f32 %v1319, %v370
  %v1324 = vadd.f32 %v1320, %v370
  %v1325 = vadd.f32 %v1321, %v370
  %s1326 = scalar_lea.vmem %s5, 64
  %v1327 = vld [vmem:[%s1326] sm:$0xff]
  %v1328 = vld [vmem:[%s1326 + $0x8] sm:$0xff]
  %v1329 = vld [vmem:[%s1326 + $0x10] sm:$0xff]
  %v1330 = vld [vmem:[%s1326 + $0x18] sm:$0xff]
  %v1331 = vld [vmem:[%s1326 + $0x20] sm:$0xff]
  %v1332 = vld [vmem:[%s1326 + $0x28] sm:$0xff]
  %v1333 = vld [vmem:[%s1326 + $0x30] sm:$0xff]
  %v1334 = vld [vmem:[%s1326 + $0x38] sm:$0xff]
  %s1335 = scalar_lea.vmem %s6, 1
  %v1336 = vld [vmem:[%s1335] sm:$0x1]
  %s1337 = scalar_lea.vmem %s7, 64
  %v1338 = vld [vmem:[%s1337] sm:$0xff]
  %v1339 = vld [vmem:[%s1337 + $0x8] sm:$0xff]
  %v1340 = vld [vmem:[%s1337 + $0x10] sm:$0xff]
  %v1341 = vld [vmem:[%s1337 + $0x18] sm:$0xff]
  %v1342 = vld [vmem:[%s1337 + $0x20] sm:$0xff]
  %v1343 = vld [vmem:[%s1337 + $0x28] sm:$0xff]
  %v1344 = vld [vmem:[%s1337 + $0x30] sm:$0xff]
  %v1345 = vld [vmem:[%s1337 + $0x38] sm:$0xff]
  %s1346 = scalar_lea.vmem %s8, 1
  %v1347 = vld [vmem:[%s1346] sm:$0x1]
  %s1348 = scalar_lea.vmem %s9, 1
  %v1349 = vld [vmem:[%s1348] sm:$0x1]
  %s1350 = scalar_lea.vmem %s10, 1
  %v1351 = vld [vmem:[%s1350] sm:$0x1]
  %s1352 = scalar_lea.vmem %s11, 32
  %v1353 = vld [vmem:[%s1352] sm:$0xff]
  %v1354 = vld [vmem:[%s1352 + $0x8] sm:$0xff]
  %v1355 = vld [vmem:[%s1352 + $0x10] sm:$0xff]
  %v1356 = vld [vmem:[%s1352 + $0x18] sm:$0xff]
  %s1357 = scalar_lea.vmem %s12, 1
  %v1358 = vld [vmem:[%s1357] sm:$0x1]
  %v1359 = vpack.c.bf16 %v1323, %v1322
  %v1360 = vpack.c.bf16 %v1325, %v1324
  %v1361 = vpack.c.bf16 %v1328, %v1327
  %v1362 = vpack.c.bf16 %v1330, %v1329
  %v1363 = vpack.c.bf16 %v80, %v79
  %v1364 = vpack.c.bf16 %v82, %v81
  %v1365 = vpack.c.bf16 %v1332, %v1331
  %v1366 = vpack.c.bf16 %v1334, %v1333
  %v1368 = vsel %vm115, %v1363, 0
  %v1371 = vsel %vm115, %v1364, 0
  %1373 = vmatpush.bf16.msra.mxu0 0
  %1374 = vmatpush.bf16.msra.mxu0 0
  %1375 = vmatpush.bf16.msra.mxu0 0
  %1376 = vmatpush.bf16.msra.mxu0 0
  %1377 = vmatpush.bf16.msra.mxu0 0
  %1378 = vmatpush.bf16.msra.mxu0 0
  %1379 = vmatpush.bf16.msra.mxu0 %v1366
  %1380 = vmatpush.bf16.msra.mxu0 %v1365
  %1381 = vmatmul.bf16.gmra.mxu0 %v1368
  %v1382 = vpop.f32.mrf.mxu0
  %v1383 = vadd.f32 0.0, %v1382
  %v1384 = vpop.f32.mrf.mxu0
  %v1385 = vadd.f32 0.0, %v1384
  %1386 = vmatmul.bf16.gmra.mxu0 %v1371
  %v1387 = vpop.f32.mrf.mxu0
  %v1388 = vadd.f32 0.0, %v1387
  %v1389 = vpop.f32.mrf.mxu0
  %v1390 = vadd.f32 0.0, %v1389
  %1391 = vdwg.mxu0
  %v1393 = vsel %vm115, %v1359, 0
  %v1396 = vsel %vm115, %v1360, 0
  %1398 = vmatpush.bf16.msra.mxu0 0
  %1399 = vmatpush.bf16.msra.mxu0 0
  %1400 = vmatpush.bf16.msra.mxu0 0
  %1401 = vmatpush.bf16.msra.mxu0 0
  %1402 = vmatpush.bf16.msra.mxu0 0
  %1403 = vmatpush.bf16.msra.mxu0 0
  %1404 = vmatpush.bf16.msra.mxu0 %v1362
  %1405 = vmatpush.bf16.msra.mxu0 %v1361
  %1406 = vmatmul.bf16.gmra.mxu0 %v1393
  %v1407 = vpop.f32.mrf.mxu0
  %v1408 = vadd.f32 %v1383, %v1407
  %v1409 = vpop.f32.mrf.mxu0
  %v1410 = vadd.f32 %v1385, %v1409
  %1411 = vmatmul.bf16.gmra.mxu0 %v1396
  %v1412 = vpop.f32.mrf.mxu0
  %v1413 = vadd.f32 %v1388, %v1412
  %v1414 = vpop.f32.mrf.mxu0
  %v1415 = vadd.f32 %v1390, %v1414
  %1416 = vdwg.mxu0
  %v1418 = vperm.slane %v1336, 0
  %v1420 = vadd.f32 %v1408, %v1418
  %v1421 = vadd.f32 %v1410, %v1418
  %v1422 = vadd.f32 %v1413, %v1418
  %v1423 = vadd.f32 %v1415, %v1418
  %v1424 = vxor.u32 %v1420, 2147483648
  %v1425 = vxor.u32 %v1421, 2147483648
  %v1426 = vxor.u32 %v1422, 2147483648
  %v1427 = vxor.u32 %v1423, 2147483648
  %v1428 = vmul.f32 %v1424, 1.442695
  %v1429 = vpow.pop %v1428
  %v1430 = vmul.f32 %v1425, 1.442695
  %v1431 = vpow.pop %v1430
  %v1432 = vmul.f32 %v1426, 1.442695
  %v1433 = vpow.pop %v1432
  %v1434 = vmul.f32 %v1427, 1.442695
  %v1435 = vpow.pop %v1434
  %v1436 = vadd.f32 %v1429, 1.0
  %v1437 = vadd.f32 %v1431, 1.0
  %v1438 = vadd.f32 %v1433, 1.0
  %v1439 = vadd.f32 %v1435, 1.0
  %v1440 = vrcp.pop %v1436
  %v1441 = vmul.f32 %v1436, %v1440
  %v1442 = vsub.f32 1.0, %v1441
  %v1443 = vmul.f32 %v1440, %v1442
  %v1444 = vadd.f32 %v1440, %v1443
  %vm1445 = vweird.f32 %v1436
  %vm1446 = vweird.f32 %v1440
  %vm1447 = vmor %vm1445, %vm1446
  %v1448 = vsel %vm1447, %v1440, %v1444
  %v1449 = vand.u32 2147483647, %v1436
  %vm1450 = vcmp.eq.f32.partialorder %v1449, 8.507059e+37
  %v1451 = vand.u32 %v1436, 2147483648
  %v1452 = vor.u32 1.1754944e-38, %v1451
  %v1453 = vsel %vm1450, %v1452, %v1448
  %v1454 = vmul.f32 1.0, %v1453
  %v1455 = vrcp.pop %v1437
  %v1456 = vmul.f32 %v1437, %v1455
  %v1457 = vsub.f32 1.0, %v1456
  %v1458 = vmul.f32 %v1455, %v1457
  %v1459 = vadd.f32 %v1455, %v1458
  %vm1460 = vweird.f32 %v1437
  %vm1461 = vweird.f32 %v1455
  %vm1462 = vmor %vm1460, %vm1461
  %v1463 = vsel %vm1462, %v1455, %v1459
  %v1464 = vand.u32 2147483647, %v1437
  %vm1465 = vcmp.eq.f32.partialorder %v1464, 8.507059e+37
  %v1466 = vand.u32 %v1437, 2147483648
  %v1467 = vor.u32 1.1754944e-38, %v1466
  %v1468 = vsel %vm1465, %v1467, %v1463
  %v1469 = vmul.f32 1.0, %v1468
  %v1470 = vrcp.pop %v1438
  %v1471 = vmul.f32 %v1438, %v1470
  %v1472 = vsub.f32 1.0, %v1471
  %v1473 = vmul.f32 %v1470, %v1472
  %v1474 = vadd.f32 %v1470, %v1473
  %vm1475 = vweird.f32 %v1438
  %vm1476 = vweird.f32 %v1470
  %vm1477 = vmor %vm1475, %vm1476
  %v1478 = vsel %vm1477, %v1470, %v1474
  %v1479 = vand.u32 2147483647, %v1438
  %vm1480 = vcmp.eq.f32.partialorder %v1479, 8.507059e+37
  %v1481 = vand.u32 %v1438, 2147483648
  %v1482 = vor.u32 1.1754944e-38, %v1481
  %v1483 = vsel %vm1480, %v1482, %v1478
  %v1484 = vmul.f32 1.0, %v1483
  %v1485 = vrcp.pop %v1439
  %v1486 = vmul.f32 %v1439, %v1485
  %v1487 = vsub.f32 1.0, %v1486
  %v1488 = vmul.f32 %v1485, %v1487
  %v1489 = vadd.f32 %v1485, %v1488
  %vm1490 = vweird.f32 %v1439
  %vm1491 = vweird.f32 %v1485
  %vm1492 = vmor %vm1490, %vm1491
  %v1493 = vsel %vm1492, %v1485, %v1489
  %v1494 = vand.u32 2147483647, %v1439
  %vm1495 = vcmp.eq.f32.partialorder %v1494, 8.507059e+37
  %v1496 = vand.u32 %v1439, 2147483648
  %v1497 = vor.u32 1.1754944e-38, %v1496
  %v1498 = vsel %vm1495, %v1497, %v1493
  %v1499 = vmul.f32 1.0, %v1498
  %v1500 = vmul.f32 %v1454, %v1322
  %v1501 = vmul.f32 %v1469, %v1323
  %v1502 = vmul.f32 %v1484, %v1324
  %v1503 = vmul.f32 %v1499, %v1325
  %v1504 = vsub.f32 1.0, %v1454
  %v1505 = vsub.f32 1.0, %v1469
  %v1506 = vsub.f32 1.0, %v1484
  %v1507 = vsub.f32 1.0, %v1499
  %v1508 = vmul.f32 %v1504, %v79
  %v1509 = vmul.f32 %v1505, %v80
  %v1510 = vmul.f32 %v1506, %v81
  %v1511 = vmul.f32 %v1507, %v82
  %v1512 = vadd.f32 %v1500, %v1508
  %v1513 = vadd.f32 %v1501, %v1509
  %v1514 = vadd.f32 %v1502, %v1510
  %v1515 = vadd.f32 %v1503, %v1511
  %v1516 = vpack.c.bf16 %v1339, %v1338
  %v1517 = vpack.c.bf16 %v1341, %v1340
  %v1518 = vpack.c.bf16 %v85, %v84
  %v1519 = vpack.c.bf16 %v87, %v86
  %v1520 = vpack.c.bf16 %v1343, %v1342
  %v1521 = vpack.c.bf16 %v1345, %v1344
  %v1523 = vsel %vm115, %v1518, 0
  %v1526 = vsel %vm115, %v1519, 0
  %1528 = vmatpush.bf16.msra.mxu0 0
  %1529 = vmatpush.bf16.msra.mxu0 0
  %1530 = vmatpush.bf16.msra.mxu0 0
  %1531 = vmatpush.bf16.msra.mxu0 0
  %1532 = vmatpush.bf16.msra.mxu0 0
  %1533 = vmatpush.bf16.msra.mxu0 0
  %1534 = vmatpush.bf16.msra.mxu0 %v1521
  %1535 = vmatpush.bf16.msra.mxu0 %v1520
  %1536 = vmatmul.bf16.gmra.mxu0 %v1523
  %v1537 = vpop.f32.mrf.mxu0
  %v1538 = vadd.f32 0.0, %v1537
  %v1539 = vpop.f32.mrf.mxu0
  %v1540 = vadd.f32 0.0, %v1539
  %1541 = vmatmul.bf16.gmra.mxu0 %v1526
  %v1542 = vpop.f32.mrf.mxu0
  %v1543 = vadd.f32 0.0, %v1542
  %v1544 = vpop.f32.mrf.mxu0
  %v1545 = vadd.f32 0.0, %v1544
  %1546 = vdwg.mxu0
  %1547 = vmatpush.bf16.msra.mxu0 0
  %1548 = vmatpush.bf16.msra.mxu0 0
  %1549 = vmatpush.bf16.msra.mxu0 0
  %1550 = vmatpush.bf16.msra.mxu0 0
  %1551 = vmatpush.bf16.msra.mxu0 0
  %1552 = vmatpush.bf16.msra.mxu0 0
  %1553 = vmatpush.bf16.msra.mxu0 %v1517
  %1554 = vmatpush.bf16.msra.mxu0 %v1516
  %1555 = vmatmul.bf16.gmra.mxu0 %v1393
  %v1556 = vpop.f32.mrf.mxu0
  %v1557 = vadd.f32 %v1538, %v1556
  %v1558 = vpop.f32.mrf.mxu0
  %v1559 = vadd.f32 %v1540, %v1558
  %1560 = vmatmul.bf16.gmra.mxu0 %v1396
  %v1561 = vpop.f32.mrf.mxu0
  %v1562 = vadd.f32 %v1543, %v1561
  %v1563 = vpop.f32.mrf.mxu0
  %v1564 = vadd.f32 %v1545, %v1563
  %1565 = vdwg.mxu0
  %v1567 = vperm.slane %v1347, 0
  %v1569 = vadd.f32 %v1557, %v1567
  %v1570 = vadd.f32 %v1559, %v1567
  %v1571 = vadd.f32 %v1562, %v1567
  %v1572 = vadd.f32 %v1564, %v1567
  %v1573 = vxor.u32 %v1569, 2147483648
  %v1574 = vxor.u32 %v1570, 2147483648
  %v1575 = vxor.u32 %v1571, 2147483648
  %v1576 = vxor.u32 %v1572, 2147483648
  %v1577 = vmul.f32 %v1573, 1.442695
  %v1578 = vpow.pop %v1577
  %v1579 = vmul.f32 %v1574, 1.442695
  %v1580 = vpow.pop %v1579
  %v1581 = vmul.f32 %v1575, 1.442695
  %v1582 = vpow.pop %v1581
  %v1583 = vmul.f32 %v1576, 1.442695
  %v1584 = vpow.pop %v1583
  %v1585 = vadd.f32 %v1578, 1.0
  %v1586 = vadd.f32 %v1580, 1.0
  %v1587 = vadd.f32 %v1582, 1.0
  %v1588 = vadd.f32 %v1584, 1.0
  %v1589 = vrcp.pop %v1585
  %v1590 = vmul.f32 %v1585, %v1589
  %v1591 = vsub.f32 1.0, %v1590
  %v1592 = vmul.f32 %v1589, %v1591
  %v1593 = vadd.f32 %v1589, %v1592
  %vm1594 = vweird.f32 %v1585
  %vm1595 = vweird.f32 %v1589
  %vm1596 = vmor %vm1594, %vm1595
  %v1597 = vsel %vm1596, %v1589, %v1593
  %v1598 = vand.u32 2147483647, %v1585
  %vm1599 = vcmp.eq.f32.partialorder %v1598, 8.507059e+37
  %v1600 = vand.u32 %v1585, 2147483648
  %v1601 = vor.u32 1.1754944e-38, %v1600
  %v1602 = vsel %vm1599, %v1601, %v1597
  %v1603 = vmul.f32 1.0, %v1602
  %v1604 = vrcp.pop %v1586
  %v1605 = vmul.f32 %v1586, %v1604
  %v1606 = vsub.f32 1.0, %v1605
  %v1607 = vmul.f32 %v1604, %v1606
  %v1608 = vadd.f32 %v1604, %v1607
  %vm1609 = vweird.f32 %v1586
  %vm1610 = vweird.f32 %v1604
  %vm1611 = vmor %vm1609, %vm1610
  %v1612 = vsel %vm1611, %v1604, %v1608
  %v1613 = vand.u32 2147483647, %v1586
  %vm1614 = vcmp.eq.f32.partialorder %v1613, 8.507059e+37
  %v1615 = vand.u32 %v1586, 2147483648
  %v1616 = vor.u32 1.1754944e-38, %v1615
  %v1617 = vsel %vm1614, %v1616, %v1612
  %v1618 = vmul.f32 1.0, %v1617
  %v1619 = vrcp.pop %v1587
  %v1620 = vmul.f32 %v1587, %v1619
  %v1621 = vsub.f32 1.0, %v1620
  %v1622 = vmul.f32 %v1619, %v1621
  %v1623 = vadd.f32 %v1619, %v1622
  %vm1624 = vweird.f32 %v1587
  %vm1625 = vweird.f32 %v1619
  %vm1626 = vmor %vm1624, %vm1625
  %v1627 = vsel %vm1626, %v1619, %v1623
  %v1628 = vand.u32 2147483647, %v1587
  %vm1629 = vcmp.eq.f32.partialorder %v1628, 8.507059e+37
  %v1630 = vand.u32 %v1587, 2147483648
  %v1631 = vor.u32 1.1754944e-38, %v1630
  %v1632 = vsel %vm1629, %v1631, %v1627
  %v1633 = vmul.f32 1.0, %v1632
  %v1634 = vrcp.pop %v1588
  %v1635 = vmul.f32 %v1588, %v1634
  %v1636 = vsub.f32 1.0, %v1635
  %v1637 = vmul.f32 %v1634, %v1636
  %v1638 = vadd.f32 %v1634, %v1637
  %vm1639 = vweird.f32 %v1588
  %vm1640 = vweird.f32 %v1634
  %vm1641 = vmor %vm1639, %vm1640
  %v1642 = vsel %vm1641, %v1634, %v1638
  %v1643 = vand.u32 2147483647, %v1588
  %vm1644 = vcmp.eq.f32.partialorder %v1643, 8.507059e+37
  %v1645 = vand.u32 %v1588, 2147483648
  %v1646 = vor.u32 1.1754944e-38, %v1645
  %v1647 = vsel %vm1644, %v1646, %v1642
  %v1648 = vmul.f32 1.0, %v1647
  %v1649 = vmul.f32 %v1603, %v1322
  %v1650 = vmul.f32 %v1618, %v1323
  %v1651 = vmul.f32 %v1633, %v1324
  %v1652 = vmul.f32 %v1648, %v1325
  %v1653 = vsub.f32 1.0, %v1603
  %v1654 = vsub.f32 1.0, %v1618
  %v1655 = vsub.f32 1.0, %v1633
  %v1656 = vsub.f32 1.0, %v1648
  %v1657 = vmul.f32 %v1653, %v84
  %v1658 = vmul.f32 %v1654, %v85
  %v1659 = vmul.f32 %v1655, %v86
  %v1660 = vmul.f32 %v1656, %v87
  %v1661 = vadd.f32 %v1649, %v1657
  %v1662 = vadd.f32 %v1650, %v1658
  %v1663 = vadd.f32 %v1651, %v1659
  %v1664 = vadd.f32 %v1652, %v1660
  %v1665 = vpack.c.bf16 %v1513, %v1512
  %v1666 = vpack.c.bf16 %v1515, %v1514
  %v1667 = vpack.c.bf16 %v1354, %v1353
  %v1668 = vpack.c.bf16 %v1356, %v1355
  %v1670 = vsel %vm115, %v1665, 0
  %v1673 = vsel %vm115, %v1666, 0
  %1675 = vmatpush.bf16.msra.mxu0 0
  %1676 = vmatpush.bf16.msra.mxu0 0
  %1677 = vmatpush.bf16.msra.mxu0 0
  %1678 = vmatpush.bf16.msra.mxu0 0
  %1679 = vmatpush.bf16.msra.mxu0 0
  %1680 = vmatpush.bf16.msra.mxu0 0
  %1681 = vmatpush.bf16.msra.mxu0 %v1668
  %1682 = vmatpush.bf16.msra.mxu0 %v1667
  %1683 = vmatmul.bf16.gmra.mxu0 %v1670
  %v1684 = vpop.f32.mrf.mxu0
  %v1685 = vadd.f32 0.0, %v1684
  %v1686 = vpop.f32.mrf.mxu0
  %v1687 = vadd.f32 0.0, %v1686
  %1688 = vmatmul.bf16.gmra.mxu0 %v1673
  %v1689 = vpop.f32.mrf.mxu0
  %v1690 = vadd.f32 0.0, %v1689
  %v1691 = vpop.f32.mrf.mxu0
  %v1692 = vadd.f32 0.0, %v1691
  %1693 = vdwg.mxu0
  %v1694 = vadd.f32 %v1512, %v1685
  %v1695 = vadd.f32 %v1513, %v1687
  %v1696 = vadd.f32 %v1514, %v1690
  %v1697 = vadd.f32 %v1515, %v1692
  %v1699 = vperm.slane %v1358, 0
  %v1701 = vadd.f32 %v1694, %v1699
  %v1702 = vadd.f32 %v1695, %v1699
  %v1703 = vadd.f32 %v1696, %v1699
  %v1704 = vadd.f32 %v1697, %v1699
  %v1705 = vpack.c.bf16 %v1662, %v1661
  %v1706 = vpack.c.bf16 %v1664, %v1663
  %v1708 = vsel %vm115, %v1705, 0
  %v1711 = vsel %vm115, %v1706, 0
  %1713 = vmatpush.bf16.msra.mxu0 0
  %1714 = vmatpush.bf16.msra.mxu0 0
  %1715 = vmatpush.bf16.msra.mxu0 0
  %1716 = vmatpush.bf16.msra.mxu0 0
  %1717 = vmatpush.bf16.msra.mxu0 0
  %1718 = vmatpush.bf16.msra.mxu0 0
  %1719 = vmatpush.bf16.msra.mxu0 %v1668
  %1720 = vmatpush.bf16.msra.mxu0 %v1667
  %1721 = vmatmul.bf16.gmra.mxu0 %v1708
  %v1722 = vpop.f32.mrf.mxu0
  %v1723 = vadd.f32 0.0, %v1722
  %v1724 = vpop.f32.mrf.mxu0
  %v1725 = vadd.f32 0.0, %v1724
  %1726 = vmatmul.bf16.gmra.mxu0 %v1711
  %v1727 = vpop.f32.mrf.mxu0
  %v1728 = vadd.f32 0.0, %v1727
  %v1729 = vpop.f32.mrf.mxu0
  %v1730 = vadd.f32 0.0, %v1729
  %1731 = vdwg.mxu0
  %v1732 = vadd.f32 %v1661, %v1723
  %v1733 = vadd.f32 %v1662, %v1725
  %v1734 = vadd.f32 %v1663, %v1728
  %v1735 = vadd.f32 %v1664, %v1730
  %v1736 = vadd.f32 %v1732, %v1699
  %v1737 = vadd.f32 %v1733, %v1699
  %v1738 = vadd.f32 %v1734, %v1699
  %v1739 = vadd.f32 %v1735, %v1699
  %v1740 = vsel %vm115, %v1701, 0.0
  %1741 = vadd.xlane.f32.xlu0 %v1740
  %v1742 = vpop.xlane.xlu0 %1741
  %v1743 = vsel %vm115, %v1702, 0.0
  %1744 = vadd.xlane.f32.xlu0 %v1743
  %v1745 = vpop.xlane.xlu0 %1744
  %v1746 = vsel %vm115, %v1703, 0.0
  %1747 = vadd.xlane.f32.xlu0 %v1746
  %v1748 = vpop.xlane.xlu0 %1747
  %v1749 = vsel %vm115, %v1704, 0.0
  %1750 = vadd.xlane.f32.xlu0 %v1749
  %v1751 = vpop.xlane.xlu0 %1750
  %v1752 = vmul.f32 %v1742, %v285
  %v1753 = vmul.f32 %v1745, %v285
  %v1754 = vmul.f32 %v1748, %v285
  %v1755 = vmul.f32 %v1751, %v285
  %v1756 = vsub.f32 %v1701, %v1752
  %v1757 = vsub.f32 %v1702, %v1753
  %v1758 = vsub.f32 %v1703, %v1754
  %v1759 = vsub.f32 %v1704, %v1755
  %v1760 = vmul.f32 %v1756, %v1756
  %v1761 = vmul.f32 %v1757, %v1757
  %v1762 = vmul.f32 %v1758, %v1758
  %v1763 = vmul.f32 %v1759, %v1759
  %v1764 = vsel %vm115, %v1760, 0.0
  %1765 = vadd.xlane.f32.xlu0 %v1764
  %v1766 = vpop.xlane.xlu0 %1765
  %v1767 = vsel %vm115, %v1761, 0.0
  %1768 = vadd.xlane.f32.xlu0 %v1767
  %v1769 = vpop.xlane.xlu0 %1768
  %v1770 = vsel %vm115, %v1762, 0.0
  %1771 = vadd.xlane.f32.xlu0 %v1770
  %v1772 = vpop.xlane.xlu0 %1771
  %v1773 = vsel %vm115, %v1763, 0.0
  %1774 = vadd.xlane.f32.xlu0 %v1773
  %v1775 = vpop.xlane.xlu0 %1774
  %v1776 = vmul.f32 %v1766, %v285
  %v1777 = vmul.f32 %v1769, %v285
  %v1778 = vmul.f32 %v1772, %v285
  %v1779 = vmul.f32 %v1775, %v285
  %v1780 = vadd.f32 %v1776, 1e-05
  %v1781 = vadd.f32 %v1777, 1e-05
  %v1782 = vadd.f32 %v1778, 1e-05
  %v1783 = vadd.f32 %v1779, 1e-05
  %v1784 = vrsqrt.pop %v1780
  %v1785 = vmul.f32 %v1784, %v1780
  %v1786 = vmul.f32 %v1785, %v1784
  %v1787 = vmul.f32 0.5, %v1786
  %v1788 = vsub.f32 1.5, %v1787
  %v1789 = vmul.f32 %v1784, %v1788
  %vm1790 = vweird.f32 %v1780
  %vm1791 = vweird.f32 %v1784
  %vm1792 = vmor %vm1790, %vm1791
  %v1793 = vsel %vm1792, %v1784, %v1789
  %v1794 = vrsqrt.pop %v1781
  %v1795 = vmul.f32 %v1794, %v1781
  %v1796 = vmul.f32 %v1795, %v1794
  %v1797 = vmul.f32 0.5, %v1796
  %v1798 = vsub.f32 1.5, %v1797
  %v1799 = vmul.f32 %v1794, %v1798
  %vm1800 = vweird.f32 %v1781
  %vm1801 = vweird.f32 %v1794
  %vm1802 = vmor %vm1800, %vm1801
  %v1803 = vsel %vm1802, %v1794, %v1799
  %v1804 = vrsqrt.pop %v1782
  %v1805 = vmul.f32 %v1804, %v1782
  %v1806 = vmul.f32 %v1805, %v1804
  %v1807 = vmul.f32 0.5, %v1806
  %v1808 = vsub.f32 1.5, %v1807
  %v1809 = vmul.f32 %v1804, %v1808
  %vm1810 = vweird.f32 %v1782
  %vm1811 = vweird.f32 %v1804
  %vm1812 = vmor %vm1810, %vm1811
  %v1813 = vsel %vm1812, %v1804, %v1809
  %v1814 = vrsqrt.pop %v1783
  %v1815 = vmul.f32 %v1814, %v1783
  %v1816 = vmul.f32 %v1815, %v1814
  %v1817 = vmul.f32 0.5, %v1816
  %v1818 = vsub.f32 1.5, %v1817
  %v1819 = vmul.f32 %v1814, %v1818
  %vm1820 = vweird.f32 %v1783
  %vm1821 = vweird.f32 %v1814
  %vm1822 = vmor %vm1820, %vm1821
  %v1823 = vsel %vm1822, %v1814, %v1819
  %v1824 = vmul.f32 %v1756, %v1793
  %v1825 = vmul.f32 %v1757, %v1803
  %v1826 = vmul.f32 %v1758, %v1813
  %v1827 = vmul.f32 %v1759, %v1823
  %v1829 = vperm.slane %v1349, 0
  %v1831 = vmul.f32 %v1824, %v1829
  %v1832 = vmul.f32 %v1825, %v1829
  %v1833 = vmul.f32 %v1826, %v1829
  %v1834 = vmul.f32 %v1827, %v1829
  %v1836 = vperm.slane %v1351, 0
  %v1838 = vadd.f32 %v1831, %v1836
  %v1839 = vadd.f32 %v1832, %v1836
  %v1840 = vadd.f32 %v1833, %v1836
  %v1841 = vadd.f32 %v1834, %v1836
  %v1842 = vsel %vm115, %v1736, 0.0
  %1843 = vadd.xlane.f32.xlu0 %v1842
  %v1844 = vpop.xlane.xlu0 %1843
  %v1845 = vsel %vm115, %v1737, 0.0
  %1846 = vadd.xlane.f32.xlu0 %v1845
  %v1847 = vpop.xlane.xlu0 %1846
  %v1848 = vsel %vm115, %v1738, 0.0
  %1849 = vadd.xlane.f32.xlu0 %v1848
  %v1850 = vpop.xlane.xlu0 %1849
  %v1851 = vsel %vm115, %v1739, 0.0
  %1852 = vadd.xlane.f32.xlu0 %v1851
  %v1853 = vpop.xlane.xlu0 %1852
  %v1854 = vmul.f32 %v1844, %v285
  %v1855 = vmul.f32 %v1847, %v285
  %v1856 = vmul.f32 %v1850, %v285
  %v1857 = vmul.f32 %v1853, %v285
  %v1858 = vsub.f32 %v1736, %v1854
  %v1859 = vsub.f32 %v1737, %v1855
  %v1860 = vsub.f32 %v1738, %v1856
  %v1861 = vsub.f32 %v1739, %v1857
  %v1862 = vmul.f32 %v1858, %v1858
  %v1863 = vmul.f32 %v1859, %v1859
  %v1864 = vmul.f32 %v1860, %v1860
  %v1865 = vmul.f32 %v1861, %v1861
  %v1866 = vsel %vm115, %v1862, 0.0
  %1867 = vadd.xlane.f32.xlu0 %v1866
  %v1868 = vpop.xlane.xlu0 %1867
  %v1869 = vsel %vm115, %v1863, 0.0
  %1870 = vadd.xlane.f32.xlu0 %v1869
  %v1871 = vpop.xlane.xlu0 %1870
  %v1872 = vsel %vm115, %v1864, 0.0
  %1873 = vadd.xlane.f32.xlu0 %v1872
  %v1874 = vpop.xlane.xlu0 %1873
  %v1875 = vsel %vm115, %v1865, 0.0
  %1876 = vadd.xlane.f32.xlu0 %v1875
  %v1877 = vpop.xlane.xlu0 %1876
  %v1878 = vmul.f32 %v1868, %v285
  %v1879 = vmul.f32 %v1871, %v285
  %v1880 = vmul.f32 %v1874, %v285
  %v1881 = vmul.f32 %v1877, %v285
  %v1882 = vadd.f32 %v1878, 1e-05
  %v1883 = vadd.f32 %v1879, 1e-05
  %v1884 = vadd.f32 %v1880, 1e-05
  %v1885 = vadd.f32 %v1881, 1e-05
  %v1886 = vrsqrt.pop %v1882
  %v1887 = vmul.f32 %v1886, %v1882
  %v1888 = vmul.f32 %v1887, %v1886
  %v1889 = vmul.f32 0.5, %v1888
  %v1890 = vsub.f32 1.5, %v1889
  %v1891 = vmul.f32 %v1886, %v1890
  %vm1892 = vweird.f32 %v1882
  %vm1893 = vweird.f32 %v1886
  %vm1894 = vmor %vm1892, %vm1893
  %v1895 = vsel %vm1894, %v1886, %v1891
  %v1896 = vrsqrt.pop %v1883
  %v1897 = vmul.f32 %v1896, %v1883
  %v1898 = vmul.f32 %v1897, %v1896
  %v1899 = vmul.f32 0.5, %v1898
  %v1900 = vsub.f32 1.5, %v1899
  %v1901 = vmul.f32 %v1896, %v1900
  %vm1902 = vweird.f32 %v1883
  %vm1903 = vweird.f32 %v1896
  %vm1904 = vmor %vm1902, %vm1903
  %v1905 = vsel %vm1904, %v1896, %v1901
  %v1906 = vrsqrt.pop %v1884
  %v1907 = vmul.f32 %v1906, %v1884
  %v1908 = vmul.f32 %v1907, %v1906
  %v1909 = vmul.f32 0.5, %v1908
  %v1910 = vsub.f32 1.5, %v1909
  %v1911 = vmul.f32 %v1906, %v1910
  %vm1912 = vweird.f32 %v1884
  %vm1913 = vweird.f32 %v1906
  %vm1914 = vmor %vm1912, %vm1913
  %v1915 = vsel %vm1914, %v1906, %v1911
  %v1916 = vrsqrt.pop %v1885
  %v1917 = vmul.f32 %v1916, %v1885
  %v1918 = vmul.f32 %v1917, %v1916
  %v1919 = vmul.f32 0.5, %v1918
  %v1920 = vsub.f32 1.5, %v1919
  %v1921 = vmul.f32 %v1916, %v1920
  %vm1922 = vweird.f32 %v1885
  %vm1923 = vweird.f32 %v1916
  %vm1924 = vmor %vm1922, %vm1923
  %v1925 = vsel %vm1924, %v1916, %v1921
  %v1926 = vmul.f32 %v1858, %v1895
  %v1927 = vmul.f32 %v1859, %v1905
  %v1928 = vmul.f32 %v1860, %v1915
  %v1929 = vmul.f32 %v1861, %v1925
  %v1930 = vmul.f32 %v1926, %v1829
  %v1931 = vmul.f32 %v1927, %v1829
  %v1932 = vmul.f32 %v1928, %v1829
  %v1933 = vmul.f32 %v1929, %v1829
  %v1934 = vadd.f32 %v1930, %v1836
  %v1935 = vadd.f32 %v1931, %v1836
  %v1936 = vadd.f32 %v1932, %v1836
  %v1937 = vadd.f32 %v1933, %v1836
  %v1938 = vpack.c.bf16 %v1839, %v1838
  %v1939 = vpack.c.bf16 %v1841, %v1840
  %v1940 = vpack.c.bf16 %v1935, %v1934
  %v1941 = vpack.c.bf16 %v1937, %v1936
  %v1943 = vsel %vm115, %v1940, 0
  %v1946 = vsel %vm115, %v1941, 0
  %1948 = vmatpush.bf16.msra.mxu0 0
  %1949 = vmatpush.bf16.msra.mxu0 0
  %1950 = vmatpush.bf16.msra.mxu0 0
  %1951 = vmatpush.bf16.msra.mxu0 0
  %1952 = vmatpush.bf16.msra.mxu0 0
  %1953 = vmatpush.bf16.msra.mxu0 0
  %1954 = vmatpush.bf16.msra.mxu0 %v1521
  %1955 = vmatpush.bf16.msra.mxu0 %v1520
  %1956 = vmatmul.bf16.gmra.mxu0 %v1943
  %v1957 = vpop.f32.mrf.mxu0
  %v1958 = vadd.f32 0.0, %v1957
  %v1959 = vpop.f32.mrf.mxu0
  %v1960 = vadd.f32 0.0, %v1959
  %1961 = vmatmul.bf16.gmra.mxu0 %v1946
  %v1962 = vpop.f32.mrf.mxu0
  %v1963 = vadd.f32 0.0, %v1962
  %v1964 = vpop.f32.mrf.mxu0
  %v1965 = vadd.f32 0.0, %v1964
  %1966 = vdwg.mxu0
  %v1968 = vsel %vm115, %v1938, 0
  %v1971 = vsel %vm115, %v1939, 0
  %1973 = vmatpush.bf16.msra.mxu0 0
  %1974 = vmatpush.bf16.msra.mxu0 0
  %1975 = vmatpush.bf16.msra.mxu0 0
  %1976 = vmatpush.bf16.msra.mxu0 0
  %1977 = vmatpush.bf16.msra.mxu0 0
  %1978 = vmatpush.bf16.msra.mxu0 0
  %1979 = vmatpush.bf16.msra.mxu0 %v1517
  %1980 = vmatpush.bf16.msra.mxu0 %v1516
  %1981 = vmatmul.bf16.gmra.mxu0 %v1968
  %v1982 = vpop.f32.mrf.mxu0
  %v1983 = vadd.f32 %v1958, %v1982
  %v1984 = vpop.f32.mrf.mxu0
  %v1985 = vadd.f32 %v1960, %v1984
  %1986 = vmatmul.bf16.gmra.mxu0 %v1971
  %v1987 = vpop.f32.mrf.mxu0
  %v1988 = vadd.f32 %v1963, %v1987
  %v1989 = vpop.f32.mrf.mxu0
  %v1990 = vadd.f32 %v1965, %v1989
  %1991 = vdwg.mxu0
  %v1992 = vadd.f32 %v1983, %v1567
  %v1993 = vadd.f32 %v1985, %v1567
  %v1994 = vadd.f32 %v1988, %v1567
  %v1995 = vadd.f32 %v1990, %v1567
  %v1996 = vxor.u32 %v1992, 2147483648
  %v1997 = vxor.u32 %v1993, 2147483648
  %v1998 = vxor.u32 %v1994, 2147483648
  %v1999 = vxor.u32 %v1995, 2147483648
  %v2000 = vmul.f32 %v1996, 1.442695
  %v2001 = vpow.pop %v2000
  %v2002 = vmul.f32 %v1997, 1.442695
  %v2003 = vpow.pop %v2002
  %v2004 = vmul.f32 %v1998, 1.442695
  %v2005 = vpow.pop %v2004
  %v2006 = vmul.f32 %v1999, 1.442695
  %v2007 = vpow.pop %v2006
  %v2008 = vadd.f32 %v2001, 1.0
  %v2009 = vadd.f32 %v2003, 1.0
  %v2010 = vadd.f32 %v2005, 1.0
  %v2011 = vadd.f32 %v2007, 1.0
  %v2012 = vrcp.pop %v2008
  %v2013 = vmul.f32 %v2008, %v2012
  %v2014 = vsub.f32 1.0, %v2013
  %v2015 = vmul.f32 %v2012, %v2014
  %v2016 = vadd.f32 %v2012, %v2015
  %vm2017 = vweird.f32 %v2008
  %vm2018 = vweird.f32 %v2012
  %vm2019 = vmor %vm2017, %vm2018
  %v2020 = vsel %vm2019, %v2012, %v2016
  %v2021 = vand.u32 2147483647, %v2008
  %vm2022 = vcmp.eq.f32.partialorder %v2021, 8.507059e+37
  %v2023 = vand.u32 %v2008, 2147483648
  %v2024 = vor.u32 1.1754944e-38, %v2023
  %v2025 = vsel %vm2022, %v2024, %v2020
  %v2026 = vmul.f32 1.0, %v2025
  %v2027 = vrcp.pop %v2009
  %v2028 = vmul.f32 %v2009, %v2027
  %v2029 = vsub.f32 1.0, %v2028
  %v2030 = vmul.f32 %v2027, %v2029
  %v2031 = vadd.f32 %v2027, %v2030
  %vm2032 = vweird.f32 %v2009
  %vm2033 = vweird.f32 %v2027
  %vm2034 = vmor %vm2032, %vm2033
  %v2035 = vsel %vm2034, %v2027, %v2031
  %v2036 = vand.u32 2147483647, %v2009
  %vm2037 = vcmp.eq.f32.partialorder %v2036, 8.507059e+37
  %v2038 = vand.u32 %v2009, 2147483648
  %v2039 = vor.u32 1.1754944e-38, %v2038
  %v2040 = vsel %vm2037, %v2039, %v2035
  %v2041 = vmul.f32 1.0, %v2040
  %v2042 = vrcp.pop %v2010
  %v2043 = vmul.f32 %v2010, %v2042
  %v2044 = vsub.f32 1.0, %v2043
  %v2045 = vmul.f32 %v2042, %v2044
  %v2046 = vadd.f32 %v2042, %v2045
  %vm2047 = vweird.f32 %v2010
  %vm2048 = vweird.f32 %v2042
  %vm2049 = vmor %vm2047, %vm2048
  %v2050 = vsel %vm2049, %v2042, %v2046
  %v2051 = vand.u32 2147483647, %v2010
  %vm2052 = vcmp.eq.f32.partialorder %v2051, 8.507059e+37
  %v2053 = vand.u32 %v2010, 2147483648
  %v2054 = vor.u32 1.1754944e-38, %v2053
  %v2055 = vsel %vm2052, %v2054, %v2050
  %v2056 = vmul.f32 1.0, %v2055
  %v2057 = vrcp.pop %v2011
  %v2058 = vmul.f32 %v2011, %v2057
  %v2059 = vsub.f32 1.0, %v2058
  %v2060 = vmul.f32 %v2057, %v2059
  %v2061 = vadd.f32 %v2057, %v2060
  %vm2062 = vweird.f32 %v2011
  %vm2063 = vweird.f32 %v2057
  %vm2064 = vmor %vm2062, %vm2063
  %v2065 = vsel %vm2064, %v2057, %v2061
  %v2066 = vand.u32 2147483647, %v2011
  %vm2067 = vcmp.eq.f32.partialorder %v2066, 8.507059e+37
  %v2068 = vand.u32 %v2011, 2147483648
  %v2069 = vor.u32 1.1754944e-38, %v2068
  %v2070 = vsel %vm2067, %v2069, %v2065
  %v2071 = vmul.f32 1.0, %v2070
  %v2072 = vmul.f32 %v2026, %v1838
  %v2073 = vmul.f32 %v2041, %v1839
  %v2074 = vmul.f32 %v2056, %v1840
  %v2075 = vmul.f32 %v2071, %v1841
  %v2076 = vsub.f32 1.0, %v2026
  %v2077 = vsub.f32 1.0, %v2041
  %v2078 = vsub.f32 1.0, %v2056
  %v2079 = vsub.f32 1.0, %v2071
  %v2080 = vmul.f32 %v2076, %v1934
  %v2081 = vmul.f32 %v2077, %v1935
  %v2082 = vmul.f32 %v2078, %v1936
  %v2083 = vmul.f32 %v2079, %v1937
  %v2084 = vadd.f32 %v2072, %v2080
  %v2085 = vadd.f32 %v2073, %v2081
  %v2086 = vadd.f32 %v2074, %v2082
  %v2087 = vadd.f32 %v2075, %v2083
  %v2088 = vsel %vm115, %v2084, 0.0
  %2089 = vadd.xlane.f32.xlu0 %v2088
  %v2090 = vpop.xlane.xlu0 %2089
  %v2091 = vsel %vm115, %v2085, 0.0
  %2092 = vadd.xlane.f32.xlu0 %v2091
  %v2093 = vpop.xlane.xlu0 %2092
  %v2094 = vsel %vm115, %v2086, 0.0
  %2095 = vadd.xlane.f32.xlu0 %v2094
  %v2096 = vpop.xlane.xlu0 %2095
  %v2097 = vsel %vm115, %v2087, 0.0
  %2098 = vadd.xlane.f32.xlu0 %v2097
  %v2099 = vpop.xlane.xlu0 %2098
  %v2100 = vmul.f32 %v2090, %v285
  %v2101 = vmul.f32 %v2093, %v285
  %v2102 = vmul.f32 %v2096, %v285
  %v2103 = vmul.f32 %v2099, %v285
  %v2104 = vsub.f32 %v2084, %v2100
  %v2105 = vsub.f32 %v2085, %v2101
  %v2106 = vsub.f32 %v2086, %v2102
  %v2107 = vsub.f32 %v2087, %v2103
  %v2108 = vmul.f32 %v2104, %v2104
  %v2109 = vmul.f32 %v2105, %v2105
  %v2110 = vmul.f32 %v2106, %v2106
  %v2111 = vmul.f32 %v2107, %v2107
  %v2112 = vsel %vm115, %v2108, 0.0
  %2113 = vadd.xlane.f32.xlu0 %v2112
  %v2114 = vpop.xlane.xlu0 %2113
  %v2115 = vsel %vm115, %v2109, 0.0
  %2116 = vadd.xlane.f32.xlu0 %v2115
  %v2117 = vpop.xlane.xlu0 %2116
  %v2118 = vsel %vm115, %v2110, 0.0
  %2119 = vadd.xlane.f32.xlu0 %v2118
  %v2120 = vpop.xlane.xlu0 %2119
  %v2121 = vsel %vm115, %v2111, 0.0
  %2122 = vadd.xlane.f32.xlu0 %v2121
  %v2123 = vpop.xlane.xlu0 %2122
  %v2124 = vmul.f32 %v2114, %v285
  %v2125 = vmul.f32 %v2117, %v285
  %v2126 = vmul.f32 %v2120, %v285
  %v2127 = vmul.f32 %v2123, %v285
  %v2128 = vadd.f32 %v2124, 1e-05
  %v2129 = vadd.f32 %v2125, 1e-05
  %v2130 = vadd.f32 %v2126, 1e-05
  %v2131 = vadd.f32 %v2127, 1e-05
  %v2132 = vrsqrt.pop %v2128
  %v2133 = vmul.f32 %v2132, %v2128
  %v2134 = vmul.f32 %v2133, %v2132
  %v2135 = vmul.f32 0.5, %v2134
  %v2136 = vsub.f32 1.5, %v2135
  %v2137 = vmul.f32 %v2132, %v2136
  %vm2138 = vweird.f32 %v2128
  %vm2139 = vweird.f32 %v2132
  %vm2140 = vmor %vm2138, %vm2139
  %v2141 = vsel %vm2140, %v2132, %v2137
  %v2142 = vrsqrt.pop %v2129
  %v2143 = vmul.f32 %v2142, %v2129
  %v2144 = vmul.f32 %v2143, %v2142
  %v2145 = vmul.f32 0.5, %v2144
  %v2146 = vsub.f32 1.5, %v2145
  %v2147 = vmul.f32 %v2142, %v2146
  %vm2148 = vweird.f32 %v2129
  %vm2149 = vweird.f32 %v2142
  %vm2150 = vmor %vm2148, %vm2149
  %v2151 = vsel %vm2150, %v2142, %v2147
  %v2152 = vrsqrt.pop %v2130
  %v2153 = vmul.f32 %v2152, %v2130
  %v2154 = vmul.f32 %v2153, %v2152
  %v2155 = vmul.f32 0.5, %v2154
  %v2156 = vsub.f32 1.5, %v2155
  %v2157 = vmul.f32 %v2152, %v2156
  %vm2158 = vweird.f32 %v2130
  %vm2159 = vweird.f32 %v2152
  %vm2160 = vmor %vm2158, %vm2159
  %v2161 = vsel %vm2160, %v2152, %v2157
  %v2162 = vrsqrt.pop %v2131
  %v2163 = vmul.f32 %v2162, %v2131
  %v2164 = vmul.f32 %v2163, %v2162
  %v2165 = vmul.f32 0.5, %v2164
  %v2166 = vsub.f32 1.5, %v2165
  %v2167 = vmul.f32 %v2162, %v2166
  %vm2168 = vweird.f32 %v2131
  %vm2169 = vweird.f32 %v2162
  %vm2170 = vmor %vm2168, %vm2169
  %v2171 = vsel %vm2170, %v2162, %v2167
  %v2172 = vmul.f32 %v2104, %v2141
  %v2173 = vmul.f32 %v2105, %v2151
  %v2174 = vmul.f32 %v2106, %v2161
  %v2175 = vmul.f32 %v2107, %v2171
  %v2176 = vmul.f32 %v2172, %v1829
  %v2177 = vmul.f32 %v2173, %v1829
  %v2178 = vmul.f32 %v2174, %v1829
  %v2179 = vmul.f32 %v2175, %v1829
  %v2180 = vadd.f32 %v2176, %v1836
  %v2181 = vadd.f32 %v2177, %v1836
  %v2182 = vadd.f32 %v2178, %v1836
  %v2183 = vadd.f32 %v2179, %v1836
  %v2184 = vadd.f32 %v1322, %v2180
  %v2185 = vadd.f32 %v1323, %v2181
  %v2186 = vadd.f32 %v1324, %v2182
  %v2187 = vadd.f32 %v1325, %v2183
  %v2188 = vsel %vm115, %v2184, 0.0
  %2189 = vadd.xlane.f32.xlu0 %v2188
  %v2190 = vpop.xlane.xlu0 %2189
  %v2191 = vsel %vm115, %v2185, 0.0
  %2192 = vadd.xlane.f32.xlu0 %v2191
  %v2193 = vpop.xlane.xlu0 %2192
  %v2194 = vsel %vm115, %v2186, 0.0
  %2195 = vadd.xlane.f32.xlu0 %v2194
  %v2196 = vpop.xlane.xlu0 %2195
  %v2197 = vsel %vm115, %v2187, 0.0
  %2198 = vadd.xlane.f32.xlu0 %v2197
  %v2199 = vpop.xlane.xlu0 %2198
  %v2200 = vmul.f32 %v2190, %v285
  %v2201 = vmul.f32 %v2193, %v285
  %v2202 = vmul.f32 %v2196, %v285
  %v2203 = vmul.f32 %v2199, %v285
  %v2204 = vsub.f32 %v2184, %v2200
  %v2205 = vsub.f32 %v2185, %v2201
  %v2206 = vsub.f32 %v2186, %v2202
  %v2207 = vsub.f32 %v2187, %v2203
  %v2208 = vmul.f32 %v2204, %v2204
  %v2209 = vmul.f32 %v2205, %v2205
  %v2210 = vmul.f32 %v2206, %v2206
  %v2211 = vmul.f32 %v2207, %v2207
  %v2212 = vsel %vm115, %v2208, 0.0
  %2213 = vadd.xlane.f32.xlu0 %v2212
  %v2214 = vpop.xlane.xlu0 %2213
  %v2215 = vsel %vm115, %v2209, 0.0
  %2216 = vadd.xlane.f32.xlu0 %v2215
  %v2217 = vpop.xlane.xlu0 %2216
  %v2218 = vsel %vm115, %v2210, 0.0
  %2219 = vadd.xlane.f32.xlu0 %v2218
  %v2220 = vpop.xlane.xlu0 %2219
  %v2221 = vsel %vm115, %v2211, 0.0
  %2222 = vadd.xlane.f32.xlu0 %v2221
  %v2223 = vpop.xlane.xlu0 %2222
  %v2224 = vmul.f32 %v2214, %v285
  %v2225 = vmul.f32 %v2217, %v285
  %v2226 = vmul.f32 %v2220, %v285
  %v2227 = vmul.f32 %v2223, %v285
  %v2228 = vadd.f32 %v2224, 1e-05
  %v2229 = vadd.f32 %v2225, 1e-05
  %v2230 = vadd.f32 %v2226, 1e-05
  %v2231 = vadd.f32 %v2227, 1e-05
  %v2232 = vrsqrt.pop %v2228
  %v2233 = vmul.f32 %v2232, %v2228
  %v2234 = vmul.f32 %v2233, %v2232
  %v2235 = vmul.f32 0.5, %v2234
  %v2236 = vsub.f32 1.5, %v2235
  %v2237 = vmul.f32 %v2232, %v2236
  %vm2238 = vweird.f32 %v2228
  %vm2239 = vweird.f32 %v2232
  %vm2240 = vmor %vm2238, %vm2239
  %v2241 = vsel %vm2240, %v2232, %v2237
  %v2242 = vrsqrt.pop %v2229
  %v2243 = vmul.f32 %v2242, %v2229
  %v2244 = vmul.f32 %v2243, %v2242
  %v2245 = vmul.f32 0.5, %v2244
  %v2246 = vsub.f32 1.5, %v2245
  %v2247 = vmul.f32 %v2242, %v2246
  %vm2248 = vweird.f32 %v2229
  %vm2249 = vweird.f32 %v2242
  %vm2250 = vmor %vm2248, %vm2249
  %v2251 = vsel %vm2250, %v2242, %v2247
  %v2252 = vrsqrt.pop %v2230
  %v2253 = vmul.f32 %v2252, %v2230
  %v2254 = vmul.f32 %v2253, %v2252
  %v2255 = vmul.f32 0.5, %v2254
  %v2256 = vsub.f32 1.5, %v2255
  %v2257 = vmul.f32 %v2252, %v2256
  %vm2258 = vweird.f32 %v2230
  %vm2259 = vweird.f32 %v2252
  %vm2260 = vmor %vm2258, %vm2259
  %v2261 = vsel %vm2260, %v2252, %v2257
  %v2262 = vrsqrt.pop %v2231
  %v2263 = vmul.f32 %v2262, %v2231
  %v2264 = vmul.f32 %v2263, %v2262
  %v2265 = vmul.f32 0.5, %v2264
  %v2266 = vsub.f32 1.5, %v2265
  %v2267 = vmul.f32 %v2262, %v2266
  %vm2268 = vweird.f32 %v2231
  %vm2269 = vweird.f32 %v2262
  %vm2270 = vmor %vm2268, %vm2269
  %v2271 = vsel %vm2270, %v2262, %v2267
  %v2272 = vmul.f32 %v2204, %v2241
  %v2273 = vmul.f32 %v2205, %v2251
  %v2274 = vmul.f32 %v2206, %v2261
  %v2275 = vmul.f32 %v2207, %v2271
  %v2276 = vmul.f32 %v2272, %v363
  %v2277 = vmul.f32 %v2273, %v363
  %v2278 = vmul.f32 %v2274, %v363
  %v2279 = vmul.f32 %v2275, %v363
  %v2280 = vadd.f32 %v2276, %v370
  %v2281 = vadd.f32 %v2277, %v370
  %v2282 = vadd.f32 %v2278, %v370
  %v2283 = vadd.f32 %v2279, %v370
  %s2284 = scalar_lea.vmem %s5, 128
  %v2285 = vld [vmem:[%s2284] sm:$0xff]
  %v2286 = vld [vmem:[%s2284 + $0x8] sm:$0xff]
  %v2287 = vld [vmem:[%s2284 + $0x10] sm:$0xff]
  %v2288 = vld [vmem:[%s2284 + $0x18] sm:$0xff]
  %v2289 = vld [vmem:[%s2284 + $0x20] sm:$0xff]
  %v2290 = vld [vmem:[%s2284 + $0x28] sm:$0xff]
  %v2291 = vld [vmem:[%s2284 + $0x30] sm:$0xff]
  %v2292 = vld [vmem:[%s2284 + $0x38] sm:$0xff]
  %s2293 = scalar_lea.vmem %s6, 2
  %v2294 = vld [vmem:[%s2293] sm:$0x1]
  %s2295 = scalar_lea.vmem %s7, 128
  %v2296 = vld [vmem:[%s2295] sm:$0xff]
  %v2297 = vld [vmem:[%s2295 + $0x8] sm:$0xff]
  %v2298 = vld [vmem:[%s2295 + $0x10] sm:$0xff]
  %v2299 = vld [vmem:[%s2295 + $0x18] sm:$0xff]
  %v2300 = vld [vmem:[%s2295 + $0x20] sm:$0xff]
  %v2301 = vld [vmem:[%s2295 + $0x28] sm:$0xff]
  %v2302 = vld [vmem:[%s2295 + $0x30] sm:$0xff]
  %v2303 = vld [vmem:[%s2295 + $0x38] sm:$0xff]
  %s2304 = scalar_lea.vmem %s8, 2
  %v2305 = vld [vmem:[%s2304] sm:$0x1]
  %s2306 = scalar_lea.vmem %s9, 2
  %v2307 = vld [vmem:[%s2306] sm:$0x1]
  %s2308 = scalar_lea.vmem %s10, 2
  %v2309 = vld [vmem:[%s2308] sm:$0x1]
  %s2310 = scalar_lea.vmem %s11, 64
  %v2311 = vld [vmem:[%s2310] sm:$0xff]
  %v2312 = vld [vmem:[%s2310 + $0x8] sm:$0xff]
  %v2313 = vld [vmem:[%s2310 + $0x10] sm:$0xff]
  %v2314 = vld [vmem:[%s2310 + $0x18] sm:$0xff]
  %s2315 = scalar_lea.vmem %s12, 2
  %v2316 = vld [vmem:[%s2315] sm:$0x1]
  %v2317 = vpack.c.bf16 %v2281, %v2280
  %v2318 = vpack.c.bf16 %v2283, %v2282
  %v2319 = vpack.c.bf16 %v2286, %v2285
  %v2320 = vpack.c.bf16 %v2288, %v2287
  %v2321 = vpack.c.bf16 %v90, %v89
  %v2322 = vpack.c.bf16 %v92, %v91
  %v2323 = vpack.c.bf16 %v2290, %v2289
  %v2324 = vpack.c.bf16 %v2292, %v2291
  %v2326 = vsel %vm115, %v2321, 0
  %v2329 = vsel %vm115, %v2322, 0
  %2331 = vmatpush.bf16.msra.mxu0 0
  %2332 = vmatpush.bf16.msra.mxu0 0
  %2333 = vmatpush.bf16.msra.mxu0 0
  %2334 = vmatpush.bf16.msra.mxu0 0
  %2335 = vmatpush.bf16.msra.mxu0 0
  %2336 = vmatpush.bf16.msra.mxu0 0
  %2337 = vmatpush.bf16.msra.mxu0 %v2324
  %2338 = vmatpush.bf16.msra.mxu0 %v2323
  %2339 = vmatmul.bf16.gmra.mxu0 %v2326
  %v2340 = vpop.f32.mrf.mxu0
  %v2341 = vadd.f32 0.0, %v2340
  %v2342 = vpop.f32.mrf.mxu0
  %v2343 = vadd.f32 0.0, %v2342
  %2344 = vmatmul.bf16.gmra.mxu0 %v2329
  %v2345 = vpop.f32.mrf.mxu0
  %v2346 = vadd.f32 0.0, %v2345
  %v2347 = vpop.f32.mrf.mxu0
  %v2348 = vadd.f32 0.0, %v2347
  %2349 = vdwg.mxu0
  %v2351 = vsel %vm115, %v2317, 0
  %v2354 = vsel %vm115, %v2318, 0
  %2356 = vmatpush.bf16.msra.mxu0 0
  %2357 = vmatpush.bf16.msra.mxu0 0
  %2358 = vmatpush.bf16.msra.mxu0 0
  %2359 = vmatpush.bf16.msra.mxu0 0
  %2360 = vmatpush.bf16.msra.mxu0 0
  %2361 = vmatpush.bf16.msra.mxu0 0
  %2362 = vmatpush.bf16.msra.mxu0 %v2320
  %2363 = vmatpush.bf16.msra.mxu0 %v2319
  %2364 = vmatmul.bf16.gmra.mxu0 %v2351
  %v2365 = vpop.f32.mrf.mxu0
  %v2366 = vadd.f32 %v2341, %v2365
  %v2367 = vpop.f32.mrf.mxu0
  %v2368 = vadd.f32 %v2343, %v2367
  %2369 = vmatmul.bf16.gmra.mxu0 %v2354
  %v2370 = vpop.f32.mrf.mxu0
  %v2371 = vadd.f32 %v2346, %v2370
  %v2372 = vpop.f32.mrf.mxu0
  %v2373 = vadd.f32 %v2348, %v2372
  %2374 = vdwg.mxu0
  %v2376 = vperm.slane %v2294, 0
  %v2378 = vadd.f32 %v2366, %v2376
  %v2379 = vadd.f32 %v2368, %v2376
  %v2380 = vadd.f32 %v2371, %v2376
  %v2381 = vadd.f32 %v2373, %v2376
  %v2382 = vxor.u32 %v2378, 2147483648
  %v2383 = vxor.u32 %v2379, 2147483648
  %v2384 = vxor.u32 %v2380, 2147483648
  %v2385 = vxor.u32 %v2381, 2147483648
  %v2386 = vmul.f32 %v2382, 1.442695
  %v2387 = vpow.pop %v2386
  %v2388 = vmul.f32 %v2383, 1.442695
  %v2389 = vpow.pop %v2388
  %v2390 = vmul.f32 %v2384, 1.442695
  %v2391 = vpow.pop %v2390
  %v2392 = vmul.f32 %v2385, 1.442695
  %v2393 = vpow.pop %v2392
  %v2394 = vadd.f32 %v2387, 1.0
  %v2395 = vadd.f32 %v2389, 1.0
  %v2396 = vadd.f32 %v2391, 1.0
  %v2397 = vadd.f32 %v2393, 1.0
  %v2398 = vrcp.pop %v2394
  %v2399 = vmul.f32 %v2394, %v2398
  %v2400 = vsub.f32 1.0, %v2399
  %v2401 = vmul.f32 %v2398, %v2400
  %v2402 = vadd.f32 %v2398, %v2401
  %vm2403 = vweird.f32 %v2394
  %vm2404 = vweird.f32 %v2398
  %vm2405 = vmor %vm2403, %vm2404
  %v2406 = vsel %vm2405, %v2398, %v2402
  %v2407 = vand.u32 2147483647, %v2394
  %vm2408 = vcmp.eq.f32.partialorder %v2407, 8.507059e+37
  %v2409 = vand.u32 %v2394, 2147483648
  %v2410 = vor.u32 1.1754944e-38, %v2409
  %v2411 = vsel %vm2408, %v2410, %v2406
  %v2412 = vmul.f32 1.0, %v2411
  %v2413 = vrcp.pop %v2395
  %v2414 = vmul.f32 %v2395, %v2413
  %v2415 = vsub.f32 1.0, %v2414
  %v2416 = vmul.f32 %v2413, %v2415
  %v2417 = vadd.f32 %v2413, %v2416
  %vm2418 = vweird.f32 %v2395
  %vm2419 = vweird.f32 %v2413
  %vm2420 = vmor %vm2418, %vm2419
  %v2421 = vsel %vm2420, %v2413, %v2417
  %v2422 = vand.u32 2147483647, %v2395
  %vm2423 = vcmp.eq.f32.partialorder %v2422, 8.507059e+37
  %v2424 = vand.u32 %v2395, 2147483648
  %v2425 = vor.u32 1.1754944e-38, %v2424
  %v2426 = vsel %vm2423, %v2425, %v2421
  %v2427 = vmul.f32 1.0, %v2426
  %v2428 = vrcp.pop %v2396
  %v2429 = vmul.f32 %v2396, %v2428
  %v2430 = vsub.f32 1.0, %v2429
  %v2431 = vmul.f32 %v2428, %v2430
  %v2432 = vadd.f32 %v2428, %v2431
  %vm2433 = vweird.f32 %v2396
  %vm2434 = vweird.f32 %v2428
  %vm2435 = vmor %vm2433, %vm2434
  %v2436 = vsel %vm2435, %v2428, %v2432
  %v2437 = vand.u32 2147483647, %v2396
  %vm2438 = vcmp.eq.f32.partialorder %v2437, 8.507059e+37
  %v2439 = vand.u32 %v2396, 2147483648
  %v2440 = vor.u32 1.1754944e-38, %v2439
  %v2441 = vsel %vm2438, %v2440, %v2436
  %v2442 = vmul.f32 1.0, %v2441
  %v2443 = vrcp.pop %v2397
  %v2444 = vmul.f32 %v2397, %v2443
  %v2445 = vsub.f32 1.0, %v2444
  %v2446 = vmul.f32 %v2443, %v2445
  %v2447 = vadd.f32 %v2443, %v2446
  %vm2448 = vweird.f32 %v2397
  %vm2449 = vweird.f32 %v2443
  %vm2450 = vmor %vm2448, %vm2449
  %v2451 = vsel %vm2450, %v2443, %v2447
  %v2452 = vand.u32 2147483647, %v2397
  %vm2453 = vcmp.eq.f32.partialorder %v2452, 8.507059e+37
  %v2454 = vand.u32 %v2397, 2147483648
  %v2455 = vor.u32 1.1754944e-38, %v2454
  %v2456 = vsel %vm2453, %v2455, %v2451
  %v2457 = vmul.f32 1.0, %v2456
  %v2458 = vmul.f32 %v2412, %v2280
  %v2459 = vmul.f32 %v2427, %v2281
  %v2460 = vmul.f32 %v2442, %v2282
  %v2461 = vmul.f32 %v2457, %v2283
  %v2462 = vsub.f32 1.0, %v2412
  %v2463 = vsub.f32 1.0, %v2427
  %v2464 = vsub.f32 1.0, %v2442
  %v2465 = vsub.f32 1.0, %v2457
  %v2466 = vmul.f32 %v2462, %v89
  %v2467 = vmul.f32 %v2463, %v90
  %v2468 = vmul.f32 %v2464, %v91
  %v2469 = vmul.f32 %v2465, %v92
  %v2470 = vadd.f32 %v2458, %v2466
  %v2471 = vadd.f32 %v2459, %v2467
  %v2472 = vadd.f32 %v2460, %v2468
  %v2473 = vadd.f32 %v2461, %v2469
  %v2474 = vpack.c.bf16 %v2297, %v2296
  %v2475 = vpack.c.bf16 %v2299, %v2298
  %v2476 = vpack.c.bf16 %v95, %v94
  %v2477 = vpack.c.bf16 %v97, %v96
  %v2478 = vpack.c.bf16 %v2301, %v2300
  %v2479 = vpack.c.bf16 %v2303, %v2302
  %v2481 = vsel %vm115, %v2476, 0
  %v2484 = vsel %vm115, %v2477, 0
  %2486 = vmatpush.bf16.msra.mxu0 0
  %2487 = vmatpush.bf16.msra.mxu0 0
  %2488 = vmatpush.bf16.msra.mxu0 0
  %2489 = vmatpush.bf16.msra.mxu0 0
  %2490 = vmatpush.bf16.msra.mxu0 0
  %2491 = vmatpush.bf16.msra.mxu0 0
  %2492 = vmatpush.bf16.msra.mxu0 %v2479
  %2493 = vmatpush.bf16.msra.mxu0 %v2478
  %2494 = vmatmul.bf16.gmra.mxu0 %v2481
  %v2495 = vpop.f32.mrf.mxu0
  %v2496 = vadd.f32 0.0, %v2495
  %v2497 = vpop.f32.mrf.mxu0
  %v2498 = vadd.f32 0.0, %v2497
  %2499 = vmatmul.bf16.gmra.mxu0 %v2484
  %v2500 = vpop.f32.mrf.mxu0
  %v2501 = vadd.f32 0.0, %v2500
  %v2502 = vpop.f32.mrf.mxu0
  %v2503 = vadd.f32 0.0, %v2502
  %2504 = vdwg.mxu0
  %2505 = vmatpush.bf16.msra.mxu0 0
  %2506 = vmatpush.bf16.msra.mxu0 0
  %2507 = vmatpush.bf16.msra.mxu0 0
  %2508 = vmatpush.bf16.msra.mxu0 0
  %2509 = vmatpush.bf16.msra.mxu0 0
  %2510 = vmatpush.bf16.msra.mxu0 0
  %2511 = vmatpush.bf16.msra.mxu0 %v2475
  %2512 = vmatpush.bf16.msra.mxu0 %v2474
  %2513 = vmatmul.bf16.gmra.mxu0 %v2351
  %v2514 = vpop.f32.mrf.mxu0
  %v2515 = vadd.f32 %v2496, %v2514
  %v2516 = vpop.f32.mrf.mxu0
  %v2517 = vadd.f32 %v2498, %v2516
  %2518 = vmatmul.bf16.gmra.mxu0 %v2354
  %v2519 = vpop.f32.mrf.mxu0
  %v2520 = vadd.f32 %v2501, %v2519
  %v2521 = vpop.f32.mrf.mxu0
  %v2522 = vadd.f32 %v2503, %v2521
  %2523 = vdwg.mxu0
  %v2525 = vperm.slane %v2305, 0
  %v2527 = vadd.f32 %v2515, %v2525
  %v2528 = vadd.f32 %v2517, %v2525
  %v2529 = vadd.f32 %v2520, %v2525
  %v2530 = vadd.f32 %v2522, %v2525
  %v2531 = vxor.u32 %v2527, 2147483648
  %v2532 = vxor.u32 %v2528, 2147483648
  %v2533 = vxor.u32 %v2529, 2147483648
  %v2534 = vxor.u32 %v2530, 2147483648
  %v2535 = vmul.f32 %v2531, 1.442695
  %v2536 = vpow.pop %v2535
  %v2537 = vmul.f32 %v2532, 1.442695
  %v2538 = vpow.pop %v2537
  %v2539 = vmul.f32 %v2533, 1.442695
  %v2540 = vpow.pop %v2539
  %v2541 = vmul.f32 %v2534, 1.442695
  %v2542 = vpow.pop %v2541
  %v2543 = vadd.f32 %v2536, 1.0
  %v2544 = vadd.f32 %v2538, 1.0
  %v2545 = vadd.f32 %v2540, 1.0
  %v2546 = vadd.f32 %v2542, 1.0
  %v2547 = vrcp.pop %v2543
  %v2548 = vmul.f32 %v2543, %v2547
  %v2549 = vsub.f32 1.0, %v2548
  %v2550 = vmul.f32 %v2547, %v2549
  %v2551 = vadd.f32 %v2547, %v2550
  %vm2552 = vweird.f32 %v2543
  %vm2553 = vweird.f32 %v2547
  %vm2554 = vmor %vm2552, %vm2553
  %v2555 = vsel %vm2554, %v2547, %v2551
  %v2556 = vand.u32 2147483647, %v2543
  %vm2557 = vcmp.eq.f32.partialorder %v2556, 8.507059e+37
  %v2558 = vand.u32 %v2543, 2147483648
  %v2559 = vor.u32 1.1754944e-38, %v2558
  %v2560 = vsel %vm2557, %v2559, %v2555
  %v2561 = vmul.f32 1.0, %v2560
  %v2562 = vrcp.pop %v2544
  %v2563 = vmul.f32 %v2544, %v2562
  %v2564 = vsub.f32 1.0, %v2563
  %v2565 = vmul.f32 %v2562, %v2564
  %v2566 = vadd.f32 %v2562, %v2565
  %vm2567 = vweird.f32 %v2544
  %vm2568 = vweird.f32 %v2562
  %vm2569 = vmor %vm2567, %vm2568
  %v2570 = vsel %vm2569, %v2562, %v2566
  %v2571 = vand.u32 2147483647, %v2544
  %vm2572 = vcmp.eq.f32.partialorder %v2571, 8.507059e+37
  %v2573 = vand.u32 %v2544, 2147483648
  %v2574 = vor.u32 1.1754944e-38, %v2573
  %v2575 = vsel %vm2572, %v2574, %v2570
  %v2576 = vmul.f32 1.0, %v2575
  %v2577 = vrcp.pop %v2545
  %v2578 = vmul.f32 %v2545, %v2577
  %v2579 = vsub.f32 1.0, %v2578
  %v2580 = vmul.f32 %v2577, %v2579
  %v2581 = vadd.f32 %v2577, %v2580
  %vm2582 = vweird.f32 %v2545
  %vm2583 = vweird.f32 %v2577
  %vm2584 = vmor %vm2582, %vm2583
  %v2585 = vsel %vm2584, %v2577, %v2581
  %v2586 = vand.u32 2147483647, %v2545
  %vm2587 = vcmp.eq.f32.partialorder %v2586, 8.507059e+37
  %v2588 = vand.u32 %v2545, 2147483648
  %v2589 = vor.u32 1.1754944e-38, %v2588
  %v2590 = vsel %vm2587, %v2589, %v2585
  %v2591 = vmul.f32 1.0, %v2590
  %v2592 = vrcp.pop %v2546
  %v2593 = vmul.f32 %v2546, %v2592
  %v2594 = vsub.f32 1.0, %v2593
  %v2595 = vmul.f32 %v2592, %v2594
  %v2596 = vadd.f32 %v2592, %v2595
  %vm2597 = vweird.f32 %v2546
  %vm2598 = vweird.f32 %v2592
  %vm2599 = vmor %vm2597, %vm2598
  %v2600 = vsel %vm2599, %v2592, %v2596
  %v2601 = vand.u32 2147483647, %v2546
  %vm2602 = vcmp.eq.f32.partialorder %v2601, 8.507059e+37
  %v2603 = vand.u32 %v2546, 2147483648
  %v2604 = vor.u32 1.1754944e-38, %v2603
  %v2605 = vsel %vm2602, %v2604, %v2600
  %v2606 = vmul.f32 1.0, %v2605
  %v2607 = vmul.f32 %v2561, %v2280
  %v2608 = vmul.f32 %v2576, %v2281
  %v2609 = vmul.f32 %v2591, %v2282
  %v2610 = vmul.f32 %v2606, %v2283
  %v2611 = vsub.f32 1.0, %v2561
  %v2612 = vsub.f32 1.0, %v2576
  %v2613 = vsub.f32 1.0, %v2591
  %v2614 = vsub.f32 1.0, %v2606
  %v2615 = vmul.f32 %v2611, %v94
  %v2616 = vmul.f32 %v2612, %v95
  %v2617 = vmul.f32 %v2613, %v96
  %v2618 = vmul.f32 %v2614, %v97
  %v2619 = vadd.f32 %v2607, %v2615
  %v2620 = vadd.f32 %v2608, %v2616
  %v2621 = vadd.f32 %v2609, %v2617
  %v2622 = vadd.f32 %v2610, %v2618
  %v2623 = vpack.c.bf16 %v2471, %v2470
  %v2624 = vpack.c.bf16 %v2473, %v2472
  %v2625 = vpack.c.bf16 %v2312, %v2311
  %v2626 = vpack.c.bf16 %v2314, %v2313
  %v2628 = vsel %vm115, %v2623, 0
  %v2631 = vsel %vm115, %v2624, 0
  %2633 = vmatpush.bf16.msra.mxu0 0
  %2634 = vmatpush.bf16.msra.mxu0 0
  %2635 = vmatpush.bf16.msra.mxu0 0
  %2636 = vmatpush.bf16.msra.mxu0 0
  %2637 = vmatpush.bf16.msra.mxu0 0
  %2638 = vmatpush.bf16.msra.mxu0 0
  %2639 = vmatpush.bf16.msra.mxu0 %v2626
  %2640 = vmatpush.bf16.msra.mxu0 %v2625
  %2641 = vmatmul.bf16.gmra.mxu0 %v2628
  %v2642 = vpop.f32.mrf.mxu0
  %v2643 = vadd.f32 0.0, %v2642
  %v2644 = vpop.f32.mrf.mxu0
  %v2645 = vadd.f32 0.0, %v2644
  %2646 = vmatmul.bf16.gmra.mxu0 %v2631
  %v2647 = vpop.f32.mrf.mxu0
  %v2648 = vadd.f32 0.0, %v2647
  %v2649 = vpop.f32.mrf.mxu0
  %v2650 = vadd.f32 0.0, %v2649
  %2651 = vdwg.mxu0
  %v2652 = vadd.f32 %v2470, %v2643
  %v2653 = vadd.f32 %v2471, %v2645
  %v2654 = vadd.f32 %v2472, %v2648
  %v2655 = vadd.f32 %v2473, %v2650
  %v2657 = vperm.slane %v2316, 0
  %v2659 = vadd.f32 %v2652, %v2657
  %v2660 = vadd.f32 %v2653, %v2657
  %v2661 = vadd.f32 %v2654, %v2657
  %v2662 = vadd.f32 %v2655, %v2657
  %v2663 = vpack.c.bf16 %v2620, %v2619
  %v2664 = vpack.c.bf16 %v2622, %v2621
  %v2666 = vsel %vm115, %v2663, 0
  %v2669 = vsel %vm115, %v2664, 0
  %2671 = vmatpush.bf16.msra.mxu0 0
  %2672 = vmatpush.bf16.msra.mxu0 0
  %2673 = vmatpush.bf16.msra.mxu0 0
  %2674 = vmatpush.bf16.msra.mxu0 0
  %2675 = vmatpush.bf16.msra.mxu0 0
  %2676 = vmatpush.bf16.msra.mxu0 0
  %2677 = vmatpush.bf16.msra.mxu0 %v2626
  %2678 = vmatpush.bf16.msra.mxu0 %v2625
  %2679 = vmatmul.bf16.gmra.mxu0 %v2666
  %v2680 = vpop.f32.mrf.mxu0
  %v2681 = vadd.f32 0.0, %v2680
  %v2682 = vpop.f32.mrf.mxu0
  %v2683 = vadd.f32 0.0, %v2682
  %2684 = vmatmul.bf16.gmra.mxu0 %v2669
  %v2685 = vpop.f32.mrf.mxu0
  %v2686 = vadd.f32 0.0, %v2685
  %v2687 = vpop.f32.mrf.mxu0
  %v2688 = vadd.f32 0.0, %v2687
  %2689 = vdwg.mxu0
  %v2690 = vadd.f32 %v2619, %v2681
  %v2691 = vadd.f32 %v2620, %v2683
  %v2692 = vadd.f32 %v2621, %v2686
  %v2693 = vadd.f32 %v2622, %v2688
  %v2694 = vadd.f32 %v2690, %v2657
  %v2695 = vadd.f32 %v2691, %v2657
  %v2696 = vadd.f32 %v2692, %v2657
  %v2697 = vadd.f32 %v2693, %v2657
  %v2698 = vsel %vm115, %v2659, 0.0
  %2699 = vadd.xlane.f32.xlu0 %v2698
  %v2700 = vpop.xlane.xlu0 %2699
  %v2701 = vsel %vm115, %v2660, 0.0
  %2702 = vadd.xlane.f32.xlu0 %v2701
  %v2703 = vpop.xlane.xlu0 %2702
  %v2704 = vsel %vm115, %v2661, 0.0
  %2705 = vadd.xlane.f32.xlu0 %v2704
  %v2706 = vpop.xlane.xlu0 %2705
  %v2707 = vsel %vm115, %v2662, 0.0
  %2708 = vadd.xlane.f32.xlu0 %v2707
  %v2709 = vpop.xlane.xlu0 %2708
  %v2710 = vmul.f32 %v2700, %v285
  %v2711 = vmul.f32 %v2703, %v285
  %v2712 = vmul.f32 %v2706, %v285
  %v2713 = vmul.f32 %v2709, %v285
  %v2714 = vsub.f32 %v2659, %v2710
  %v2715 = vsub.f32 %v2660, %v2711
  %v2716 = vsub.f32 %v2661, %v2712
  %v2717 = vsub.f32 %v2662, %v2713
  %v2718 = vmul.f32 %v2714, %v2714
  %v2719 = vmul.f32 %v2715, %v2715
  %v2720 = vmul.f32 %v2716, %v2716
  %v2721 = vmul.f32 %v2717, %v2717
  %v2722 = vsel %vm115, %v2718, 0.0
  %2723 = vadd.xlane.f32.xlu0 %v2722
  %v2724 = vpop.xlane.xlu0 %2723
  %v2725 = vsel %vm115, %v2719, 0.0
  %2726 = vadd.xlane.f32.xlu0 %v2725
  %v2727 = vpop.xlane.xlu0 %2726
  %v2728 = vsel %vm115, %v2720, 0.0
  %2729 = vadd.xlane.f32.xlu0 %v2728
  %v2730 = vpop.xlane.xlu0 %2729
  %v2731 = vsel %vm115, %v2721, 0.0
  %2732 = vadd.xlane.f32.xlu0 %v2731
  %v2733 = vpop.xlane.xlu0 %2732
  %v2734 = vmul.f32 %v2724, %v285
  %v2735 = vmul.f32 %v2727, %v285
  %v2736 = vmul.f32 %v2730, %v285
  %v2737 = vmul.f32 %v2733, %v285
  %v2738 = vadd.f32 %v2734, 1e-05
  %v2739 = vadd.f32 %v2735, 1e-05
  %v2740 = vadd.f32 %v2736, 1e-05
  %v2741 = vadd.f32 %v2737, 1e-05
  %v2742 = vrsqrt.pop %v2738
  %v2743 = vmul.f32 %v2742, %v2738
  %v2744 = vmul.f32 %v2743, %v2742
  %v2745 = vmul.f32 0.5, %v2744
  %v2746 = vsub.f32 1.5, %v2745
  %v2747 = vmul.f32 %v2742, %v2746
  %vm2748 = vweird.f32 %v2738
  %vm2749 = vweird.f32 %v2742
  %vm2750 = vmor %vm2748, %vm2749
  %v2751 = vsel %vm2750, %v2742, %v2747
  %v2752 = vrsqrt.pop %v2739
  %v2753 = vmul.f32 %v2752, %v2739
  %v2754 = vmul.f32 %v2753, %v2752
  %v2755 = vmul.f32 0.5, %v2754
  %v2756 = vsub.f32 1.5, %v2755
  %v2757 = vmul.f32 %v2752, %v2756
  %vm2758 = vweird.f32 %v2739
  %vm2759 = vweird.f32 %v2752
  %vm2760 = vmor %vm2758, %vm2759
  %v2761 = vsel %vm2760, %v2752, %v2757
  %v2762 = vrsqrt.pop %v2740
  %v2763 = vmul.f32 %v2762, %v2740
  %v2764 = vmul.f32 %v2763, %v2762
  %v2765 = vmul.f32 0.5, %v2764
  %v2766 = vsub.f32 1.5, %v2765
  %v2767 = vmul.f32 %v2762, %v2766
  %vm2768 = vweird.f32 %v2740
  %vm2769 = vweird.f32 %v2762
  %vm2770 = vmor %vm2768, %vm2769
  %v2771 = vsel %vm2770, %v2762, %v2767
  %v2772 = vrsqrt.pop %v2741
  %v2773 = vmul.f32 %v2772, %v2741
  %v2774 = vmul.f32 %v2773, %v2772
  %v2775 = vmul.f32 0.5, %v2774
  %v2776 = vsub.f32 1.5, %v2775
  %v2777 = vmul.f32 %v2772, %v2776
  %vm2778 = vweird.f32 %v2741
  %vm2779 = vweird.f32 %v2772
  %vm2780 = vmor %vm2778, %vm2779
  %v2781 = vsel %vm2780, %v2772, %v2777
  %v2782 = vmul.f32 %v2714, %v2751
  %v2783 = vmul.f32 %v2715, %v2761
  %v2784 = vmul.f32 %v2716, %v2771
  %v2785 = vmul.f32 %v2717, %v2781
  %v2787 = vperm.slane %v2307, 0
  %v2789 = vmul.f32 %v2782, %v2787
  %v2790 = vmul.f32 %v2783, %v2787
  %v2791 = vmul.f32 %v2784, %v2787
  %v2792 = vmul.f32 %v2785, %v2787
  %v2794 = vperm.slane %v2309, 0
  %v2796 = vadd.f32 %v2789, %v2794
  %v2797 = vadd.f32 %v2790, %v2794
  %v2798 = vadd.f32 %v2791, %v2794
  %v2799 = vadd.f32 %v2792, %v2794
  %v2800 = vsel %vm115, %v2694, 0.0
  %2801 = vadd.xlane.f32.xlu0 %v2800
  %v2802 = vpop.xlane.xlu0 %2801
  %v2803 = vsel %vm115, %v2695, 0.0
  %2804 = vadd.xlane.f32.xlu0 %v2803
  %v2805 = vpop.xlane.xlu0 %2804
  %v2806 = vsel %vm115, %v2696, 0.0
  %2807 = vadd.xlane.f32.xlu0 %v2806
  %v2808 = vpop.xlane.xlu0 %2807
  %v2809 = vsel %vm115, %v2697, 0.0
  %2810 = vadd.xlane.f32.xlu0 %v2809
  %v2811 = vpop.xlane.xlu0 %2810
  %v2812 = vmul.f32 %v2802, %v285
  %v2813 = vmul.f32 %v2805, %v285
  %v2814 = vmul.f32 %v2808, %v285
  %v2815 = vmul.f32 %v2811, %v285
  %v2816 = vsub.f32 %v2694, %v2812
  %v2817 = vsub.f32 %v2695, %v2813
  %v2818 = vsub.f32 %v2696, %v2814
  %v2819 = vsub.f32 %v2697, %v2815
  %v2820 = vmul.f32 %v2816, %v2816
  %v2821 = vmul.f32 %v2817, %v2817
  %v2822 = vmul.f32 %v2818, %v2818
  %v2823 = vmul.f32 %v2819, %v2819
  %v2824 = vsel %vm115, %v2820, 0.0
  %2825 = vadd.xlane.f32.xlu0 %v2824
  %v2826 = vpop.xlane.xlu0 %2825
  %v2827 = vsel %vm115, %v2821, 0.0
  %2828 = vadd.xlane.f32.xlu0 %v2827
  %v2829 = vpop.xlane.xlu0 %2828
  %v2830 = vsel %vm115, %v2822, 0.0
  %2831 = vadd.xlane.f32.xlu0 %v2830
  %v2832 = vpop.xlane.xlu0 %2831
  %v2833 = vsel %vm115, %v2823, 0.0
  %2834 = vadd.xlane.f32.xlu0 %v2833
  %v2835 = vpop.xlane.xlu0 %2834
  %v2836 = vmul.f32 %v2826, %v285
  %v2837 = vmul.f32 %v2829, %v285
  %v2838 = vmul.f32 %v2832, %v285
  %v2839 = vmul.f32 %v2835, %v285
  %v2840 = vadd.f32 %v2836, 1e-05
  %v2841 = vadd.f32 %v2837, 1e-05
  %v2842 = vadd.f32 %v2838, 1e-05
  %v2843 = vadd.f32 %v2839, 1e-05
  %v2844 = vrsqrt.pop %v2840
  %v2845 = vmul.f32 %v2844, %v2840
  %v2846 = vmul.f32 %v2845, %v2844
  %v2847 = vmul.f32 0.5, %v2846
  %v2848 = vsub.f32 1.5, %v2847
  %v2849 = vmul.f32 %v2844, %v2848
  %vm2850 = vweird.f32 %v2840
  %vm2851 = vweird.f32 %v2844
  %vm2852 = vmor %vm2850, %vm2851
  %v2853 = vsel %vm2852, %v2844, %v2849
  %v2854 = vrsqrt.pop %v2841
  %v2855 = vmul.f32 %v2854, %v2841
  %v2856 = vmul.f32 %v2855, %v2854
  %v2857 = vmul.f32 0.5, %v2856
  %v2858 = vsub.f32 1.5, %v2857
  %v2859 = vmul.f32 %v2854, %v2858
  %vm2860 = vweird.f32 %v2841
  %vm2861 = vweird.f32 %v2854
  %vm2862 = vmor %vm2860, %vm2861
  %v2863 = vsel %vm2862, %v2854, %v2859
  %v2864 = vrsqrt.pop %v2842
  %v2865 = vmul.f32 %v2864, %v2842
  %v2866 = vmul.f32 %v2865, %v2864
  %v2867 = vmul.f32 0.5, %v2866
  %v2868 = vsub.f32 1.5, %v2867
  %v2869 = vmul.f32 %v2864, %v2868
  %vm2870 = vweird.f32 %v2842
  %vm2871 = vweird.f32 %v2864
  %vm2872 = vmor %vm2870, %vm2871
  %v2873 = vsel %vm2872, %v2864, %v2869
  %v2874 = vrsqrt.pop %v2843
  %v2875 = vmul.f32 %v2874, %v2843
  %v2876 = vmul.f32 %v2875, %v2874
  %v2877 = vmul.f32 0.5, %v2876
  %v2878 = vsub.f32 1.5, %v2877
  %v2879 = vmul.f32 %v2874, %v2878
  %vm2880 = vweird.f32 %v2843
  %vm2881 = vweird.f32 %v2874
  %vm2882 = vmor %vm2880, %vm2881
  %v2883 = vsel %vm2882, %v2874, %v2879
  %v2884 = vmul.f32 %v2816, %v2853
  %v2885 = vmul.f32 %v2817, %v2863
  %v2886 = vmul.f32 %v2818, %v2873
  %v2887 = vmul.f32 %v2819, %v2883
  %v2888 = vmul.f32 %v2884, %v2787
  %v2889 = vmul.f32 %v2885, %v2787
  %v2890 = vmul.f32 %v2886, %v2787
  %v2891 = vmul.f32 %v2887, %v2787
  %v2892 = vadd.f32 %v2888, %v2794
  %v2893 = vadd.f32 %v2889, %v2794
  %v2894 = vadd.f32 %v2890, %v2794
  %v2895 = vadd.f32 %v2891, %v2794
  %v2896 = vpack.c.bf16 %v2797, %v2796
  %v2897 = vpack.c.bf16 %v2799, %v2798
  %v2898 = vpack.c.bf16 %v2893, %v2892
  %v2899 = vpack.c.bf16 %v2895, %v2894
  %v2901 = vsel %vm115, %v2898, 0
  %v2904 = vsel %vm115, %v2899, 0
  %2906 = vmatpush.bf16.msra.mxu0 0
  %2907 = vmatpush.bf16.msra.mxu0 0
  %2908 = vmatpush.bf16.msra.mxu0 0
  %2909 = vmatpush.bf16.msra.mxu0 0
  %2910 = vmatpush.bf16.msra.mxu0 0
  %2911 = vmatpush.bf16.msra.mxu0 0
  %2912 = vmatpush.bf16.msra.mxu0 %v2479
  %2913 = vmatpush.bf16.msra.mxu0 %v2478
  %2914 = vmatmul.bf16.gmra.mxu0 %v2901
  %v2915 = vpop.f32.mrf.mxu0
  %v2916 = vadd.f32 0.0, %v2915
  %v2917 = vpop.f32.mrf.mxu0
  %v2918 = vadd.f32 0.0, %v2917
  %2919 = vmatmul.bf16.gmra.mxu0 %v2904
  %v2920 = vpop.f32.mrf.mxu0
  %v2921 = vadd.f32 0.0, %v2920
  %v2922 = vpop.f32.mrf.mxu0
  %v2923 = vadd.f32 0.0, %v2922
  %2924 = vdwg.mxu0
  %v2926 = vsel %vm115, %v2896, 0
  %v2929 = vsel %vm115, %v2897, 0
  %2931 = vmatpush.bf16.msra.mxu0 0
  %2932 = vmatpush.bf16.msra.mxu0 0
  %2933 = vmatpush.bf16.msra.mxu0 0
  %2934 = vmatpush.bf16.msra.mxu0 0
  %2935 = vmatpush.bf16.msra.mxu0 0
  %2936 = vmatpush.bf16.msra.mxu0 0
  %2937 = vmatpush.bf16.msra.mxu0 %v2475
  %2938 = vmatpush.bf16.msra.mxu0 %v2474
  %2939 = vmatmul.bf16.gmra.mxu0 %v2926
  %v2940 = vpop.f32.mrf.mxu0
  %v2941 = vadd.f32 %v2916, %v2940
  %v2942 = vpop.f32.mrf.mxu0
  %v2943 = vadd.f32 %v2918, %v2942
  %2944 = vmatmul.bf16.gmra.mxu0 %v2929
  %v2945 = vpop.f32.mrf.mxu0
  %v2946 = vadd.f32 %v2921, %v2945
  %v2947 = vpop.f32.mrf.mxu0
  %v2948 = vadd.f32 %v2923, %v2947
  %2949 = vdwg.mxu0
  %v2950 = vadd.f32 %v2941, %v2525
  %v2951 = vadd.f32 %v2943, %v2525
  %v2952 = vadd.f32 %v2946, %v2525
  %v2953 = vadd.f32 %v2948, %v2525
  %v2954 = vxor.u32 %v2950, 2147483648
  %v2955 = vxor.u32 %v2951, 2147483648
  %v2956 = vxor.u32 %v2952, 2147483648
  %v2957 = vxor.u32 %v2953, 2147483648
  %v2958 = vmul.f32 %v2954, 1.442695
  %v2959 = vpow.pop %v2958
  %v2960 = vmul.f32 %v2955, 1.442695
  %v2961 = vpow.pop %v2960
  %v2962 = vmul.f32 %v2956, 1.442695
  %v2963 = vpow.pop %v2962
  %v2964 = vmul.f32 %v2957, 1.442695
  %v2965 = vpow.pop %v2964
  %v2966 = vadd.f32 %v2959, 1.0
  %v2967 = vadd.f32 %v2961, 1.0
  %v2968 = vadd.f32 %v2963, 1.0
  %v2969 = vadd.f32 %v2965, 1.0
  %v2970 = vrcp.pop %v2966
  %v2971 = vmul.f32 %v2966, %v2970
  %v2972 = vsub.f32 1.0, %v2971
  %v2973 = vmul.f32 %v2970, %v2972
  %v2974 = vadd.f32 %v2970, %v2973
  %vm2975 = vweird.f32 %v2966
  %vm2976 = vweird.f32 %v2970
  %vm2977 = vmor %vm2975, %vm2976
  %v2978 = vsel %vm2977, %v2970, %v2974
  %v2979 = vand.u32 2147483647, %v2966
  %vm2980 = vcmp.eq.f32.partialorder %v2979, 8.507059e+37
  %v2981 = vand.u32 %v2966, 2147483648
  %v2982 = vor.u32 1.1754944e-38, %v2981
  %v2983 = vsel %vm2980, %v2982, %v2978
  %v2984 = vmul.f32 1.0, %v2983
  %v2985 = vrcp.pop %v2967
  %v2986 = vmul.f32 %v2967, %v2985
  %v2987 = vsub.f32 1.0, %v2986
  %v2988 = vmul.f32 %v2985, %v2987
  %v2989 = vadd.f32 %v2985, %v2988
  %vm2990 = vweird.f32 %v2967
  %vm2991 = vweird.f32 %v2985
  %vm2992 = vmor %vm2990, %vm2991
  %v2993 = vsel %vm2992, %v2985, %v2989
  %v2994 = vand.u32 2147483647, %v2967
  %vm2995 = vcmp.eq.f32.partialorder %v2994, 8.507059e+37
  %v2996 = vand.u32 %v2967, 2147483648
  %v2997 = vor.u32 1.1754944e-38, %v2996
  %v2998 = vsel %vm2995, %v2997, %v2993
  %v2999 = vmul.f32 1.0, %v2998
  %v3000 = vrcp.pop %v2968
  %v3001 = vmul.f32 %v2968, %v3000
  %v3002 = vsub.f32 1.0, %v3001
  %v3003 = vmul.f32 %v3000, %v3002
  %v3004 = vadd.f32 %v3000, %v3003
  %vm3005 = vweird.f32 %v2968
  %vm3006 = vweird.f32 %v3000
  %vm3007 = vmor %vm3005, %vm3006
  %v3008 = vsel %vm3007, %v3000, %v3004
  %v3009 = vand.u32 2147483647, %v2968
  %vm3010 = vcmp.eq.f32.partialorder %v3009, 8.507059e+37
  %v3011 = vand.u32 %v2968, 2147483648
  %v3012 = vor.u32 1.1754944e-38, %v3011
  %v3013 = vsel %vm3010, %v3012, %v3008
  %v3014 = vmul.f32 1.0, %v3013
  %v3015 = vrcp.pop %v2969
  %v3016 = vmul.f32 %v2969, %v3015
  %v3017 = vsub.f32 1.0, %v3016
  %v3018 = vmul.f32 %v3015, %v3017
  %v3019 = vadd.f32 %v3015, %v3018
  %vm3020 = vweird.f32 %v2969
  %vm3021 = vweird.f32 %v3015
  %vm3022 = vmor %vm3020, %vm3021
  %v3023 = vsel %vm3022, %v3015, %v3019
  %v3024 = vand.u32 2147483647, %v2969
  %vm3025 = vcmp.eq.f32.partialorder %v3024, 8.507059e+37
  %v3026 = vand.u32 %v2969, 2147483648
  %v3027 = vor.u32 1.1754944e-38, %v3026
  %v3028 = vsel %vm3025, %v3027, %v3023
  %v3029 = vmul.f32 1.0, %v3028
  %v3030 = vmul.f32 %v2984, %v2796
  %v3031 = vmul.f32 %v2999, %v2797
  %v3032 = vmul.f32 %v3014, %v2798
  %v3033 = vmul.f32 %v3029, %v2799
  %v3034 = vsub.f32 1.0, %v2984
  %v3035 = vsub.f32 1.0, %v2999
  %v3036 = vsub.f32 1.0, %v3014
  %v3037 = vsub.f32 1.0, %v3029
  %v3038 = vmul.f32 %v3034, %v2892
  %v3039 = vmul.f32 %v3035, %v2893
  %v3040 = vmul.f32 %v3036, %v2894
  %v3041 = vmul.f32 %v3037, %v2895
  %v3042 = vadd.f32 %v3030, %v3038
  %v3043 = vadd.f32 %v3031, %v3039
  %v3044 = vadd.f32 %v3032, %v3040
  %v3045 = vadd.f32 %v3033, %v3041
  %v3046 = vsel %vm115, %v3042, 0.0
  %3047 = vadd.xlane.f32.xlu0 %v3046
  %v3048 = vpop.xlane.xlu0 %3047
  %v3049 = vsel %vm115, %v3043, 0.0
  %3050 = vadd.xlane.f32.xlu0 %v3049
  %v3051 = vpop.xlane.xlu0 %3050
  %v3052 = vsel %vm115, %v3044, 0.0
  %3053 = vadd.xlane.f32.xlu0 %v3052
  %v3054 = vpop.xlane.xlu0 %3053
  %v3055 = vsel %vm115, %v3045, 0.0
  %3056 = vadd.xlane.f32.xlu0 %v3055
  %v3057 = vpop.xlane.xlu0 %3056
  %v3058 = vmul.f32 %v3048, %v285
  %v3059 = vmul.f32 %v3051, %v285
  %v3060 = vmul.f32 %v3054, %v285
  %v3061 = vmul.f32 %v3057, %v285
  %v3062 = vsub.f32 %v3042, %v3058
  %v3063 = vsub.f32 %v3043, %v3059
  %v3064 = vsub.f32 %v3044, %v3060
  %v3065 = vsub.f32 %v3045, %v3061
  %v3066 = vmul.f32 %v3062, %v3062
  %v3067 = vmul.f32 %v3063, %v3063
  %v3068 = vmul.f32 %v3064, %v3064
  %v3069 = vmul.f32 %v3065, %v3065
  %v3070 = vsel %vm115, %v3066, 0.0
  %3071 = vadd.xlane.f32.xlu0 %v3070
  %v3072 = vpop.xlane.xlu0 %3071
  %v3073 = vsel %vm115, %v3067, 0.0
  %3074 = vadd.xlane.f32.xlu0 %v3073
  %v3075 = vpop.xlane.xlu0 %3074
  %v3076 = vsel %vm115, %v3068, 0.0
  %3077 = vadd.xlane.f32.xlu0 %v3076
  %v3078 = vpop.xlane.xlu0 %3077
  %v3079 = vsel %vm115, %v3069, 0.0
  %3080 = vadd.xlane.f32.xlu0 %v3079
  %v3081 = vpop.xlane.xlu0 %3080
  %v3082 = vmul.f32 %v3072, %v285
  %v3083 = vmul.f32 %v3075, %v285
  %v3084 = vmul.f32 %v3078, %v285
  %v3085 = vmul.f32 %v3081, %v285
  %v3086 = vadd.f32 %v3082, 1e-05
  %v3087 = vadd.f32 %v3083, 1e-05
  %v3088 = vadd.f32 %v3084, 1e-05
  %v3089 = vadd.f32 %v3085, 1e-05
  %v3090 = vrsqrt.pop %v3086
  %v3091 = vmul.f32 %v3090, %v3086
  %v3092 = vmul.f32 %v3091, %v3090
  %v3093 = vmul.f32 0.5, %v3092
  %v3094 = vsub.f32 1.5, %v3093
  %v3095 = vmul.f32 %v3090, %v3094
  %vm3096 = vweird.f32 %v3086
  %vm3097 = vweird.f32 %v3090
  %vm3098 = vmor %vm3096, %vm3097
  %v3099 = vsel %vm3098, %v3090, %v3095
  %v3100 = vrsqrt.pop %v3087
  %v3101 = vmul.f32 %v3100, %v3087
  %v3102 = vmul.f32 %v3101, %v3100
  %v3103 = vmul.f32 0.5, %v3102
  %v3104 = vsub.f32 1.5, %v3103
  %v3105 = vmul.f32 %v3100, %v3104
  %vm3106 = vweird.f32 %v3087
  %vm3107 = vweird.f32 %v3100
  %vm3108 = vmor %vm3106, %vm3107
  %v3109 = vsel %vm3108, %v3100, %v3105
  %v3110 = vrsqrt.pop %v3088
  %v3111 = vmul.f32 %v3110, %v3088
  %v3112 = vmul.f32 %v3111, %v3110
  %v3113 = vmul.f32 0.5, %v3112
  %v3114 = vsub.f32 1.5, %v3113
  %v3115 = vmul.f32 %v3110, %v3114
  %vm3116 = vweird.f32 %v3088
  %vm3117 = vweird.f32 %v3110
  %vm3118 = vmor %vm3116, %vm3117
  %v3119 = vsel %vm3118, %v3110, %v3115
  %v3120 = vrsqrt.pop %v3089
  %v3121 = vmul.f32 %v3120, %v3089
  %v3122 = vmul.f32 %v3121, %v3120
  %v3123 = vmul.f32 0.5, %v3122
  %v3124 = vsub.f32 1.5, %v3123
  %v3125 = vmul.f32 %v3120, %v3124
  %vm3126 = vweird.f32 %v3089
  %vm3127 = vweird.f32 %v3120
  %vm3128 = vmor %vm3126, %vm3127
  %v3129 = vsel %vm3128, %v3120, %v3125
  %v3130 = vmul.f32 %v3062, %v3099
  %v3131 = vmul.f32 %v3063, %v3109
  %v3132 = vmul.f32 %v3064, %v3119
  %v3133 = vmul.f32 %v3065, %v3129
  %v3134 = vmul.f32 %v3130, %v2787
  %v3135 = vmul.f32 %v3131, %v2787
  %v3136 = vmul.f32 %v3132, %v2787
  %v3137 = vmul.f32 %v3133, %v2787
  %v3138 = vadd.f32 %v3134, %v2794
  %v3139 = vadd.f32 %v3135, %v2794
  %v3140 = vadd.f32 %v3136, %v2794
  %v3141 = vadd.f32 %v3137, %v2794
  %v3142 = vadd.f32 %v2280, %v3138
  %v3143 = vadd.f32 %v2281, %v3139
  %v3144 = vadd.f32 %v2282, %v3140
  %v3145 = vadd.f32 %v2283, %v3141
  %v3146 = vld [vmem:[%s13] sm:$0x1]
  %v3148 = vperm.slane %v3146, 0
  %v3150 = vmul.f32 %v3142, %v3148
  %v3151 = vmul.f32 %v3143, %v3148
  %v3152 = vmul.f32 %v3144, %v3148
  %v3153 = vmul.f32 %v3145, %v3148
  %v3154 = vmul.f32 %v59, %v3148
  %v3155 = vmul.f32 %v60, %v3148
  %v3156 = vmul.f32 %v61, %v3148
  %v3157 = vmul.f32 %v62, %v3148
  %v3158 = vmul.f32 %v64, %v3148
  %v3159 = vmul.f32 %v65, %v3148
  %v3160 = vmul.f32 %v66, %v3148
  %v3161 = vmul.f32 %v67, %v3148
  %v3162 = vmul.f32 %v69, %v3148
  %v3163 = vmul.f32 %v70, %v3148
  %v3164 = vmul.f32 %v71, %v3148
  %v3165 = vmul.f32 %v72, %v3148
  %v3166 = vmul.f32 %v74, %v3148
  %v3167 = vmul.f32 %v75, %v3148
  %v3168 = vmul.f32 %v76, %v3148
  %v3169 = vmul.f32 %v77, %v3148
  %v3170 = vsel %vm115, %v3150, 0.0
  %3171 = vadd.xlane.f32.xlu0 %v3170
  %v3172 = vpop.xlane.xlu0 %3171
  %v3173 = vsel %vm115, %v3151, 0.0
  %3174 = vadd.xlane.f32.xlu0 %v3173
  %v3175 = vpop.xlane.xlu0 %3174
  %v3176 = vsel %vm115, %v3152, 0.0
  %3177 = vadd.xlane.f32.xlu0 %v3176
  %v3178 = vpop.xlane.xlu0 %3177
  %v3179 = vsel %vm115, %v3153, 0.0
  %3180 = vadd.xlane.f32.xlu0 %v3179
  %v3181 = vpop.xlane.xlu0 %3180
  %v3182 = vsel %vm115, %v3154, 0.0
  %3183 = vadd.xlane.f32.xlu0 %v3182
  %v3184 = vpop.xlane.xlu0 %3183
  %v3185 = vsel %vm115, %v3155, 0.0
  %3186 = vadd.xlane.f32.xlu0 %v3185
  %v3187 = vpop.xlane.xlu0 %3186
  %v3188 = vsel %vm115, %v3156, 0.0
  %3189 = vadd.xlane.f32.xlu0 %v3188
  %v3190 = vpop.xlane.xlu0 %3189
  %v3191 = vsel %vm115, %v3157, 0.0
  %3192 = vadd.xlane.f32.xlu0 %v3191
  %v3193 = vpop.xlane.xlu0 %3192
  %v3194 = vsel %vm115, %v3158, 0.0
  %3195 = vadd.xlane.f32.xlu0 %v3194
  %v3196 = vpop.xlane.xlu0 %3195
  %v3197 = vsel %vm115, %v3159, 0.0
  %3198 = vadd.xlane.f32.xlu0 %v3197
  %v3199 = vpop.xlane.xlu0 %3198
  %v3200 = vsel %vm115, %v3160, 0.0
  %3201 = vadd.xlane.f32.xlu0 %v3200
  %v3202 = vpop.xlane.xlu0 %3201
  %v3203 = vsel %vm115, %v3161, 0.0
  %3204 = vadd.xlane.f32.xlu0 %v3203
  %v3205 = vpop.xlane.xlu0 %3204
  %v3206 = vsel %vm115, %v3162, 0.0
  %3207 = vadd.xlane.f32.xlu0 %v3206
  %v3208 = vpop.xlane.xlu0 %3207
  %v3209 = vsel %vm115, %v3163, 0.0
  %3210 = vadd.xlane.f32.xlu0 %v3209
  %v3211 = vpop.xlane.xlu0 %3210
  %v3212 = vsel %vm115, %v3164, 0.0
  %3213 = vadd.xlane.f32.xlu0 %v3212
  %v3214 = vpop.xlane.xlu0 %3213
  %v3215 = vsel %vm115, %v3165, 0.0
  %3216 = vadd.xlane.f32.xlu0 %v3215
  %v3217 = vpop.xlane.xlu0 %3216
  %v3218 = vsel %vm115, %v3166, 0.0
  %3219 = vadd.xlane.f32.xlu0 %v3218
  %v3220 = vpop.xlane.xlu0 %3219
  %v3221 = vsel %vm115, %v3167, 0.0
  %3222 = vadd.xlane.f32.xlu0 %v3221
  %v3223 = vpop.xlane.xlu0 %3222
  %v3224 = vsel %vm115, %v3168, 0.0
  %3225 = vadd.xlane.f32.xlu0 %v3224
  %v3226 = vpop.xlane.xlu0 %3225
  %v3227 = vsel %vm115, %v3169, 0.0
  %3228 = vadd.xlane.f32.xlu0 %v3227
  %v3229 = vpop.xlane.xlu0 %3228
  %v3230 = vld [vmem:[#allocation2] sm:$0x1]
  %v3232 = vperm.slane %v3230, 0
  %3233 = vset.pattern.permute.xlu0 0
  %3234 = vperm.xlu0 %3233, %v3232
  %v3235 = vpop.permute.xlu0 %3234
  %v3237 = vadd.f32 %v3172, %v3235
  %v3238 = vadd.f32 %v3175, %v3235
  %v3239 = vadd.f32 %v3178, %v3235
  %v3240 = vadd.f32 %v3181, %v3235
  %v3241 = vadd.f32 %v3184, %v3235
  %v3242 = vadd.f32 %v3187, %v3235
  %v3243 = vadd.f32 %v3190, %v3235
  %v3244 = vadd.f32 %v3193, %v3235
  %v3245 = vadd.f32 %v3196, %v3235
  %v3246 = vadd.f32 %v3199, %v3235
  %v3247 = vadd.f32 %v3202, %v3235
  %v3248 = vadd.f32 %v3205, %v3235
  %v3249 = vadd.f32 %v3208, %v3235
  %v3250 = vadd.f32 %v3211, %v3235
  %v3251 = vadd.f32 %v3214, %v3235
  %v3252 = vadd.f32 %v3217, %v3235
  %v3253 = vadd.f32 %v3220, %v3235
  %v3254 = vadd.f32 %v3223, %v3235
  %v3255 = vadd.f32 %v3226, %v3235
  %v3256 = vadd.f32 %v3229, %v3235
  %v3277 = vlaneseq
  %v3278 = vand.u32 %v3277, 127
  %v3279 = vperm.slane %v3237, %v3278
  %v3280 = vadd.s32 %v3278, 4294967288
  %v3281 = vperm.slane %v3238, %v3280
  %vm3282 = vcmask 130112
  %v3283 = vsel %vm3282, %v3281, %v3279
  %v3284 = vperm.slane %v3239, %v3278
  %v3285 = vperm.slane %v3240, %v3280
  %v3286 = vsel %vm3282, %v3285, %v3284
  %v3287 = vperm.slane %v3241, %v3278
  %v3288 = vperm.slane %v3242, %v3280
  %v3289 = vsel %vm3282, %v3288, %v3287
  %v3290 = vperm.slane %v3243, %v3278
  %v3291 = vperm.slane %v3244, %v3280
  %v3292 = vsel %vm3282, %v3291, %v3290
  %v3293 = vperm.slane %v3245, %v3278
  %v3294 = vperm.slane %v3246, %v3280
  %v3295 = vsel %vm3282, %v3294, %v3293
  %v3296 = vperm.slane %v3247, %v3278
  %v3297 = vperm.slane %v3248, %v3280
  %v3298 = vsel %vm3282, %v3297, %v3296
  %v3299 = vperm.slane %v3249, %v3278
  %v3300 = vperm.slane %v3250, %v3280
  %v3301 = vsel %vm3282, %v3300, %v3299
  %v3302 = vperm.slane %v3251, %v3278
  %v3303 = vperm.slane %v3252, %v3280
  %v3304 = vsel %vm3282, %v3303, %v3302
  %v3305 = vperm.slane %v3253, %v3278
  %v3306 = vperm.slane %v3254, %v3280
  %v3307 = vsel %vm3282, %v3306, %v3305
  %v3308 = vperm.slane %v3255, %v3278
  %v3309 = vperm.slane %v3256, %v3280
  %v3310 = vsel %vm3282, %v3309, %v3308
  %vm3311 = vcmask 1041409
  %v3312 = vsel %vm3311, %v3286, %v3283
  %vm3313 = vcmask 1042434
  %v3314 = vsel %vm3313, %v3289, %v3312
  %vm3315 = vcmask 1043459
  %v3316 = vsel %vm3315, %v3292, %v3314
  %vm3317 = vcmask 1044484
  %v3318 = vsel %vm3317, %v3295, %v3316
  %vm3319 = vcmask 1045509
  %v3320 = vsel %vm3319, %v3298, %v3318
  %vm3321 = vcmask 1046534
  %v3322 = vsel %vm3321, %v3301, %v3320
  %vm3323 = vcmask 1047559
  %v3324 = vsel %vm3323, %v3304, %v3322
  %v3325 = vsel %vm3311, %v3310, %v3307
  %vm3328 = vcmask 130048
  %v3329 = vsel %vm3328, %v3324, -inf
  %3330 = vmax.xlane.f32.xlu0 %v3329
  %v3331 = vpop.xlane.xlu0 %3330
  %vm3332 = vcmask 123904
  %v3333 = vsel %vm3332, %v3325, -inf
  %3334 = vmax.xlane.f32.xlu0 %v3333
  %v3335 = vpop.xlane.xlu0 %3334
  %v3338 = vperm.slane %v3331, 0
  %v3339 = vperm.slane %v3331, 1
  %v3340 = vperm.slane %v3331, 2
  %v3341 = vperm.slane %v3331, 3
  %v3342 = vperm.slane %v3331, 4
  %v3343 = vperm.slane %v3331, 5
  %v3344 = vperm.slane %v3331, 6
  %v3345 = vperm.slane %v3331, 7
  %v3346 = vperm.slane %v3335, 0
  %v3347 = vperm.slane %v3335, 1
  %v3358 = vsub.f32 %v3237, %v3338
  %v3359 = vsub.f32 %v3238, %v3338
  %v3360 = vsub.f32 %v3239, %v3339
  %v3361 = vsub.f32 %v3240, %v3339
  %v3362 = vsub.f32 %v3241, %v3340
  %v3363 = vsub.f32 %v3242, %v3340
  %v3364 = vsub.f32 %v3243, %v3341
  %v3365 = vsub.f32 %v3244, %v3341
  %v3366 = vsub.f32 %v3245, %v3342
  %v3367 = vsub.f32 %v3246, %v3342
  %v3368 = vsub.f32 %v3247, %v3343
  %v3369 = vsub.f32 %v3248, %v3343
  %v3370 = vsub.f32 %v3249, %v3344
  %v3371 = vsub.f32 %v3250, %v3344
  %v3372 = vsub.f32 %v3251, %v3345
  %v3373 = vsub.f32 %v3252, %v3345
  %v3374 = vsub.f32 %v3253, %v3346
  %v3375 = vsub.f32 %v3254, %v3346
  %v3376 = vsub.f32 %v3255, %v3347
  %v3377 = vsub.f32 %v3256, %v3347
  %v3378 = vmul.f32 %v3358, 1.442695
  %v3379 = vpow.pop %v3378
  %v3380 = vmul.f32 %v3359, 1.442695
  %v3381 = vpow.pop %v3380
  %v3382 = vmul.f32 %v3360, 1.442695
  %v3383 = vpow.pop %v3382
  %v3384 = vmul.f32 %v3361, 1.442695
  %v3385 = vpow.pop %v3384
  %v3386 = vmul.f32 %v3362, 1.442695
  %v3387 = vpow.pop %v3386
  %v3388 = vmul.f32 %v3363, 1.442695
  %v3389 = vpow.pop %v3388
  %v3390 = vmul.f32 %v3364, 1.442695
  %v3391 = vpow.pop %v3390
  %v3392 = vmul.f32 %v3365, 1.442695
  %v3393 = vpow.pop %v3392
  %v3394 = vmul.f32 %v3366, 1.442695
  %v3395 = vpow.pop %v3394
  %v3396 = vmul.f32 %v3367, 1.442695
  %v3397 = vpow.pop %v3396
  %v3398 = vmul.f32 %v3368, 1.442695
  %v3399 = vpow.pop %v3398
  %v3400 = vmul.f32 %v3369, 1.442695
  %v3401 = vpow.pop %v3400
  %v3402 = vmul.f32 %v3370, 1.442695
  %v3403 = vpow.pop %v3402
  %v3404 = vmul.f32 %v3371, 1.442695
  %v3405 = vpow.pop %v3404
  %v3406 = vmul.f32 %v3372, 1.442695
  %v3407 = vpow.pop %v3406
  %v3408 = vmul.f32 %v3373, 1.442695
  %v3409 = vpow.pop %v3408
  %v3410 = vmul.f32 %v3374, 1.442695
  %v3411 = vpow.pop %v3410
  %v3412 = vmul.f32 %v3375, 1.442695
  %v3413 = vpow.pop %v3412
  %v3414 = vmul.f32 %v3376, 1.442695
  %v3415 = vpow.pop %v3414
  %v3416 = vmul.f32 %v3377, 1.442695
  %v3417 = vpow.pop %v3416
  %3438 = vset.pattern.permute.xlu0 0
  %3439 = vperm.xlu0 %3438, %v3379
  %v3440 = vpop.permute.xlu0 %3439
  %3441 = vset.pattern.permute.xlu0 0
  %3442 = vperm.xlu0 %3441, %v3381
  %v3443 = vpop.permute.xlu0 %3442
  %3444 = vset.pattern.permute.xlu0 0
  %3445 = vperm.xlu0 %3444, %v3383
  %v3446 = vpop.permute.xlu0 %3445
  %3447 = vset.pattern.permute.xlu0 0
  %3448 = vperm.xlu0 %3447, %v3385
  %v3449 = vpop.permute.xlu0 %3448
  %3450 = vset.pattern.permute.xlu0 0
  %3451 = vperm.xlu0 %3450, %v3387
  %v3452 = vpop.permute.xlu0 %3451
  %3453 = vset.pattern.permute.xlu0 0
  %3454 = vperm.xlu0 %3453, %v3389
  %v3455 = vpop.permute.xlu0 %3454
  %3456 = vset.pattern.permute.xlu0 0
  %3457 = vperm.xlu0 %3456, %v3391
  %v3458 = vpop.permute.xlu0 %3457
  %3459 = vset.pattern.permute.xlu0 0
  %3460 = vperm.xlu0 %3459, %v3393
  %v3461 = vpop.permute.xlu0 %3460
  %3462 = vset.pattern.permute.xlu0 0
  %3463 = vperm.xlu0 %3462, %v3395
  %v3464 = vpop.permute.xlu0 %3463
  %3465 = vset.pattern.permute.xlu0 0
  %3466 = vperm.xlu0 %3465, %v3397
  %v3467 = vpop.permute.xlu0 %3466
  %3468 = vset.pattern.permute.xlu0 0
  %3469 = vperm.xlu0 %3468, %v3399
  %v3470 = vpop.permute.xlu0 %3469
  %3471 = vset.pattern.permute.xlu0 0
  %3472 = vperm.xlu0 %3471, %v3401
  %v3473 = vpop.permute.xlu0 %3472
  %3474 = vset.pattern.permute.xlu0 0
  %3475 = vperm.xlu0 %3474, %v3403
  %v3476 = vpop.permute.xlu0 %3475
  %3477 = vset.pattern.permute.xlu0 0
  %3478 = vperm.xlu0 %3477, %v3405
  %v3479 = vpop.permute.xlu0 %3478
  %3480 = vset.pattern.permute.xlu0 0
  %3481 = vperm.xlu0 %3480, %v3407
  %v3482 = vpop.permute.xlu0 %3481
  %3483 = vset.pattern.permute.xlu0 0
  %3484 = vperm.xlu0 %3483, %v3409
  %v3485 = vpop.permute.xlu0 %3484
  %3486 = vset.pattern.permute.xlu0 0
  %3487 = vperm.xlu0 %3486, %v3411
  %v3488 = vpop.permute.xlu0 %3487
  %3489 = vset.pattern.permute.xlu0 0
  %3490 = vperm.xlu0 %3489, %v3413
  %v3491 = vpop.permute.xlu0 %3490
  %3492 = vset.pattern.permute.xlu0 0
  %3493 = vperm.xlu0 %3492, %v3415
  %v3494 = vpop.permute.xlu0 %3493
  %3495 = vset.pattern.permute.xlu0 0
  %3496 = vperm.xlu0 %3495, %v3417
  %v3497 = vpop.permute.xlu0 %3496
  %v3498 = vperm.slane %v3440, %v3278
  %v3499 = vperm.slane %v3443, %v3280
  %v3500 = vsel %vm3282, %v3499, %v3498
  %v3501 = vperm.slane %v3446, %v3278
  %v3502 = vperm.slane %v3449, %v3280
  %v3503 = vsel %vm3282, %v3502, %v3501
  %v3504 = vperm.slane %v3452, %v3278
  %v3505 = vperm.slane %v3455, %v3280
  %v3506 = vsel %vm3282, %v3505, %v3504
  %v3507 = vperm.slane %v3458, %v3278
  %v3508 = vperm.slane %v3461, %v3280
  %v3509 = vsel %vm3282, %v3508, %v3507
  %v3510 = vperm.slane %v3464, %v3278
  %v3511 = vperm.slane %v3467, %v3280
  %v3512 = vsel %vm3282, %v3511, %v3510
  %v3513 = vperm.slane %v3470, %v3278
  %v3514 = vperm.slane %v3473, %v3280
  %v3515 = vsel %vm3282, %v3514, %v3513
  %v3516 = vperm.slane %v3476, %v3278
  %v3517 = vperm.slane %v3479, %v3280
  %v3518 = vsel %vm3282, %v3517, %v3516
  %v3519 = vperm.slane %v3482, %v3278
  %v3520 = vperm.slane %v3485, %v3280
  %v3521 = vsel %vm3282, %v3520, %v3519
  %v3522 = vperm.slane %v3488, %v3278
  %v3523 = vperm.slane %v3491, %v3280
  %v3524 = vsel %vm3282, %v3523, %v3522
  %v3525 = vperm.slane %v3494, %v3278
  %v3526 = vperm.slane %v3497, %v3280
  %v3527 = vsel %vm3282, %v3526, %v3525
  %v3528 = vsel %vm3311, %v3503, %v3500
  %v3529 = vsel %vm3313, %v3506, %v3528
  %v3530 = vsel %vm3315, %v3509, %v3529
  %v3531 = vsel %vm3317, %v3512, %v3530
  %v3532 = vsel %vm3319, %v3515, %v3531
  %v3533 = vsel %vm3321, %v3518, %v3532
  %v3534 = vsel %vm3323, %v3521, %v3533
  %v3535 = vsel %vm3311, %v3527, %v3524
  %v3538 = vsel %vm3328, %v3534, 0.0
  %3539 = vadd.xlane.f32.xlu0 %v3538
  %v3540 = vpop.xlane.xlu0 %3539
  %v3541 = vsel %vm3332, %v3535, 0.0
  %3542 = vadd.xlane.f32.xlu0 %v3541
  %v3543 = vpop.xlane.xlu0 %3542
  %v3544 = vrcp.pop %v3540
  %v3545 = vrcp.pop %v3543
  %v3548 = vperm.slane %v3544, 0
  %v3549 = vperm.slane %v3544, 1
  %v3550 = vperm.slane %v3544, 2
  %v3551 = vperm.slane %v3544, 3
  %v3552 = vperm.slane %v3544, 4
  %v3553 = vperm.slane %v3544, 5
  %v3554 = vperm.slane %v3544, 6
  %v3555 = vperm.slane %v3544, 7
  %v3556 = vperm.slane %v3545, 0
  %v3557 = vperm.slane %v3545, 1
  %v3568 = vmul.f32 %v3379, %v3548
  %v3569 = vmul.f32 %v3381, %v3548
  %v3570 = vmul.f32 %v3383, %v3549
  %v3571 = vmul.f32 %v3385, %v3549
  %v3572 = vmul.f32 %v3387, %v3550
  %v3573 = vmul.f32 %v3389, %v3550
  %v3574 = vmul.f32 %v3391, %v3551
  %v3575 = vmul.f32 %v3393, %v3551
  %v3576 = vmul.f32 %v3395, %v3552
  %v3577 = vmul.f32 %v3397, %v3552
  %v3578 = vmul.f32 %v3399, %v3553
  %v3579 = vmul.f32 %v3401, %v3553
  %v3580 = vmul.f32 %v3403, %v3554
  %v3581 = vmul.f32 %v3405, %v3554
  %v3582 = vmul.f32 %v3407, %v3555
  %v3583 = vmul.f32 %v3409, %v3555
  %v3584 = vmul.f32 %v3411, %v3556
  %v3585 = vmul.f32 %v3413, %v3556
  %v3586 = vmul.f32 %v3415, %v3557
  %v3587 = vmul.f32 %v3417, %v3557
  %3589 = vset.pattern.permute.xlu0 0
  %3590 = vperm.xlu0 %3589, %v3568
  %v3591 = vpop.permute.xlu0 %3590
  %3594 = vset.pattern.permute.xlu0 0
  %3595 = vperm.xlu0 %3594, %v3569
  %v3596 = vpop.permute.xlu0 %3595
  %3599 = vset.pattern.permute.xlu0 0
  %3600 = vperm.xlu0 %3599, %v3570
  %v3601 = vpop.permute.xlu0 %3600
  %3604 = vset.pattern.permute.xlu0 0
  %3605 = vperm.xlu0 %3604, %v3571
  %v3606 = vpop.permute.xlu0 %3605
  %3609 = vset.pattern.permute.xlu0 0
  %3610 = vperm.xlu0 %3609, %v3572
  %v3611 = vpop.permute.xlu0 %3610
  %3614 = vset.pattern.permute.xlu0 0
  %3615 = vperm.xlu0 %3614, %v3573
  %v3616 = vpop.permute.xlu0 %3615
  %3619 = vset.pattern.permute.xlu0 0
  %3620 = vperm.xlu0 %3619, %v3574
  %v3621 = vpop.permute.xlu0 %3620
  %3624 = vset.pattern.permute.xlu0 0
  %3625 = vperm.xlu0 %3624, %v3575
  %v3626 = vpop.permute.xlu0 %3625
  %3629 = vset.pattern.permute.xlu0 0
  %3630 = vperm.xlu0 %3629, %v3576
  %v3631 = vpop.permute.xlu0 %3630
  %3634 = vset.pattern.permute.xlu0 0
  %3635 = vperm.xlu0 %3634, %v3577
  %v3636 = vpop.permute.xlu0 %3635
  %3639 = vset.pattern.permute.xlu0 0
  %3640 = vperm.xlu0 %3639, %v3578
  %v3641 = vpop.permute.xlu0 %3640
  %3644 = vset.pattern.permute.xlu0 0
  %3645 = vperm.xlu0 %3644, %v3579
  %v3646 = vpop.permute.xlu0 %3645
  %3649 = vset.pattern.permute.xlu0 0
  %3650 = vperm.xlu0 %3649, %v3580
  %v3651 = vpop.permute.xlu0 %3650
  %3654 = vset.pattern.permute.xlu0 0
  %3655 = vperm.xlu0 %3654, %v3581
  %v3656 = vpop.permute.xlu0 %3655
  %3659 = vset.pattern.permute.xlu0 0
  %3660 = vperm.xlu0 %3659, %v3582
  %v3661 = vpop.permute.xlu0 %3660
  %3664 = vset.pattern.permute.xlu0 0
  %3665 = vperm.xlu0 %3664, %v3583
  %v3666 = vpop.permute.xlu0 %3665
  %3669 = vset.pattern.permute.xlu0 0
  %3670 = vperm.xlu0 %3669, %v3584
  %v3671 = vpop.permute.xlu0 %3670
  %3674 = vset.pattern.permute.xlu0 0
  %3675 = vperm.xlu0 %3674, %v3585
  %v3676 = vpop.permute.xlu0 %3675
  %3679 = vset.pattern.permute.xlu0 0
  %3680 = vperm.xlu0 %3679, %v3586
  %v3681 = vpop.permute.xlu0 %3680
  %3684 = vset.pattern.permute.xlu0 0
  %3685 = vperm.xlu0 %3684, %v3587
  %v3686 = vpop.permute.xlu0 %3685
  %v3688 = vmul.f32 %v3591, %v3142
  %v3689 = vmul.f32 %v3596, %v3143
  %v3690 = vmul.f32 %v3601, %v3144
  %v3691 = vmul.f32 %v3606, %v3145
  %v3692 = vmul.f32 %v3611, %v59
  %v3693 = vmul.f32 %v3616, %v60
  %v3694 = vmul.f32 %v3621, %v61
  %v3695 = vmul.f32 %v3626, %v62
  %v3696 = vmul.f32 %v3631, %v64
  %v3697 = vmul.f32 %v3636, %v65
  %v3698 = vmul.f32 %v3641, %v66
  %v3699 = vmul.f32 %v3646, %v67
  %v3700 = vmul.f32 %v3651, %v69
  %v3701 = vmul.f32 %v3656, %v70
  %v3702 = vmul.f32 %v3661, %v71
  %v3703 = vmul.f32 %v3666, %v72
  %v3704 = vmul.f32 %v3671, %v74
  %v3705 = vmul.f32 %v3676, %v75
  %v3706 = vmul.f32 %v3681, %v76
  %v3707 = vmul.f32 %v3686, %v77
  %v3708 = vsel %vm115, %v3688, 0.0
  %v3709 = vsel %vm115, %v3689, 0.0
  %v3710 = vadd.f32 %v3708, %v3709
  %v3711 = vrot.slane %v3710, 4
  %v3712 = vadd.f32 %v3710, %v3711
  %v3713 = vrot.slane %v3712, 2
  %v3714 = vadd.f32 %v3712, %v3713
  %v3715 = vrot.slane %v3714, 1
  %v3716 = vadd.f32 %v3714, %v3715
  %v3717 = vsel %vm115, %v3690, 0.0
  %v3718 = vsel %vm115, %v3691, 0.0
  %v3719 = vadd.f32 %v3717, %v3718
  %v3720 = vrot.slane %v3719, 4
  %v3721 = vadd.f32 %v3719, %v3720
  %v3722 = vrot.slane %v3721, 2
  %v3723 = vadd.f32 %v3721, %v3722
  %v3724 = vrot.slane %v3723, 1
  %v3725 = vadd.f32 %v3723, %v3724
  %v3726 = vsel %vm115, %v3692, 0.0
  %v3727 = vsel %vm115, %v3693, 0.0
  %v3728 = vadd.f32 %v3726, %v3727
  %v3729 = vrot.slane %v3728, 4
  %v3730 = vadd.f32 %v3728, %v3729
  %v3731 = vrot.slane %v3730, 2
  %v3732 = vadd.f32 %v3730, %v3731
  %v3733 = vrot.slane %v3732, 1
  %v3734 = vadd.f32 %v3732, %v3733
  %v3735 = vsel %vm115, %v3694, 0.0
  %v3736 = vsel %vm115, %v3695, 0.0
  %v3737 = vadd.f32 %v3735, %v3736
  %v3738 = vrot.slane %v3737, 4
  %v3739 = vadd.f32 %v3737, %v3738
  %v3740 = vrot.slane %v3739, 2
  %v3741 = vadd.f32 %v3739, %v3740
  %v3742 = vrot.slane %v3741, 1
  %v3743 = vadd.f32 %v3741, %v3742
  %v3744 = vsel %vm115, %v3696, 0.0
  %v3745 = vsel %vm115, %v3697, 0.0
  %v3746 = vadd.f32 %v3744, %v3745
  %v3747 = vrot.slane %v3746, 4
  %v3748 = vadd.f32 %v3746, %v3747
  %v3749 = vrot.slane %v3748, 2
  %v3750 = vadd.f32 %v3748, %v3749
  %v3751 = vrot.slane %v3750, 1
  %v3752 = vadd.f32 %v3750, %v3751
  %v3753 = vsel %vm115, %v3698, 0.0
  %v3754 = vsel %vm115, %v3699, 0.0
  %v3755 = vadd.f32 %v3753, %v3754
  %v3756 = vrot.slane %v3755, 4
  %v3757 = vadd.f32 %v3755, %v3756
  %v3758 = vrot.slane %v3757, 2
  %v3759 = vadd.f32 %v3757, %v3758
  %v3760 = vrot.slane %v3759, 1
  %v3761 = vadd.f32 %v3759, %v3760
  %v3762 = vsel %vm115, %v3700, 0.0
  %v3763 = vsel %vm115, %v3701, 0.0
  %v3764 = vadd.f32 %v3762, %v3763
  %v3765 = vrot.slane %v3764, 4
  %v3766 = vadd.f32 %v3764, %v3765
  %v3767 = vrot.slane %v3766, 2
  %v3768 = vadd.f32 %v3766, %v3767
  %v3769 = vrot.slane %v3768, 1
  %v3770 = vadd.f32 %v3768, %v3769
  %v3771 = vsel %vm115, %v3702, 0.0
  %v3772 = vsel %vm115, %v3703, 0.0
  %v3773 = vadd.f32 %v3771, %v3772
  %v3774 = vrot.slane %v3773, 4
  %v3775 = vadd.f32 %v3773, %v3774
  %v3776 = vrot.slane %v3775, 2
  %v3777 = vadd.f32 %v3775, %v3776
  %v3778 = vrot.slane %v3777, 1
  %v3779 = vadd.f32 %v3777, %v3778
  %v3780 = vsel %vm115, %v3704, 0.0
  %v3781 = vsel %vm115, %v3705, 0.0
  %v3782 = vadd.f32 %v3780, %v3781
  %v3783 = vrot.slane %v3782, 4
  %v3784 = vadd.f32 %v3782, %v3783
  %v3785 = vrot.slane %v3784, 2
  %v3786 = vadd.f32 %v3784, %v3785
  %v3787 = vrot.slane %v3786, 1
  %v3788 = vadd.f32 %v3786, %v3787
  %v3789 = vsel %vm115, %v3706, 0.0
  %v3790 = vsel %vm115, %v3707, 0.0
  %v3791 = vadd.f32 %v3789, %v3790
  %v3792 = vrot.slane %v3791, 4
  %v3793 = vadd.f32 %v3791, %v3792
  %v3794 = vrot.slane %v3793, 2
  %v3795 = vadd.f32 %v3793, %v3794
  %v3796 = vrot.slane %v3795, 1
  %v3797 = vadd.f32 %v3795, %v3796
  %v3798 = vld [vmem:[%s15] sm:$0xff]
  %v3799 = vld [vmem:[%s15 + $0x8] sm:$0xff]
  %v3800 = vld [vmem:[%s15 + $0x10] sm:$0xff]
  %v3801 = vld [vmem:[%s15 + $0x18] sm:$0xff]
  %v3802 = vpack.c.bf16 %v3716, %v3716
  %v3803 = vpack.c.bf16 %v3725, %v3725
  %v3804 = vpack.c.bf16 %v3734, %v3734
  %v3805 = vpack.c.bf16 %v3743, %v3743
  %v3806 = vpack.c.bf16 %v3752, %v3752
  %v3807 = vpack.c.bf16 %v3761, %v3761
  %v3808 = vpack.c.bf16 %v3770, %v3770
  %v3809 = vpack.c.bf16 %v3779, %v3779
  %v3810 = vpack.c.bf16 %v3788, %v3788
  %v3811 = vpack.c.bf16 %v3797, %v3797
  %v3812 = vpack.c.bf16 %v3799, %v3798
  %v3813 = vpack.c.bf16 %v3801, %v3800
  %v3814 = vld [vmem:[%s16] sm:$0x1]
  %v3816 = vperm.slane %v3814, 0
  %v3828 = vunpack.c.l.b16 %v3802
  %v3829 = vunpack.c.l.b16 %v3803
  %v3830 = vunpack.c.l.b16 %v3804
  %v3831 = vunpack.c.l.b16 %v3805
  %v3832 = vunpack.c.l.b16 %v3806
  %v3833 = vunpack.c.l.b16 %v3807
  %v3834 = vunpack.c.l.b16 %v3808
  %v3835 = vunpack.c.l.b16 %v3809
  %v3836 = vunpack.c.l.b16 %v3810
  %v3837 = vunpack.c.l.b16 %v3811
  %v3838 = vsel %vm3311, %v3829, %v3828
  %v3839 = vsel %vm3313, %v3830, %v3838
  %v3840 = vsel %vm3315, %v3831, %v3839
  %v3841 = vsel %vm3317, %v3832, %v3840
  %v3842 = vsel %vm3319, %v3833, %v3841
  %v3843 = vsel %vm3321, %v3834, %v3842
  %v3844 = vsel %vm3323, %v3835, %v3843
  %v3845 = vsel %vm3311, %v3837, %v3836
  %v3846 = vpack.c.b16 %v3845, %v3844
  %v3848 = vsel %vm115, %v3846, 0
  %3850 = vmatpush.bf16.msra.mxu0 0
  %3851 = vmatpush.bf16.msra.mxu0 0
  %3852 = vmatpush.bf16.msra.mxu0 0
  %3853 = vmatpush.bf16.msra.mxu0 0
  %3854 = vmatpush.bf16.msra.mxu0 0
  %3855 = vmatpush.bf16.msra.mxu0 0
  %3856 = vmatpush.bf16.msra.mxu0 %v3813
  %3857 = vmatpush.bf16.msra.mxu0 %v3812
  %3858 = vmatmul.bf16.gmra.mxu0 %v3848
  %v3859 = vpop.f32.mrf.mxu0
  %v3860 = vadd.f32 %v3816, %v3859
  %v3861 = vpop.f32.mrf.mxu0
  %v3862 = vadd.f32 %v3816, %v3861
  %3863 = vdwg.mxu0
  %v3865 = vrot.slane %v3860, 2
  %v3866 = vrot.slane %v3860, 4
  %v3867 = vrot.slane %v3860, 6
  %vm3871 = vcmask 74752
  %3872 = vst.msk [vmem:[%s17] sm:$0x3] %vm3871, %v3860
  %3873 = vst.msk [vmem:[%s17 + $0x2] sm:$0x3] %vm3871, %v3865
  %3874 = vst.msk [vmem:[%s17 + $0x4] sm:$0x3] %vm3871, %v3866
  %3875 = vst.msk [vmem:[%s17 + $0x6] sm:$0x3] %vm3871, %v3867
  %3876 = vst.msk [vmem:[%s17 + $0x8] sm:$0x3] %vm3871, %v3862
  // Predicated region
  $region70: #{transformer_classifier_fwd.19} parent=0 // pred_check
    _
  $region71: #{transformer_classifier_fwd.19} parent=0 // pred_check_branch
    %3878 = sbr.rel (0) target = $region73
  $region72: #{transformer_classifier_fwd.19} parent=0 // pred_region
    _
  $region73: #{transformer_classifier_fwd.19} parent=0 // pred_fallthru
    _
  // Predicated region
  $region74: #{transformer_classifier_fwd.19} parent=0 // pred_check
    _
  $region75: #{transformer_classifier_fwd.19} parent=0 // pred_check_branch
    %3880 = sbr.rel (0) target = $region77
  $region76: #{transformer_classifier_fwd.19} parent=0 // pred_region
    _
  $region77: #{transformer_classifier_fwd.19} parent=0 // pred_fallthru
    _

</llo_original>
